<compile_context>
chip_gen: v6e
topology: v6e:2x2x1
jax: 0.10.0
libtpu: 0.0.40
codegen_flags: <defaults>
</compile_context>

<pallas_src>
import jax
import jax.numpy as jnp
from jax.experimental import pallas as pl
from jax.experimental.pallas import tpu as pltpu

_NPER = 15  # per-layer operand count passed to the kernel


# ----------------------------------------------------------------------------
# Fused whole-model kernel (all layers, grid-less, everything resident in VMEM)
# ----------------------------------------------------------------------------
def make_anomuly_kernel(n_layers, V, N, dims):
    """dims: list of (H, G) per layer (static Python ints)."""

    def kernel(*refs):
        adj_ref, x_ref = refs[0], refs[1]
        n_in = 2 + n_layers * _NPER
        out_ref = refs[n_in]
        hn_refs = refs[n_in + 1:n_in + 1 + n_layers]

        x_slab = x_ref[...]                                    # (N, V*in_dim) lane-dense slab
        for l in range(n_layers):
            (w_gcn, b_gcn, gamma, beta, gcn_mask, h0,
             w_ih, b_ih, w_hh, b_hh,
             w_att, b_att, seg, expand, rep) = refs[2 + l * _NPER:2 + (l + 1) * _NPER]
            H, G = dims[l]
            VH, VG = V * H, V * G

            # ---- Stage 1: GCN -> BatchNorm(batch stats) -> ReLU on the (N, V*H) slab.
            # One block-diagonal X@W matmul for all views; per-view Â aggregation via
            # masked slab matmuls (lane-dense, no mid-lane slices / lane concats).
            xw = jnp.dot(x_slab, w_gcn[...], preferred_element_type=jnp.float32)       # (N, VH)
            agg = jnp.zeros((N, VH), jnp.float32)
            for v in range(V):
                agg = agg + jnp.dot(adj_ref[v], xw * gcn_mask[v],
                                    preferred_element_type=jnp.float32)
            hv = agg + b_gcn[...]
            mean = jnp.mean(hv, axis=0, keepdims=True)
            var = jnp.mean(hv * hv, axis=0, keepdims=True) - mean * mean               # one-pass
            hv = (hv - mean) * jax.lax.rsqrt(var + 1e-5) * gamma[...] + beta[...]
            hv = jnp.maximum(hv, 0.0)                                                   # ReLU
            # TODO(synk): F.dropout has no deterministic Pallas equivalent; identity (eval mode).

            # Input-side GRU gate pre-activations hoisted out of the recurrence; gates on
            # a separate leading axis so the serial loop never does 48/96 column slicing.
            gx = [jnp.dot(hv, w_ih[g], preferred_element_type=jnp.float32) + b_ih[g]
                  for g in range(3)]                                                    # 3x(N,VG)
            whh = [w_hh[g] for g in range(3)]                                           # 3x(VG,VG)
            bhh = [b_hh[g] for g in range(3)]

            # ---- Stage 2: GRU recurrence (all views batched via block-diag per-gate
            # hidden weights), fully unrolled.  The 3 per-step matmuls are independent
            # given h, so their MXU latencies overlap; hidden weights are loop-invariant.
            h = h0[...]                                                                 # (1, VG)
            rows = []
            for t in range(N):
                gh_r = jnp.dot(h, whh[0], preferred_element_type=jnp.float32) + bhh[0]
                gh_z = jnp.dot(h, whh[1], preferred_element_type=jnp.float32) + bhh[1]
                gh_n = jnp.dot(h, whh[2], preferred_element_type=jnp.float32) + bhh[2]
                r = jax.nn.sigmoid(gx[0][t:t + 1, :] + gh_r)
                z = jax.nn.sigmoid(gx[1][t:t + 1, :] + gh_z)
                c = jnp.tanh(gx[2][t:t + 1, :] + r * gh_n)
                h = (1.0 - z) * c + z * h
                rows.append(h)                       # kept in registers; no per-step store
            hn_refs[l][...] = h                      # single (1, VG) store
            seq = jnp.concatenate(rows, axis=0)      # (N, VG), packed once after the loop

            # ---- Stage 3: MultiplexAttention + residual (+ sigmoid on last layer).
            # score[n,v] = tanh(<seq_v[n], Linear_v(seq_v[n])>), softmax over views,
            # attn[n] = sum_v a[n,v]*seq_v[n], out_v = seq_v + attn — all done lane-dense
            # on the slab with tiny constant-matrix matmuls (segment-sum / view-broadcast).
            lin = jnp.dot(seq, w_att[...], preferred_element_type=jnp.float32) + b_att[...]
            scores = jnp.tanh(jnp.dot(seq * lin, seg[...],
                                      preferred_element_type=jnp.float32))             # (N, V)
            m = jnp.max(scores, axis=-1, keepdims=True)
            e = jnp.exp(scores - m)
            a = e * pl.reciprocal(jnp.sum(e, axis=-1, keepdims=True), approx=True)
            a_bcast = jnp.dot(a, expand[...], preferred_element_type=jnp.float32)       # (N, VG)
            attn = jnp.dot(a_bcast * seq, rep[...],
                           preferred_element_type=jnp.float32)                          # tiled
            x_slab = seq + attn
            if l == n_layers - 1:                    # compile-time branch (last layer only)
                x_slab = jax.nn.sigmoid(x_slab)

        out_ref[...] = x_slab                        # single lane-dense (N, V*G_last) store

    return kernel


# ----------------------------------------------------------------------------
# Block-diagonal / concatenated parameter packing (plain JAX, tiny, jit-folded)
# ----------------------------------------------------------------------------
def _pack_layer(p, V):
    f32 = jnp.float32
    Fin, H = p["w_gcn"].shape[1], p["w_gcn"].shape[2]
    G = p["w_hh"].shape[-1]
    VF, VH, VG = V * Fin, V * H, V * G

    w_gcn_blk = jnp.zeros((VF, VH), f32)
    w_att_blk = jnp.zeros((VG, VG), f32)
    w_ih_blk = jnp.zeros((3, VH, VG), f32)
    w_hh_blk = jnp.zeros((3, VG, VG), f32)
    for v in range(V):
        w_gcn_blk = w_gcn_blk.at[v * Fin:(v + 1) * Fin, v * H:(v + 1) * H].set(p["w_gcn"][v])
        w_att_blk = w_att_blk.at[v * G:(v + 1) * G, v * G:(v + 1) * G].set(p["w_att"][v])
        for g in range(3):
            w_ih_blk = w_ih_blk.at[g, v * H:(v + 1) * H, v * G:(v + 1) * G].set(p["w_ih"][v, g])
            w_hh_blk = w_hh_blk.at[g, v * G:(v + 1) * G, v * G:(v + 1) * G].set(p["w_hh"][v, g])

    b_gcn_cat = p["b_gcn"].reshape(1, VH)
    gamma_cat = p["gamma"].reshape(1, VH)
    beta_cat = p["beta"].reshape(1, VH)
    b_ih_cat = jnp.transpose(p["b_ih"], (1, 2, 0, 3)).reshape(3, 1, VG)
    b_hh_cat = jnp.transpose(p["b_hh"], (1, 2, 0, 3)).reshape(3, 1, VG)
    b_att_cat = p["b_att"].reshape(1, VG)

    # constant 0/1 helper matrices (per-view column masks / segment-sum / view-broadcast)
    gcn_mask = jnp.kron(jnp.eye(V, dtype=f32), jnp.ones((1, H), f32)).reshape(V, 1, VH)
    seg = jnp.kron(jnp.eye(V, dtype=f32), jnp.ones((G, 1), f32))            # (VG, V)
    expand = jnp.transpose(seg)                                             # (V, VG)
    rep = jnp.kron(jnp.ones((V, V), f32), jnp.eye(G, dtype=f32))            # (VG, VG)

    return dict(w_gcn=w_gcn_blk, b_gcn=b_gcn_cat, gamma=gamma_cat, beta=beta_cat,
                gcn_mask=gcn_mask, w_ih=w_ih_blk, b_ih=b_ih_cat, w_hh=w_hh_blk,
                b_hh=b_hh_cat, w_att=w_att_blk, b_att=b_att_cat,
                seg=seg, expand=expand, rep=rep)


# ----------------------------------------------------------------------------
# ANOMULY forward: ONE fused pallas_call for all layers
# ----------------------------------------------------------------------------
def anomuly_forward(x, adj, params, hiddens):
    V, N, F = x.shape
    n_layers = len(params)
    dims = [(p["w_gcn"].shape[2], p["w_hh"].shape[-1]) for p in params]

    flat_inputs = [adj, jnp.transpose(x, (1, 0, 2)).reshape(N, V * F)]
    for l, p in enumerate(params):
        G = dims[l][1]
        pk = _pack_layer(p, V)
        h0_flat = jnp.transpose(hiddens[l], (1, 0, 2)).reshape(1, V * G)
        flat_inputs += [pk["w_gcn"], pk["b_gcn"], pk["gamma"], pk["beta"], pk["gcn_mask"],
                        h0_flat, pk["w_ih"], pk["b_ih"], pk["w_hh"], pk["b_hh"],
                        pk["w_att"], pk["b_att"], pk["seg"], pk["expand"], pk["rep"]]

    G_last = dims[-1][1]
    vmem = pl.BlockSpec(memory_space=pltpu.MemorySpace.VMEM)
    out_shape = tuple([jax.ShapeDtypeStruct((N, V * G_last), jnp.float32)]
                      + [jax.ShapeDtypeStruct((1, V * g), jnp.float32) for _, g in dims])

    results = pl.pallas_call(
        make_anomuly_kernel(n_layers, V, N, dims),
        out_shape=out_shape,
        in_specs=[vmem] * len(flat_inputs),
        out_specs=tuple([vmem] * len(out_shape)),
    )(*flat_inputs)

    out = results[0].reshape(N, V, G_last).transpose(1, 0, 2)               # (V, N, G_last)
    new_hiddens = [hn.reshape(V, g)[:, None, :] for hn, (_, g) in zip(results[1:], dims)]
    return jnp.squeeze(out), new_hiddens


# ----------------------------------------------------------------------------
# deterministic parameter / input construction
# ----------------------------------------------------------------------------
def build_norm_adj(key, V, N, p=0.3):
    a = (jax.random.uniform(key, (V, N, N)) < p).astype(jnp.float32)
    a = jnp.maximum(a, jnp.transpose(a, (0, 2, 1)))          # symmetric (undirected edges)
    a = jnp.maximum(a, jnp.eye(N, dtype=jnp.float32)[None])  # add self loops
    deg = jnp.sum(a, axis=-1)
    dinv = 1.0 / jnp.sqrt(deg)
    return dinv[:, :, None] * a * dinv[:, None, :]           # D^-1/2 (A+I) D^-1/2


def init_params(key, V, num_features, hidden_dims, gru_hidden_dims, n_layers):
    params = []
    in_dim = num_features
    k = key
    for layer in range(n_layers):
        H = hidden_dims[layer]
        G = gru_hidden_dims[layer]
        k, *ks = jax.random.split(k, 11)
        params.append(dict(
            w_gcn=0.2 * jax.random.normal(ks[0], (V, in_dim, H), jnp.float32),
            b_gcn=0.1 * jax.random.normal(ks[1], (V, 1, H), jnp.float32),
            gamma=1.0 + 0.1 * jax.random.normal(ks[2], (V, 1, H), jnp.float32),
            beta=0.1 * jax.random.normal(ks[3], (V, 1, H), jnp.float32),
            w_ih=0.2 * jax.random.normal(ks[4], (V, 3, H, G), jnp.float32),   # gates r,z,n
            w_hh=0.2 * jax.random.normal(ks[5], (V, 3, G, G), jnp.float32),
            b_ih=0.1 * jax.random.normal(ks[6], (V, 3, 1, G), jnp.float32),
            b_hh=0.1 * jax.random.normal(ks[7], (V, 3, 1, G), jnp.float32),
            w_att=0.2 * jax.random.normal(ks[8], (V, G, G), jnp.float32),     # stored (in,out)
            b_att=0.1 * jax.random.normal(ks[9], (V, 1, G), jnp.float32),
        ))
        in_dim = G
    return params


if __name__ == "__main__":
    V, N, F = 3, 16, 8                          # views, nodes, input features
    hidden_dims = [16, 16]
    gru_hidden_dims = [16, 16]
    n_layers = 2

    key = jax.random.PRNGKey(0)
    kx, ka, kp = jax.random.split(key, 3)

    x = jax.random.normal(kx, (V, N, F), jnp.float32)
    adj = build_norm_adj(ka, V, N)
    params = init_params(kp, V, F, hidden_dims, gru_hidden_dims, n_layers)
    hiddens = [jnp.zeros((V, 1, gru_hidden_dims[l]), jnp.float32) for l in range(n_layers)]

    fwd = jax.jit(anomuly_forward)
    out, new_hiddens = fwd(x, adj, params, hiddens)
    out = jax.block_until_ready(out)
    for h in new_hiddens:
        jax.block_until_ready(h)
    assert out.shape == (V, N, gru_hidden_dims[-1])
    for h, g in zip(new_hiddens, gru_hidden_dims):
        assert h.shape == (V, 1, g)
    print("KERNEL_OK")
</pallas_src>

<mosaic_0001>
module attributes {stable_mosaic.version = 11 : i64} {
  func.func @kernel(%arg0: memref<3x16x16xf32, #tpu.memory_space<vmem>>, %arg1: memref<16x24xf32, #tpu.memory_space<vmem>>, %arg2: memref<24x48xf32, #tpu.memory_space<vmem>>, %arg3: memref<1x48xf32, #tpu.memory_space<vmem>>, %arg4: memref<1x48xf32, #tpu.memory_space<vmem>>, %arg5: memref<1x48xf32, #tpu.memory_space<vmem>>, %arg6: memref<3x1x48xf32, #tpu.memory_space<vmem>>, %arg7: memref<1x48xf32, #tpu.memory_space<vmem>>, %arg8: memref<3x48x48xf32, #tpu.memory_space<vmem>>, %arg9: memref<3x1x48xf32, #tpu.memory_space<vmem>>, %arg10: memref<3x48x48xf32, #tpu.memory_space<vmem>>, %arg11: memref<3x1x48xf32, #tpu.memory_space<vmem>>, %arg12: memref<48x48xf32, #tpu.memory_space<vmem>>, %arg13: memref<1x48xf32, #tpu.memory_space<vmem>>, %arg14: memref<48x3xf32, #tpu.memory_space<vmem>>, %arg15: memref<3x48xf32, #tpu.memory_space<vmem>>, %arg16: memref<48x48xf32, #tpu.memory_space<vmem>>, %arg17: memref<48x48xf32, #tpu.memory_space<vmem>>, %arg18: memref<1x48xf32, #tpu.memory_space<vmem>>, %arg19: memref<1x48xf32, #tpu.memory_space<vmem>>, %arg20: memref<1x48xf32, #tpu.memory_space<vmem>>, %arg21: memref<3x1x48xf32, #tpu.memory_space<vmem>>, %arg22: memref<1x48xf32, #tpu.memory_space<vmem>>, %arg23: memref<3x48x48xf32, #tpu.memory_space<vmem>>, %arg24: memref<3x1x48xf32, #tpu.memory_space<vmem>>, %arg25: memref<3x48x48xf32, #tpu.memory_space<vmem>>, %arg26: memref<3x1x48xf32, #tpu.memory_space<vmem>>, %arg27: memref<48x48xf32, #tpu.memory_space<vmem>>, %arg28: memref<1x48xf32, #tpu.memory_space<vmem>>, %arg29: memref<48x3xf32, #tpu.memory_space<vmem>>, %arg30: memref<3x48xf32, #tpu.memory_space<vmem>>, %arg31: memref<48x48xf32, #tpu.memory_space<vmem>>, %arg32: memref<16x48xf32, #tpu.memory_space<vmem>>, %arg33: memref<1x48xf32, #tpu.memory_space<vmem>>, %arg34: memref<1x48xf32, #tpu.memory_space<vmem>>) attributes {dimension_semantics = [], scalar_prefetch = 0 : i64, scratch_operands = 0 : i64, tpu.core_type = #tpu.core_type<tc>} {
    %c0 = arith.constant 0 : index
    %c0_0 = arith.constant 0 : index
    %0 = vector.load %arg1[%c0, %c0_0] : memref<16x24xf32, #tpu.memory_space<vmem>>, vector<16x24xf32>
    %c0_1 = arith.constant 0 : index
    %c0_2 = arith.constant 0 : index
    %1 = vector.load %arg2[%c0_1, %c0_2] : memref<24x48xf32, #tpu.memory_space<vmem>>, vector<24x48xf32>
    %cst = arith.constant dense<0.000000e+00> : vector<16x48xf32>
    %2 = tpu.matmul %0, %1, %cst {dimension_numbers = #tpu.dot_dimension_numbers<[1], [0], [0], [1], [0, 0, 1, 1], [], []>} : vector<16x24xf32>, vector<24x48xf32>, vector<16x48xf32> -> vector<16x48xf32>
    %cst_3 = arith.constant 0.000000e+00 : f32
    %3 = vector.broadcast %cst_3 : f32 to vector<16x48xf32>
    %c0_4 = arith.constant 0 : index
    %c0_5 = arith.constant 0 : index
    %c0_6 = arith.constant 0 : index
    %4 = vector.load %arg0[%c0_4, %c0_5, %c0_6] : memref<3x16x16xf32, #tpu.memory_space<vmem>>, vector<1x16x16xf32>
    %5 = vector.shape_cast %4 : vector<1x16x16xf32> to vector<16x16xf32>
    %c0_7 = arith.constant 0 : index
    %c0_8 = arith.constant 0 : index
    %c0_9 = arith.constant 0 : index
    %6 = vector.load %arg6[%c0_7, %c0_8, %c0_9] : memref<3x1x48xf32, #tpu.memory_space<vmem>>, vector<1x1x48xf32>
    %7 = vector.shape_cast %6 : vector<1x1x48xf32> to vector<1x48xf32>
    %8 = vector.broadcast %7 : vector<1x48xf32> to vector<16x48xf32>
    %9 = arith.mulf %2, %8 : vector<16x48xf32>
    %cst_10 = arith.constant dense<0.000000e+00> : vector<16x48xf32>
    %10 = tpu.matmul %5, %9, %cst_10 {dimension_numbers = #tpu.dot_dimension_numbers<[1], [0], [0], [1], [0, 0, 1, 1], [], []>} : vector<16x16xf32>, vector<16x48xf32>, vector<16x48xf32> -> vector<16x48xf32>
    %11 = arith.addf %3, %10 : vector<16x48xf32>
    %c1 = arith.constant 1 : index
    %c0_11 = arith.constant 0 : index
    %c0_12 = arith.constant 0 : index
    %12 = vector.load %arg0[%c1, %c0_11, %c0_12] : memref<3x16x16xf32, #tpu.memory_space<vmem>>, vector<1x16x16xf32>
    %13 = vector.shape_cast %12 : vector<1x16x16xf32> to vector<16x16xf32>
    %c1_13 = arith.constant 1 : index
    %c0_14 = arith.constant 0 : index
    %c0_15 = arith.constant 0 : index
    %14 = vector.load %arg6[%c1_13, %c0_14, %c0_15] : memref<3x1x48xf32, #tpu.memory_space<vmem>>, vector<1x1x48xf32>
    %15 = vector.shape_cast %14 : vector<1x1x48xf32> to vector<1x48xf32>
    %16 = vector.broadcast %15 : vector<1x48xf32> to vector<16x48xf32>
    %17 = arith.mulf %2, %16 : vector<16x48xf32>
    %cst_16 = arith.constant dense<0.000000e+00> : vector<16x48xf32>
    %18 = tpu.matmul %13, %17, %cst_16 {dimension_numbers = #tpu.dot_dimension_numbers<[1], [0], [0], [1], [0, 0, 1, 1], [], []>} : vector<16x16xf32>, vector<16x48xf32>, vector<16x48xf32> -> vector<16x48xf32>
    %19 = arith.addf %11, %18 : vector<16x48xf32>
    %c2 = arith.constant 2 : index
    %c0_17 = arith.constant 0 : index
    %c0_18 = arith.constant 0 : index
    %20 = vector.load %arg0[%c2, %c0_17, %c0_18] : memref<3x16x16xf32, #tpu.memory_space<vmem>>, vector<1x16x16xf32>
    %21 = vector.shape_cast %20 : vector<1x16x16xf32> to vector<16x16xf32>
    %c2_19 = arith.constant 2 : index
    %c0_20 = arith.constant 0 : index
    %c0_21 = arith.constant 0 : index
    %22 = vector.load %arg6[%c2_19, %c0_20, %c0_21] : memref<3x1x48xf32, #tpu.memory_space<vmem>>, vector<1x1x48xf32>
    %23 = vector.shape_cast %22 : vector<1x1x48xf32> to vector<1x48xf32>
    %24 = vector.broadcast %23 : vector<1x48xf32> to vector<16x48xf32>
    %25 = arith.mulf %2, %24 : vector<16x48xf32>
    %cst_22 = arith.constant dense<0.000000e+00> : vector<16x48xf32>
    %26 = tpu.matmul %21, %25, %cst_22 {dimension_numbers = #tpu.dot_dimension_numbers<[1], [0], [0], [1], [0, 0, 1, 1], [], []>} : vector<16x16xf32>, vector<16x48xf32>, vector<16x48xf32> -> vector<16x48xf32>
    %27 = arith.addf %19, %26 : vector<16x48xf32>
    %c0_23 = arith.constant 0 : index
    %c0_24 = arith.constant 0 : index
    %28 = vector.load %arg3[%c0_23, %c0_24] : memref<1x48xf32, #tpu.memory_space<vmem>>, vector<1x48xf32>
    %29 = vector.broadcast %28 : vector<1x48xf32> to vector<16x48xf32>
    %30 = arith.addf %27, %29 : vector<16x48xf32>
    %cst_25 = arith.constant dense<0.000000e+00> : vector<48xf32>
    %31 = vector.multi_reduction <add>, %30, %cst_25 [0] : vector<16x48xf32> to vector<48xf32>
    %32 = vector.shape_cast %31 : vector<48xf32> to vector<1x48xf32>
    %cst_26 = arith.constant 1.600000e+01 : f32
    %33 = vector.broadcast %cst_26 : f32 to vector<1x48xf32>
    %34 = arith.divf %32, %33 : vector<1x48xf32>
    %35 = arith.mulf %30, %30 : vector<16x48xf32>
    %cst_27 = arith.constant dense<0.000000e+00> : vector<48xf32>
    %36 = vector.multi_reduction <add>, %35, %cst_27 [0] : vector<16x48xf32> to vector<48xf32>
    %37 = vector.shape_cast %36 : vector<48xf32> to vector<1x48xf32>
    %cst_28 = arith.constant 1.600000e+01 : f32
    %38 = vector.broadcast %cst_28 : f32 to vector<1x48xf32>
    %39 = arith.divf %37, %38 : vector<1x48xf32>
    %40 = arith.mulf %34, %34 : vector<1x48xf32>
    %41 = arith.subf %39, %40 : vector<1x48xf32>
    %42 = vector.broadcast %34 : vector<1x48xf32> to vector<16x48xf32>
    %43 = arith.subf %30, %42 : vector<16x48xf32>
    %cst_29 = arith.constant 9.99999974E-6 : f32
    %44 = vector.broadcast %cst_29 : f32 to vector<1x48xf32>
    %45 = arith.addf %41, %44 : vector<1x48xf32>
    %46 = math.rsqrt %45 : vector<1x48xf32>
    %47 = vector.broadcast %46 : vector<1x48xf32> to vector<16x48xf32>
    %48 = arith.mulf %43, %47 : vector<16x48xf32>
    %c0_30 = arith.constant 0 : index
    %c0_31 = arith.constant 0 : index
    %49 = vector.load %arg4[%c0_30, %c0_31] : memref<1x48xf32, #tpu.memory_space<vmem>>, vector<1x48xf32>
    %50 = vector.broadcast %49 : vector<1x48xf32> to vector<16x48xf32>
    %51 = arith.mulf %48, %50 : vector<16x48xf32>
    %c0_32 = arith.constant 0 : index
    %c0_33 = arith.constant 0 : index
    %52 = vector.load %arg5[%c0_32, %c0_33] : memref<1x48xf32, #tpu.memory_space<vmem>>, vector<1x48xf32>
    %53 = vector.broadcast %52 : vector<1x48xf32> to vector<16x48xf32>
    %54 = arith.addf %51, %53 : vector<16x48xf32>
    %cst_34 = arith.constant 0.000000e+00 : f32
    %55 = vector.broadcast %cst_34 : f32 to vector<16x48xf32>
    %56 = arith.maximumf %54, %55 : vector<16x48xf32>
    %c0_35 = arith.constant 0 : index
    %c0_36 = arith.constant 0 : index
    %c0_37 = arith.constant 0 : index
    %57 = vector.load %arg8[%c0_35, %c0_36, %c0_37] : memref<3x48x48xf32, #tpu.memory_space<vmem>>, vector<1x48x48xf32>
    %58 = vector.shape_cast %57 : vector<1x48x48xf32> to vector<48x48xf32>
    %cst_38 = arith.constant dense<0.000000e+00> : vector<16x48xf32>
    %59 = tpu.matmul %56, %58, %cst_38 {dimension_numbers = #tpu.dot_dimension_numbers<[1], [0], [0], [1], [0, 0, 1, 1], [], []>} : vector<16x48xf32>, vector<48x48xf32>, vector<16x48xf32> -> vector<16x48xf32>
    %c0_39 = arith.constant 0 : index
    %c0_40 = arith.constant 0 : index
    %c0_41 = arith.constant 0 : index
    %60 = vector.load %arg9[%c0_39, %c0_40, %c0_41] : memref<3x1x48xf32, #tpu.memory_space<vmem>>, vector<1x1x48xf32>
    %61 = vector.shape_cast %60 : vector<1x1x48xf32> to vector<1x48xf32>
    %62 = vector.broadcast %61 : vector<1x48xf32> to vector<16x48xf32>
    %63 = arith.addf %59, %62 : vector<16x48xf32>
    %c1_42 = arith.constant 1 : index
    %c0_43 = arith.constant 0 : index
    %c0_44 = arith.constant 0 : index
    %64 = vector.load %arg8[%c1_42, %c0_43, %c0_44] : memref<3x48x48xf32, #tpu.memory_space<vmem>>, vector<1x48x48xf32>
    %65 = vector.shape_cast %64 : vector<1x48x48xf32> to vector<48x48xf32>
    %cst_45 = arith.constant dense<0.000000e+00> : vector<16x48xf32>
    %66 = tpu.matmul %56, %65, %cst_45 {dimension_numbers = #tpu.dot_dimension_numbers<[1], [0], [0], [1], [0, 0, 1, 1], [], []>} : vector<16x48xf32>, vector<48x48xf32>, vector<16x48xf32> -> vector<16x48xf32>
    %c1_46 = arith.constant 1 : index
    %c0_47 = arith.constant 0 : index
    %c0_48 = arith.constant 0 : index
    %67 = vector.load %arg9[%c1_46, %c0_47, %c0_48] : memref<3x1x48xf32, #tpu.memory_space<vmem>>, vector<1x1x48xf32>
    %68 = vector.shape_cast %67 : vector<1x1x48xf32> to vector<1x48xf32>
    %69 = vector.broadcast %68 : vector<1x48xf32> to vector<16x48xf32>
    %70 = arith.addf %66, %69 : vector<16x48xf32>
    %c2_49 = arith.constant 2 : index
    %c0_50 = arith.constant 0 : index
    %c0_51 = arith.constant 0 : index
    %71 = vector.load %arg8[%c2_49, %c0_50, %c0_51] : memref<3x48x48xf32, #tpu.memory_space<vmem>>, vector<1x48x48xf32>
    %72 = vector.shape_cast %71 : vector<1x48x48xf32> to vector<48x48xf32>
    %cst_52 = arith.constant dense<0.000000e+00> : vector<16x48xf32>
    %73 = tpu.matmul %56, %72, %cst_52 {dimension_numbers = #tpu.dot_dimension_numbers<[1], [0], [0], [1], [0, 0, 1, 1], [], []>} : vector<16x48xf32>, vector<48x48xf32>, vector<16x48xf32> -> vector<16x48xf32>
    %c2_53 = arith.constant 2 : index
    %c0_54 = arith.constant 0 : index
    %c0_55 = arith.constant 0 : index
    %74 = vector.load %arg9[%c2_53, %c0_54, %c0_55] : memref<3x1x48xf32, #tpu.memory_space<vmem>>, vector<1x1x48xf32>
    %75 = vector.shape_cast %74 : vector<1x1x48xf32> to vector<1x48xf32>
    %76 = vector.broadcast %75 : vector<1x48xf32> to vector<16x48xf32>
    %77 = arith.addf %73, %76 : vector<16x48xf32>
    %c0_56 = arith.constant 0 : index
    %c0_57 = arith.constant 0 : index
    %c0_58 = arith.constant 0 : index
    %78 = vector.load %arg10[%c0_56, %c0_57, %c0_58] : memref<3x48x48xf32, #tpu.memory_space<vmem>>, vector<1x48x48xf32>
    %79 = vector.shape_cast %78 : vector<1x48x48xf32> to vector<48x48xf32>
    %c1_59 = arith.constant 1 : index
    %c0_60 = arith.constant 0 : index
    %c0_61 = arith.constant 0 : index
    %80 = vector.load %arg10[%c1_59, %c0_60, %c0_61] : memref<3x48x48xf32, #tpu.memory_space<vmem>>, vector<1x48x48xf32>
    %81 = vector.shape_cast %80 : vector<1x48x48xf32> to vector<48x48xf32>
    %c2_62 = arith.constant 2 : index
    %c0_63 = arith.constant 0 : index
    %c0_64 = arith.constant 0 : index
    %82 = vector.load %arg10[%c2_62, %c0_63, %c0_64] : memref<3x48x48xf32, #tpu.memory_space<vmem>>, vector<1x48x48xf32>
    %83 = vector.shape_cast %82 : vector<1x48x48xf32> to vector<48x48xf32>
    %c0_65 = arith.constant 0 : index
    %c0_66 = arith.constant 0 : index
    %c0_67 = arith.constant 0 : index
    %84 = vector.load %arg11[%c0_65, %c0_66, %c0_67] : memref<3x1x48xf32, #tpu.memory_space<vmem>>, vector<1x1x48xf32>
    %85 = vector.shape_cast %84 : vector<1x1x48xf32> to vector<1x48xf32>
    %c1_68 = arith.constant 1 : index
    %c0_69 = arith.constant 0 : index
    %c0_70 = arith.constant 0 : index
    %86 = vector.load %arg11[%c1_68, %c0_69, %c0_70] : memref<3x1x48xf32, #tpu.memory_space<vmem>>, vector<1x1x48xf32>
    %87 = vector.shape_cast %86 : vector<1x1x48xf32> to vector<1x48xf32>
    %c2_71 = arith.constant 2 : index
    %c0_72 = arith.constant 0 : index
    %c0_73 = arith.constant 0 : index
    %88 = vector.load %arg11[%c2_71, %c0_72, %c0_73] : memref<3x1x48xf32, #tpu.memory_space<vmem>>, vector<1x1x48xf32>
    %89 = vector.shape_cast %88 : vector<1x1x48xf32> to vector<1x48xf32>
    %c0_74 = arith.constant 0 : index
    %c0_75 = arith.constant 0 : index
    %90 = vector.load %arg7[%c0_74, %c0_75] : memref<1x48xf32, #tpu.memory_space<vmem>>, vector<1x48xf32>
    %cst_76 = arith.constant dense<0.000000e+00> : vector<1x48xf32>
    %91 = tpu.matmul %90, %79, %cst_76 {dimension_numbers = #tpu.dot_dimension_numbers<[1], [0], [0], [1], [0, 0, 1, 1], [], []>} : vector<1x48xf32>, vector<48x48xf32>, vector<1x48xf32> -> vector<1x48xf32>
    %92 = arith.addf %91, %85 : vector<1x48xf32>
    %cst_77 = arith.constant dense<0.000000e+00> : vector<1x48xf32>
    %93 = tpu.matmul %90, %81, %cst_77 {dimension_numbers = #tpu.dot_dimension_numbers<[1], [0], [0], [1], [0, 0, 1, 1], [], []>} : vector<1x48xf32>, vector<48x48xf32>, vector<1x48xf32> -> vector<1x48xf32>
    %94 = arith.addf %93, %87 : vector<1x48xf32>
    %cst_78 = arith.constant dense<0.000000e+00> : vector<1x48xf32>
    %95 = tpu.matmul %90, %83, %cst_78 {dimension_numbers = #tpu.dot_dimension_numbers<[1], [0], [0], [1], [0, 0, 1, 1], [], []>} : vector<1x48xf32>, vector<48x48xf32>, vector<1x48xf32> -> vector<1x48xf32>
    %96 = arith.addf %95, %89 : vector<1x48xf32>
    %97 = vector.extract_strided_slice %63 {offsets = [0, 0], sizes = [1, 48], strides = [1, 1]} : vector<16x48xf32> to vector<1x48xf32>
    %98 = arith.addf %97, %92 : vector<1x48xf32>
    %99 = arith.negf %98 : vector<1x48xf32>
    %100 = math.exp %99 : vector<1x48xf32>
    %cst_79 = arith.constant 1.000000e+00 : f32
    %101 = vector.broadcast %cst_79 : f32 to vector<1x48xf32>
    %102 = arith.addf %101, %100 : vector<1x48xf32>
    %103 = arith.divf %101, %102 : vector<1x48xf32>
    %104 = vector.extract_strided_slice %70 {offsets = [0, 0], sizes = [1, 48], strides = [1, 1]} : vector<16x48xf32> to vector<1x48xf32>
    %105 = arith.addf %104, %94 : vector<1x48xf32>
    %106 = arith.negf %105 : vector<1x48xf32>
    %107 = math.exp %106 : vector<1x48xf32>
    %cst_80 = arith.constant 1.000000e+00 : f32
    %108 = vector.broadcast %cst_80 : f32 to vector<1x48xf32>
    %109 = arith.addf %108, %107 : vector<1x48xf32>
    %110 = arith.divf %108, %109 : vector<1x48xf32>
    %111 = vector.extract_strided_slice %77 {offsets = [0, 0], sizes = [1, 48], strides = [1, 1]} : vector<16x48xf32> to vector<1x48xf32>
    %112 = arith.mulf %103, %96 : vector<1x48xf32>
    %113 = arith.addf %111, %112 : vector<1x48xf32>
    %114 = math.tanh %113 : vector<1x48xf32>
    %cst_81 = arith.constant 1.000000e+00 : f32
    %115 = vector.broadcast %cst_81 : f32 to vector<1x48xf32>
    %116 = arith.subf %115, %110 : vector<1x48xf32>
    %117 = arith.mulf %116, %114 : vector<1x48xf32>
    %118 = arith.mulf %110, %90 : vector<1x48xf32>
    %119 = arith.addf %117, %118 : vector<1x48xf32>
    %cst_82 = arith.constant dense<0.000000e+00> : vector<1x48xf32>
    %120 = tpu.matmul %119, %79, %cst_82 {dimension_numbers = #tpu.dot_dimension_numbers<[1], [0], [0], [1], [0, 0, 1, 1], [], []>} : vector<1x48xf32>, vector<48x48xf32>, vector<1x48xf32> -> vector<1x48xf32>
    %121 = arith.addf %120, %85 : vector<1x48xf32>
    %cst_83 = arith.constant dense<0.000000e+00> : vector<1x48xf32>
    %122 = tpu.matmul %119, %81, %cst_83 {dimension_numbers = #tpu.dot_dimension_numbers<[1], [0], [0], [1], [0, 0, 1, 1], [], []>} : vector<1x48xf32>, vector<48x48xf32>, vector<1x48xf32> -> vector<1x48xf32>
    %123 = arith.addf %122, %87 : vector<1x48xf32>
    %cst_84 = arith.constant dense<0.000000e+00> : vector<1x48xf32>
    %124 = tpu.matmul %119, %83, %cst_84 {dimension_numbers = #tpu.dot_dimension_numbers<[1], [0], [0], [1], [0, 0, 1, 1], [], []>} : vector<1x48xf32>, vector<48x48xf32>, vector<1x48xf32> -> vector<1x48xf32>
    %125 = arith.addf %124, %89 : vector<1x48xf32>
    %126 = vector.extract_strided_slice %63 {offsets = [1, 0], sizes = [1, 48], strides = [1, 1]} : vector<16x48xf32> to vector<1x48xf32>
    %127 = arith.addf %126, %121 : vector<1x48xf32>
    %128 = arith.negf %127 : vector<1x48xf32>
    %129 = math.exp %128 : vector<1x48xf32>
    %cst_85 = arith.constant 1.000000e+00 : f32
    %130 = vector.broadcast %cst_85 : f32 to vector<1x48xf32>
    %131 = arith.addf %130, %129 : vector<1x48xf32>
    %132 = arith.divf %130, %131 : vector<1x48xf32>
    %133 = vector.extract_strided_slice %70 {offsets = [1, 0], sizes = [1, 48], strides = [1, 1]} : vector<16x48xf32> to vector<1x48xf32>
    %134 = arith.addf %133, %123 : vector<1x48xf32>
    %135 = arith.negf %134 : vector<1x48xf32>
    %136 = math.exp %135 : vector<1x48xf32>
    %cst_86 = arith.constant 1.000000e+00 : f32
    %137 = vector.broadcast %cst_86 : f32 to vector<1x48xf32>
    %138 = arith.addf %137, %136 : vector<1x48xf32>
    %139 = arith.divf %137, %138 : vector<1x48xf32>
    %140 = vector.extract_strided_slice %77 {offsets = [1, 0], sizes = [1, 48], strides = [1, 1]} : vector<16x48xf32> to vector<1x48xf32>
    %141 = arith.mulf %132, %125 : vector<1x48xf32>
    %142 = arith.addf %140, %141 : vector<1x48xf32>
    %143 = math.tanh %142 : vector<1x48xf32>
    %cst_87 = arith.constant 1.000000e+00 : f32
    %144 = vector.broadcast %cst_87 : f32 to vector<1x48xf32>
    %145 = arith.subf %144, %139 : vector<1x48xf32>
    %146 = arith.mulf %145, %143 : vector<1x48xf32>
    %147 = arith.mulf %139, %119 : vector<1x48xf32>
    %148 = arith.addf %146, %147 : vector<1x48xf32>
    %cst_88 = arith.constant dense<0.000000e+00> : vector<1x48xf32>
    %149 = tpu.matmul %148, %79, %cst_88 {dimension_numbers = #tpu.dot_dimension_numbers<[1], [0], [0], [1], [0, 0, 1, 1], [], []>} : vector<1x48xf32>, vector<48x48xf32>, vector<1x48xf32> -> vector<1x48xf32>
    %150 = arith.addf %149, %85 : vector<1x48xf32>
    %cst_89 = arith.constant dense<0.000000e+00> : vector<1x48xf32>
    %151 = tpu.matmul %148, %81, %cst_89 {dimension_numbers = #tpu.dot_dimension_numbers<[1], [0], [0], [1], [0, 0, 1, 1], [], []>} : vector<1x48xf32>, vector<48x48xf32>, vector<1x48xf32> -> vector<1x48xf32>
    %152 = arith.addf %151, %87 : vector<1x48xf32>
    %cst_90 = arith.constant dense<0.000000e+00> : vector<1x48xf32>
    %153 = tpu.matmul %148, %83, %cst_90 {dimension_numbers = #tpu.dot_dimension_numbers<[1], [0], [0], [1], [0, 0, 1, 1], [], []>} : vector<1x48xf32>, vector<48x48xf32>, vector<1x48xf32> -> vector<1x48xf32>
    %154 = arith.addf %153, %89 : vector<1x48xf32>
    %155 = vector.extract_strided_slice %63 {offsets = [2, 0], sizes = [1, 48], strides = [1, 1]} : vector<16x48xf32> to vector<1x48xf32>
    %156 = arith.addf %155, %150 : vector<1x48xf32>
    %157 = arith.negf %156 : vector<1x48xf32>
    %158 = math.exp %157 : vector<1x48xf32>
    %cst_91 = arith.constant 1.000000e+00 : f32
    %159 = vector.broadcast %cst_91 : f32 to vector<1x48xf32>
    %160 = arith.addf %159, %158 : vector<1x48xf32>
    %161 = arith.divf %159, %160 : vector<1x48xf32>
    %162 = vector.extract_strided_slice %70 {offsets = [2, 0], sizes = [1, 48], strides = [1, 1]} : vector<16x48xf32> to vector<1x48xf32>
    %163 = arith.addf %162, %152 : vector<1x48xf32>
    %164 = arith.negf %163 : vector<1x48xf32>
    %165 = math.exp %164 : vector<1x48xf32>
    %cst_92 = arith.constant 1.000000e+00 : f32
    %166 = vector.broadcast %cst_92 : f32 to vector<1x48xf32>
    %167 = arith.addf %166, %165 : vector<1x48xf32>
    %168 = arith.divf %166, %167 : vector<1x48xf32>
    %169 = vector.extract_strided_slice %77 {offsets = [2, 0], sizes = [1, 48], strides = [1, 1]} : vector<16x48xf32> to vector<1x48xf32>
    %170 = arith.mulf %161, %154 : vector<1x48xf32>
    %171 = arith.addf %169, %170 : vector<1x48xf32>
    %172 = math.tanh %171 : vector<1x48xf32>
    %cst_93 = arith.constant 1.000000e+00 : f32
    %173 = vector.broadcast %cst_93 : f32 to vector<1x48xf32>
    %174 = arith.subf %173, %168 : vector<1x48xf32>
    %175 = arith.mulf %174, %172 : vector<1x48xf32>
    %176 = arith.mulf %168, %148 : vector<1x48xf32>
    %177 = arith.addf %175, %176 : vector<1x48xf32>
    %cst_94 = arith.constant dense<0.000000e+00> : vector<1x48xf32>
    %178 = tpu.matmul %177, %79, %cst_94 {dimension_numbers = #tpu.dot_dimension_numbers<[1], [0], [0], [1], [0, 0, 1, 1], [], []>} : vector<1x48xf32>, vector<48x48xf32>, vector<1x48xf32> -> vector<1x48xf32>
    %179 = arith.addf %178, %85 : vector<1x48xf32>
    %cst_95 = arith.constant dense<0.000000e+00> : vector<1x48xf32>
    %180 = tpu.matmul %177, %81, %cst_95 {dimension_numbers = #tpu.dot_dimension_numbers<[1], [0], [0], [1], [0, 0, 1, 1], [], []>} : vector<1x48xf32>, vector<48x48xf32>, vector<1x48xf32> -> vector<1x48xf32>
    %181 = arith.addf %180, %87 : vector<1x48xf32>
    %cst_96 = arith.constant dense<0.000000e+00> : vector<1x48xf32>
    %182 = tpu.matmul %177, %83, %cst_96 {dimension_numbers = #tpu.dot_dimension_numbers<[1], [0], [0], [1], [0, 0, 1, 1], [], []>} : vector<1x48xf32>, vector<48x48xf32>, vector<1x48xf32> -> vector<1x48xf32>
    %183 = arith.addf %182, %89 : vector<1x48xf32>
    %184 = vector.extract_strided_slice %63 {offsets = [3, 0], sizes = [1, 48], strides = [1, 1]} : vector<16x48xf32> to vector<1x48xf32>
    %185 = arith.addf %184, %179 : vector<1x48xf32>
    %186 = arith.negf %185 : vector<1x48xf32>
    %187 = math.exp %186 : vector<1x48xf32>
    %cst_97 = arith.constant 1.000000e+00 : f32
    %188 = vector.broadcast %cst_97 : f32 to vector<1x48xf32>
    %189 = arith.addf %188, %187 : vector<1x48xf32>
    %190 = arith.divf %188, %189 : vector<1x48xf32>
    %191 = vector.extract_strided_slice %70 {offsets = [3, 0], sizes = [1, 48], strides = [1, 1]} : vector<16x48xf32> to vector<1x48xf32>
    %192 = arith.addf %191, %181 : vector<1x48xf32>
    %193 = arith.negf %192 : vector<1x48xf32>
    %194 = math.exp %193 : vector<1x48xf32>
    %cst_98 = arith.constant 1.000000e+00 : f32
    %195 = vector.broadcast %cst_98 : f32 to vector<1x48xf32>
    %196 = arith.addf %195, %194 : vector<1x48xf32>
    %197 = arith.divf %195, %196 : vector<1x48xf32>
    %198 = vector.extract_strided_slice %77 {offsets = [3, 0], sizes = [1, 48], strides = [1, 1]} : vector<16x48xf32> to vector<1x48xf32>
    %199 = arith.mulf %190, %183 : vector<1x48xf32>
    %200 = arith.addf %198, %199 : vector<1x48xf32>
    %201 = math.tanh %200 : vector<1x48xf32>
    %cst_99 = arith.constant 1.000000e+00 : f32
    %202 = vector.broadcast %cst_99 : f32 to vector<1x48xf32>
    %203 = arith.subf %202, %197 : vector<1x48xf32>
    %204 = arith.mulf %203, %201 : vector<1x48xf32>
    %205 = arith.mulf %197, %177 : vector<1x48xf32>
    %206 = arith.addf %204, %205 : vector<1x48xf32>
    %cst_100 = arith.constant dense<0.000000e+00> : vector<1x48xf32>
    %207 = tpu.matmul %206, %79, %cst_100 {dimension_numbers = #tpu.dot_dimension_numbers<[1], [0], [0], [1], [0, 0, 1, 1], [], []>} : vector<1x48xf32>, vector<48x48xf32>, vector<1x48xf32> -> vector<1x48xf32>
    %208 = arith.addf %207, %85 : vector<1x48xf32>
    %cst_101 = arith.constant dense<0.000000e+00> : vector<1x48xf32>
    %209 = tpu.matmul %206, %81, %cst_101 {dimension_numbers = #tpu.dot_dimension_numbers<[1], [0], [0], [1], [0, 0, 1, 1], [], []>} : vector<1x48xf32>, vector<48x48xf32>, vector<1x48xf32> -> vector<1x48xf32>
    %210 = arith.addf %209, %87 : vector<1x48xf32>
    %cst_102 = arith.constant dense<0.000000e+00> : vector<1x48xf32>
    %211 = tpu.matmul %206, %83, %cst_102 {dimension_numbers = #tpu.dot_dimension_numbers<[1], [0], [0], [1], [0, 0, 1, 1], [], []>} : vector<1x48xf32>, vector<48x48xf32>, vector<1x48xf32> -> vector<1x48xf32>
    %212 = arith.addf %211, %89 : vector<1x48xf32>
    %213 = vector.extract_strided_slice %63 {offsets = [4, 0], sizes = [1, 48], strides = [1, 1]} : vector<16x48xf32> to vector<1x48xf32>
    %214 = arith.addf %213, %208 : vector<1x48xf32>
    %215 = arith.negf %214 : vector<1x48xf32>
    %216 = math.exp %215 : vector<1x48xf32>
    %cst_103 = arith.constant 1.000000e+00 : f32
    %217 = vector.broadcast %cst_103 : f32 to vector<1x48xf32>
    %218 = arith.addf %217, %216 : vector<1x48xf32>
    %219 = arith.divf %217, %218 : vector<1x48xf32>
    %220 = vector.extract_strided_slice %70 {offsets = [4, 0], sizes = [1, 48], strides = [1, 1]} : vector<16x48xf32> to vector<1x48xf32>
    %221 = arith.addf %220, %210 : vector<1x48xf32>
    %222 = arith.negf %221 : vector<1x48xf32>
    %223 = math.exp %222 : vector<1x48xf32>
    %cst_104 = arith.constant 1.000000e+00 : f32
    %224 = vector.broadcast %cst_104 : f32 to vector<1x48xf32>
    %225 = arith.addf %224, %223 : vector<1x48xf32>
    %226 = arith.divf %224, %225 : vector<1x48xf32>
    %227 = vector.extract_strided_slice %77 {offsets = [4, 0], sizes = [1, 48], strides = [1, 1]} : vector<16x48xf32> to vector<1x48xf32>
    %228 = arith.mulf %219, %212 : vector<1x48xf32>
    %229 = arith.addf %227, %228 : vector<1x48xf32>
    %230 = math.tanh %229 : vector<1x48xf32>
    %cst_105 = arith.constant 1.000000e+00 : f32
    %231 = vector.broadcast %cst_105 : f32 to vector<1x48xf32>
    %232 = arith.subf %231, %226 : vector<1x48xf32>
    %233 = arith.mulf %232, %230 : vector<1x48xf32>
    %234 = arith.mulf %226, %206 : vector<1x48xf32>
    %235 = arith.addf %233, %234 : vector<1x48xf32>
    %cst_106 = arith.constant dense<0.000000e+00> : vector<1x48xf32>
    %236 = tpu.matmul %235, %79, %cst_106 {dimension_numbers = #tpu.dot_dimension_numbers<[1], [0], [0], [1], [0, 0, 1, 1], [], []>} : vector<1x48xf32>, vector<48x48xf32>, vector<1x48xf32> -> vector<1x48xf32>
    %237 = arith.addf %236, %85 : vector<1x48xf32>
    %cst_107 = arith.constant dense<0.000000e+00> : vector<1x48xf32>
    %238 = tpu.matmul %235, %81, %cst_107 {dimension_numbers = #tpu.dot_dimension_numbers<[1], [0], [0], [1], [0, 0, 1, 1], [], []>} : vector<1x48xf32>, vector<48x48xf32>, vector<1x48xf32> -> vector<1x48xf32>
    %239 = arith.addf %238, %87 : vector<1x48xf32>
    %cst_108 = arith.constant dense<0.000000e+00> : vector<1x48xf32>
    %240 = tpu.matmul %235, %83, %cst_108 {dimension_numbers = #tpu.dot_dimension_numbers<[1], [0], [0], [1], [0, 0, 1, 1], [], []>} : vector<1x48xf32>, vector<48x48xf32>, vector<1x48xf32> -> vector<1x48xf32>
    %241 = arith.addf %240, %89 : vector<1x48xf32>
    %242 = vector.extract_strided_slice %63 {offsets = [5, 0], sizes = [1, 48], strides = [1, 1]} : vector<16x48xf32> to vector<1x48xf32>
    %243 = arith.addf %242, %237 : vector<1x48xf32>
    %244 = arith.negf %243 : vector<1x48xf32>
    %245 = math.exp %244 : vector<1x48xf32>
    %cst_109 = arith.constant 1.000000e+00 : f32
    %246 = vector.broadcast %cst_109 : f32 to vector<1x48xf32>
    %247 = arith.addf %246, %245 : vector<1x48xf32>
    %248 = arith.divf %246, %247 : vector<1x48xf32>
    %249 = vector.extract_strided_slice %70 {offsets = [5, 0], sizes = [1, 48], strides = [1, 1]} : vector<16x48xf32> to vector<1x48xf32>
    %250 = arith.addf %249, %239 : vector<1x48xf32>
    %251 = arith.negf %250 : vector<1x48xf32>
    %252 = math.exp %251 : vector<1x48xf32>
    %cst_110 = arith.constant 1.000000e+00 : f32
    %253 = vector.broadcast %cst_110 : f32 to vector<1x48xf32>
    %254 = arith.addf %253, %252 : vector<1x48xf32>
    %255 = arith.divf %253, %254 : vector<1x48xf32>
    %256 = vector.extract_strided_slice %77 {offsets = [5, 0], sizes = [1, 48], strides = [1, 1]} : vector<16x48xf32> to vector<1x48xf32>
    %257 = arith.mulf %248, %241 : vector<1x48xf32>
    %258 = arith.addf %256, %257 : vector<1x48xf32>
    %259 = math.tanh %258 : vector<1x48xf32>
    %cst_111 = arith.constant 1.000000e+00 : f32
    %260 = vector.broadcast %cst_111 : f32 to vector<1x48xf32>
    %261 = arith.subf %260, %255 : vector<1x48xf32>
    %262 = arith.mulf %261, %259 : vector<1x48xf32>
    %263 = arith.mulf %255, %235 : vector<1x48xf32>
    %264 = arith.addf %262, %263 : vector<1x48xf32>
    %cst_112 = arith.constant dense<0.000000e+00> : vector<1x48xf32>
    %265 = tpu.matmul %264, %79, %cst_112 {dimension_numbers = #tpu.dot_dimension_numbers<[1], [0], [0], [1], [0, 0, 1, 1], [], []>} : vector<1x48xf32>, vector<48x48xf32>, vector<1x48xf32> -> vector<1x48xf32>
    %266 = arith.addf %265, %85 : vector<1x48xf32>
    %cst_113 = arith.constant dense<0.000000e+00> : vector<1x48xf32>
    %267 = tpu.matmul %264, %81, %cst_113 {dimension_numbers = #tpu.dot_dimension_numbers<[1], [0], [0], [1], [0, 0, 1, 1], [], []>} : vector<1x48xf32>, vector<48x48xf32>, vector<1x48xf32> -> vector<1x48xf32>
    %268 = arith.addf %267, %87 : vector<1x48xf32>
    %cst_114 = arith.constant dense<0.000000e+00> : vector<1x48xf32>
    %269 = tpu.matmul %264, %83, %cst_114 {dimension_numbers = #tpu.dot_dimension_numbers<[1], [0], [0], [1], [0, 0, 1, 1], [], []>} : vector<1x48xf32>, vector<48x48xf32>, vector<1x48xf32> -> vector<1x48xf32>
    %270 = arith.addf %269, %89 : vector<1x48xf32>
    %271 = vector.extract_strided_slice %63 {offsets = [6, 0], sizes = [1, 48], strides = [1, 1]} : vector<16x48xf32> to vector<1x48xf32>
    %272 = arith.addf %271, %266 : vector<1x48xf32>
    %273 = arith.negf %272 : vector<1x48xf32>
    %274 = math.exp %273 : vector<1x48xf32>
    %cst_115 = arith.constant 1.000000e+00 : f32
    %275 = vector.broadcast %cst_115 : f32 to vector<1x48xf32>
    %276 = arith.addf %275, %274 : vector<1x48xf32>
    %277 = arith.divf %275, %276 : vector<1x48xf32>
    %278 = vector.extract_strided_slice %70 {offsets = [6, 0], sizes = [1, 48], strides = [1, 1]} : vector<16x48xf32> to vector<1x48xf32>
    %279 = arith.addf %278, %268 : vector<1x48xf32>
    %280 = arith.negf %279 : vector<1x48xf32>
    %281 = math.exp %280 : vector<1x48xf32>
    %cst_116 = arith.constant 1.000000e+00 : f32
    %282 = vector.broadcast %cst_116 : f32 to vector<1x48xf32>
    %283 = arith.addf %282, %281 : vector<1x48xf32>
    %284 = arith.divf %282, %283 : vector<1x48xf32>
    %285 = vector.extract_strided_slice %77 {offsets = [6, 0], sizes = [1, 48], strides = [1, 1]} : vector<16x48xf32> to vector<1x48xf32>
    %286 = arith.mulf %277, %270 : vector<1x48xf32>
    %287 = arith.addf %285, %286 : vector<1x48xf32>
    %288 = math.tanh %287 : vector<1x48xf32>
    %cst_117 = arith.constant 1.000000e+00 : f32
    %289 = vector.broadcast %cst_117 : f32 to vector<1x48xf32>
    %290 = arith.subf %289, %284 : vector<1x48xf32>
    %291 = arith.mulf %290, %288 : vector<1x48xf32>
    %292 = arith.mulf %284, %264 : vector<1x48xf32>
    %293 = arith.addf %291, %292 : vector<1x48xf32>
    %cst_118 = arith.constant dense<0.000000e+00> : vector<1x48xf32>
    %294 = tpu.matmul %293, %79, %cst_118 {dimension_numbers = #tpu.dot_dimension_numbers<[1], [0], [0], [1], [0, 0, 1, 1], [], []>} : vector<1x48xf32>, vector<48x48xf32>, vector<1x48xf32> -> vector<1x48xf32>
    %295 = arith.addf %294, %85 : vector<1x48xf32>
    %cst_119 = arith.constant dense<0.000000e+00> : vector<1x48xf32>
    %296 = tpu.matmul %293, %81, %cst_119 {dimension_numbers = #tpu.dot_dimension_numbers<[1], [0], [0], [1], [0, 0, 1, 1], [], []>} : vector<1x48xf32>, vector<48x48xf32>, vector<1x48xf32> -> vector<1x48xf32>
    %297 = arith.addf %296, %87 : vector<1x48xf32>
    %cst_120 = arith.constant dense<0.000000e+00> : vector<1x48xf32>
    %298 = tpu.matmul %293, %83, %cst_120 {dimension_numbers = #tpu.dot_dimension_numbers<[1], [0], [0], [1], [0, 0, 1, 1], [], []>} : vector<1x48xf32>, vector<48x48xf32>, vector<1x48xf32> -> vector<1x48xf32>
    %299 = arith.addf %298, %89 : vector<1x48xf32>
    %300 = vector.extract_strided_slice %63 {offsets = [7, 0], sizes = [1, 48], strides = [1, 1]} : vector<16x48xf32> to vector<1x48xf32>
    %301 = arith.addf %300, %295 : vector<1x48xf32>
    %302 = arith.negf %301 : vector<1x48xf32>
    %303 = math.exp %302 : vector<1x48xf32>
    %cst_121 = arith.constant 1.000000e+00 : f32
    %304 = vector.broadcast %cst_121 : f32 to vector<1x48xf32>
    %305 = arith.addf %304, %303 : vector<1x48xf32>
    %306 = arith.divf %304, %305 : vector<1x48xf32>
    %307 = vector.extract_strided_slice %70 {offsets = [7, 0], sizes = [1, 48], strides = [1, 1]} : vector<16x48xf32> to vector<1x48xf32>
    %308 = arith.addf %307, %297 : vector<1x48xf32>
    %309 = arith.negf %308 : vector<1x48xf32>
    %310 = math.exp %309 : vector<1x48xf32>
    %cst_122 = arith.constant 1.000000e+00 : f32
    %311 = vector.broadcast %cst_122 : f32 to vector<1x48xf32>
    %312 = arith.addf %311, %310 : vector<1x48xf32>
    %313 = arith.divf %311, %312 : vector<1x48xf32>
    %314 = vector.extract_strided_slice %77 {offsets = [7, 0], sizes = [1, 48], strides = [1, 1]} : vector<16x48xf32> to vector<1x48xf32>
    %315 = arith.mulf %306, %299 : vector<1x48xf32>
    %316 = arith.addf %314, %315 : vector<1x48xf32>
    %317 = math.tanh %316 : vector<1x48xf32>
    %cst_123 = arith.constant 1.000000e+00 : f32
    %318 = vector.broadcast %cst_123 : f32 to vector<1x48xf32>
    %319 = arith.subf %318, %313 : vector<1x48xf32>
    %320 = arith.mulf %319, %317 : vector<1x48xf32>
    %321 = arith.mulf %313, %293 : vector<1x48xf32>
    %322 = arith.addf %320, %321 : vector<1x48xf32>
    %cst_124 = arith.constant dense<0.000000e+00> : vector<1x48xf32>
    %323 = tpu.matmul %322, %79, %cst_124 {dimension_numbers = #tpu.dot_dimension_numbers<[1], [0], [0], [1], [0, 0, 1, 1], [], []>} : vector<1x48xf32>, vector<48x48xf32>, vector<1x48xf32> -> vector<1x48xf32>
    %324 = arith.addf %323, %85 : vector<1x48xf32>
    %cst_125 = arith.constant dense<0.000000e+00> : vector<1x48xf32>
    %325 = tpu.matmul %322, %81, %cst_125 {dimension_numbers = #tpu.dot_dimension_numbers<[1], [0], [0], [1], [0, 0, 1, 1], [], []>} : vector<1x48xf32>, vector<48x48xf32>, vector<1x48xf32> -> vector<1x48xf32>
    %326 = arith.addf %325, %87 : vector<1x48xf32>
    %cst_126 = arith.constant dense<0.000000e+00> : vector<1x48xf32>
    %327 = tpu.matmul %322, %83, %cst_126 {dimension_numbers = #tpu.dot_dimension_numbers<[1], [0], [0], [1], [0, 0, 1, 1], [], []>} : vector<1x48xf32>, vector<48x48xf32>, vector<1x48xf32> -> vector<1x48xf32>
    %328 = arith.addf %327, %89 : vector<1x48xf32>
    %329 = vector.extract_strided_slice %63 {offsets = [8, 0], sizes = [1, 48], strides = [1, 1]} : vector<16x48xf32> to vector<1x48xf32>
    %330 = arith.addf %329, %324 : vector<1x48xf32>
    %331 = arith.negf %330 : vector<1x48xf32>
    %332 = math.exp %331 : vector<1x48xf32>
    %cst_127 = arith.constant 1.000000e+00 : f32
    %333 = vector.broadcast %cst_127 : f32 to vector<1x48xf32>
    %334 = arith.addf %333, %332 : vector<1x48xf32>
    %335 = arith.divf %333, %334 : vector<1x48xf32>
    %336 = vector.extract_strided_slice %70 {offsets = [8, 0], sizes = [1, 48], strides = [1, 1]} : vector<16x48xf32> to vector<1x48xf32>
    %337 = arith.addf %336, %326 : vector<1x48xf32>
    %338 = arith.negf %337 : vector<1x48xf32>
    %339 = math.exp %338 : vector<1x48xf32>
    %cst_128 = arith.constant 1.000000e+00 : f32
    %340 = vector.broadcast %cst_128 : f32 to vector<1x48xf32>
    %341 = arith.addf %340, %339 : vector<1x48xf32>
    %342 = arith.divf %340, %341 : vector<1x48xf32>
    %343 = vector.extract_strided_slice %77 {offsets = [8, 0], sizes = [1, 48], strides = [1, 1]} : vector<16x48xf32> to vector<1x48xf32>
    %344 = arith.mulf %335, %328 : vector<1x48xf32>
    %345 = arith.addf %343, %344 : vector<1x48xf32>
    %346 = math.tanh %345 : vector<1x48xf32>
    %cst_129 = arith.constant 1.000000e+00 : f32
    %347 = vector.broadcast %cst_129 : f32 to vector<1x48xf32>
    %348 = arith.subf %347, %342 : vector<1x48xf32>
    %349 = arith.mulf %348, %346 : vector<1x48xf32>
    %350 = arith.mulf %342, %322 : vector<1x48xf32>
    %351 = arith.addf %349, %350 : vector<1x48xf32>
    %cst_130 = arith.constant dense<0.000000e+00> : vector<1x48xf32>
    %352 = tpu.matmul %351, %79, %cst_130 {dimension_numbers = #tpu.dot_dimension_numbers<[1], [0], [0], [1], [0, 0, 1, 1], [], []>} : vector<1x48xf32>, vector<48x48xf32>, vector<1x48xf32> -> vector<1x48xf32>
    %353 = arith.addf %352, %85 : vector<1x48xf32>
    %cst_131 = arith.constant dense<0.000000e+00> : vector<1x48xf32>
    %354 = tpu.matmul %351, %81, %cst_131 {dimension_numbers = #tpu.dot_dimension_numbers<[1], [0], [0], [1], [0, 0, 1, 1], [], []>} : vector<1x48xf32>, vector<48x48xf32>, vector<1x48xf32> -> vector<1x48xf32>
    %355 = arith.addf %354, %87 : vector<1x48xf32>
    %cst_132 = arith.constant dense<0.000000e+00> : vector<1x48xf32>
    %356 = tpu.matmul %351, %83, %cst_132 {dimension_numbers = #tpu.dot_dimension_numbers<[1], [0], [0], [1], [0, 0, 1, 1], [], []>} : vector<1x48xf32>, vector<48x48xf32>, vector<1x48xf32> -> vector<1x48xf32>
    %357 = arith.addf %356, %89 : vector<1x48xf32>
    %358 = vector.extract_strided_slice %63 {offsets = [9, 0], sizes = [1, 48], strides = [1, 1]} : vector<16x48xf32> to vector<1x48xf32>
    %359 = arith.addf %358, %353 : vector<1x48xf32>
    %360 = arith.negf %359 : vector<1x48xf32>
    %361 = math.exp %360 : vector<1x48xf32>
    %cst_133 = arith.constant 1.000000e+00 : f32
    %362 = vector.broadcast %cst_133 : f32 to vector<1x48xf32>
    %363 = arith.addf %362, %361 : vector<1x48xf32>
    %364 = arith.divf %362, %363 : vector<1x48xf32>
    %365 = vector.extract_strided_slice %70 {offsets = [9, 0], sizes = [1, 48], strides = [1, 1]} : vector<16x48xf32> to vector<1x48xf32>
    %366 = arith.addf %365, %355 : vector<1x48xf32>
    %367 = arith.negf %366 : vector<1x48xf32>
    %368 = math.exp %367 : vector<1x48xf32>
    %cst_134 = arith.constant 1.000000e+00 : f32
    %369 = vector.broadcast %cst_134 : f32 to vector<1x48xf32>
    %370 = arith.addf %369, %368 : vector<1x48xf32>
    %371 = arith.divf %369, %370 : vector<1x48xf32>
    %372 = vector.extract_strided_slice %77 {offsets = [9, 0], sizes = [1, 48], strides = [1, 1]} : vector<16x48xf32> to vector<1x48xf32>
    %373 = arith.mulf %364, %357 : vector<1x48xf32>
    %374 = arith.addf %372, %373 : vector<1x48xf32>
    %375 = math.tanh %374 : vector<1x48xf32>
    %cst_135 = arith.constant 1.000000e+00 : f32
    %376 = vector.broadcast %cst_135 : f32 to vector<1x48xf32>
    %377 = arith.subf %376, %371 : vector<1x48xf32>
    %378 = arith.mulf %377, %375 : vector<1x48xf32>
    %379 = arith.mulf %371, %351 : vector<1x48xf32>
    %380 = arith.addf %378, %379 : vector<1x48xf32>
    %cst_136 = arith.constant dense<0.000000e+00> : vector<1x48xf32>
    %381 = tpu.matmul %380, %79, %cst_136 {dimension_numbers = #tpu.dot_dimension_numbers<[1], [0], [0], [1], [0, 0, 1, 1], [], []>} : vector<1x48xf32>, vector<48x48xf32>, vector<1x48xf32> -> vector<1x48xf32>
    %382 = arith.addf %381, %85 : vector<1x48xf32>
    %cst_137 = arith.constant dense<0.000000e+00> : vector<1x48xf32>
    %383 = tpu.matmul %380, %81, %cst_137 {dimension_numbers = #tpu.dot_dimension_numbers<[1], [0], [0], [1], [0, 0, 1, 1], [], []>} : vector<1x48xf32>, vector<48x48xf32>, vector<1x48xf32> -> vector<1x48xf32>
    %384 = arith.addf %383, %87 : vector<1x48xf32>
    %cst_138 = arith.constant dense<0.000000e+00> : vector<1x48xf32>
    %385 = tpu.matmul %380, %83, %cst_138 {dimension_numbers = #tpu.dot_dimension_numbers<[1], [0], [0], [1], [0, 0, 1, 1], [], []>} : vector<1x48xf32>, vector<48x48xf32>, vector<1x48xf32> -> vector<1x48xf32>
    %386 = arith.addf %385, %89 : vector<1x48xf32>
    %387 = vector.extract_strided_slice %63 {offsets = [10, 0], sizes = [1, 48], strides = [1, 1]} : vector<16x48xf32> to vector<1x48xf32>
    %388 = arith.addf %387, %382 : vector<1x48xf32>
    %389 = arith.negf %388 : vector<1x48xf32>
    %390 = math.exp %389 : vector<1x48xf32>
    %cst_139 = arith.constant 1.000000e+00 : f32
    %391 = vector.broadcast %cst_139 : f32 to vector<1x48xf32>
    %392 = arith.addf %391, %390 : vector<1x48xf32>
    %393 = arith.divf %391, %392 : vector<1x48xf32>
    %394 = vector.extract_strided_slice %70 {offsets = [10, 0], sizes = [1, 48], strides = [1, 1]} : vector<16x48xf32> to vector<1x48xf32>
    %395 = arith.addf %394, %384 : vector<1x48xf32>
    %396 = arith.negf %395 : vector<1x48xf32>
    %397 = math.exp %396 : vector<1x48xf32>
    %cst_140 = arith.constant 1.000000e+00 : f32
    %398 = vector.broadcast %cst_140 : f32 to vector<1x48xf32>
    %399 = arith.addf %398, %397 : vector<1x48xf32>
    %400 = arith.divf %398, %399 : vector<1x48xf32>
    %401 = vector.extract_strided_slice %77 {offsets = [10, 0], sizes = [1, 48], strides = [1, 1]} : vector<16x48xf32> to vector<1x48xf32>
    %402 = arith.mulf %393, %386 : vector<1x48xf32>
    %403 = arith.addf %401, %402 : vector<1x48xf32>
    %404 = math.tanh %403 : vector<1x48xf32>
    %cst_141 = arith.constant 1.000000e+00 : f32
    %405 = vector.broadcast %cst_141 : f32 to vector<1x48xf32>
    %406 = arith.subf %405, %400 : vector<1x48xf32>
    %407 = arith.mulf %406, %404 : vector<1x48xf32>
    %408 = arith.mulf %400, %380 : vector<1x48xf32>
    %409 = arith.addf %407, %408 : vector<1x48xf32>
    %cst_142 = arith.constant dense<0.000000e+00> : vector<1x48xf32>
    %410 = tpu.matmul %409, %79, %cst_142 {dimension_numbers = #tpu.dot_dimension_numbers<[1], [0], [0], [1], [0, 0, 1, 1], [], []>} : vector<1x48xf32>, vector<48x48xf32>, vector<1x48xf32> -> vector<1x48xf32>
    %411 = arith.addf %410, %85 : vector<1x48xf32>
    %cst_143 = arith.constant dense<0.000000e+00> : vector<1x48xf32>
    %412 = tpu.matmul %409, %81, %cst_143 {dimension_numbers = #tpu.dot_dimension_numbers<[1], [0], [0], [1], [0, 0, 1, 1], [], []>} : vector<1x48xf32>, vector<48x48xf32>, vector<1x48xf32> -> vector<1x48xf32>
    %413 = arith.addf %412, %87 : vector<1x48xf32>
    %cst_144 = arith.constant dense<0.000000e+00> : vector<1x48xf32>
    %414 = tpu.matmul %409, %83, %cst_144 {dimension_numbers = #tpu.dot_dimension_numbers<[1], [0], [0], [1], [0, 0, 1, 1], [], []>} : vector<1x48xf32>, vector<48x48xf32>, vector<1x48xf32> -> vector<1x48xf32>
    %415 = arith.addf %414, %89 : vector<1x48xf32>
    %416 = vector.extract_strided_slice %63 {offsets = [11, 0], sizes = [1, 48], strides = [1, 1]} : vector<16x48xf32> to vector<1x48xf32>
    %417 = arith.addf %416, %411 : vector<1x48xf32>
    %418 = arith.negf %417 : vector<1x48xf32>
    %419 = math.exp %418 : vector<1x48xf32>
    %cst_145 = arith.constant 1.000000e+00 : f32
    %420 = vector.broadcast %cst_145 : f32 to vector<1x48xf32>
    %421 = arith.addf %420, %419 : vector<1x48xf32>
    %422 = arith.divf %420, %421 : vector<1x48xf32>
    %423 = vector.extract_strided_slice %70 {offsets = [11, 0], sizes = [1, 48], strides = [1, 1]} : vector<16x48xf32> to vector<1x48xf32>
    %424 = arith.addf %423, %413 : vector<1x48xf32>
    %425 = arith.negf %424 : vector<1x48xf32>
    %426 = math.exp %425 : vector<1x48xf32>
    %cst_146 = arith.constant 1.000000e+00 : f32
    %427 = vector.broadcast %cst_146 : f32 to vector<1x48xf32>
    %428 = arith.addf %427, %426 : vector<1x48xf32>
    %429 = arith.divf %427, %428 : vector<1x48xf32>
    %430 = vector.extract_strided_slice %77 {offsets = [11, 0], sizes = [1, 48], strides = [1, 1]} : vector<16x48xf32> to vector<1x48xf32>
    %431 = arith.mulf %422, %415 : vector<1x48xf32>
    %432 = arith.addf %430, %431 : vector<1x48xf32>
    %433 = math.tanh %432 : vector<1x48xf32>
    %cst_147 = arith.constant 1.000000e+00 : f32
    %434 = vector.broadcast %cst_147 : f32 to vector<1x48xf32>
    %435 = arith.subf %434, %429 : vector<1x48xf32>
    %436 = arith.mulf %435, %433 : vector<1x48xf32>
    %437 = arith.mulf %429, %409 : vector<1x48xf32>
    %438 = arith.addf %436, %437 : vector<1x48xf32>
    %cst_148 = arith.constant dense<0.000000e+00> : vector<1x48xf32>
    %439 = tpu.matmul %438, %79, %cst_148 {dimension_numbers = #tpu.dot_dimension_numbers<[1], [0], [0], [1], [0, 0, 1, 1], [], []>} : vector<1x48xf32>, vector<48x48xf32>, vector<1x48xf32> -> vector<1x48xf32>
    %440 = arith.addf %439, %85 : vector<1x48xf32>
    %cst_149 = arith.constant dense<0.000000e+00> : vector<1x48xf32>
    %441 = tpu.matmul %438, %81, %cst_149 {dimension_numbers = #tpu.dot_dimension_numbers<[1], [0], [0], [1], [0, 0, 1, 1], [], []>} : vector<1x48xf32>, vector<48x48xf32>, vector<1x48xf32> -> vector<1x48xf32>
    %442 = arith.addf %441, %87 : vector<1x48xf32>
    %cst_150 = arith.constant dense<0.000000e+00> : vector<1x48xf32>
    %443 = tpu.matmul %438, %83, %cst_150 {dimension_numbers = #tpu.dot_dimension_numbers<[1], [0], [0], [1], [0, 0, 1, 1], [], []>} : vector<1x48xf32>, vector<48x48xf32>, vector<1x48xf32> -> vector<1x48xf32>
    %444 = arith.addf %443, %89 : vector<1x48xf32>
    %445 = vector.extract_strided_slice %63 {offsets = [12, 0], sizes = [1, 48], strides = [1, 1]} : vector<16x48xf32> to vector<1x48xf32>
    %446 = arith.addf %445, %440 : vector<1x48xf32>
    %447 = arith.negf %446 : vector<1x48xf32>
    %448 = math.exp %447 : vector<1x48xf32>
    %cst_151 = arith.constant 1.000000e+00 : f32
    %449 = vector.broadcast %cst_151 : f32 to vector<1x48xf32>
    %450 = arith.addf %449, %448 : vector<1x48xf32>
    %451 = arith.divf %449, %450 : vector<1x48xf32>
    %452 = vector.extract_strided_slice %70 {offsets = [12, 0], sizes = [1, 48], strides = [1, 1]} : vector<16x48xf32> to vector<1x48xf32>
    %453 = arith.addf %452, %442 : vector<1x48xf32>
    %454 = arith.negf %453 : vector<1x48xf32>
    %455 = math.exp %454 : vector<1x48xf32>
    %cst_152 = arith.constant 1.000000e+00 : f32
    %456 = vector.broadcast %cst_152 : f32 to vector<1x48xf32>
    %457 = arith.addf %456, %455 : vector<1x48xf32>
    %458 = arith.divf %456, %457 : vector<1x48xf32>
    %459 = vector.extract_strided_slice %77 {offsets = [12, 0], sizes = [1, 48], strides = [1, 1]} : vector<16x48xf32> to vector<1x48xf32>
    %460 = arith.mulf %451, %444 : vector<1x48xf32>
    %461 = arith.addf %459, %460 : vector<1x48xf32>
    %462 = math.tanh %461 : vector<1x48xf32>
    %cst_153 = arith.constant 1.000000e+00 : f32
    %463 = vector.broadcast %cst_153 : f32 to vector<1x48xf32>
    %464 = arith.subf %463, %458 : vector<1x48xf32>
    %465 = arith.mulf %464, %462 : vector<1x48xf32>
    %466 = arith.mulf %458, %438 : vector<1x48xf32>
    %467 = arith.addf %465, %466 : vector<1x48xf32>
    %cst_154 = arith.constant dense<0.000000e+00> : vector<1x48xf32>
    %468 = tpu.matmul %467, %79, %cst_154 {dimension_numbers = #tpu.dot_dimension_numbers<[1], [0], [0], [1], [0, 0, 1, 1], [], []>} : vector<1x48xf32>, vector<48x48xf32>, vector<1x48xf32> -> vector<1x48xf32>
    %469 = arith.addf %468, %85 : vector<1x48xf32>
    %cst_155 = arith.constant dense<0.000000e+00> : vector<1x48xf32>
    %470 = tpu.matmul %467, %81, %cst_155 {dimension_numbers = #tpu.dot_dimension_numbers<[1], [0], [0], [1], [0, 0, 1, 1], [], []>} : vector<1x48xf32>, vector<48x48xf32>, vector<1x48xf32> -> vector<1x48xf32>
    %471 = arith.addf %470, %87 : vector<1x48xf32>
    %cst_156 = arith.constant dense<0.000000e+00> : vector<1x48xf32>
    %472 = tpu.matmul %467, %83, %cst_156 {dimension_numbers = #tpu.dot_dimension_numbers<[1], [0], [0], [1], [0, 0, 1, 1], [], []>} : vector<1x48xf32>, vector<48x48xf32>, vector<1x48xf32> -> vector<1x48xf32>
    %473 = arith.addf %472, %89 : vector<1x48xf32>
    %474 = vector.extract_strided_slice %63 {offsets = [13, 0], sizes = [1, 48], strides = [1, 1]} : vector<16x48xf32> to vector<1x48xf32>
    %475 = arith.addf %474, %469 : vector<1x48xf32>
    %476 = arith.negf %475 : vector<1x48xf32>
    %477 = math.exp %476 : vector<1x48xf32>
    %cst_157 = arith.constant 1.000000e+00 : f32
    %478 = vector.broadcast %cst_157 : f32 to vector<1x48xf32>
    %479 = arith.addf %478, %477 : vector<1x48xf32>
    %480 = arith.divf %478, %479 : vector<1x48xf32>
    %481 = vector.extract_strided_slice %70 {offsets = [13, 0], sizes = [1, 48], strides = [1, 1]} : vector<16x48xf32> to vector<1x48xf32>
    %482 = arith.addf %481, %471 : vector<1x48xf32>
    %483 = arith.negf %482 : vector<1x48xf32>
    %484 = math.exp %483 : vector<1x48xf32>
    %cst_158 = arith.constant 1.000000e+00 : f32
    %485 = vector.broadcast %cst_158 : f32 to vector<1x48xf32>
    %486 = arith.addf %485, %484 : vector<1x48xf32>
    %487 = arith.divf %485, %486 : vector<1x48xf32>
    %488 = vector.extract_strided_slice %77 {offsets = [13, 0], sizes = [1, 48], strides = [1, 1]} : vector<16x48xf32> to vector<1x48xf32>
    %489 = arith.mulf %480, %473 : vector<1x48xf32>
    %490 = arith.addf %488, %489 : vector<1x48xf32>
    %491 = math.tanh %490 : vector<1x48xf32>
    %cst_159 = arith.constant 1.000000e+00 : f32
    %492 = vector.broadcast %cst_159 : f32 to vector<1x48xf32>
    %493 = arith.subf %492, %487 : vector<1x48xf32>
    %494 = arith.mulf %493, %491 : vector<1x48xf32>
    %495 = arith.mulf %487, %467 : vector<1x48xf32>
    %496 = arith.addf %494, %495 : vector<1x48xf32>
    %cst_160 = arith.constant dense<0.000000e+00> : vector<1x48xf32>
    %497 = tpu.matmul %496, %79, %cst_160 {dimension_numbers = #tpu.dot_dimension_numbers<[1], [0], [0], [1], [0, 0, 1, 1], [], []>} : vector<1x48xf32>, vector<48x48xf32>, vector<1x48xf32> -> vector<1x48xf32>
    %498 = arith.addf %497, %85 : vector<1x48xf32>
    %cst_161 = arith.constant dense<0.000000e+00> : vector<1x48xf32>
    %499 = tpu.matmul %496, %81, %cst_161 {dimension_numbers = #tpu.dot_dimension_numbers<[1], [0], [0], [1], [0, 0, 1, 1], [], []>} : vector<1x48xf32>, vector<48x48xf32>, vector<1x48xf32> -> vector<1x48xf32>
    %500 = arith.addf %499, %87 : vector<1x48xf32>
    %cst_162 = arith.constant dense<0.000000e+00> : vector<1x48xf32>
    %501 = tpu.matmul %496, %83, %cst_162 {dimension_numbers = #tpu.dot_dimension_numbers<[1], [0], [0], [1], [0, 0, 1, 1], [], []>} : vector<1x48xf32>, vector<48x48xf32>, vector<1x48xf32> -> vector<1x48xf32>
    %502 = arith.addf %501, %89 : vector<1x48xf32>
    %503 = vector.extract_strided_slice %63 {offsets = [14, 0], sizes = [1, 48], strides = [1, 1]} : vector<16x48xf32> to vector<1x48xf32>
    %504 = arith.addf %503, %498 : vector<1x48xf32>
    %505 = arith.negf %504 : vector<1x48xf32>
    %506 = math.exp %505 : vector<1x48xf32>
    %cst_163 = arith.constant 1.000000e+00 : f32
    %507 = vector.broadcast %cst_163 : f32 to vector<1x48xf32>
    %508 = arith.addf %507, %506 : vector<1x48xf32>
    %509 = arith.divf %507, %508 : vector<1x48xf32>
    %510 = vector.extract_strided_slice %70 {offsets = [14, 0], sizes = [1, 48], strides = [1, 1]} : vector<16x48xf32> to vector<1x48xf32>
    %511 = arith.addf %510, %500 : vector<1x48xf32>
    %512 = arith.negf %511 : vector<1x48xf32>
    %513 = math.exp %512 : vector<1x48xf32>
    %cst_164 = arith.constant 1.000000e+00 : f32
    %514 = vector.broadcast %cst_164 : f32 to vector<1x48xf32>
    %515 = arith.addf %514, %513 : vector<1x48xf32>
    %516 = arith.divf %514, %515 : vector<1x48xf32>
    %517 = vector.extract_strided_slice %77 {offsets = [14, 0], sizes = [1, 48], strides = [1, 1]} : vector<16x48xf32> to vector<1x48xf32>
    %518 = arith.mulf %509, %502 : vector<1x48xf32>
    %519 = arith.addf %517, %518 : vector<1x48xf32>
    %520 = math.tanh %519 : vector<1x48xf32>
    %cst_165 = arith.constant 1.000000e+00 : f32
    %521 = vector.broadcast %cst_165 : f32 to vector<1x48xf32>
    %522 = arith.subf %521, %516 : vector<1x48xf32>
    %523 = arith.mulf %522, %520 : vector<1x48xf32>
    %524 = arith.mulf %516, %496 : vector<1x48xf32>
    %525 = arith.addf %523, %524 : vector<1x48xf32>
    %cst_166 = arith.constant dense<0.000000e+00> : vector<1x48xf32>
    %526 = tpu.matmul %525, %79, %cst_166 {dimension_numbers = #tpu.dot_dimension_numbers<[1], [0], [0], [1], [0, 0, 1, 1], [], []>} : vector<1x48xf32>, vector<48x48xf32>, vector<1x48xf32> -> vector<1x48xf32>
    %527 = arith.addf %526, %85 : vector<1x48xf32>
    %cst_167 = arith.constant dense<0.000000e+00> : vector<1x48xf32>
    %528 = tpu.matmul %525, %81, %cst_167 {dimension_numbers = #tpu.dot_dimension_numbers<[1], [0], [0], [1], [0, 0, 1, 1], [], []>} : vector<1x48xf32>, vector<48x48xf32>, vector<1x48xf32> -> vector<1x48xf32>
    %529 = arith.addf %528, %87 : vector<1x48xf32>
    %cst_168 = arith.constant dense<0.000000e+00> : vector<1x48xf32>
    %530 = tpu.matmul %525, %83, %cst_168 {dimension_numbers = #tpu.dot_dimension_numbers<[1], [0], [0], [1], [0, 0, 1, 1], [], []>} : vector<1x48xf32>, vector<48x48xf32>, vector<1x48xf32> -> vector<1x48xf32>
    %531 = arith.addf %530, %89 : vector<1x48xf32>
    %532 = vector.extract_strided_slice %63 {offsets = [15, 0], sizes = [1, 48], strides = [1, 1]} : vector<16x48xf32> to vector<1x48xf32>
    %533 = arith.addf %532, %527 : vector<1x48xf32>
    %534 = arith.negf %533 : vector<1x48xf32>
    %535 = math.exp %534 : vector<1x48xf32>
    %cst_169 = arith.constant 1.000000e+00 : f32
    %536 = vector.broadcast %cst_169 : f32 to vector<1x48xf32>
    %537 = arith.addf %536, %535 : vector<1x48xf32>
    %538 = arith.divf %536, %537 : vector<1x48xf32>
    %539 = vector.extract_strided_slice %70 {offsets = [15, 0], sizes = [1, 48], strides = [1, 1]} : vector<16x48xf32> to vector<1x48xf32>
    %540 = arith.addf %539, %529 : vector<1x48xf32>
    %541 = arith.negf %540 : vector<1x48xf32>
    %542 = math.exp %541 : vector<1x48xf32>
    %cst_170 = arith.constant 1.000000e+00 : f32
    %543 = vector.broadcast %cst_170 : f32 to vector<1x48xf32>
    %544 = arith.addf %543, %542 : vector<1x48xf32>
    %545 = arith.divf %543, %544 : vector<1x48xf32>
    %546 = vector.extract_strided_slice %77 {offsets = [15, 0], sizes = [1, 48], strides = [1, 1]} : vector<16x48xf32> to vector<1x48xf32>
    %547 = arith.mulf %538, %531 : vector<1x48xf32>
    %548 = arith.addf %546, %547 : vector<1x48xf32>
    %549 = math.tanh %548 : vector<1x48xf32>
    %cst_171 = arith.constant 1.000000e+00 : f32
    %550 = vector.broadcast %cst_171 : f32 to vector<1x48xf32>
    %551 = arith.subf %550, %545 : vector<1x48xf32>
    %552 = arith.mulf %551, %549 : vector<1x48xf32>
    %553 = arith.mulf %545, %525 : vector<1x48xf32>
    %554 = arith.addf %552, %553 : vector<1x48xf32>
    %c0_172 = arith.constant 0 : index
    %c0_173 = arith.constant 0 : index
    %555 = vector.load %arg33[%c0_172, %c0_173] : memref<1x48xf32, #tpu.memory_space<vmem>>, vector<1x48xf32>
    tpu.vector_store %arg33[%c0_172, %c0_173], %554 {strides = array<i32>} : memref<1x48xf32, #tpu.memory_space<vmem>>, vector<1x48xf32>,
    %556 = tpu.concatenate %119, %148, %177, %206, %235, %264, %293, %322, %351, %380, %409, %438, %467, %496, %525, %554 in 0 : vector<1x48xf32>, vector<1x48xf32>, vector<1x48xf32>, vector<1x48xf32>, vector<1x48xf32>, vector<1x48xf32>, vector<1x48xf32>, vector<1x48xf32>, vector<1x48xf32>, vector<1x48xf32>, vector<1x48xf32>, vector<1x48xf32>, vector<1x48xf32>, vector<1x48xf32>, vector<1x48xf32>, vector<1x48xf32> -> vector<16x48xf32>
    %c0_174 = arith.constant 0 : index
    %c0_175 = arith.constant 0 : index
    %557 = vector.load %arg12[%c0_174, %c0_175] : memref<48x48xf32, #tpu.memory_space<vmem>>, vector<48x48xf32>
    %cst_176 = arith.constant dense<0.000000e+00> : vector<16x48xf32>
    %558 = tpu.matmul %556, %557, %cst_176 {dimension_numbers = #tpu.dot_dimension_numbers<[1], [0], [0], [1], [0, 0, 1, 1], [], []>} : vector<16x48xf32>, vector<48x48xf32>, vector<16x48xf32> -> vector<16x48xf32>
    %c0_177 = arith.constant 0 : index
    %c0_178 = arith.constant 0 : index
    %559 = vector.load %arg13[%c0_177, %c0_178] : memref<1x48xf32, #tpu.memory_space<vmem>>, vector<1x48xf32>
    %560 = vector.broadcast %559 : vector<1x48xf32> to vector<16x48xf32>
    %561 = arith.addf %558, %560 : vector<16x48xf32>
    %562 = arith.mulf %556, %561 : vector<16x48xf32>
    %c0_179 = arith.constant 0 : index
    %c0_180 = arith.constant 0 : index
    %563 = vector.load %arg14[%c0_179, %c0_180] : memref<48x3xf32, #tpu.memory_space<vmem>>, vector<48x3xf32>
    %cst_181 = arith.constant dense<0.000000e+00> : vector<16x3xf32>
    %564 = tpu.matmul %562, %563, %cst_181 {dimension_numbers = #tpu.dot_dimension_numbers<[1], [0], [0], [1], [0, 0, 1, 1], [], []>} : vector<16x48xf32>, vector<48x3xf32>, vector<16x3xf32> -> vector<16x3xf32>
    %565 = math.tanh %564 : vector<16x3xf32>
    %cst_182 = arith.constant dense<0xFF800000> : vector<16xf32>
    %566 = vector.multi_reduction <maximumf>, %565, %cst_182 [1] : vector<16x3xf32> to vector<16xf32>
    %567 = vector.shape_cast %566 : vector<16xf32> to vector<16x1xf32>
    %568 = vector.broadcast %567 : vector<16x1xf32> to vector<16x3xf32>
    %569 = arith.subf %565, %568 : vector<16x3xf32>
    %570 = math.exp %569 : vector<16x3xf32>
    %cst_183 = arith.constant dense<0.000000e+00> : vector<16xf32>
    %571 = vector.multi_reduction <add>, %570, %cst_183 [1] : vector<16x3xf32> to vector<16xf32>
    %572 = vector.shape_cast %571 : vector<16xf32> to vector<16x1xf32>
    %573 = tpu.reciprocal %572 {approx = true} : vector<16x1xf32> -> vector<16x1xf32>
    %574 = vector.broadcast %573 : vector<16x1xf32> to vector<16x3xf32>
    %575 = arith.mulf %570, %574 : vector<16x3xf32>
    %c0_184 = arith.constant 0 : index
    %c0_185 = arith.constant 0 : index
    %576 = vector.load %arg15[%c0_184, %c0_185] : memref<3x48xf32, #tpu.memory_space<vmem>>, vector<3x48xf32>
    %cst_186 = arith.constant dense<0.000000e+00> : vector<16x48xf32>
    %577 = tpu.matmul %575, %576, %cst_186 {dimension_numbers = #tpu.dot_dimension_numbers<[1], [0], [0], [1], [0, 0, 1, 1], [], []>} : vector<16x3xf32>, vector<3x48xf32>, vector<16x48xf32> -> vector<16x48xf32>
    %578 = arith.mulf %577, %556 : vector<16x48xf32>
    %c0_187 = arith.constant 0 : index
    %c0_188 = arith.constant 0 : index
    %579 = vector.load %arg16[%c0_187, %c0_188] : memref<48x48xf32, #tpu.memory_space<vmem>>, vector<48x48xf32>
    %cst_189 = arith.constant dense<0.000000e+00> : vector<16x48xf32>
    %580 = tpu.matmul %578, %579, %cst_189 {dimension_numbers = #tpu.dot_dimension_numbers<[1], [0], [0], [1], [0, 0, 1, 1], [], []>} : vector<16x48xf32>, vector<48x48xf32>, vector<16x48xf32> -> vector<16x48xf32>
    %581 = arith.addf %556, %580 : vector<16x48xf32>
    %c0_190 = arith.constant 0 : index
    %c0_191 = arith.constant 0 : index
    %582 = vector.load %arg17[%c0_190, %c0_191] : memref<48x48xf32, #tpu.memory_space<vmem>>, vector<48x48xf32>
    %cst_192 = arith.constant dense<0.000000e+00> : vector<16x48xf32>
    %583 = tpu.matmul %581, %582, %cst_192 {dimension_numbers = #tpu.dot_dimension_numbers<[1], [0], [0], [1], [0, 0, 1, 1], [], []>} : vector<16x48xf32>, vector<48x48xf32>, vector<16x48xf32> -> vector<16x48xf32>
    %cst_193 = arith.constant 0.000000e+00 : f32
    %584 = vector.broadcast %cst_193 : f32 to vector<16x48xf32>
    %c0_194 = arith.constant 0 : index
    %c0_195 = arith.constant 0 : index
    %c0_196 = arith.constant 0 : index
    %585 = vector.load %arg0[%c0_194, %c0_195, %c0_196] : memref<3x16x16xf32, #tpu.memory_space<vmem>>, vector<1x16x16xf32>
    %586 = vector.shape_cast %585 : vector<1x16x16xf32> to vector<16x16xf32>
    %c0_197 = arith.constant 0 : index
    %c0_198 = arith.constant 0 : index
    %c0_199 = arith.constant 0 : index
    %587 = vector.load %arg21[%c0_197, %c0_198, %c0_199] : memref<3x1x48xf32, #tpu.memory_space<vmem>>, vector<1x1x48xf32>
    %588 = vector.shape_cast %587 : vector<1x1x48xf32> to vector<1x48xf32>
    %589 = vector.broadcast %588 : vector<1x48xf32> to vector<16x48xf32>
    %590 = arith.mulf %583, %589 : vector<16x48xf32>
    %cst_200 = arith.constant dense<0.000000e+00> : vector<16x48xf32>
    %591 = tpu.matmul %586, %590, %cst_200 {dimension_numbers = #tpu.dot_dimension_numbers<[1], [0], [0], [1], [0, 0, 1, 1], [], []>} : vector<16x16xf32>, vector<16x48xf32>, vector<16x48xf32> -> vector<16x48xf32>
    %592 = arith.addf %584, %591 : vector<16x48xf32>
    %c1_201 = arith.constant 1 : index
    %c0_202 = arith.constant 0 : index
    %c0_203 = arith.constant 0 : index
    %593 = vector.load %arg0[%c1_201, %c0_202, %c0_203] : memref<3x16x16xf32, #tpu.memory_space<vmem>>, vector<1x16x16xf32>
    %594 = vector.shape_cast %593 : vector<1x16x16xf32> to vector<16x16xf32>
    %c1_204 = arith.constant 1 : index
    %c0_205 = arith.constant 0 : index
    %c0_206 = arith.constant 0 : index
    %595 = vector.load %arg21[%c1_204, %c0_205, %c0_206] : memref<3x1x48xf32, #tpu.memory_space<vmem>>, vector<1x1x48xf32>
    %596 = vector.shape_cast %595 : vector<1x1x48xf32> to vector<1x48xf32>
    %597 = vector.broadcast %596 : vector<1x48xf32> to vector<16x48xf32>
    %598 = arith.mulf %583, %597 : vector<16x48xf32>
    %cst_207 = arith.constant dense<0.000000e+00> : vector<16x48xf32>
    %599 = tpu.matmul %594, %598, %cst_207 {dimension_numbers = #tpu.dot_dimension_numbers<[1], [0], [0], [1], [0, 0, 1, 1], [], []>} : vector<16x16xf32>, vector<16x48xf32>, vector<16x48xf32> -> vector<16x48xf32>
    %600 = arith.addf %592, %599 : vector<16x48xf32>
    %c2_208 = arith.constant 2 : index
    %c0_209 = arith.constant 0 : index
    %c0_210 = arith.constant 0 : index
    %601 = vector.load %arg0[%c2_208, %c0_209, %c0_210] : memref<3x16x16xf32, #tpu.memory_space<vmem>>, vector<1x16x16xf32>
    %602 = vector.shape_cast %601 : vector<1x16x16xf32> to vector<16x16xf32>
    %c2_211 = arith.constant 2 : index
    %c0_212 = arith.constant 0 : index
    %c0_213 = arith.constant 0 : index
    %603 = vector.load %arg21[%c2_211, %c0_212, %c0_213] : memref<3x1x48xf32, #tpu.memory_space<vmem>>, vector<1x1x48xf32>
    %604 = vector.shape_cast %603 : vector<1x1x48xf32> to vector<1x48xf32>
    %605 = vector.broadcast %604 : vector<1x48xf32> to vector<16x48xf32>
    %606 = arith.mulf %583, %605 : vector<16x48xf32>
    %cst_214 = arith.constant dense<0.000000e+00> : vector<16x48xf32>
    %607 = tpu.matmul %602, %606, %cst_214 {dimension_numbers = #tpu.dot_dimension_numbers<[1], [0], [0], [1], [0, 0, 1, 1], [], []>} : vector<16x16xf32>, vector<16x48xf32>, vector<16x48xf32> -> vector<16x48xf32>
    %608 = arith.addf %600, %607 : vector<16x48xf32>
    %c0_215 = arith.constant 0 : index
    %c0_216 = arith.constant 0 : index
    %609 = vector.load %arg18[%c0_215, %c0_216] : memref<1x48xf32, #tpu.memory_space<vmem>>, vector<1x48xf32>
    %610 = vector.broadcast %609 : vector<1x48xf32> to vector<16x48xf32>
    %611 = arith.addf %608, %610 : vector<16x48xf32>
    %cst_217 = arith.constant dense<0.000000e+00> : vector<48xf32>
    %612 = vector.multi_reduction <add>, %611, %cst_217 [0] : vector<16x48xf32> to vector<48xf32>
    %613 = vector.shape_cast %612 : vector<48xf32> to vector<1x48xf32>
    %cst_218 = arith.constant 1.600000e+01 : f32
    %614 = vector.broadcast %cst_218 : f32 to vector<1x48xf32>
    %615 = arith.divf %613, %614 : vector<1x48xf32>
    %616 = arith.mulf %611, %611 : vector<16x48xf32>
    %cst_219 = arith.constant dense<0.000000e+00> : vector<48xf32>
    %617 = vector.multi_reduction <add>, %616, %cst_219 [0] : vector<16x48xf32> to vector<48xf32>
    %618 = vector.shape_cast %617 : vector<48xf32> to vector<1x48xf32>
    %cst_220 = arith.constant 1.600000e+01 : f32
    %619 = vector.broadcast %cst_220 : f32 to vector<1x48xf32>
    %620 = arith.divf %618, %619 : vector<1x48xf32>
    %621 = arith.mulf %615, %615 : vector<1x48xf32>
    %622 = arith.subf %620, %621 : vector<1x48xf32>
    %623 = vector.broadcast %615 : vector<1x48xf32> to vector<16x48xf32>
    %624 = arith.subf %611, %623 : vector<16x48xf32>
    %cst_221 = arith.constant 9.99999974E-6 : f32
    %625 = vector.broadcast %cst_221 : f32 to vector<1x48xf32>
    %626 = arith.addf %622, %625 : vector<1x48xf32>
    %627 = math.rsqrt %626 : vector<1x48xf32>
    %628 = vector.broadcast %627 : vector<1x48xf32> to vector<16x48xf32>
    %629 = arith.mulf %624, %628 : vector<16x48xf32>
    %c0_222 = arith.constant 0 : index
    %c0_223 = arith.constant 0 : index
    %630 = vector.load %arg19[%c0_222, %c0_223] : memref<1x48xf32, #tpu.memory_space<vmem>>, vector<1x48xf32>
    %631 = vector.broadcast %630 : vector<1x48xf32> to vector<16x48xf32>
    %632 = arith.mulf %629, %631 : vector<16x48xf32>
    %c0_224 = arith.constant 0 : index
    %c0_225 = arith.constant 0 : index
    %633 = vector.load %arg20[%c0_224, %c0_225] : memref<1x48xf32, #tpu.memory_space<vmem>>, vector<1x48xf32>
    %634 = vector.broadcast %633 : vector<1x48xf32> to vector<16x48xf32>
    %635 = arith.addf %632, %634 : vector<16x48xf32>
    %cst_226 = arith.constant 0.000000e+00 : f32
    %636 = vector.broadcast %cst_226 : f32 to vector<16x48xf32>
    %637 = arith.maximumf %635, %636 : vector<16x48xf32>
    %c0_227 = arith.constant 0 : index
    %c0_228 = arith.constant 0 : index
    %c0_229 = arith.constant 0 : index
    %638 = vector.load %arg23[%c0_227, %c0_228, %c0_229] : memref<3x48x48xf32, #tpu.memory_space<vmem>>, vector<1x48x48xf32>
    %639 = vector.shape_cast %638 : vector<1x48x48xf32> to vector<48x48xf32>
    %cst_230 = arith.constant dense<0.000000e+00> : vector<16x48xf32>
    %640 = tpu.matmul %637, %639, %cst_230 {dimension_numbers = #tpu.dot_dimension_numbers<[1], [0], [0], [1], [0, 0, 1, 1], [], []>} : vector<16x48xf32>, vector<48x48xf32>, vector<16x48xf32> -> vector<16x48xf32>
    %c0_231 = arith.constant 0 : index
    %c0_232 = arith.constant 0 : index
    %c0_233 = arith.constant 0 : index
    %641 = vector.load %arg24[%c0_231, %c0_232, %c0_233] : memref<3x1x48xf32, #tpu.memory_space<vmem>>, vector<1x1x48xf32>
    %642 = vector.shape_cast %641 : vector<1x1x48xf32> to vector<1x48xf32>
    %643 = vector.broadcast %642 : vector<1x48xf32> to vector<16x48xf32>
    %644 = arith.addf %640, %643 : vector<16x48xf32>
    %c1_234 = arith.constant 1 : index
    %c0_235 = arith.constant 0 : index
    %c0_236 = arith.constant 0 : index
    %645 = vector.load %arg23[%c1_234, %c0_235, %c0_236] : memref<3x48x48xf32, #tpu.memory_space<vmem>>, vector<1x48x48xf32>
    %646 = vector.shape_cast %645 : vector<1x48x48xf32> to vector<48x48xf32>
    %cst_237 = arith.constant dense<0.000000e+00> : vector<16x48xf32>
    %647 = tpu.matmul %637, %646, %cst_237 {dimension_numbers = #tpu.dot_dimension_numbers<[1], [0], [0], [1], [0, 0, 1, 1], [], []>} : vector<16x48xf32>, vector<48x48xf32>, vector<16x48xf32> -> vector<16x48xf32>
    %c1_238 = arith.constant 1 : index
    %c0_239 = arith.constant 0 : index
    %c0_240 = arith.constant 0 : index
    %648 = vector.load %arg24[%c1_238, %c0_239, %c0_240] : memref<3x1x48xf32, #tpu.memory_space<vmem>>, vector<1x1x48xf32>
    %649 = vector.shape_cast %648 : vector<1x1x48xf32> to vector<1x48xf32>
    %650 = vector.broadcast %649 : vector<1x48xf32> to vector<16x48xf32>
    %651 = arith.addf %647, %650 : vector<16x48xf32>
    %c2_241 = arith.constant 2 : index
    %c0_242 = arith.constant 0 : index
    %c0_243 = arith.constant 0 : index
    %652 = vector.load %arg23[%c2_241, %c0_242, %c0_243] : memref<3x48x48xf32, #tpu.memory_space<vmem>>, vector<1x48x48xf32>
    %653 = vector.shape_cast %652 : vector<1x48x48xf32> to vector<48x48xf32>
    %cst_244 = arith.constant dense<0.000000e+00> : vector<16x48xf32>
    %654 = tpu.matmul %637, %653, %cst_244 {dimension_numbers = #tpu.dot_dimension_numbers<[1], [0], [0], [1], [0, 0, 1, 1], [], []>} : vector<16x48xf32>, vector<48x48xf32>, vector<16x48xf32> -> vector<16x48xf32>
    %c2_245 = arith.constant 2 : index
    %c0_246 = arith.constant 0 : index
    %c0_247 = arith.constant 0 : index
    %655 = vector.load %arg24[%c2_245, %c0_246, %c0_247] : memref<3x1x48xf32, #tpu.memory_space<vmem>>, vector<1x1x48xf32>
    %656 = vector.shape_cast %655 : vector<1x1x48xf32> to vector<1x48xf32>
    %657 = vector.broadcast %656 : vector<1x48xf32> to vector<16x48xf32>
    %658 = arith.addf %654, %657 : vector<16x48xf32>
    %c0_248 = arith.constant 0 : index
    %c0_249 = arith.constant 0 : index
    %c0_250 = arith.constant 0 : index
    %659 = vector.load %arg25[%c0_248, %c0_249, %c0_250] : memref<3x48x48xf32, #tpu.memory_space<vmem>>, vector<1x48x48xf32>
    %660 = vector.shape_cast %659 : vector<1x48x48xf32> to vector<48x48xf32>
    %c1_251 = arith.constant 1 : index
    %c0_252 = arith.constant 0 : index
    %c0_253 = arith.constant 0 : index
    %661 = vector.load %arg25[%c1_251, %c0_252, %c0_253] : memref<3x48x48xf32, #tpu.memory_space<vmem>>, vector<1x48x48xf32>
    %662 = vector.shape_cast %661 : vector<1x48x48xf32> to vector<48x48xf32>
    %c2_254 = arith.constant 2 : index
    %c0_255 = arith.constant 0 : index
    %c0_256 = arith.constant 0 : index
    %663 = vector.load %arg25[%c2_254, %c0_255, %c0_256] : memref<3x48x48xf32, #tpu.memory_space<vmem>>, vector<1x48x48xf32>
    %664 = vector.shape_cast %663 : vector<1x48x48xf32> to vector<48x48xf32>
    %c0_257 = arith.constant 0 : index
    %c0_258 = arith.constant 0 : index
    %c0_259 = arith.constant 0 : index
    %665 = vector.load %arg26[%c0_257, %c0_258, %c0_259] : memref<3x1x48xf32, #tpu.memory_space<vmem>>, vector<1x1x48xf32>
    %666 = vector.shape_cast %665 : vector<1x1x48xf32> to vector<1x48xf32>
    %c1_260 = arith.constant 1 : index
    %c0_261 = arith.constant 0 : index
    %c0_262 = arith.constant 0 : index
    %667 = vector.load %arg26[%c1_260, %c0_261, %c0_262] : memref<3x1x48xf32, #tpu.memory_space<vmem>>, vector<1x1x48xf32>
    %668 = vector.shape_cast %667 : vector<1x1x48xf32> to vector<1x48xf32>
    %c2_263 = arith.constant 2 : index
    %c0_264 = arith.constant 0 : index
    %c0_265 = arith.constant 0 : index
    %669 = vector.load %arg26[%c2_263, %c0_264, %c0_265] : memref<3x1x48xf32, #tpu.memory_space<vmem>>, vector<1x1x48xf32>
    %670 = vector.shape_cast %669 : vector<1x1x48xf32> to vector<1x48xf32>
    %c0_266 = arith.constant 0 : index
    %c0_267 = arith.constant 0 : index
    %671 = vector.load %arg22[%c0_266, %c0_267] : memref<1x48xf32, #tpu.memory_space<vmem>>, vector<1x48xf32>
    %cst_268 = arith.constant dense<0.000000e+00> : vector<1x48xf32>
    %672 = tpu.matmul %671, %660, %cst_268 {dimension_numbers = #tpu.dot_dimension_numbers<[1], [0], [0], [1], [0, 0, 1, 1], [], []>} : vector<1x48xf32>, vector<48x48xf32>, vector<1x48xf32> -> vector<1x48xf32>
    %673 = arith.addf %672, %666 : vector<1x48xf32>
    %cst_269 = arith.constant dense<0.000000e+00> : vector<1x48xf32>
    %674 = tpu.matmul %671, %662, %cst_269 {dimension_numbers = #tpu.dot_dimension_numbers<[1], [0], [0], [1], [0, 0, 1, 1], [], []>} : vector<1x48xf32>, vector<48x48xf32>, vector<1x48xf32> -> vector<1x48xf32>
    %675 = arith.addf %674, %668 : vector<1x48xf32>
    %cst_270 = arith.constant dense<0.000000e+00> : vector<1x48xf32>
    %676 = tpu.matmul %671, %664, %cst_270 {dimension_numbers = #tpu.dot_dimension_numbers<[1], [0], [0], [1], [0, 0, 1, 1], [], []>} : vector<1x48xf32>, vector<48x48xf32>, vector<1x48xf32> -> vector<1x48xf32>
    %677 = arith.addf %676, %670 : vector<1x48xf32>
    %678 = vector.extract_strided_slice %644 {offsets = [0, 0], sizes = [1, 48], strides = [1, 1]} : vector<16x48xf32> to vector<1x48xf32>
    %679 = arith.addf %678, %673 : vector<1x48xf32>
    %680 = arith.negf %679 : vector<1x48xf32>
    %681 = math.exp %680 : vector<1x48xf32>
    %cst_271 = arith.constant 1.000000e+00 : f32
    %682 = vector.broadcast %cst_271 : f32 to vector<1x48xf32>
    %683 = arith.addf %682, %681 : vector<1x48xf32>
    %684 = arith.divf %682, %683 : vector<1x48xf32>
    %685 = vector.extract_strided_slice %651 {offsets = [0, 0], sizes = [1, 48], strides = [1, 1]} : vector<16x48xf32> to vector<1x48xf32>
    %686 = arith.addf %685, %675 : vector<1x48xf32>
    %687 = arith.negf %686 : vector<1x48xf32>
    %688 = math.exp %687 : vector<1x48xf32>
    %cst_272 = arith.constant 1.000000e+00 : f32
    %689 = vector.broadcast %cst_272 : f32 to vector<1x48xf32>
    %690 = arith.addf %689, %688 : vector<1x48xf32>
    %691 = arith.divf %689, %690 : vector<1x48xf32>
    %692 = vector.extract_strided_slice %658 {offsets = [0, 0], sizes = [1, 48], strides = [1, 1]} : vector<16x48xf32> to vector<1x48xf32>
    %693 = arith.mulf %684, %677 : vector<1x48xf32>
    %694 = arith.addf %692, %693 : vector<1x48xf32>
    %695 = math.tanh %694 : vector<1x48xf32>
    %cst_273 = arith.constant 1.000000e+00 : f32
    %696 = vector.broadcast %cst_273 : f32 to vector<1x48xf32>
    %697 = arith.subf %696, %691 : vector<1x48xf32>
    %698 = arith.mulf %697, %695 : vector<1x48xf32>
    %699 = arith.mulf %691, %671 : vector<1x48xf32>
    %700 = arith.addf %698, %699 : vector<1x48xf32>
    %cst_274 = arith.constant dense<0.000000e+00> : vector<1x48xf32>
    %701 = tpu.matmul %700, %660, %cst_274 {dimension_numbers = #tpu.dot_dimension_numbers<[1], [0], [0], [1], [0, 0, 1, 1], [], []>} : vector<1x48xf32>, vector<48x48xf32>, vector<1x48xf32> -> vector<1x48xf32>
    %702 = arith.addf %701, %666 : vector<1x48xf32>
    %cst_275 = arith.constant dense<0.000000e+00> : vector<1x48xf32>
    %703 = tpu.matmul %700, %662, %cst_275 {dimension_numbers = #tpu.dot_dimension_numbers<[1], [0], [0], [1], [0, 0, 1, 1], [], []>} : vector<1x48xf32>, vector<48x48xf32>, vector<1x48xf32> -> vector<1x48xf32>
    %704 = arith.addf %703, %668 : vector<1x48xf32>
    %cst_276 = arith.constant dense<0.000000e+00> : vector<1x48xf32>
    %705 = tpu.matmul %700, %664, %cst_276 {dimension_numbers = #tpu.dot_dimension_numbers<[1], [0], [0], [1], [0, 0, 1, 1], [], []>} : vector<1x48xf32>, vector<48x48xf32>, vector<1x48xf32> -> vector<1x48xf32>
    %706 = arith.addf %705, %670 : vector<1x48xf32>
    %707 = vector.extract_strided_slice %644 {offsets = [1, 0], sizes = [1, 48], strides = [1, 1]} : vector<16x48xf32> to vector<1x48xf32>
    %708 = arith.addf %707, %702 : vector<1x48xf32>
    %709 = arith.negf %708 : vector<1x48xf32>
    %710 = math.exp %709 : vector<1x48xf32>
    %cst_277 = arith.constant 1.000000e+00 : f32
    %711 = vector.broadcast %cst_277 : f32 to vector<1x48xf32>
    %712 = arith.addf %711, %710 : vector<1x48xf32>
    %713 = arith.divf %711, %712 : vector<1x48xf32>
    %714 = vector.extract_strided_slice %651 {offsets = [1, 0], sizes = [1, 48], strides = [1, 1]} : vector<16x48xf32> to vector<1x48xf32>
    %715 = arith.addf %714, %704 : vector<1x48xf32>
    %716 = arith.negf %715 : vector<1x48xf32>
    %717 = math.exp %716 : vector<1x48xf32>
    %cst_278 = arith.constant 1.000000e+00 : f32
    %718 = vector.broadcast %cst_278 : f32 to vector<1x48xf32>
    %719 = arith.addf %718, %717 : vector<1x48xf32>
    %720 = arith.divf %718, %719 : vector<1x48xf32>
    %721 = vector.extract_strided_slice %658 {offsets = [1, 0], sizes = [1, 48], strides = [1, 1]} : vector<16x48xf32> to vector<1x48xf32>
    %722 = arith.mulf %713, %706 : vector<1x48xf32>
    %723 = arith.addf %721, %722 : vector<1x48xf32>
    %724 = math.tanh %723 : vector<1x48xf32>
    %cst_279 = arith.constant 1.000000e+00 : f32
    %725 = vector.broadcast %cst_279 : f32 to vector<1x48xf32>
    %726 = arith.subf %725, %720 : vector<1x48xf32>
    %727 = arith.mulf %726, %724 : vector<1x48xf32>
    %728 = arith.mulf %720, %700 : vector<1x48xf32>
    %729 = arith.addf %727, %728 : vector<1x48xf32>
    %cst_280 = arith.constant dense<0.000000e+00> : vector<1x48xf32>
    %730 = tpu.matmul %729, %660, %cst_280 {dimension_numbers = #tpu.dot_dimension_numbers<[1], [0], [0], [1], [0, 0, 1, 1], [], []>} : vector<1x48xf32>, vector<48x48xf32>, vector<1x48xf32> -> vector<1x48xf32>
    %731 = arith.addf %730, %666 : vector<1x48xf32>
    %cst_281 = arith.constant dense<0.000000e+00> : vector<1x48xf32>
    %732 = tpu.matmul %729, %662, %cst_281 {dimension_numbers = #tpu.dot_dimension_numbers<[1], [0], [0], [1], [0, 0, 1, 1], [], []>} : vector<1x48xf32>, vector<48x48xf32>, vector<1x48xf32> -> vector<1x48xf32>
    %733 = arith.addf %732, %668 : vector<1x48xf32>
    %cst_282 = arith.constant dense<0.000000e+00> : vector<1x48xf32>
    %734 = tpu.matmul %729, %664, %cst_282 {dimension_numbers = #tpu.dot_dimension_numbers<[1], [0], [0], [1], [0, 0, 1, 1], [], []>} : vector<1x48xf32>, vector<48x48xf32>, vector<1x48xf32> -> vector<1x48xf32>
    %735 = arith.addf %734, %670 : vector<1x48xf32>
    %736 = vector.extract_strided_slice %644 {offsets = [2, 0], sizes = [1, 48], strides = [1, 1]} : vector<16x48xf32> to vector<1x48xf32>
    %737 = arith.addf %736, %731 : vector<1x48xf32>
    %738 = arith.negf %737 : vector<1x48xf32>
    %739 = math.exp %738 : vector<1x48xf32>
    %cst_283 = arith.constant 1.000000e+00 : f32
    %740 = vector.broadcast %cst_283 : f32 to vector<1x48xf32>
    %741 = arith.addf %740, %739 : vector<1x48xf32>
    %742 = arith.divf %740, %741 : vector<1x48xf32>
    %743 = vector.extract_strided_slice %651 {offsets = [2, 0], sizes = [1, 48], strides = [1, 1]} : vector<16x48xf32> to vector<1x48xf32>
    %744 = arith.addf %743, %733 : vector<1x48xf32>
    %745 = arith.negf %744 : vector<1x48xf32>
    %746 = math.exp %745 : vector<1x48xf32>
    %cst_284 = arith.constant 1.000000e+00 : f32
    %747 = vector.broadcast %cst_284 : f32 to vector<1x48xf32>
    %748 = arith.addf %747, %746 : vector<1x48xf32>
    %749 = arith.divf %747, %748 : vector<1x48xf32>
    %750 = vector.extract_strided_slice %658 {offsets = [2, 0], sizes = [1, 48], strides = [1, 1]} : vector<16x48xf32> to vector<1x48xf32>
    %751 = arith.mulf %742, %735 : vector<1x48xf32>
    %752 = arith.addf %750, %751 : vector<1x48xf32>
    %753 = math.tanh %752 : vector<1x48xf32>
    %cst_285 = arith.constant 1.000000e+00 : f32
    %754 = vector.broadcast %cst_285 : f32 to vector<1x48xf32>
    %755 = arith.subf %754, %749 : vector<1x48xf32>
    %756 = arith.mulf %755, %753 : vector<1x48xf32>
    %757 = arith.mulf %749, %729 : vector<1x48xf32>
    %758 = arith.addf %756, %757 : vector<1x48xf32>
    %cst_286 = arith.constant dense<0.000000e+00> : vector<1x48xf32>
    %759 = tpu.matmul %758, %660, %cst_286 {dimension_numbers = #tpu.dot_dimension_numbers<[1], [0], [0], [1], [0, 0, 1, 1], [], []>} : vector<1x48xf32>, vector<48x48xf32>, vector<1x48xf32> -> vector<1x48xf32>
    %760 = arith.addf %759, %666 : vector<1x48xf32>
    %cst_287 = arith.constant dense<0.000000e+00> : vector<1x48xf32>
    %761 = tpu.matmul %758, %662, %cst_287 {dimension_numbers = #tpu.dot_dimension_numbers<[1], [0], [0], [1], [0, 0, 1, 1], [], []>} : vector<1x48xf32>, vector<48x48xf32>, vector<1x48xf32> -> vector<1x48xf32>
    %762 = arith.addf %761, %668 : vector<1x48xf32>
    %cst_288 = arith.constant dense<0.000000e+00> : vector<1x48xf32>
    %763 = tpu.matmul %758, %664, %cst_288 {dimension_numbers = #tpu.dot_dimension_numbers<[1], [0], [0], [1], [0, 0, 1, 1], [], []>} : vector<1x48xf32>, vector<48x48xf32>, vector<1x48xf32> -> vector<1x48xf32>
    %764 = arith.addf %763, %670 : vector<1x48xf32>
    %765 = vector.extract_strided_slice %644 {offsets = [3, 0], sizes = [1, 48], strides = [1, 1]} : vector<16x48xf32> to vector<1x48xf32>
    %766 = arith.addf %765, %760 : vector<1x48xf32>
    %767 = arith.negf %766 : vector<1x48xf32>
    %768 = math.exp %767 : vector<1x48xf32>
    %cst_289 = arith.constant 1.000000e+00 : f32
    %769 = vector.broadcast %cst_289 : f32 to vector<1x48xf32>
    %770 = arith.addf %769, %768 : vector<1x48xf32>
    %771 = arith.divf %769, %770 : vector<1x48xf32>
    %772 = vector.extract_strided_slice %651 {offsets = [3, 0], sizes = [1, 48], strides = [1, 1]} : vector<16x48xf32> to vector<1x48xf32>
    %773 = arith.addf %772, %762 : vector<1x48xf32>
    %774 = arith.negf %773 : vector<1x48xf32>
    %775 = math.exp %774 : vector<1x48xf32>
    %cst_290 = arith.constant 1.000000e+00 : f32
    %776 = vector.broadcast %cst_290 : f32 to vector<1x48xf32>
    %777 = arith.addf %776, %775 : vector<1x48xf32>
    %778 = arith.divf %776, %777 : vector<1x48xf32>
    %779 = vector.extract_strided_slice %658 {offsets = [3, 0], sizes = [1, 48], strides = [1, 1]} : vector<16x48xf32> to vector<1x48xf32>
    %780 = arith.mulf %771, %764 : vector<1x48xf32>
    %781 = arith.addf %779, %780 : vector<1x48xf32>
    %782 = math.tanh %781 : vector<1x48xf32>
    %cst_291 = arith.constant 1.000000e+00 : f32
    %783 = vector.broadcast %cst_291 : f32 to vector<1x48xf32>
    %784 = arith.subf %783, %778 : vector<1x48xf32>
    %785 = arith.mulf %784, %782 : vector<1x48xf32>
    %786 = arith.mulf %778, %758 : vector<1x48xf32>
    %787 = arith.addf %785, %786 : vector<1x48xf32>
    %cst_292 = arith.constant dense<0.000000e+00> : vector<1x48xf32>
    %788 = tpu.matmul %787, %660, %cst_292 {dimension_numbers = #tpu.dot_dimension_numbers<[1], [0], [0], [1], [0, 0, 1, 1], [], []>} : vector<1x48xf32>, vector<48x48xf32>, vector<1x48xf32> -> vector<1x48xf32>
    %789 = arith.addf %788, %666 : vector<1x48xf32>
    %cst_293 = arith.constant dense<0.000000e+00> : vector<1x48xf32>
    %790 = tpu.matmul %787, %662, %cst_293 {dimension_numbers = #tpu.dot_dimension_numbers<[1], [0], [0], [1], [0, 0, 1, 1], [], []>} : vector<1x48xf32>, vector<48x48xf32>, vector<1x48xf32> -> vector<1x48xf32>
    %791 = arith.addf %790, %668 : vector<1x48xf32>
    %cst_294 = arith.constant dense<0.000000e+00> : vector<1x48xf32>
    %792 = tpu.matmul %787, %664, %cst_294 {dimension_numbers = #tpu.dot_dimension_numbers<[1], [0], [0], [1], [0, 0, 1, 1], [], []>} : vector<1x48xf32>, vector<48x48xf32>, vector<1x48xf32> -> vector<1x48xf32>
    %793 = arith.addf %792, %670 : vector<1x48xf32>
    %794 = vector.extract_strided_slice %644 {offsets = [4, 0], sizes = [1, 48], strides = [1, 1]} : vector<16x48xf32> to vector<1x48xf32>
    %795 = arith.addf %794, %789 : vector<1x48xf32>
    %796 = arith.negf %795 : vector<1x48xf32>
    %797 = math.exp %796 : vector<1x48xf32>
    %cst_295 = arith.constant 1.000000e+00 : f32
    %798 = vector.broadcast %cst_295 : f32 to vector<1x48xf32>
    %799 = arith.addf %798, %797 : vector<1x48xf32>
    %800 = arith.divf %798, %799 : vector<1x48xf32>
    %801 = vector.extract_strided_slice %651 {offsets = [4, 0], sizes = [1, 48], strides = [1, 1]} : vector<16x48xf32> to vector<1x48xf32>
    %802 = arith.addf %801, %791 : vector<1x48xf32>
    %803 = arith.negf %802 : vector<1x48xf32>
    %804 = math.exp %803 : vector<1x48xf32>
    %cst_296 = arith.constant 1.000000e+00 : f32
    %805 = vector.broadcast %cst_296 : f32 to vector<1x48xf32>
    %806 = arith.addf %805, %804 : vector<1x48xf32>
    %807 = arith.divf %805, %806 : vector<1x48xf32>
    %808 = vector.extract_strided_slice %658 {offsets = [4, 0], sizes = [1, 48], strides = [1, 1]} : vector<16x48xf32> to vector<1x48xf32>
    %809 = arith.mulf %800, %793 : vector<1x48xf32>
    %810 = arith.addf %808, %809 : vector<1x48xf32>
    %811 = math.tanh %810 : vector<1x48xf32>
    %cst_297 = arith.constant 1.000000e+00 : f32
    %812 = vector.broadcast %cst_297 : f32 to vector<1x48xf32>
    %813 = arith.subf %812, %807 : vector<1x48xf32>
    %814 = arith.mulf %813, %811 : vector<1x48xf32>
    %815 = arith.mulf %807, %787 : vector<1x48xf32>
    %816 = arith.addf %814, %815 : vector<1x48xf32>
    %cst_298 = arith.constant dense<0.000000e+00> : vector<1x48xf32>
    %817 = tpu.matmul %816, %660, %cst_298 {dimension_numbers = #tpu.dot_dimension_numbers<[1], [0], [0], [1], [0, 0, 1, 1], [], []>} : vector<1x48xf32>, vector<48x48xf32>, vector<1x48xf32> -> vector<1x48xf32>
    %818 = arith.addf %817, %666 : vector<1x48xf32>
    %cst_299 = arith.constant dense<0.000000e+00> : vector<1x48xf32>
    %819 = tpu.matmul %816, %662, %cst_299 {dimension_numbers = #tpu.dot_dimension_numbers<[1], [0], [0], [1], [0, 0, 1, 1], [], []>} : vector<1x48xf32>, vector<48x48xf32>, vector<1x48xf32> -> vector<1x48xf32>
    %820 = arith.addf %819, %668 : vector<1x48xf32>
    %cst_300 = arith.constant dense<0.000000e+00> : vector<1x48xf32>
    %821 = tpu.matmul %816, %664, %cst_300 {dimension_numbers = #tpu.dot_dimension_numbers<[1], [0], [0], [1], [0, 0, 1, 1], [], []>} : vector<1x48xf32>, vector<48x48xf32>, vector<1x48xf32> -> vector<1x48xf32>
    %822 = arith.addf %821, %670 : vector<1x48xf32>
    %823 = vector.extract_strided_slice %644 {offsets = [5, 0], sizes = [1, 48], strides = [1, 1]} : vector<16x48xf32> to vector<1x48xf32>
    %824 = arith.addf %823, %818 : vector<1x48xf32>
    %825 = arith.negf %824 : vector<1x48xf32>
    %826 = math.exp %825 : vector<1x48xf32>
    %cst_301 = arith.constant 1.000000e+00 : f32
    %827 = vector.broadcast %cst_301 : f32 to vector<1x48xf32>
    %828 = arith.addf %827, %826 : vector<1x48xf32>
    %829 = arith.divf %827, %828 : vector<1x48xf32>
    %830 = vector.extract_strided_slice %651 {offsets = [5, 0], sizes = [1, 48], strides = [1, 1]} : vector<16x48xf32> to vector<1x48xf32>
    %831 = arith.addf %830, %820 : vector<1x48xf32>
    %832 = arith.negf %831 : vector<1x48xf32>
    %833 = math.exp %832 : vector<1x48xf32>
    %cst_302 = arith.constant 1.000000e+00 : f32
    %834 = vector.broadcast %cst_302 : f32 to vector<1x48xf32>
    %835 = arith.addf %834, %833 : vector<1x48xf32>
    %836 = arith.divf %834, %835 : vector<1x48xf32>
    %837 = vector.extract_strided_slice %658 {offsets = [5, 0], sizes = [1, 48], strides = [1, 1]} : vector<16x48xf32> to vector<1x48xf32>
    %838 = arith.mulf %829, %822 : vector<1x48xf32>
    %839 = arith.addf %837, %838 : vector<1x48xf32>
    %840 = math.tanh %839 : vector<1x48xf32>
    %cst_303 = arith.constant 1.000000e+00 : f32
    %841 = vector.broadcast %cst_303 : f32 to vector<1x48xf32>
    %842 = arith.subf %841, %836 : vector<1x48xf32>
    %843 = arith.mulf %842, %840 : vector<1x48xf32>
    %844 = arith.mulf %836, %816 : vector<1x48xf32>
    %845 = arith.addf %843, %844 : vector<1x48xf32>
    %cst_304 = arith.constant dense<0.000000e+00> : vector<1x48xf32>
    %846 = tpu.matmul %845, %660, %cst_304 {dimension_numbers = #tpu.dot_dimension_numbers<[1], [0], [0], [1], [0, 0, 1, 1], [], []>} : vector<1x48xf32>, vector<48x48xf32>, vector<1x48xf32> -> vector<1x48xf32>
    %847 = arith.addf %846, %666 : vector<1x48xf32>
    %cst_305 = arith.constant dense<0.000000e+00> : vector<1x48xf32>
    %848 = tpu.matmul %845, %662, %cst_305 {dimension_numbers = #tpu.dot_dimension_numbers<[1], [0], [0], [1], [0, 0, 1, 1], [], []>} : vector<1x48xf32>, vector<48x48xf32>, vector<1x48xf32> -> vector<1x48xf32>
    %849 = arith.addf %848, %668 : vector<1x48xf32>
    %cst_306 = arith.constant dense<0.000000e+00> : vector<1x48xf32>
    %850 = tpu.matmul %845, %664, %cst_306 {dimension_numbers = #tpu.dot_dimension_numbers<[1], [0], [0], [1], [0, 0, 1, 1], [], []>} : vector<1x48xf32>, vector<48x48xf32>, vector<1x48xf32> -> vector<1x48xf32>
    %851 = arith.addf %850, %670 : vector<1x48xf32>
    %852 = vector.extract_strided_slice %644 {offsets = [6, 0], sizes = [1, 48], strides = [1, 1]} : vector<16x48xf32> to vector<1x48xf32>
    %853 = arith.addf %852, %847 : vector<1x48xf32>
    %854 = arith.negf %853 : vector<1x48xf32>
    %855 = math.exp %854 : vector<1x48xf32>
    %cst_307 = arith.constant 1.000000e+00 : f32
    %856 = vector.broadcast %cst_307 : f32 to vector<1x48xf32>
    %857 = arith.addf %856, %855 : vector<1x48xf32>
    %858 = arith.divf %856, %857 : vector<1x48xf32>
    %859 = vector.extract_strided_slice %651 {offsets = [6, 0], sizes = [1, 48], strides = [1, 1]} : vector<16x48xf32> to vector<1x48xf32>
    %860 = arith.addf %859, %849 : vector<1x48xf32>
    %861 = arith.negf %860 : vector<1x48xf32>
    %862 = math.exp %861 : vector<1x48xf32>
    %cst_308 = arith.constant 1.000000e+00 : f32
    %863 = vector.broadcast %cst_308 : f32 to vector<1x48xf32>
    %864 = arith.addf %863, %862 : vector<1x48xf32>
    %865 = arith.divf %863, %864 : vector<1x48xf32>
    %866 = vector.extract_strided_slice %658 {offsets = [6, 0], sizes = [1, 48], strides = [1, 1]} : vector<16x48xf32> to vector<1x48xf32>
    %867 = arith.mulf %858, %851 : vector<1x48xf32>
    %868 = arith.addf %866, %867 : vector<1x48xf32>
    %869 = math.tanh %868 : vector<1x48xf32>
    %cst_309 = arith.constant 1.000000e+00 : f32
    %870 = vector.broadcast %cst_309 : f32 to vector<1x48xf32>
    %871 = arith.subf %870, %865 : vector<1x48xf32>
    %872 = arith.mulf %871, %869 : vector<1x48xf32>
    %873 = arith.mulf %865, %845 : vector<1x48xf32>
    %874 = arith.addf %872, %873 : vector<1x48xf32>
    %cst_310 = arith.constant dense<0.000000e+00> : vector<1x48xf32>
    %875 = tpu.matmul %874, %660, %cst_310 {dimension_numbers = #tpu.dot_dimension_numbers<[1], [0], [0], [1], [0, 0, 1, 1], [], []>} : vector<1x48xf32>, vector<48x48xf32>, vector<1x48xf32> -> vector<1x48xf32>
    %876 = arith.addf %875, %666 : vector<1x48xf32>
    %cst_311 = arith.constant dense<0.000000e+00> : vector<1x48xf32>
    %877 = tpu.matmul %874, %662, %cst_311 {dimension_numbers = #tpu.dot_dimension_numbers<[1], [0], [0], [1], [0, 0, 1, 1], [], []>} : vector<1x48xf32>, vector<48x48xf32>, vector<1x48xf32> -> vector<1x48xf32>
    %878 = arith.addf %877, %668 : vector<1x48xf32>
    %cst_312 = arith.constant dense<0.000000e+00> : vector<1x48xf32>
    %879 = tpu.matmul %874, %664, %cst_312 {dimension_numbers = #tpu.dot_dimension_numbers<[1], [0], [0], [1], [0, 0, 1, 1], [], []>} : vector<1x48xf32>, vector<48x48xf32>, vector<1x48xf32> -> vector<1x48xf32>
    %880 = arith.addf %879, %670 : vector<1x48xf32>
    %881 = vector.extract_strided_slice %644 {offsets = [7, 0], sizes = [1, 48], strides = [1, 1]} : vector<16x48xf32> to vector<1x48xf32>
    %882 = arith.addf %881, %876 : vector<1x48xf32>
    %883 = arith.negf %882 : vector<1x48xf32>
    %884 = math.exp %883 : vector<1x48xf32>
    %cst_313 = arith.constant 1.000000e+00 : f32
    %885 = vector.broadcast %cst_313 : f32 to vector<1x48xf32>
    %886 = arith.addf %885, %884 : vector<1x48xf32>
    %887 = arith.divf %885, %886 : vector<1x48xf32>
    %888 = vector.extract_strided_slice %651 {offsets = [7, 0], sizes = [1, 48], strides = [1, 1]} : vector<16x48xf32> to vector<1x48xf32>
    %889 = arith.addf %888, %878 : vector<1x48xf32>
    %890 = arith.negf %889 : vector<1x48xf32>
    %891 = math.exp %890 : vector<1x48xf32>
    %cst_314 = arith.constant 1.000000e+00 : f32
    %892 = vector.broadcast %cst_314 : f32 to vector<1x48xf32>
    %893 = arith.addf %892, %891 : vector<1x48xf32>
    %894 = arith.divf %892, %893 : vector<1x48xf32>
    %895 = vector.extract_strided_slice %658 {offsets = [7, 0], sizes = [1, 48], strides = [1, 1]} : vector<16x48xf32> to vector<1x48xf32>
    %896 = arith.mulf %887, %880 : vector<1x48xf32>
    %897 = arith.addf %895, %896 : vector<1x48xf32>
    %898 = math.tanh %897 : vector<1x48xf32>
    %cst_315 = arith.constant 1.000000e+00 : f32
    %899 = vector.broadcast %cst_315 : f32 to vector<1x48xf32>
    %900 = arith.subf %899, %894 : vector<1x48xf32>
    %901 = arith.mulf %900, %898 : vector<1x48xf32>
    %902 = arith.mulf %894, %874 : vector<1x48xf32>
    %903 = arith.addf %901, %902 : vector<1x48xf32>
    %cst_316 = arith.constant dense<0.000000e+00> : vector<1x48xf32>
    %904 = tpu.matmul %903, %660, %cst_316 {dimension_numbers = #tpu.dot_dimension_numbers<[1], [0], [0], [1], [0, 0, 1, 1], [], []>} : vector<1x48xf32>, vector<48x48xf32>, vector<1x48xf32> -> vector<1x48xf32>
    %905 = arith.addf %904, %666 : vector<1x48xf32>
    %cst_317 = arith.constant dense<0.000000e+00> : vector<1x48xf32>
    %906 = tpu.matmul %903, %662, %cst_317 {dimension_numbers = #tpu.dot_dimension_numbers<[1], [0], [0], [1], [0, 0, 1, 1], [], []>} : vector<1x48xf32>, vector<48x48xf32>, vector<1x48xf32> -> vector<1x48xf32>
    %907 = arith.addf %906, %668 : vector<1x48xf32>
    %cst_318 = arith.constant dense<0.000000e+00> : vector<1x48xf32>
    %908 = tpu.matmul %903, %664, %cst_318 {dimension_numbers = #tpu.dot_dimension_numbers<[1], [0], [0], [1], [0, 0, 1, 1], [], []>} : vector<1x48xf32>, vector<48x48xf32>, vector<1x48xf32> -> vector<1x48xf32>
    %909 = arith.addf %908, %670 : vector<1x48xf32>
    %910 = vector.extract_strided_slice %644 {offsets = [8, 0], sizes = [1, 48], strides = [1, 1]} : vector<16x48xf32> to vector<1x48xf32>
    %911 = arith.addf %910, %905 : vector<1x48xf32>
    %912 = arith.negf %911 : vector<1x48xf32>
    %913 = math.exp %912 : vector<1x48xf32>
    %cst_319 = arith.constant 1.000000e+00 : f32
    %914 = vector.broadcast %cst_319 : f32 to vector<1x48xf32>
    %915 = arith.addf %914, %913 : vector<1x48xf32>
    %916 = arith.divf %914, %915 : vector<1x48xf32>
    %917 = vector.extract_strided_slice %651 {offsets = [8, 0], sizes = [1, 48], strides = [1, 1]} : vector<16x48xf32> to vector<1x48xf32>
    %918 = arith.addf %917, %907 : vector<1x48xf32>
    %919 = arith.negf %918 : vector<1x48xf32>
    %920 = math.exp %919 : vector<1x48xf32>
    %cst_320 = arith.constant 1.000000e+00 : f32
    %921 = vector.broadcast %cst_320 : f32 to vector<1x48xf32>
    %922 = arith.addf %921, %920 : vector<1x48xf32>
    %923 = arith.divf %921, %922 : vector<1x48xf32>
    %924 = vector.extract_strided_slice %658 {offsets = [8, 0], sizes = [1, 48], strides = [1, 1]} : vector<16x48xf32> to vector<1x48xf32>
    %925 = arith.mulf %916, %909 : vector<1x48xf32>
    %926 = arith.addf %924, %925 : vector<1x48xf32>
    %927 = math.tanh %926 : vector<1x48xf32>
    %cst_321 = arith.constant 1.000000e+00 : f32
    %928 = vector.broadcast %cst_321 : f32 to vector<1x48xf32>
    %929 = arith.subf %928, %923 : vector<1x48xf32>
    %930 = arith.mulf %929, %927 : vector<1x48xf32>
    %931 = arith.mulf %923, %903 : vector<1x48xf32>
    %932 = arith.addf %930, %931 : vector<1x48xf32>
    %cst_322 = arith.constant dense<0.000000e+00> : vector<1x48xf32>
    %933 = tpu.matmul %932, %660, %cst_322 {dimension_numbers = #tpu.dot_dimension_numbers<[1], [0], [0], [1], [0, 0, 1, 1], [], []>} : vector<1x48xf32>, vector<48x48xf32>, vector<1x48xf32> -> vector<1x48xf32>
    %934 = arith.addf %933, %666 : vector<1x48xf32>
    %cst_323 = arith.constant dense<0.000000e+00> : vector<1x48xf32>
    %935 = tpu.matmul %932, %662, %cst_323 {dimension_numbers = #tpu.dot_dimension_numbers<[1], [0], [0], [1], [0, 0, 1, 1], [], []>} : vector<1x48xf32>, vector<48x48xf32>, vector<1x48xf32> -> vector<1x48xf32>
    %936 = arith.addf %935, %668 : vector<1x48xf32>
    %cst_324 = arith.constant dense<0.000000e+00> : vector<1x48xf32>
    %937 = tpu.matmul %932, %664, %cst_324 {dimension_numbers = #tpu.dot_dimension_numbers<[1], [0], [0], [1], [0, 0, 1, 1], [], []>} : vector<1x48xf32>, vector<48x48xf32>, vector<1x48xf32> -> vector<1x48xf32>
    %938 = arith.addf %937, %670 : vector<1x48xf32>
    %939 = vector.extract_strided_slice %644 {offsets = [9, 0], sizes = [1, 48], strides = [1, 1]} : vector<16x48xf32> to vector<1x48xf32>
    %940 = arith.addf %939, %934 : vector<1x48xf32>
    %941 = arith.negf %940 : vector<1x48xf32>
    %942 = math.exp %941 : vector<1x48xf32>
    %cst_325 = arith.constant 1.000000e+00 : f32
    %943 = vector.broadcast %cst_325 : f32 to vector<1x48xf32>
    %944 = arith.addf %943, %942 : vector<1x48xf32>
    %945 = arith.divf %943, %944 : vector<1x48xf32>
    %946 = vector.extract_strided_slice %651 {offsets = [9, 0], sizes = [1, 48], strides = [1, 1]} : vector<16x48xf32> to vector<1x48xf32>
    %947 = arith.addf %946, %936 : vector<1x48xf32>
    %948 = arith.negf %947 : vector<1x48xf32>
    %949 = math.exp %948 : vector<1x48xf32>
    %cst_326 = arith.constant 1.000000e+00 : f32
    %950 = vector.broadcast %cst_326 : f32 to vector<1x48xf32>
    %951 = arith.addf %950, %949 : vector<1x48xf32>
    %952 = arith.divf %950, %951 : vector<1x48xf32>
    %953 = vector.extract_strided_slice %658 {offsets = [9, 0], sizes = [1, 48], strides = [1, 1]} : vector<16x48xf32> to vector<1x48xf32>
    %954 = arith.mulf %945, %938 : vector<1x48xf32>
    %955 = arith.addf %953, %954 : vector<1x48xf32>
    %956 = math.tanh %955 : vector<1x48xf32>
    %cst_327 = arith.constant 1.000000e+00 : f32
    %957 = vector.broadcast %cst_327 : f32 to vector<1x48xf32>
    %958 = arith.subf %957, %952 : vector<1x48xf32>
    %959 = arith.mulf %958, %956 : vector<1x48xf32>
    %960 = arith.mulf %952, %932 : vector<1x48xf32>
    %961 = arith.addf %959, %960 : vector<1x48xf32>
    %cst_328 = arith.constant dense<0.000000e+00> : vector<1x48xf32>
    %962 = tpu.matmul %961, %660, %cst_328 {dimension_numbers = #tpu.dot_dimension_numbers<[1], [0], [0], [1], [0, 0, 1, 1], [], []>} : vector<1x48xf32>, vector<48x48xf32>, vector<1x48xf32> -> vector<1x48xf32>
    %963 = arith.addf %962, %666 : vector<1x48xf32>
    %cst_329 = arith.constant dense<0.000000e+00> : vector<1x48xf32>
    %964 = tpu.matmul %961, %662, %cst_329 {dimension_numbers = #tpu.dot_dimension_numbers<[1], [0], [0], [1], [0, 0, 1, 1], [], []>} : vector<1x48xf32>, vector<48x48xf32>, vector<1x48xf32> -> vector<1x48xf32>
    %965 = arith.addf %964, %668 : vector<1x48xf32>
    %cst_330 = arith.constant dense<0.000000e+00> : vector<1x48xf32>
    %966 = tpu.matmul %961, %664, %cst_330 {dimension_numbers = #tpu.dot_dimension_numbers<[1], [0], [0], [1], [0, 0, 1, 1], [], []>} : vector<1x48xf32>, vector<48x48xf32>, vector<1x48xf32> -> vector<1x48xf32>
    %967 = arith.addf %966, %670 : vector<1x48xf32>
    %968 = vector.extract_strided_slice %644 {offsets = [10, 0], sizes = [1, 48], strides = [1, 1]} : vector<16x48xf32> to vector<1x48xf32>
    %969 = arith.addf %968, %963 : vector<1x48xf32>
    %970 = arith.negf %969 : vector<1x48xf32>
    %971 = math.exp %970 : vector<1x48xf32>
    %cst_331 = arith.constant 1.000000e+00 : f32
    %972 = vector.broadcast %cst_331 : f32 to vector<1x48xf32>
    %973 = arith.addf %972, %971 : vector<1x48xf32>
    %974 = arith.divf %972, %973 : vector<1x48xf32>
    %975 = vector.extract_strided_slice %651 {offsets = [10, 0], sizes = [1, 48], strides = [1, 1]} : vector<16x48xf32> to vector<1x48xf32>
    %976 = arith.addf %975, %965 : vector<1x48xf32>
    %977 = arith.negf %976 : vector<1x48xf32>
    %978 = math.exp %977 : vector<1x48xf32>
    %cst_332 = arith.constant 1.000000e+00 : f32
    %979 = vector.broadcast %cst_332 : f32 to vector<1x48xf32>
    %980 = arith.addf %979, %978 : vector<1x48xf32>
    %981 = arith.divf %979, %980 : vector<1x48xf32>
    %982 = vector.extract_strided_slice %658 {offsets = [10, 0], sizes = [1, 48], strides = [1, 1]} : vector<16x48xf32> to vector<1x48xf32>
    %983 = arith.mulf %974, %967 : vector<1x48xf32>
    %984 = arith.addf %982, %983 : vector<1x48xf32>
    %985 = math.tanh %984 : vector<1x48xf32>
    %cst_333 = arith.constant 1.000000e+00 : f32
    %986 = vector.broadcast %cst_333 : f32 to vector<1x48xf32>
    %987 = arith.subf %986, %981 : vector<1x48xf32>
    %988 = arith.mulf %987, %985 : vector<1x48xf32>
    %989 = arith.mulf %981, %961 : vector<1x48xf32>
    %990 = arith.addf %988, %989 : vector<1x48xf32>
    %cst_334 = arith.constant dense<0.000000e+00> : vector<1x48xf32>
    %991 = tpu.matmul %990, %660, %cst_334 {dimension_numbers = #tpu.dot_dimension_numbers<[1], [0], [0], [1], [0, 0, 1, 1], [], []>} : vector<1x48xf32>, vector<48x48xf32>, vector<1x48xf32> -> vector<1x48xf32>
    %992 = arith.addf %991, %666 : vector<1x48xf32>
    %cst_335 = arith.constant dense<0.000000e+00> : vector<1x48xf32>
    %993 = tpu.matmul %990, %662, %cst_335 {dimension_numbers = #tpu.dot_dimension_numbers<[1], [0], [0], [1], [0, 0, 1, 1], [], []>} : vector<1x48xf32>, vector<48x48xf32>, vector<1x48xf32> -> vector<1x48xf32>
    %994 = arith.addf %993, %668 : vector<1x48xf32>
    %cst_336 = arith.constant dense<0.000000e+00> : vector<1x48xf32>
    %995 = tpu.matmul %990, %664, %cst_336 {dimension_numbers = #tpu.dot_dimension_numbers<[1], [0], [0], [1], [0, 0, 1, 1], [], []>} : vector<1x48xf32>, vector<48x48xf32>, vector<1x48xf32> -> vector<1x48xf32>
    %996 = arith.addf %995, %670 : vector<1x48xf32>
    %997 = vector.extract_strided_slice %644 {offsets = [11, 0], sizes = [1, 48], strides = [1, 1]} : vector<16x48xf32> to vector<1x48xf32>
    %998 = arith.addf %997, %992 : vector<1x48xf32>
    %999 = arith.negf %998 : vector<1x48xf32>
    %1000 = math.exp %999 : vector<1x48xf32>
    %cst_337 = arith.constant 1.000000e+00 : f32
    %1001 = vector.broadcast %cst_337 : f32 to vector<1x48xf32>
    %1002 = arith.addf %1001, %1000 : vector<1x48xf32>
    %1003 = arith.divf %1001, %1002 : vector<1x48xf32>
    %1004 = vector.extract_strided_slice %651 {offsets = [11, 0], sizes = [1, 48], strides = [1, 1]} : vector<16x48xf32> to vector<1x48xf32>
    %1005 = arith.addf %1004, %994 : vector<1x48xf32>
    %1006 = arith.negf %1005 : vector<1x48xf32>
    %1007 = math.exp %1006 : vector<1x48xf32>
    %cst_338 = arith.constant 1.000000e+00 : f32
    %1008 = vector.broadcast %cst_338 : f32 to vector<1x48xf32>
    %1009 = arith.addf %1008, %1007 : vector<1x48xf32>
    %1010 = arith.divf %1008, %1009 : vector<1x48xf32>
    %1011 = vector.extract_strided_slice %658 {offsets = [11, 0], sizes = [1, 48], strides = [1, 1]} : vector<16x48xf32> to vector<1x48xf32>
    %1012 = arith.mulf %1003, %996 : vector<1x48xf32>
    %1013 = arith.addf %1011, %1012 : vector<1x48xf32>
    %1014 = math.tanh %1013 : vector<1x48xf32>
    %cst_339 = arith.constant 1.000000e+00 : f32
    %1015 = vector.broadcast %cst_339 : f32 to vector<1x48xf32>
    %1016 = arith.subf %1015, %1010 : vector<1x48xf32>
    %1017 = arith.mulf %1016, %1014 : vector<1x48xf32>
    %1018 = arith.mulf %1010, %990 : vector<1x48xf32>
    %1019 = arith.addf %1017, %1018 : vector<1x48xf32>
    %cst_340 = arith.constant dense<0.000000e+00> : vector<1x48xf32>
    %1020 = tpu.matmul %1019, %660, %cst_340 {dimension_numbers = #tpu.dot_dimension_numbers<[1], [0], [0], [1], [0, 0, 1, 1], [], []>} : vector<1x48xf32>, vector<48x48xf32>, vector<1x48xf32> -> vector<1x48xf32>
    %1021 = arith.addf %1020, %666 : vector<1x48xf32>
    %cst_341 = arith.constant dense<0.000000e+00> : vector<1x48xf32>
    %1022 = tpu.matmul %1019, %662, %cst_341 {dimension_numbers = #tpu.dot_dimension_numbers<[1], [0], [0], [1], [0, 0, 1, 1], [], []>} : vector<1x48xf32>, vector<48x48xf32>, vector<1x48xf32> -> vector<1x48xf32>
    %1023 = arith.addf %1022, %668 : vector<1x48xf32>
    %cst_342 = arith.constant dense<0.000000e+00> : vector<1x48xf32>
    %1024 = tpu.matmul %1019, %664, %cst_342 {dimension_numbers = #tpu.dot_dimension_numbers<[1], [0], [0], [1], [0, 0, 1, 1], [], []>} : vector<1x48xf32>, vector<48x48xf32>, vector<1x48xf32> -> vector<1x48xf32>
    %1025 = arith.addf %1024, %670 : vector<1x48xf32>
    %1026 = vector.extract_strided_slice %644 {offsets = [12, 0], sizes = [1, 48], strides = [1, 1]} : vector<16x48xf32> to vector<1x48xf32>
    %1027 = arith.addf %1026, %1021 : vector<1x48xf32>
    %1028 = arith.negf %1027 : vector<1x48xf32>
    %1029 = math.exp %1028 : vector<1x48xf32>
    %cst_343 = arith.constant 1.000000e+00 : f32
    %1030 = vector.broadcast %cst_343 : f32 to vector<1x48xf32>
    %1031 = arith.addf %1030, %1029 : vector<1x48xf32>
    %1032 = arith.divf %1030, %1031 : vector<1x48xf32>
    %1033 = vector.extract_strided_slice %651 {offsets = [12, 0], sizes = [1, 48], strides = [1, 1]} : vector<16x48xf32> to vector<1x48xf32>
    %1034 = arith.addf %1033, %1023 : vector<1x48xf32>
    %1035 = arith.negf %1034 : vector<1x48xf32>
    %1036 = math.exp %1035 : vector<1x48xf32>
    %cst_344 = arith.constant 1.000000e+00 : f32
    %1037 = vector.broadcast %cst_344 : f32 to vector<1x48xf32>
    %1038 = arith.addf %1037, %1036 : vector<1x48xf32>
    %1039 = arith.divf %1037, %1038 : vector<1x48xf32>
    %1040 = vector.extract_strided_slice %658 {offsets = [12, 0], sizes = [1, 48], strides = [1, 1]} : vector<16x48xf32> to vector<1x48xf32>
    %1041 = arith.mulf %1032, %1025 : vector<1x48xf32>
    %1042 = arith.addf %1040, %1041 : vector<1x48xf32>
    %1043 = math.tanh %1042 : vector<1x48xf32>
    %cst_345 = arith.constant 1.000000e+00 : f32
    %1044 = vector.broadcast %cst_345 : f32 to vector<1x48xf32>
    %1045 = arith.subf %1044, %1039 : vector<1x48xf32>
    %1046 = arith.mulf %1045, %1043 : vector<1x48xf32>
    %1047 = arith.mulf %1039, %1019 : vector<1x48xf32>
    %1048 = arith.addf %1046, %1047 : vector<1x48xf32>
    %cst_346 = arith.constant dense<0.000000e+00> : vector<1x48xf32>
    %1049 = tpu.matmul %1048, %660, %cst_346 {dimension_numbers = #tpu.dot_dimension_numbers<[1], [0], [0], [1], [0, 0, 1, 1], [], []>} : vector<1x48xf32>, vector<48x48xf32>, vector<1x48xf32> -> vector<1x48xf32>
    %1050 = arith.addf %1049, %666 : vector<1x48xf32>
    %cst_347 = arith.constant dense<0.000000e+00> : vector<1x48xf32>
    %1051 = tpu.matmul %1048, %662, %cst_347 {dimension_numbers = #tpu.dot_dimension_numbers<[1], [0], [0], [1], [0, 0, 1, 1], [], []>} : vector<1x48xf32>, vector<48x48xf32>, vector<1x48xf32> -> vector<1x48xf32>
    %1052 = arith.addf %1051, %668 : vector<1x48xf32>
    %cst_348 = arith.constant dense<0.000000e+00> : vector<1x48xf32>
    %1053 = tpu.matmul %1048, %664, %cst_348 {dimension_numbers = #tpu.dot_dimension_numbers<[1], [0], [0], [1], [0, 0, 1, 1], [], []>} : vector<1x48xf32>, vector<48x48xf32>, vector<1x48xf32> -> vector<1x48xf32>
    %1054 = arith.addf %1053, %670 : vector<1x48xf32>
    %1055 = vector.extract_strided_slice %644 {offsets = [13, 0], sizes = [1, 48], strides = [1, 1]} : vector<16x48xf32> to vector<1x48xf32>
    %1056 = arith.addf %1055, %1050 : vector<1x48xf32>
    %1057 = arith.negf %1056 : vector<1x48xf32>
    %1058 = math.exp %1057 : vector<1x48xf32>
    %cst_349 = arith.constant 1.000000e+00 : f32
    %1059 = vector.broadcast %cst_349 : f32 to vector<1x48xf32>
    %1060 = arith.addf %1059, %1058 : vector<1x48xf32>
    %1061 = arith.divf %1059, %1060 : vector<1x48xf32>
    %1062 = vector.extract_strided_slice %651 {offsets = [13, 0], sizes = [1, 48], strides = [1, 1]} : vector<16x48xf32> to vector<1x48xf32>
    %1063 = arith.addf %1062, %1052 : vector<1x48xf32>
    %1064 = arith.negf %1063 : vector<1x48xf32>
    %1065 = math.exp %1064 : vector<1x48xf32>
    %cst_350 = arith.constant 1.000000e+00 : f32
    %1066 = vector.broadcast %cst_350 : f32 to vector<1x48xf32>
    %1067 = arith.addf %1066, %1065 : vector<1x48xf32>
    %1068 = arith.divf %1066, %1067 : vector<1x48xf32>
    %1069 = vector.extract_strided_slice %658 {offsets = [13, 0], sizes = [1, 48], strides = [1, 1]} : vector<16x48xf32> to vector<1x48xf32>
    %1070 = arith.mulf %1061, %1054 : vector<1x48xf32>
    %1071 = arith.addf %1069, %1070 : vector<1x48xf32>
    %1072 = math.tanh %1071 : vector<1x48xf32>
    %cst_351 = arith.constant 1.000000e+00 : f32
    %1073 = vector.broadcast %cst_351 : f32 to vector<1x48xf32>
    %1074 = arith.subf %1073, %1068 : vector<1x48xf32>
    %1075 = arith.mulf %1074, %1072 : vector<1x48xf32>
    %1076 = arith.mulf %1068, %1048 : vector<1x48xf32>
    %1077 = arith.addf %1075, %1076 : vector<1x48xf32>
    %cst_352 = arith.constant dense<0.000000e+00> : vector<1x48xf32>
    %1078 = tpu.matmul %1077, %660, %cst_352 {dimension_numbers = #tpu.dot_dimension_numbers<[1], [0], [0], [1], [0, 0, 1, 1], [], []>} : vector<1x48xf32>, vector<48x48xf32>, vector<1x48xf32> -> vector<1x48xf32>
    %1079 = arith.addf %1078, %666 : vector<1x48xf32>
    %cst_353 = arith.constant dense<0.000000e+00> : vector<1x48xf32>
    %1080 = tpu.matmul %1077, %662, %cst_353 {dimension_numbers = #tpu.dot_dimension_numbers<[1], [0], [0], [1], [0, 0, 1, 1], [], []>} : vector<1x48xf32>, vector<48x48xf32>, vector<1x48xf32> -> vector<1x48xf32>
    %1081 = arith.addf %1080, %668 : vector<1x48xf32>
    %cst_354 = arith.constant dense<0.000000e+00> : vector<1x48xf32>
    %1082 = tpu.matmul %1077, %664, %cst_354 {dimension_numbers = #tpu.dot_dimension_numbers<[1], [0], [0], [1], [0, 0, 1, 1], [], []>} : vector<1x48xf32>, vector<48x48xf32>, vector<1x48xf32> -> vector<1x48xf32>
    %1083 = arith.addf %1082, %670 : vector<1x48xf32>
    %1084 = vector.extract_strided_slice %644 {offsets = [14, 0], sizes = [1, 48], strides = [1, 1]} : vector<16x48xf32> to vector<1x48xf32>
    %1085 = arith.addf %1084, %1079 : vector<1x48xf32>
    %1086 = arith.negf %1085 : vector<1x48xf32>
    %1087 = math.exp %1086 : vector<1x48xf32>
    %cst_355 = arith.constant 1.000000e+00 : f32
    %1088 = vector.broadcast %cst_355 : f32 to vector<1x48xf32>
    %1089 = arith.addf %1088, %1087 : vector<1x48xf32>
    %1090 = arith.divf %1088, %1089 : vector<1x48xf32>
    %1091 = vector.extract_strided_slice %651 {offsets = [14, 0], sizes = [1, 48], strides = [1, 1]} : vector<16x48xf32> to vector<1x48xf32>
    %1092 = arith.addf %1091, %1081 : vector<1x48xf32>
    %1093 = arith.negf %1092 : vector<1x48xf32>
    %1094 = math.exp %1093 : vector<1x48xf32>
    %cst_356 = arith.constant 1.000000e+00 : f32
    %1095 = vector.broadcast %cst_356 : f32 to vector<1x48xf32>
    %1096 = arith.addf %1095, %1094 : vector<1x48xf32>
    %1097 = arith.divf %1095, %1096 : vector<1x48xf32>
    %1098 = vector.extract_strided_slice %658 {offsets = [14, 0], sizes = [1, 48], strides = [1, 1]} : vector<16x48xf32> to vector<1x48xf32>
    %1099 = arith.mulf %1090, %1083 : vector<1x48xf32>
    %1100 = arith.addf %1098, %1099 : vector<1x48xf32>
    %1101 = math.tanh %1100 : vector<1x48xf32>
    %cst_357 = arith.constant 1.000000e+00 : f32
    %1102 = vector.broadcast %cst_357 : f32 to vector<1x48xf32>
    %1103 = arith.subf %1102, %1097 : vector<1x48xf32>
    %1104 = arith.mulf %1103, %1101 : vector<1x48xf32>
    %1105 = arith.mulf %1097, %1077 : vector<1x48xf32>
    %1106 = arith.addf %1104, %1105 : vector<1x48xf32>
    %cst_358 = arith.constant dense<0.000000e+00> : vector<1x48xf32>
    %1107 = tpu.matmul %1106, %660, %cst_358 {dimension_numbers = #tpu.dot_dimension_numbers<[1], [0], [0], [1], [0, 0, 1, 1], [], []>} : vector<1x48xf32>, vector<48x48xf32>, vector<1x48xf32> -> vector<1x48xf32>
    %1108 = arith.addf %1107, %666 : vector<1x48xf32>
    %cst_359 = arith.constant dense<0.000000e+00> : vector<1x48xf32>
    %1109 = tpu.matmul %1106, %662, %cst_359 {dimension_numbers = #tpu.dot_dimension_numbers<[1], [0], [0], [1], [0, 0, 1, 1], [], []>} : vector<1x48xf32>, vector<48x48xf32>, vector<1x48xf32> -> vector<1x48xf32>
    %1110 = arith.addf %1109, %668 : vector<1x48xf32>
    %cst_360 = arith.constant dense<0.000000e+00> : vector<1x48xf32>
    %1111 = tpu.matmul %1106, %664, %cst_360 {dimension_numbers = #tpu.dot_dimension_numbers<[1], [0], [0], [1], [0, 0, 1, 1], [], []>} : vector<1x48xf32>, vector<48x48xf32>, vector<1x48xf32> -> vector<1x48xf32>
    %1112 = arith.addf %1111, %670 : vector<1x48xf32>
    %1113 = vector.extract_strided_slice %644 {offsets = [15, 0], sizes = [1, 48], strides = [1, 1]} : vector<16x48xf32> to vector<1x48xf32>
    %1114 = arith.addf %1113, %1108 : vector<1x48xf32>
    %1115 = arith.negf %1114 : vector<1x48xf32>
    %1116 = math.exp %1115 : vector<1x48xf32>
    %cst_361 = arith.constant 1.000000e+00 : f32
    %1117 = vector.broadcast %cst_361 : f32 to vector<1x48xf32>
    %1118 = arith.addf %1117, %1116 : vector<1x48xf32>
    %1119 = arith.divf %1117, %1118 : vector<1x48xf32>
    %1120 = vector.extract_strided_slice %651 {offsets = [15, 0], sizes = [1, 48], strides = [1, 1]} : vector<16x48xf32> to vector<1x48xf32>
    %1121 = arith.addf %1120, %1110 : vector<1x48xf32>
    %1122 = arith.negf %1121 : vector<1x48xf32>
    %1123 = math.exp %1122 : vector<1x48xf32>
    %cst_362 = arith.constant 1.000000e+00 : f32
    %1124 = vector.broadcast %cst_362 : f32 to vector<1x48xf32>
    %1125 = arith.addf %1124, %1123 : vector<1x48xf32>
    %1126 = arith.divf %1124, %1125 : vector<1x48xf32>
    %1127 = vector.extract_strided_slice %658 {offsets = [15, 0], sizes = [1, 48], strides = [1, 1]} : vector<16x48xf32> to vector<1x48xf32>
    %1128 = arith.mulf %1119, %1112 : vector<1x48xf32>
    %1129 = arith.addf %1127, %1128 : vector<1x48xf32>
    %1130 = math.tanh %1129 : vector<1x48xf32>
    %cst_363 = arith.constant 1.000000e+00 : f32
    %1131 = vector.broadcast %cst_363 : f32 to vector<1x48xf32>
    %1132 = arith.subf %1131, %1126 : vector<1x48xf32>
    %1133 = arith.mulf %1132, %1130 : vector<1x48xf32>
    %1134 = arith.mulf %1126, %1106 : vector<1x48xf32>
    %1135 = arith.addf %1133, %1134 : vector<1x48xf32>
    %c0_364 = arith.constant 0 : index
    %c0_365 = arith.constant 0 : index
    %1136 = vector.load %arg34[%c0_364, %c0_365] : memref<1x48xf32, #tpu.memory_space<vmem>>, vector<1x48xf32>
    tpu.vector_store %arg34[%c0_364, %c0_365], %1135 {strides = array<i32>} : memref<1x48xf32, #tpu.memory_space<vmem>>, vector<1x48xf32>,
    %1137 = tpu.concatenate %700, %729, %758, %787, %816, %845, %874, %903, %932, %961, %990, %1019, %1048, %1077, %1106, %1135 in 0 : vector<1x48xf32>, vector<1x48xf32>, vector<1x48xf32>, vector<1x48xf32>, vector<1x48xf32>, vector<1x48xf32>, vector<1x48xf32>, vector<1x48xf32>, vector<1x48xf32>, vector<1x48xf32>, vector<1x48xf32>, vector<1x48xf32>, vector<1x48xf32>, vector<1x48xf32>, vector<1x48xf32>, vector<1x48xf32> -> vector<16x48xf32>
    %c0_366 = arith.constant 0 : index
    %c0_367 = arith.constant 0 : index
    %1138 = vector.load %arg27[%c0_366, %c0_367] : memref<48x48xf32, #tpu.memory_space<vmem>>, vector<48x48xf32>
    %cst_368 = arith.constant dense<0.000000e+00> : vector<16x48xf32>
    %1139 = tpu.matmul %1137, %1138, %cst_368 {dimension_numbers = #tpu.dot_dimension_numbers<[1], [0], [0], [1], [0, 0, 1, 1], [], []>} : vector<16x48xf32>, vector<48x48xf32>, vector<16x48xf32> -> vector<16x48xf32>
    %c0_369 = arith.constant 0 : index
    %c0_370 = arith.constant 0 : index
    %1140 = vector.load %arg28[%c0_369, %c0_370] : memref<1x48xf32, #tpu.memory_space<vmem>>, vector<1x48xf32>
    %1141 = vector.broadcast %1140 : vector<1x48xf32> to vector<16x48xf32>
    %1142 = arith.addf %1139, %1141 : vector<16x48xf32>
    %1143 = arith.mulf %1137, %1142 : vector<16x48xf32>
    %c0_371 = arith.constant 0 : index
    %c0_372 = arith.constant 0 : index
    %1144 = vector.load %arg29[%c0_371, %c0_372] : memref<48x3xf32, #tpu.memory_space<vmem>>, vector<48x3xf32>
    %cst_373 = arith.constant dense<0.000000e+00> : vector<16x3xf32>
    %1145 = tpu.matmul %1143, %1144, %cst_373 {dimension_numbers = #tpu.dot_dimension_numbers<[1], [0], [0], [1], [0, 0, 1, 1], [], []>} : vector<16x48xf32>, vector<48x3xf32>, vector<16x3xf32> -> vector<16x3xf32>
    %1146 = math.tanh %1145 : vector<16x3xf32>
    %cst_374 = arith.constant dense<0xFF800000> : vector<16xf32>
    %1147 = vector.multi_reduction <maximumf>, %1146, %cst_374 [1] : vector<16x3xf32> to vector<16xf32>
    %1148 = vector.shape_cast %1147 : vector<16xf32> to vector<16x1xf32>
    %1149 = vector.broadcast %1148 : vector<16x1xf32> to vector<16x3xf32>
    %1150 = arith.subf %1146, %1149 : vector<16x3xf32>
    %1151 = math.exp %1150 : vector<16x3xf32>
    %cst_375 = arith.constant dense<0.000000e+00> : vector<16xf32>
    %1152 = vector.multi_reduction <add>, %1151, %cst_375 [1] : vector<16x3xf32> to vector<16xf32>
    %1153 = vector.shape_cast %1152 : vector<16xf32> to vector<16x1xf32>
    %1154 = tpu.reciprocal %1153 {approx = true} : vector<16x1xf32> -> vector<16x1xf32>
    %1155 = vector.broadcast %1154 : vector<16x1xf32> to vector<16x3xf32>
    %1156 = arith.mulf %1151, %1155 : vector<16x3xf32>
    %c0_376 = arith.constant 0 : index
    %c0_377 = arith.constant 0 : index
    %1157 = vector.load %arg30[%c0_376, %c0_377] : memref<3x48xf32, #tpu.memory_space<vmem>>, vector<3x48xf32>
    %cst_378 = arith.constant dense<0.000000e+00> : vector<16x48xf32>
    %1158 = tpu.matmul %1156, %1157, %cst_378 {dimension_numbers = #tpu.dot_dimension_numbers<[1], [0], [0], [1], [0, 0, 1, 1], [], []>} : vector<16x3xf32>, vector<3x48xf32>, vector<16x48xf32> -> vector<16x48xf32>
    %1159 = arith.mulf %1158, %1137 : vector<16x48xf32>
    %c0_379 = arith.constant 0 : index
    %c0_380 = arith.constant 0 : index
    %1160 = vector.load %arg31[%c0_379, %c0_380] : memref<48x48xf32, #tpu.memory_space<vmem>>, vector<48x48xf32>
    %cst_381 = arith.constant dense<0.000000e+00> : vector<16x48xf32>
    %1161 = tpu.matmul %1159, %1160, %cst_381 {dimension_numbers = #tpu.dot_dimension_numbers<[1], [0], [0], [1], [0, 0, 1, 1], [], []>} : vector<16x48xf32>, vector<48x48xf32>, vector<16x48xf32> -> vector<16x48xf32>
    %1162 = arith.addf %1137, %1161 : vector<16x48xf32>
    %1163 = arith.negf %1162 : vector<16x48xf32>
    %1164 = math.exp %1163 : vector<16x48xf32>
    %cst_382 = arith.constant 1.000000e+00 : f32
    %1165 = vector.broadcast %cst_382 : f32 to vector<16x48xf32>
    %1166 = arith.addf %1165, %1164 : vector<16x48xf32>
    %1167 = arith.divf %1165, %1166 : vector<16x48xf32>
    %c0_383 = arith.constant 0 : index
    %c0_384 = arith.constant 0 : index
    %1168 = vector.load %arg32[%c0_383, %c0_384] : memref<16x48xf32, #tpu.memory_space<vmem>>, vector<16x48xf32>
    tpu.vector_store %arg32[%c0_383, %c0_384], %1167 {strides = array<i32>} : memref<16x48xf32, #tpu.memory_space<vmem>>, vector<16x48xf32>,
    return
  }
}

</mosaic_0001>

<llo_original>
// kernel: anomuly_forward.1
$region0: #{anomuly_forward.1}
  #allocation0 [shape = 'u32[]', space=smem, size = 0x4, offset = 0x4, fixed_abs, tag = 'smem constant byte address 0x4 - core index']
  #allocation1 [shape = 'u32[144,128]{1,0:T(1,128)}', space=vmem, size = 0x12000, scoped, tag = 'internal scratch']
  %s0 = inlined_call_operand.smem [shape: u32[35], index: -1, kind: input, shape index: {}]
  %s1 = sld [smem:[%s0]]
  %s2 = scalar_lea.smem %s0, 1
  %s3 = sld [smem:[%s2]]
  %s4 = scalar_lea.smem %s0, 2
  %s5 = sld [smem:[%s4]]
  %s6 = scalar_lea.smem %s0, 3
  %s7 = sld [smem:[%s6]]
  %s8 = scalar_lea.smem %s0, 4
  %s9 = sld [smem:[%s8]]
  %s10 = scalar_lea.smem %s0, 5
  %s11 = sld [smem:[%s10]]
  %s12 = scalar_lea.smem %s0, 6
  %s13 = sld [smem:[%s12]]
  %s14 = scalar_lea.smem %s0, 7
  %s15 = sld [smem:[%s14]]
  %s16 = scalar_lea.smem %s0, 8
  %s17 = sld [smem:[%s16]]
  %s18 = scalar_lea.smem %s0, 9
  %s19 = sld [smem:[%s18]]
  %s20 = scalar_lea.smem %s0, 10
  %s21 = sld [smem:[%s20]]
  %s22 = scalar_lea.smem %s0, 11
  %s23 = sld [smem:[%s22]]
  %s24 = scalar_lea.smem %s0, 12
  %s25 = sld [smem:[%s24]]
  %s26 = scalar_lea.smem %s0, 13
  %s27 = sld [smem:[%s26]]
  %s28 = scalar_lea.smem %s0, 14
  %s29 = sld [smem:[%s28]]
  %s30 = scalar_lea.smem %s0, 15
  %s31 = sld [smem:[%s30]]
  %s32 = scalar_lea.smem %s0, 16
  %s33 = sld [smem:[%s32]]
  %s34 = scalar_lea.smem %s0, 17
  %s35 = sld [smem:[%s34]]
  %s36 = scalar_lea.smem %s0, 18
  %s37 = sld [smem:[%s36]]
  %s38 = scalar_lea.smem %s0, 19
  %s39 = sld [smem:[%s38]]
  %s40 = scalar_lea.smem %s0, 20
  %s41 = sld [smem:[%s40]]
  %s42 = scalar_lea.smem %s0, 21
  %s43 = sld [smem:[%s42]]
  %s44 = scalar_lea.smem %s0, 22
  %s45 = sld [smem:[%s44]]
  %s46 = scalar_lea.smem %s0, 23
  %s47 = sld [smem:[%s46]]
  %s48 = scalar_lea.smem %s0, 24
  %s49 = sld [smem:[%s48]]
  %s50 = scalar_lea.smem %s0, 25
  %s51 = sld [smem:[%s50]]
  %s52 = scalar_lea.smem %s0, 26
  %s53 = sld [smem:[%s52]]
  %s54 = scalar_lea.smem %s0, 27
  %s55 = sld [smem:[%s54]]
  %s56 = scalar_lea.smem %s0, 28
  %s57 = sld [smem:[%s56]]
  %s58 = scalar_lea.smem %s0, 29
  %s59 = sld [smem:[%s58]]
  %s60 = scalar_lea.smem %s0, 30
  %s61 = sld [smem:[%s60]]
  %s62 = scalar_lea.smem %s0, 31
  %s63 = sld [smem:[%s62]]
  %s64 = scalar_lea.smem %s0, 32
  %s65 = sld [smem:[%s64]]
  %s66 = scalar_lea.smem %s0, 33
  %s67 = sld [smem:[%s66]]
  %s68 = scalar_lea.smem %s0, 34
  %s69 = sld [smem:[%s68]]
  %70 = xla_tuple %s65, %s67, %s69
  %s71 = sld [smem:[#allocation0]]
  $region154: #{anomuly_forward.1} parent=0
    _
  %s73 = ssub.s32 1, %s71
  %s74 = scalar_select 0, %s73, %s71
  // Predicated region
  $region2: #{anomuly_forward.1} parent=0 // pred_check
    _
  $region3: #{anomuly_forward.1} parent=0 // pred_check_branch
    %76 = sbr.rel (0) target = $region5
  $region4: #{anomuly_forward.1} parent=0 // pred_region
    _
  $region5: #{anomuly_forward.1} parent=0 // pred_fallthru
    _
  // Predicated region
  $region6: #{anomuly_forward.1} parent=0 // pred_check
    _
  $region7: #{anomuly_forward.1} parent=0 // pred_check_branch
    %78 = sbr.rel (0) target = $region9
  $region8: #{anomuly_forward.1} parent=0 // pred_region
    _
  $region9: #{anomuly_forward.1} parent=0 // pred_fallthru
    _
  // Predicated region
  $region10: #{anomuly_forward.1} parent=0 // pred_check
    _
  $region11: #{anomuly_forward.1} parent=0 // pred_check_branch
    %80 = sbr.rel (0) target = $region13
  $region12: #{anomuly_forward.1} parent=0 // pred_region
    _
  $region13: #{anomuly_forward.1} parent=0 // pred_fallthru
    _
  // Predicated region
  $region14: #{anomuly_forward.1} parent=0 // pred_check
    _
  $region15: #{anomuly_forward.1} parent=0 // pred_check_branch
    %82 = sbr.rel (0) target = $region17
  $region16: #{anomuly_forward.1} parent=0 // pred_region
    _
  $region17: #{anomuly_forward.1} parent=0 // pred_fallthru
    _
  // Predicated region
  $region18: #{anomuly_forward.1} parent=0 // pred_check
    _
  $region19: #{anomuly_forward.1} parent=0 // pred_check_branch
    %84 = sbr.rel (0) target = $region21
  $region20: #{anomuly_forward.1} parent=0 // pred_region
    _
  $region21: #{anomuly_forward.1} parent=0 // pred_fallthru
    _
  // Predicated region
  $region22: #{anomuly_forward.1} parent=0 // pred_check
    _
  $region23: #{anomuly_forward.1} parent=0 // pred_check_branch
    %86 = sbr.rel (0) target = $region25
  $region24: #{anomuly_forward.1} parent=0 // pred_region
    _
  $region25: #{anomuly_forward.1} parent=0 // pred_fallthru
    _
  // Predicated region
  $region26: #{anomuly_forward.1} parent=0 // pred_check
    _
  $region27: #{anomuly_forward.1} parent=0 // pred_check_branch
    %88 = sbr.rel (0) target = $region29
  $region28: #{anomuly_forward.1} parent=0 // pred_region
    _
  $region29: #{anomuly_forward.1} parent=0 // pred_fallthru
    _
  // Predicated region
  $region30: #{anomuly_forward.1} parent=0 // pred_check
    _
  $region31: #{anomuly_forward.1} parent=0 // pred_check_branch
    %90 = sbr.rel (0) target = $region33
  $region32: #{anomuly_forward.1} parent=0 // pred_region
    _
  $region33: #{anomuly_forward.1} parent=0 // pred_fallthru
    _
  // Predicated region
  $region34: #{anomuly_forward.1} parent=0 // pred_check
    _
  $region35: #{anomuly_forward.1} parent=0 // pred_check_branch
    %92 = sbr.rel (0) target = $region37
  $region36: #{anomuly_forward.1} parent=0 // pred_region
    _
  $region37: #{anomuly_forward.1} parent=0 // pred_fallthru
    _
  // Predicated region
  $region38: #{anomuly_forward.1} parent=0 // pred_check
    _
  $region39: #{anomuly_forward.1} parent=0 // pred_check_branch
    %94 = sbr.rel (0) target = $region41
  $region40: #{anomuly_forward.1} parent=0 // pred_region
    _
  $region41: #{anomuly_forward.1} parent=0 // pred_fallthru
    _
  // Predicated region
  $region42: #{anomuly_forward.1} parent=0 // pred_check
    _
  $region43: #{anomuly_forward.1} parent=0 // pred_check_branch
    %96 = sbr.rel (0) target = $region45
  $region44: #{anomuly_forward.1} parent=0 // pred_region
    _
  $region45: #{anomuly_forward.1} parent=0 // pred_fallthru
    _
  // Predicated region
  $region46: #{anomuly_forward.1} parent=0 // pred_check
    _
  $region47: #{anomuly_forward.1} parent=0 // pred_check_branch
    %98 = sbr.rel (0) target = $region49
  $region48: #{anomuly_forward.1} parent=0 // pred_region
    _
  $region49: #{anomuly_forward.1} parent=0 // pred_fallthru
    _
  // Predicated region
  $region50: #{anomuly_forward.1} parent=0 // pred_check
    _
  $region51: #{anomuly_forward.1} parent=0 // pred_check_branch
    %100 = sbr.rel (0) target = $region53
  $region52: #{anomuly_forward.1} parent=0 // pred_region
    _
  $region53: #{anomuly_forward.1} parent=0 // pred_fallthru
    _
  // Predicated region
  $region54: #{anomuly_forward.1} parent=0 // pred_check
    _
  $region55: #{anomuly_forward.1} parent=0 // pred_check_branch
    %102 = sbr.rel (0) target = $region57
  $region56: #{anomuly_forward.1} parent=0 // pred_region
    _
  $region57: #{anomuly_forward.1} parent=0 // pred_fallthru
    _
  // Predicated region
  $region58: #{anomuly_forward.1} parent=0 // pred_check
    _
  $region59: #{anomuly_forward.1} parent=0 // pred_check_branch
    %104 = sbr.rel (0) target = $region61
  $region60: #{anomuly_forward.1} parent=0 // pred_region
    _
  $region61: #{anomuly_forward.1} parent=0 // pred_fallthru
    _
  // Predicated region
  $region62: #{anomuly_forward.1} parent=0 // pred_check
    _
  $region63: #{anomuly_forward.1} parent=0 // pred_check_branch
    %106 = sbr.rel (0) target = $region65
  $region64: #{anomuly_forward.1} parent=0 // pred_region
    _
  $region65: #{anomuly_forward.1} parent=0 // pred_fallthru
    _
  // Predicated region
  $region66: #{anomuly_forward.1} parent=0 // pred_check
    _
  $region67: #{anomuly_forward.1} parent=0 // pred_check_branch
    %108 = sbr.rel (0) target = $region69
  $region68: #{anomuly_forward.1} parent=0 // pred_region
    _
  $region69: #{anomuly_forward.1} parent=0 // pred_fallthru
    _
  // Predicated region
  $region70: #{anomuly_forward.1} parent=0 // pred_check
    _
  $region71: #{anomuly_forward.1} parent=0 // pred_check_branch
    %110 = sbr.rel (0) target = $region73
  $region72: #{anomuly_forward.1} parent=0 // pred_region
    _
  $region73: #{anomuly_forward.1} parent=0 // pred_fallthru
    _
  // Predicated region
  $region74: #{anomuly_forward.1} parent=0 // pred_check
    _
  $region75: #{anomuly_forward.1} parent=0 // pred_check_branch
    %112 = sbr.rel (0) target = $region77
  $region76: #{anomuly_forward.1} parent=0 // pred_region
    _
  $region77: #{anomuly_forward.1} parent=0 // pred_fallthru
    _
  // Predicated region
  $region78: #{anomuly_forward.1} parent=0 // pred_check
    _
  $region79: #{anomuly_forward.1} parent=0 // pred_check_branch
    %114 = sbr.rel (0) target = $region81
  $region80: #{anomuly_forward.1} parent=0 // pred_region
    _
  $region81: #{anomuly_forward.1} parent=0 // pred_fallthru
    _
  // Predicated region
  $region82: #{anomuly_forward.1} parent=0 // pred_check
    _
  $region83: #{anomuly_forward.1} parent=0 // pred_check_branch
    %116 = sbr.rel (0) target = $region85
  $region84: #{anomuly_forward.1} parent=0 // pred_region
    _
  $region85: #{anomuly_forward.1} parent=0 // pred_fallthru
    _
  // Predicated region
  $region86: #{anomuly_forward.1} parent=0 // pred_check
    _
  $region87: #{anomuly_forward.1} parent=0 // pred_check_branch
    %118 = sbr.rel (0) target = $region89
  $region88: #{anomuly_forward.1} parent=0 // pred_region
    _
  $region89: #{anomuly_forward.1} parent=0 // pred_fallthru
    _
  // Predicated region
  $region90: #{anomuly_forward.1} parent=0 // pred_check
    _
  $region91: #{anomuly_forward.1} parent=0 // pred_check_branch
    %120 = sbr.rel (0) target = $region93
  $region92: #{anomuly_forward.1} parent=0 // pred_region
    _
  $region93: #{anomuly_forward.1} parent=0 // pred_fallthru
    _
  // Predicated region
  $region94: #{anomuly_forward.1} parent=0 // pred_check
    _
  $region95: #{anomuly_forward.1} parent=0 // pred_check_branch
    %122 = sbr.rel (0) target = $region97
  $region96: #{anomuly_forward.1} parent=0 // pred_region
    _
  $region97: #{anomuly_forward.1} parent=0 // pred_fallthru
    _
  // Predicated region
  $region98: #{anomuly_forward.1} parent=0 // pred_check
    _
  $region99: #{anomuly_forward.1} parent=0 // pred_check_branch
    %124 = sbr.rel (0) target = $region101
  $region100: #{anomuly_forward.1} parent=0 // pred_region
    _
  $region101: #{anomuly_forward.1} parent=0 // pred_fallthru
    _
  // Predicated region
  $region102: #{anomuly_forward.1} parent=0 // pred_check
    _
  $region103: #{anomuly_forward.1} parent=0 // pred_check_branch
    %126 = sbr.rel (0) target = $region105
  $region104: #{anomuly_forward.1} parent=0 // pred_region
    _
  $region105: #{anomuly_forward.1} parent=0 // pred_fallthru
    _
  // Predicated region
  $region106: #{anomuly_forward.1} parent=0 // pred_check
    _
  $region107: #{anomuly_forward.1} parent=0 // pred_check_branch
    %128 = sbr.rel (0) target = $region109
  $region108: #{anomuly_forward.1} parent=0 // pred_region
    _
  $region109: #{anomuly_forward.1} parent=0 // pred_fallthru
    _
  // Predicated region
  $region110: #{anomuly_forward.1} parent=0 // pred_check
    _
  $region111: #{anomuly_forward.1} parent=0 // pred_check_branch
    %130 = sbr.rel (0) target = $region113
  $region112: #{anomuly_forward.1} parent=0 // pred_region
    _
  $region113: #{anomuly_forward.1} parent=0 // pred_fallthru
    _
  // Predicated region
  $region114: #{anomuly_forward.1} parent=0 // pred_check
    _
  $region115: #{anomuly_forward.1} parent=0 // pred_check_branch
    %132 = sbr.rel (0) target = $region117
  $region116: #{anomuly_forward.1} parent=0 // pred_region
    _
  $region117: #{anomuly_forward.1} parent=0 // pred_fallthru
    _
  // Predicated region
  $region118: #{anomuly_forward.1} parent=0 // pred_check
    _
  $region119: #{anomuly_forward.1} parent=0 // pred_check_branch
    %134 = sbr.rel (0) target = $region121
  $region120: #{anomuly_forward.1} parent=0 // pred_region
    _
  $region121: #{anomuly_forward.1} parent=0 // pred_fallthru
    _
  // Predicated region
  $region122: #{anomuly_forward.1} parent=0 // pred_check
    _
  $region123: #{anomuly_forward.1} parent=0 // pred_check_branch
    %136 = sbr.rel (0) target = $region125
  $region124: #{anomuly_forward.1} parent=0 // pred_region
    _
  $region125: #{anomuly_forward.1} parent=0 // pred_fallthru
    _
  // Predicated region
  $region126: #{anomuly_forward.1} parent=0 // pred_check
    _
  $region127: #{anomuly_forward.1} parent=0 // pred_check_branch
    %138 = sbr.rel (0) target = $region129
  $region128: #{anomuly_forward.1} parent=0 // pred_region
    _
  $region129: #{anomuly_forward.1} parent=0 // pred_fallthru
    _
  %v139 = vld [vmem:[%s3] sm:$0xff]
  %v140 = vld [vmem:[%s3 + $0x8] sm:$0xff]
  %v141 = vld [vmem:[%s5] sm:$0xff]
  %v142 = vld [vmem:[%s5 + $0x8] sm:$0xff]
  %v143 = vld [vmem:[%s5 + $0x10] sm:$0xff]
  %vm144 = vcmask 195584
  %v146 = vsel %vm144, %v139, 0
  %v149 = vsel %vm144, %v140, 0
  %151 = vmatprep.subr.mxu0 0.0
  %152 = vmatpush1.msra.mxu0 0.0
  %153 = vmatprep.subr.mxu0 0.0
  %154 = vmatpush1.msra.mxu0 0.0
  %155 = vmatprep.subr.mxu0 0.0
  %156 = vmatpush1.msra.mxu0 0.0
  %157 = vmatprep.subr.mxu0 0.0
  %158 = vmatpush1.msra.mxu0 0.0
  %159 = vmatprep.subr.mxu0 0.0
  %160 = vmatpush1.msra.mxu0 0.0
  %161 = vmatprep.subr.mxu0 0.0
  %162 = vmatpush1.msra.mxu0 0.0
  %163 = vmatprep.subr.mxu0 0.0
  %164 = vmatpush1.msra.mxu0 0.0
  %165 = vmatprep.subr.mxu0 0.0
  %166 = vmatpush1.msra.mxu0 0.0
  %167 = vmatprep.subr.mxu0 0.0
  %168 = vmatpush1.msra.mxu0 0.0
  %169 = vmatprep.subr.mxu0 0.0
  %170 = vmatpush1.msra.mxu0 0.0
  %171 = vmatprep.subr.mxu0 0.0
  %172 = vmatpush1.msra.mxu0 0.0
  %173 = vmatprep.subr.mxu0 0.0
  %174 = vmatpush1.msra.mxu0 0.0
  %175 = vmatprep.subr.mxu0 0.0
  %176 = vmatpush1.msra.mxu0 0.0
  %177 = vmatprep.subr.mxu0 0.0
  %178 = vmatpush1.msra.mxu0 %v143
  %179 = vmatprep.subr.mxu0 0.0
  %180 = vmatpush1.msra.mxu0 %v142
  %181 = vmatprep.subr.mxu0 0.0
  %182 = vmatpush1.msra.mxu0 %v141
  %183 = vmatprep.subr.mxu0 0.0
  %184 = vmatpush2.msra.mxu0 0.0
  %185 = vmatprep.subr.mxu0 0.0
  %186 = vmatpush2.msra.mxu0 0.0
  %187 = vmatprep.subr.mxu0 0.0
  %188 = vmatpush2.msra.mxu0 0.0
  %189 = vmatprep.subr.mxu0 0.0
  %190 = vmatpush2.msra.mxu0 0.0
  %191 = vmatprep.subr.mxu0 0.0
  %192 = vmatpush2.msra.mxu0 0.0
  %193 = vmatprep.subr.mxu0 0.0
  %194 = vmatpush2.msra.mxu0 0.0
  %195 = vmatprep.subr.mxu0 0.0
  %196 = vmatpush2.msra.mxu0 0.0
  %197 = vmatprep.subr.mxu0 0.0
  %198 = vmatpush2.msra.mxu0 0.0
  %199 = vmatprep.subr.mxu0 0.0
  %200 = vmatpush2.msra.mxu0 0.0
  %201 = vmatprep.subr.mxu0 0.0
  %202 = vmatpush2.msra.mxu0 0.0
  %203 = vmatprep.subr.mxu0 0.0
  %204 = vmatpush2.msra.mxu0 0.0
  %205 = vmatprep.subr.mxu0 0.0
  %206 = vmatpush2.msra.mxu0 0.0
  %207 = vmatprep.subr.mxu0 0.0
  %208 = vmatpush2.msra.mxu0 0.0
  %209 = vmatprep.subr.mxu0 0.0
  %210 = vmatpush2.msra.mxu0 0.0
  %211 = vmatprep.subr.mxu0 0.0
  %212 = vmatpush2.msra.mxu0 0.0
  %213 = vmatprep.subr.mxu0 0.0
  %214 = vmatpush2.msra.mxu0 0.0
  %215 = vmatprep.mubr.f32.mxu0 0.0
  %216 = vmatmul.mubr.f32.gmra.mxu0 %v146
  %v217 = vpop.f32.mrf.mxu0
  %v218 = vadd.f32 0.0, %v217
  %v219 = vpop.f32.mrf.mxu0
  %220 = vmatprep.mubr.f32.mxu0 0.0
  %221 = vmatmul.mubr.f32.gmra.mxu0 %v149
  %v222 = vpop.f32.mrf.mxu0
  %v223 = vadd.f32 0.0, %v222
  %v224 = vpop.f32.mrf.mxu0
  %225 = vdwg.mxu0
  %v226 = vld [vmem:[%s1] sm:$0xff]
  %v227 = vld [vmem:[%s1 + $0x8] sm:$0xff]
  %v228 = vld [vmem:[%s13] sm:$0x1]
  %v230 = vlaneseq
  %v231 = vshrl.u32 %v230, 7
  %v232 = vsub.s32 0, %v231
  %v233 = vrot.slane %v228, %v232
  %v235 = vmul.f32 %v218, %v233
  %v236 = vmul.f32 %v223, %v233
  %s237 = scalar_lea.vmem %s1, 16
  %v238 = vld [vmem:[%s237] sm:$0xff]
  %v239 = vld [vmem:[%s237 + $0x8] sm:$0xff]
  %s240 = scalar_lea.vmem %s13, 1
  %v241 = vld [vmem:[%s240] sm:$0x1]
  %v243 = vlaneseq
  %v244 = vshrl.u32 %v243, 7
  %v245 = vsub.s32 0, %v244
  %v246 = vrot.slane %v241, %v245
  %v248 = vmul.f32 %v218, %v246
  %v249 = vmul.f32 %v223, %v246
  %vm250 = vcmask 130048
  %v252 = vsel %vm250, %v238, 0
  %v255 = vsel %vm250, %v239, 0
  %257 = vmatprep.subr.mxu0 0.0
  %258 = vmatpush1.msra.mxu0 0.0
  %259 = vmatprep.subr.mxu0 0.0
  %260 = vmatpush1.msra.mxu0 0.0
  %261 = vmatprep.subr.mxu0 0.0
  %262 = vmatpush1.msra.mxu0 0.0
  %263 = vmatprep.subr.mxu0 0.0
  %264 = vmatpush1.msra.mxu0 0.0
  %265 = vmatprep.subr.mxu0 0.0
  %266 = vmatpush1.msra.mxu0 0.0
  %267 = vmatprep.subr.mxu0 0.0
  %268 = vmatpush1.msra.mxu0 0.0
  %269 = vmatprep.subr.mxu0 0.0
  %270 = vmatpush1.msra.mxu0 0.0
  %271 = vmatprep.subr.mxu0 0.0
  %272 = vmatpush1.msra.mxu0 0.0
  %273 = vmatprep.subr.mxu0 0.0
  %274 = vmatpush1.msra.mxu0 0.0
  %275 = vmatprep.subr.mxu0 0.0
  %276 = vmatpush1.msra.mxu0 0.0
  %277 = vmatprep.subr.mxu0 0.0
  %278 = vmatpush1.msra.mxu0 0.0
  %279 = vmatprep.subr.mxu0 0.0
  %280 = vmatpush1.msra.mxu0 0.0
  %281 = vmatprep.subr.mxu0 0.0
  %282 = vmatpush1.msra.mxu0 0.0
  %283 = vmatprep.subr.mxu0 0.0
  %284 = vmatpush1.msra.mxu0 0.0
  %285 = vmatprep.subr.mxu0 0.0
  %286 = vmatpush1.msra.mxu0 %v249
  %287 = vmatprep.subr.mxu0 0.0
  %288 = vmatpush1.msra.mxu0 %v248
  %289 = vmatprep.subr.mxu0 0.0
  %290 = vmatpush2.msra.mxu0 0.0
  %291 = vmatprep.subr.mxu0 0.0
  %292 = vmatpush2.msra.mxu0 0.0
  %293 = vmatprep.subr.mxu0 0.0
  %294 = vmatpush2.msra.mxu0 0.0
  %295 = vmatprep.subr.mxu0 0.0
  %296 = vmatpush2.msra.mxu0 0.0
  %297 = vmatprep.subr.mxu0 0.0
  %298 = vmatpush2.msra.mxu0 0.0
  %299 = vmatprep.subr.mxu0 0.0
  %300 = vmatpush2.msra.mxu0 0.0
  %301 = vmatprep.subr.mxu0 0.0
  %302 = vmatpush2.msra.mxu0 0.0
  %303 = vmatprep.subr.mxu0 0.0
  %304 = vmatpush2.msra.mxu0 0.0
  %305 = vmatprep.subr.mxu0 0.0
  %306 = vmatpush2.msra.mxu0 0.0
  %307 = vmatprep.subr.mxu0 0.0
  %308 = vmatpush2.msra.mxu0 0.0
  %309 = vmatprep.subr.mxu0 0.0
  %310 = vmatpush2.msra.mxu0 0.0
  %311 = vmatprep.subr.mxu0 0.0
  %312 = vmatpush2.msra.mxu0 0.0
  %313 = vmatprep.subr.mxu0 0.0
  %314 = vmatpush2.msra.mxu0 0.0
  %315 = vmatprep.subr.mxu0 0.0
  %316 = vmatpush2.msra.mxu0 0.0
  %317 = vmatprep.subr.mxu0 0.0
  %318 = vmatpush2.msra.mxu0 0.0
  %319 = vmatprep.subr.mxu0 0.0
  %320 = vmatpush2.msra.mxu0 0.0
  %321 = vmatprep.mubr.f32.mxu0 0.0
  %322 = vmatmul.mubr.f32.gmra.mxu0 %v252
  %v323 = vpop.f32.mrf.mxu0
  %v324 = vadd.f32 0.0, %v323
  %v325 = vpop.f32.mrf.mxu0
  %326 = vmatprep.mubr.f32.mxu0 0.0
  %327 = vmatmul.mubr.f32.gmra.mxu0 %v255
  %v328 = vpop.f32.mrf.mxu0
  %v329 = vadd.f32 0.0, %v328
  %v330 = vpop.f32.mrf.mxu0
  %331 = vdwg.mxu0
  %v333 = vsel %vm250, %v226, 0
  %v336 = vsel %vm250, %v227, 0
  %338 = vmatprep.subr.mxu0 0.0
  %339 = vmatpush1.msra.mxu0 0.0
  %340 = vmatprep.subr.mxu0 0.0
  %341 = vmatpush1.msra.mxu0 0.0
  %342 = vmatprep.subr.mxu0 0.0
  %343 = vmatpush1.msra.mxu0 0.0
  %344 = vmatprep.subr.mxu0 0.0
  %345 = vmatpush1.msra.mxu0 0.0
  %346 = vmatprep.subr.mxu0 0.0
  %347 = vmatpush1.msra.mxu0 0.0
  %348 = vmatprep.subr.mxu0 0.0
  %349 = vmatpush1.msra.mxu0 0.0
  %350 = vmatprep.subr.mxu0 0.0
  %351 = vmatpush1.msra.mxu0 0.0
  %352 = vmatprep.subr.mxu0 0.0
  %353 = vmatpush1.msra.mxu0 0.0
  %354 = vmatprep.subr.mxu0 0.0
  %355 = vmatpush1.msra.mxu0 0.0
  %356 = vmatprep.subr.mxu0 0.0
  %357 = vmatpush1.msra.mxu0 0.0
  %358 = vmatprep.subr.mxu0 0.0
  %359 = vmatpush1.msra.mxu0 0.0
  %360 = vmatprep.subr.mxu0 0.0
  %361 = vmatpush1.msra.mxu0 0.0
  %362 = vmatprep.subr.mxu0 0.0
  %363 = vmatpush1.msra.mxu0 0.0
  %364 = vmatprep.subr.mxu0 0.0
  %365 = vmatpush1.msra.mxu0 0.0
  %366 = vmatprep.subr.mxu0 0.0
  %367 = vmatpush1.msra.mxu0 %v236
  %368 = vmatprep.subr.mxu0 0.0
  %369 = vmatpush1.msra.mxu0 %v235
  %370 = vmatprep.subr.mxu0 0.0
  %371 = vmatpush2.msra.mxu0 0.0
  %372 = vmatprep.subr.mxu0 0.0
  %373 = vmatpush2.msra.mxu0 0.0
  %374 = vmatprep.subr.mxu0 0.0
  %375 = vmatpush2.msra.mxu0 0.0
  %376 = vmatprep.subr.mxu0 0.0
  %377 = vmatpush2.msra.mxu0 0.0
  %378 = vmatprep.subr.mxu0 0.0
  %379 = vmatpush2.msra.mxu0 0.0
  %380 = vmatprep.subr.mxu0 0.0
  %381 = vmatpush2.msra.mxu0 0.0
  %382 = vmatprep.subr.mxu0 0.0
  %383 = vmatpush2.msra.mxu0 0.0
  %384 = vmatprep.subr.mxu0 0.0
  %385 = vmatpush2.msra.mxu0 0.0
  %386 = vmatprep.subr.mxu0 0.0
  %387 = vmatpush2.msra.mxu0 0.0
  %388 = vmatprep.subr.mxu0 0.0
  %389 = vmatpush2.msra.mxu0 0.0
  %390 = vmatprep.subr.mxu0 0.0
  %391 = vmatpush2.msra.mxu0 0.0
  %392 = vmatprep.subr.mxu0 0.0
  %393 = vmatpush2.msra.mxu0 0.0
  %394 = vmatprep.subr.mxu0 0.0
  %395 = vmatpush2.msra.mxu0 0.0
  %396 = vmatprep.subr.mxu0 0.0
  %397 = vmatpush2.msra.mxu0 0.0
  %398 = vmatprep.subr.mxu0 0.0
  %399 = vmatpush2.msra.mxu0 0.0
  %400 = vmatprep.subr.mxu0 0.0
  %401 = vmatpush2.msra.mxu0 0.0
  %402 = vmatprep.mubr.f32.mxu0 0.0
  %403 = vmatmul.mubr.f32.gmra.mxu0 %v333
  %v404 = vpop.f32.mrf.mxu0
  %v405 = vadd.f32 %v324, %v404
  %v406 = vpop.f32.mrf.mxu0
  %407 = vmatprep.mubr.f32.mxu0 0.0
  %408 = vmatmul.mubr.f32.gmra.mxu0 %v336
  %v409 = vpop.f32.mrf.mxu0
  %v410 = vadd.f32 %v329, %v409
  %v411 = vpop.f32.mrf.mxu0
  %412 = vdwg.mxu0
  %s413 = scalar_lea.vmem %s1, 32
  %v414 = vld [vmem:[%s413] sm:$0xff]
  %v415 = vld [vmem:[%s413 + $0x8] sm:$0xff]
  %s416 = scalar_lea.vmem %s13, 2
  %v417 = vld [vmem:[%s416] sm:$0x1]
  %v419 = vlaneseq
  %v420 = vshrl.u32 %v419, 7
  %v421 = vsub.s32 0, %v420
  %v422 = vrot.slane %v417, %v421
  %v424 = vmul.f32 %v218, %v422
  %v425 = vmul.f32 %v223, %v422
  %v427 = vsel %vm250, %v414, 0
  %v430 = vsel %vm250, %v415, 0
  %432 = vmatprep.subr.mxu0 0.0
  %433 = vmatpush1.msra.mxu0 0.0
  %434 = vmatprep.subr.mxu0 0.0
  %435 = vmatpush1.msra.mxu0 0.0
  %436 = vmatprep.subr.mxu0 0.0
  %437 = vmatpush1.msra.mxu0 0.0
  %438 = vmatprep.subr.mxu0 0.0
  %439 = vmatpush1.msra.mxu0 0.0
  %440 = vmatprep.subr.mxu0 0.0
  %441 = vmatpush1.msra.mxu0 0.0
  %442 = vmatprep.subr.mxu0 0.0
  %443 = vmatpush1.msra.mxu0 0.0
  %444 = vmatprep.subr.mxu0 0.0
  %445 = vmatpush1.msra.mxu0 0.0
  %446 = vmatprep.subr.mxu0 0.0
  %447 = vmatpush1.msra.mxu0 0.0
  %448 = vmatprep.subr.mxu0 0.0
  %449 = vmatpush1.msra.mxu0 0.0
  %450 = vmatprep.subr.mxu0 0.0
  %451 = vmatpush1.msra.mxu0 0.0
  %452 = vmatprep.subr.mxu0 0.0
  %453 = vmatpush1.msra.mxu0 0.0
  %454 = vmatprep.subr.mxu0 0.0
  %455 = vmatpush1.msra.mxu0 0.0
  %456 = vmatprep.subr.mxu0 0.0
  %457 = vmatpush1.msra.mxu0 0.0
  %458 = vmatprep.subr.mxu0 0.0
  %459 = vmatpush1.msra.mxu0 0.0
  %460 = vmatprep.subr.mxu0 0.0
  %461 = vmatpush1.msra.mxu0 %v425
  %462 = vmatprep.subr.mxu0 0.0
  %463 = vmatpush1.msra.mxu0 %v424
  %464 = vmatprep.subr.mxu0 0.0
  %465 = vmatpush2.msra.mxu0 0.0
  %466 = vmatprep.subr.mxu0 0.0
  %467 = vmatpush2.msra.mxu0 0.0
  %468 = vmatprep.subr.mxu0 0.0
  %469 = vmatpush2.msra.mxu0 0.0
  %470 = vmatprep.subr.mxu0 0.0
  %471 = vmatpush2.msra.mxu0 0.0
  %472 = vmatprep.subr.mxu0 0.0
  %473 = vmatpush2.msra.mxu0 0.0
  %474 = vmatprep.subr.mxu0 0.0
  %475 = vmatpush2.msra.mxu0 0.0
  %476 = vmatprep.subr.mxu0 0.0
  %477 = vmatpush2.msra.mxu0 0.0
  %478 = vmatprep.subr.mxu0 0.0
  %479 = vmatpush2.msra.mxu0 0.0
  %480 = vmatprep.subr.mxu0 0.0
  %481 = vmatpush2.msra.mxu0 0.0
  %482 = vmatprep.subr.mxu0 0.0
  %483 = vmatpush2.msra.mxu0 0.0
  %484 = vmatprep.subr.mxu0 0.0
  %485 = vmatpush2.msra.mxu0 0.0
  %486 = vmatprep.subr.mxu0 0.0
  %487 = vmatpush2.msra.mxu0 0.0
  %488 = vmatprep.subr.mxu0 0.0
  %489 = vmatpush2.msra.mxu0 0.0
  %490 = vmatprep.subr.mxu0 0.0
  %491 = vmatpush2.msra.mxu0 0.0
  %492 = vmatprep.subr.mxu0 0.0
  %493 = vmatpush2.msra.mxu0 0.0
  %494 = vmatprep.subr.mxu0 0.0
  %495 = vmatpush2.msra.mxu0 0.0
  %496 = vmatprep.mubr.f32.mxu0 0.0
  %497 = vmatmul.mubr.f32.gmra.mxu0 %v427
  %v498 = vpop.f32.mrf.mxu0
  %v499 = vadd.f32 0.0, %v498
  %v500 = vpop.f32.mrf.mxu0
  %501 = vmatprep.mubr.f32.mxu0 0.0
  %502 = vmatmul.mubr.f32.gmra.mxu0 %v430
  %v503 = vpop.f32.mrf.mxu0
  %v504 = vadd.f32 0.0, %v503
  %v505 = vpop.f32.mrf.mxu0
  %506 = vdwg.mxu0
  %v507 = vadd.f32 %v405, %v499
  %v508 = vadd.f32 %v410, %v504
  %v509 = vld [vmem:[%s7] sm:$0x1]
  %v511 = vlaneseq
  %v512 = vshrl.u32 %v511, 7
  %v513 = vsub.s32 0, %v512
  %v514 = vrot.slane %v509, %v513
  %v516 = vadd.f32 %v507, %v514
  %v517 = vadd.f32 %v508, %v514
  %vm518 = vcmask 392192
  %v519 = vsel %vm518, %v516, 0.0
  %v520 = vsel %vm518, %v517, 0.0
  %v521 = vadd.f32 %v519, %v520
  %v522 = vrot.slane %v521, 4
  %v523 = vadd.f32 %v521, %v522
  %v524 = vrot.slane %v523, 2
  %v525 = vadd.f32 %v523, %v524
  %v526 = vrot.slane %v525, 1
  %v527 = vadd.f32 %v525, %v526
  %v528 = vrcp.pop 16.0
  %v529 = vmul.f32 %v527, %v528
  %v530 = vmul.f32 %v516, %v516
  %v531 = vmul.f32 %v517, %v517
  %v532 = vsel %vm518, %v530, 0.0
  %v533 = vsel %vm518, %v531, 0.0
  %v534 = vadd.f32 %v532, %v533
  %v535 = vrot.slane %v534, 4
  %v536 = vadd.f32 %v534, %v535
  %v537 = vrot.slane %v536, 2
  %v538 = vadd.f32 %v536, %v537
  %v539 = vrot.slane %v538, 1
  %v540 = vadd.f32 %v538, %v539
  %v541 = vmul.f32 %v540, %v528
  %v542 = vmul.f32 %v529, %v529
  %v543 = vsub.f32 %v541, %v542
  %v544 = vsub.f32 %v516, %v529
  %v545 = vsub.f32 %v517, %v529
  %v546 = vadd.f32 %v543, 1e-05
  %v547 = vrsqrt.pop %v546
  %v548 = vmul.f32 %v544, %v547
  %v549 = vmul.f32 %v545, %v547
  %v550 = vld [vmem:[%s9] sm:$0x1]
  %v552 = vlaneseq
  %v553 = vshrl.u32 %v552, 7
  %v554 = vsub.s32 0, %v553
  %v555 = vrot.slane %v550, %v554
  %v557 = vmul.f32 %v548, %v555
  %v558 = vmul.f32 %v549, %v555
  %v559 = vld [vmem:[%s11] sm:$0x1]
  %v561 = vlaneseq
  %v562 = vshrl.u32 %v561, 7
  %v563 = vsub.s32 0, %v562
  %v564 = vrot.slane %v559, %v563
  %v566 = vadd.f32 %v557, %v564
  %v567 = vadd.f32 %v558, %v564
  %v568 = vmax.f32 %v566, 0.0
  %v569 = vmax.f32 %v567, 0.0
  %v570 = vld [vmem:[%s17] sm:$0xff]
  %v571 = vld [vmem:[%s17 + $0x8] sm:$0xff]
  %v572 = vld [vmem:[%s17 + $0x10] sm:$0xff]
  %v573 = vld [vmem:[%s17 + $0x18] sm:$0xff]
  %v574 = vld [vmem:[%s17 + $0x20] sm:$0xff]
  %v575 = vld [vmem:[%s17 + $0x28] sm:$0xff]
  %v576 = vld [vmem:[%s19] sm:$0x1]
  %v578 = vlaneseq
  %v579 = vshrl.u32 %v578, 7
  %v580 = vsub.s32 0, %v579
  %v581 = vrot.slane %v576, %v580
  %v584 = vsel %vm518, %v568, 0
  %v587 = vsel %vm518, %v569, 0
  %589 = vmatprep.subr.mxu0 0.0
  %590 = vmatpush1.msra.mxu0 0.0
  %591 = vmatprep.subr.mxu0 0.0
  %592 = vmatpush1.msra.mxu0 0.0
  %593 = vmatprep.subr.mxu0 0.0
  %594 = vmatpush1.msra.mxu0 0.0
  %595 = vmatprep.subr.mxu0 0.0
  %596 = vmatpush1.msra.mxu0 0.0
  %597 = vmatprep.subr.mxu0 0.0
  %598 = vmatpush1.msra.mxu0 0.0
  %599 = vmatprep.subr.mxu0 0.0
  %600 = vmatpush1.msra.mxu0 0.0
  %601 = vmatprep.subr.mxu0 0.0
  %602 = vmatpush1.msra.mxu0 0.0
  %603 = vmatprep.subr.mxu0 0.0
  %604 = vmatpush1.msra.mxu0 0.0
  %605 = vmatprep.subr.mxu0 0.0
  %606 = vmatpush1.msra.mxu0 0.0
  %607 = vmatprep.subr.mxu0 0.0
  %608 = vmatpush1.msra.mxu0 0.0
  %609 = vmatprep.subr.mxu0 0.0
  %610 = vmatpush1.msra.mxu0 %v575
  %611 = vmatprep.subr.mxu0 0.0
  %612 = vmatpush1.msra.mxu0 %v574
  %613 = vmatprep.subr.mxu0 0.0
  %614 = vmatpush1.msra.mxu0 %v573
  %615 = vmatprep.subr.mxu0 0.0
  %616 = vmatpush1.msra.mxu0 %v572
  %617 = vmatprep.subr.mxu0 0.0
  %618 = vmatpush1.msra.mxu0 %v571
  %619 = vmatprep.subr.mxu0 0.0
  %620 = vmatpush1.msra.mxu0 %v570
  %621 = vmatprep.subr.mxu0 0.0
  %622 = vmatpush2.msra.mxu0 0.0
  %623 = vmatprep.subr.mxu0 0.0
  %624 = vmatpush2.msra.mxu0 0.0
  %625 = vmatprep.subr.mxu0 0.0
  %626 = vmatpush2.msra.mxu0 0.0
  %627 = vmatprep.subr.mxu0 0.0
  %628 = vmatpush2.msra.mxu0 0.0
  %629 = vmatprep.subr.mxu0 0.0
  %630 = vmatpush2.msra.mxu0 0.0
  %631 = vmatprep.subr.mxu0 0.0
  %632 = vmatpush2.msra.mxu0 0.0
  %633 = vmatprep.subr.mxu0 0.0
  %634 = vmatpush2.msra.mxu0 0.0
  %635 = vmatprep.subr.mxu0 0.0
  %636 = vmatpush2.msra.mxu0 0.0
  %637 = vmatprep.subr.mxu0 0.0
  %638 = vmatpush2.msra.mxu0 0.0
  %639 = vmatprep.subr.mxu0 0.0
  %640 = vmatpush2.msra.mxu0 0.0
  %641 = vmatprep.subr.mxu0 0.0
  %642 = vmatpush2.msra.mxu0 0.0
  %643 = vmatprep.subr.mxu0 0.0
  %644 = vmatpush2.msra.mxu0 0.0
  %645 = vmatprep.subr.mxu0 0.0
  %646 = vmatpush2.msra.mxu0 0.0
  %647 = vmatprep.subr.mxu0 0.0
  %648 = vmatpush2.msra.mxu0 0.0
  %649 = vmatprep.subr.mxu0 0.0
  %650 = vmatpush2.msra.mxu0 0.0
  %651 = vmatprep.subr.mxu0 0.0
  %652 = vmatpush2.msra.mxu0 0.0
  %653 = vmatprep.mubr.f32.mxu0 0.0
  %654 = vmatmul.mubr.f32.gmra.mxu0 %v584
  %v655 = vpop.f32.mrf.mxu0
  %v656 = vadd.f32 %v581, %v655
  %v657 = vpop.f32.mrf.mxu0
  %658 = vmatprep.mubr.f32.mxu0 0.0
  %659 = vmatmul.mubr.f32.gmra.mxu0 %v587
  %v660 = vpop.f32.mrf.mxu0
  %v661 = vadd.f32 %v581, %v660
  %v662 = vpop.f32.mrf.mxu0
  %663 = vdwg.mxu0
  %s664 = scalar_lea.vmem %s17, 48
  %v665 = vld [vmem:[%s664] sm:$0xff]
  %v666 = vld [vmem:[%s664 + $0x8] sm:$0xff]
  %v667 = vld [vmem:[%s664 + $0x10] sm:$0xff]
  %v668 = vld [vmem:[%s664 + $0x18] sm:$0xff]
  %v669 = vld [vmem:[%s664 + $0x20] sm:$0xff]
  %v670 = vld [vmem:[%s664 + $0x28] sm:$0xff]
  %s671 = scalar_lea.vmem %s19, 1
  %v672 = vld [vmem:[%s671] sm:$0x1]
  %v674 = vlaneseq
  %v675 = vshrl.u32 %v674, 7
  %v676 = vsub.s32 0, %v675
  %v677 = vrot.slane %v672, %v676
  %679 = vmatprep.subr.mxu0 0.0
  %680 = vmatpush1.msra.mxu0 0.0
  %681 = vmatprep.subr.mxu0 0.0
  %682 = vmatpush1.msra.mxu0 0.0
  %683 = vmatprep.subr.mxu0 0.0
  %684 = vmatpush1.msra.mxu0 0.0
  %685 = vmatprep.subr.mxu0 0.0
  %686 = vmatpush1.msra.mxu0 0.0
  %687 = vmatprep.subr.mxu0 0.0
  %688 = vmatpush1.msra.mxu0 0.0
  %689 = vmatprep.subr.mxu0 0.0
  %690 = vmatpush1.msra.mxu0 0.0
  %691 = vmatprep.subr.mxu0 0.0
  %692 = vmatpush1.msra.mxu0 0.0
  %693 = vmatprep.subr.mxu0 0.0
  %694 = vmatpush1.msra.mxu0 0.0
  %695 = vmatprep.subr.mxu0 0.0
  %696 = vmatpush1.msra.mxu0 0.0
  %697 = vmatprep.subr.mxu0 0.0
  %698 = vmatpush1.msra.mxu0 0.0
  %699 = vmatprep.subr.mxu0 0.0
  %700 = vmatpush1.msra.mxu0 %v670
  %701 = vmatprep.subr.mxu0 0.0
  %702 = vmatpush1.msra.mxu0 %v669
  %703 = vmatprep.subr.mxu0 0.0
  %704 = vmatpush1.msra.mxu0 %v668
  %705 = vmatprep.subr.mxu0 0.0
  %706 = vmatpush1.msra.mxu0 %v667
  %707 = vmatprep.subr.mxu0 0.0
  %708 = vmatpush1.msra.mxu0 %v666
  %709 = vmatprep.subr.mxu0 0.0
  %710 = vmatpush1.msra.mxu0 %v665
  %711 = vmatprep.subr.mxu0 0.0
  %712 = vmatpush2.msra.mxu0 0.0
  %713 = vmatprep.subr.mxu0 0.0
  %714 = vmatpush2.msra.mxu0 0.0
  %715 = vmatprep.subr.mxu0 0.0
  %716 = vmatpush2.msra.mxu0 0.0
  %717 = vmatprep.subr.mxu0 0.0
  %718 = vmatpush2.msra.mxu0 0.0
  %719 = vmatprep.subr.mxu0 0.0
  %720 = vmatpush2.msra.mxu0 0.0
  %721 = vmatprep.subr.mxu0 0.0
  %722 = vmatpush2.msra.mxu0 0.0
  %723 = vmatprep.subr.mxu0 0.0
  %724 = vmatpush2.msra.mxu0 0.0
  %725 = vmatprep.subr.mxu0 0.0
  %726 = vmatpush2.msra.mxu0 0.0
  %727 = vmatprep.subr.mxu0 0.0
  %728 = vmatpush2.msra.mxu0 0.0
  %729 = vmatprep.subr.mxu0 0.0
  %730 = vmatpush2.msra.mxu0 0.0
  %731 = vmatprep.subr.mxu0 0.0
  %732 = vmatpush2.msra.mxu0 0.0
  %733 = vmatprep.subr.mxu0 0.0
  %734 = vmatpush2.msra.mxu0 0.0
  %735 = vmatprep.subr.mxu0 0.0
  %736 = vmatpush2.msra.mxu0 0.0
  %737 = vmatprep.subr.mxu0 0.0
  %738 = vmatpush2.msra.mxu0 0.0
  %739 = vmatprep.subr.mxu0 0.0
  %740 = vmatpush2.msra.mxu0 0.0
  %741 = vmatprep.subr.mxu0 0.0
  %742 = vmatpush2.msra.mxu0 0.0
  %743 = vmatprep.mubr.f32.mxu0 0.0
  %744 = vmatmul.mubr.f32.gmra.mxu0 %v584
  %v745 = vpop.f32.mrf.mxu0
  %v746 = vadd.f32 %v677, %v745
  %v747 = vpop.f32.mrf.mxu0
  %748 = vmatprep.mubr.f32.mxu0 0.0
  %749 = vmatmul.mubr.f32.gmra.mxu0 %v587
  %v750 = vpop.f32.mrf.mxu0
  %v751 = vadd.f32 %v677, %v750
  %v752 = vpop.f32.mrf.mxu0
  %753 = vdwg.mxu0
  %s754 = scalar_lea.vmem %s17, 96
  %v755 = vld [vmem:[%s754] sm:$0xff]
  %v756 = vld [vmem:[%s754 + $0x8] sm:$0xff]
  %v757 = vld [vmem:[%s754 + $0x10] sm:$0xff]
  %v758 = vld [vmem:[%s754 + $0x18] sm:$0xff]
  %v759 = vld [vmem:[%s754 + $0x20] sm:$0xff]
  %v760 = vld [vmem:[%s754 + $0x28] sm:$0xff]
  %s761 = scalar_lea.vmem %s19, 2
  %v762 = vld [vmem:[%s761] sm:$0x1]
  %v764 = vlaneseq
  %v765 = vshrl.u32 %v764, 7
  %v766 = vsub.s32 0, %v765
  %v767 = vrot.slane %v762, %v766
  %769 = vmatprep.subr.mxu0 0.0
  %770 = vmatpush1.msra.mxu0 0.0
  %771 = vmatprep.subr.mxu0 0.0
  %772 = vmatpush1.msra.mxu0 0.0
  %773 = vmatprep.subr.mxu0 0.0
  %774 = vmatpush1.msra.mxu0 0.0
  %775 = vmatprep.subr.mxu0 0.0
  %776 = vmatpush1.msra.mxu0 0.0
  %777 = vmatprep.subr.mxu0 0.0
  %778 = vmatpush1.msra.mxu0 0.0
  %779 = vmatprep.subr.mxu0 0.0
  %780 = vmatpush1.msra.mxu0 0.0
  %781 = vmatprep.subr.mxu0 0.0
  %782 = vmatpush1.msra.mxu0 0.0
  %783 = vmatprep.subr.mxu0 0.0
  %784 = vmatpush1.msra.mxu0 0.0
  %785 = vmatprep.subr.mxu0 0.0
  %786 = vmatpush1.msra.mxu0 0.0
  %787 = vmatprep.subr.mxu0 0.0
  %788 = vmatpush1.msra.mxu0 0.0
  %789 = vmatprep.subr.mxu0 0.0
  %790 = vmatpush1.msra.mxu0 %v760
  %791 = vmatprep.subr.mxu0 0.0
  %792 = vmatpush1.msra.mxu0 %v759
  %793 = vmatprep.subr.mxu0 0.0
  %794 = vmatpush1.msra.mxu0 %v758
  %795 = vmatprep.subr.mxu0 0.0
  %796 = vmatpush1.msra.mxu0 %v757
  %797 = vmatprep.subr.mxu0 0.0
  %798 = vmatpush1.msra.mxu0 %v756
  %799 = vmatprep.subr.mxu0 0.0
  %800 = vmatpush1.msra.mxu0 %v755
  %801 = vmatprep.subr.mxu0 0.0
  %802 = vmatpush2.msra.mxu0 0.0
  %803 = vmatprep.subr.mxu0 0.0
  %804 = vmatpush2.msra.mxu0 0.0
  %805 = vmatprep.subr.mxu0 0.0
  %806 = vmatpush2.msra.mxu0 0.0
  %807 = vmatprep.subr.mxu0 0.0
  %808 = vmatpush2.msra.mxu0 0.0
  %809 = vmatprep.subr.mxu0 0.0
  %810 = vmatpush2.msra.mxu0 0.0
  %811 = vmatprep.subr.mxu0 0.0
  %812 = vmatpush2.msra.mxu0 0.0
  %813 = vmatprep.subr.mxu0 0.0
  %814 = vmatpush2.msra.mxu0 0.0
  %815 = vmatprep.subr.mxu0 0.0
  %816 = vmatpush2.msra.mxu0 0.0
  %817 = vmatprep.subr.mxu0 0.0
  %818 = vmatpush2.msra.mxu0 0.0
  %819 = vmatprep.subr.mxu0 0.0
  %820 = vmatpush2.msra.mxu0 0.0
  %821 = vmatprep.subr.mxu0 0.0
  %822 = vmatpush2.msra.mxu0 0.0
  %823 = vmatprep.subr.mxu0 0.0
  %824 = vmatpush2.msra.mxu0 0.0
  %825 = vmatprep.subr.mxu0 0.0
  %826 = vmatpush2.msra.mxu0 0.0
  %827 = vmatprep.subr.mxu0 0.0
  %828 = vmatpush2.msra.mxu0 0.0
  %829 = vmatprep.subr.mxu0 0.0
  %830 = vmatpush2.msra.mxu0 0.0
  %831 = vmatprep.subr.mxu0 0.0
  %832 = vmatpush2.msra.mxu0 0.0
  %833 = vmatprep.mubr.f32.mxu0 0.0
  %834 = vmatmul.mubr.f32.gmra.mxu0 %v584
  %v835 = vpop.f32.mrf.mxu0
  %v836 = vadd.f32 %v767, %v835
  %v837 = vpop.f32.mrf.mxu0
  %838 = vmatprep.mubr.f32.mxu0 0.0
  %839 = vmatmul.mubr.f32.gmra.mxu0 %v587
  %v840 = vpop.f32.mrf.mxu0
  %v841 = vadd.f32 %v767, %v840
  %v842 = vpop.f32.mrf.mxu0
  %843 = vdwg.mxu0
  %v844 = vld [vmem:[%s21] sm:$0xff]
  %v845 = vld [vmem:[%s21 + $0x8] sm:$0xff]
  %v846 = vld [vmem:[%s21 + $0x10] sm:$0xff]
  %v847 = vld [vmem:[%s21 + $0x18] sm:$0xff]
  %v848 = vld [vmem:[%s21 + $0x20] sm:$0xff]
  %v849 = vld [vmem:[%s21 + $0x28] sm:$0xff]
  %s850 = scalar_lea.vmem %s21, 48
  %v851 = vld [vmem:[%s850] sm:$0xff]
  %v852 = vld [vmem:[%s850 + $0x8] sm:$0xff]
  %v853 = vld [vmem:[%s850 + $0x10] sm:$0xff]
  %v854 = vld [vmem:[%s850 + $0x18] sm:$0xff]
  %v855 = vld [vmem:[%s850 + $0x20] sm:$0xff]
  %v856 = vld [vmem:[%s850 + $0x28] sm:$0xff]
  %s857 = scalar_lea.vmem %s21, 96
  %v858 = vld [vmem:[%s857] sm:$0xff]
  %v859 = vld [vmem:[%s857 + $0x8] sm:$0xff]
  %v860 = vld [vmem:[%s857 + $0x10] sm:$0xff]
  %v861 = vld [vmem:[%s857 + $0x18] sm:$0xff]
  %v862 = vld [vmem:[%s857 + $0x20] sm:$0xff]
  %v863 = vld [vmem:[%s857 + $0x28] sm:$0xff]
  %v864 = vld [vmem:[%s23] sm:$0x1]
  %s865 = scalar_lea.vmem %s23, 1
  %v866 = vld [vmem:[%s865] sm:$0x1]
  %s867 = scalar_lea.vmem %s23, 2
  %v868 = vld [vmem:[%s867] sm:$0x1]
  %v869 = vld [vmem:[%s15] sm:$0x1]
  %v871 = vsel %vm518, %v869, 0
  %873 = vmatprep.subr.mxu0 0.0
  %874 = vmatpush1.msra.mxu0 0.0
  %875 = vmatprep.subr.mxu0 0.0
  %876 = vmatpush1.msra.mxu0 0.0
  %877 = vmatprep.subr.mxu0 0.0
  %878 = vmatpush1.msra.mxu0 0.0
  %879 = vmatprep.subr.mxu0 0.0
  %880 = vmatpush1.msra.mxu0 0.0
  %881 = vmatprep.subr.mxu0 0.0
  %882 = vmatpush1.msra.mxu0 0.0
  %883 = vmatprep.subr.mxu0 0.0
  %884 = vmatpush1.msra.mxu0 0.0
  %885 = vmatprep.subr.mxu0 0.0
  %886 = vmatpush1.msra.mxu0 0.0
  %887 = vmatprep.subr.mxu0 0.0
  %888 = vmatpush1.msra.mxu0 0.0
  %889 = vmatprep.subr.mxu0 0.0
  %890 = vmatpush1.msra.mxu0 0.0
  %891 = vmatprep.subr.mxu0 0.0
  %892 = vmatpush1.msra.mxu0 0.0
  %893 = vmatprep.subr.mxu0 0.0
  %894 = vmatpush1.msra.mxu0 %v849
  %895 = vmatprep.subr.mxu0 0.0
  %896 = vmatpush1.msra.mxu0 %v848
  %897 = vmatprep.subr.mxu0 0.0
  %898 = vmatpush1.msra.mxu0 %v847
  %899 = vmatprep.subr.mxu0 0.0
  %900 = vmatpush1.msra.mxu0 %v846
  %901 = vmatprep.subr.mxu0 0.0
  %902 = vmatpush1.msra.mxu0 %v845
  %903 = vmatprep.subr.mxu0 0.0
  %904 = vmatpush1.msra.mxu0 %v844
  %905 = vmatprep.subr.mxu0 0.0
  %906 = vmatpush2.msra.mxu0 0.0
  %907 = vmatprep.subr.mxu0 0.0
  %908 = vmatpush2.msra.mxu0 0.0
  %909 = vmatprep.subr.mxu0 0.0
  %910 = vmatpush2.msra.mxu0 0.0
  %911 = vmatprep.subr.mxu0 0.0
  %912 = vmatpush2.msra.mxu0 0.0
  %913 = vmatprep.subr.mxu0 0.0
  %914 = vmatpush2.msra.mxu0 0.0
  %915 = vmatprep.subr.mxu0 0.0
  %916 = vmatpush2.msra.mxu0 0.0
  %917 = vmatprep.subr.mxu0 0.0
  %918 = vmatpush2.msra.mxu0 0.0
  %919 = vmatprep.subr.mxu0 0.0
  %920 = vmatpush2.msra.mxu0 0.0
  %921 = vmatprep.subr.mxu0 0.0
  %922 = vmatpush2.msra.mxu0 0.0
  %923 = vmatprep.subr.mxu0 0.0
  %924 = vmatpush2.msra.mxu0 0.0
  %925 = vmatprep.subr.mxu0 0.0
  %926 = vmatpush2.msra.mxu0 0.0
  %927 = vmatprep.subr.mxu0 0.0
  %928 = vmatpush2.msra.mxu0 0.0
  %929 = vmatprep.subr.mxu0 0.0
  %930 = vmatpush2.msra.mxu0 0.0
  %931 = vmatprep.subr.mxu0 0.0
  %932 = vmatpush2.msra.mxu0 0.0
  %933 = vmatprep.subr.mxu0 0.0
  %934 = vmatpush2.msra.mxu0 0.0
  %935 = vmatprep.subr.mxu0 0.0
  %936 = vmatpush2.msra.mxu0 0.0
  %937 = vmatprep.mubr.f32.mxu0 0.0
  %938 = vmatmul.mubr.f32.gmra.mxu0 %v871
  %v939 = vpop.f32.mrf.mxu0
  %v940 = vadd.f32 %v864, %v939
  %v941 = vpop.f32.mrf.mxu0
  %942 = vdwg.mxu0
  %943 = vmatprep.subr.mxu0 0.0
  %944 = vmatpush1.msra.mxu0 0.0
  %945 = vmatprep.subr.mxu0 0.0
  %946 = vmatpush1.msra.mxu0 0.0
  %947 = vmatprep.subr.mxu0 0.0
  %948 = vmatpush1.msra.mxu0 0.0
  %949 = vmatprep.subr.mxu0 0.0
  %950 = vmatpush1.msra.mxu0 0.0
  %951 = vmatprep.subr.mxu0 0.0
  %952 = vmatpush1.msra.mxu0 0.0
  %953 = vmatprep.subr.mxu0 0.0
  %954 = vmatpush1.msra.mxu0 0.0
  %955 = vmatprep.subr.mxu0 0.0
  %956 = vmatpush1.msra.mxu0 0.0
  %957 = vmatprep.subr.mxu0 0.0
  %958 = vmatpush1.msra.mxu0 0.0
  %959 = vmatprep.subr.mxu0 0.0
  %960 = vmatpush1.msra.mxu0 0.0
  %961 = vmatprep.subr.mxu0 0.0
  %962 = vmatpush1.msra.mxu0 0.0
  %963 = vmatprep.subr.mxu0 0.0
  %964 = vmatpush1.msra.mxu0 %v856
  %965 = vmatprep.subr.mxu0 0.0
  %966 = vmatpush1.msra.mxu0 %v855
  %967 = vmatprep.subr.mxu0 0.0
  %968 = vmatpush1.msra.mxu0 %v854
  %969 = vmatprep.subr.mxu0 0.0
  %970 = vmatpush1.msra.mxu0 %v853
  %971 = vmatprep.subr.mxu0 0.0
  %972 = vmatpush1.msra.mxu0 %v852
  %973 = vmatprep.subr.mxu0 0.0
  %974 = vmatpush1.msra.mxu0 %v851
  %975 = vmatprep.subr.mxu0 0.0
  %976 = vmatpush2.msra.mxu0 0.0
  %977 = vmatprep.subr.mxu0 0.0
  %978 = vmatpush2.msra.mxu0 0.0
  %979 = vmatprep.subr.mxu0 0.0
  %980 = vmatpush2.msra.mxu0 0.0
  %981 = vmatprep.subr.mxu0 0.0
  %982 = vmatpush2.msra.mxu0 0.0
  %983 = vmatprep.subr.mxu0 0.0
  %984 = vmatpush2.msra.mxu0 0.0
  %985 = vmatprep.subr.mxu0 0.0
  %986 = vmatpush2.msra.mxu0 0.0
  %987 = vmatprep.subr.mxu0 0.0
  %988 = vmatpush2.msra.mxu0 0.0
  %989 = vmatprep.subr.mxu0 0.0
  %990 = vmatpush2.msra.mxu0 0.0
  %991 = vmatprep.subr.mxu0 0.0
  %992 = vmatpush2.msra.mxu0 0.0
  %993 = vmatprep.subr.mxu0 0.0
  %994 = vmatpush2.msra.mxu0 0.0
  %995 = vmatprep.subr.mxu0 0.0
  %996 = vmatpush2.msra.mxu0 0.0
  %997 = vmatprep.subr.mxu0 0.0
  %998 = vmatpush2.msra.mxu0 0.0
  %999 = vmatprep.subr.mxu0 0.0
  %1000 = vmatpush2.msra.mxu0 0.0
  %1001 = vmatprep.subr.mxu0 0.0
  %1002 = vmatpush2.msra.mxu0 0.0
  %1003 = vmatprep.subr.mxu0 0.0
  %1004 = vmatpush2.msra.mxu0 0.0
  %1005 = vmatprep.subr.mxu0 0.0
  %1006 = vmatpush2.msra.mxu0 0.0
  %1007 = vmatprep.mubr.f32.mxu0 0.0
  %1008 = vmatmul.mubr.f32.gmra.mxu0 %v871
  %v1009 = vpop.f32.mrf.mxu0
  %v1010 = vadd.f32 %v866, %v1009
  %v1011 = vpop.f32.mrf.mxu0
  %1012 = vdwg.mxu0
  %1013 = vmatprep.subr.mxu0 0.0
  %1014 = vmatpush1.msra.mxu0 0.0
  %1015 = vmatprep.subr.mxu0 0.0
  %1016 = vmatpush1.msra.mxu0 0.0
  %1017 = vmatprep.subr.mxu0 0.0
  %1018 = vmatpush1.msra.mxu0 0.0
  %1019 = vmatprep.subr.mxu0 0.0
  %1020 = vmatpush1.msra.mxu0 0.0
  %1021 = vmatprep.subr.mxu0 0.0
  %1022 = vmatpush1.msra.mxu0 0.0
  %1023 = vmatprep.subr.mxu0 0.0
  %1024 = vmatpush1.msra.mxu0 0.0
  %1025 = vmatprep.subr.mxu0 0.0
  %1026 = vmatpush1.msra.mxu0 0.0
  %1027 = vmatprep.subr.mxu0 0.0
  %1028 = vmatpush1.msra.mxu0 0.0
  %1029 = vmatprep.subr.mxu0 0.0
  %1030 = vmatpush1.msra.mxu0 0.0
  %1031 = vmatprep.subr.mxu0 0.0
  %1032 = vmatpush1.msra.mxu0 0.0
  %1033 = vmatprep.subr.mxu0 0.0
  %1034 = vmatpush1.msra.mxu0 %v863
  %1035 = vmatprep.subr.mxu0 0.0
  %1036 = vmatpush1.msra.mxu0 %v862
  %1037 = vmatprep.subr.mxu0 0.0
  %1038 = vmatpush1.msra.mxu0 %v861
  %1039 = vmatprep.subr.mxu0 0.0
  %1040 = vmatpush1.msra.mxu0 %v860
  %1041 = vmatprep.subr.mxu0 0.0
  %1042 = vmatpush1.msra.mxu0 %v859
  %1043 = vmatprep.subr.mxu0 0.0
  %1044 = vmatpush1.msra.mxu0 %v858
  %1045 = vmatprep.subr.mxu0 0.0
  %1046 = vmatpush2.msra.mxu0 0.0
  %1047 = vmatprep.subr.mxu0 0.0
  %1048 = vmatpush2.msra.mxu0 0.0
  %1049 = vmatprep.subr.mxu0 0.0
  %1050 = vmatpush2.msra.mxu0 0.0
  %1051 = vmatprep.subr.mxu0 0.0
  %1052 = vmatpush2.msra.mxu0 0.0
  %1053 = vmatprep.subr.mxu0 0.0
  %1054 = vmatpush2.msra.mxu0 0.0
  %1055 = vmatprep.subr.mxu0 0.0
  %1056 = vmatpush2.msra.mxu0 0.0
  %1057 = vmatprep.subr.mxu0 0.0
  %1058 = vmatpush2.msra.mxu0 0.0
  %1059 = vmatprep.subr.mxu0 0.0
  %1060 = vmatpush2.msra.mxu0 0.0
  %1061 = vmatprep.subr.mxu0 0.0
  %1062 = vmatpush2.msra.mxu0 0.0
  %1063 = vmatprep.subr.mxu0 0.0
  %1064 = vmatpush2.msra.mxu0 0.0
  %1065 = vmatprep.subr.mxu0 0.0
  %1066 = vmatpush2.msra.mxu0 0.0
  %1067 = vmatprep.subr.mxu0 0.0
  %1068 = vmatpush2.msra.mxu0 0.0
  %1069 = vmatprep.subr.mxu0 0.0
  %1070 = vmatpush2.msra.mxu0 0.0
  %1071 = vmatprep.subr.mxu0 0.0
  %1072 = vmatpush2.msra.mxu0 0.0
  %1073 = vmatprep.subr.mxu0 0.0
  %1074 = vmatpush2.msra.mxu0 0.0
  %1075 = vmatprep.subr.mxu0 0.0
  %1076 = vmatpush2.msra.mxu0 0.0
  %1077 = vmatprep.mubr.f32.mxu0 0.0
  %1078 = vmatmul.mubr.f32.gmra.mxu0 %v871
  %v1079 = vpop.f32.mrf.mxu0
  %v1080 = vadd.f32 %v868, %v1079
  %v1081 = vpop.f32.mrf.mxu0
  %1082 = vdwg.mxu0
  %v1083 = vadd.f32 %v656, %v940
  %v1084 = vxor.u32 %v1083, 2147483648
  %v1085 = vmul.f32 %v1084, 1.442695
  %v1086 = vpow.pop %v1085
  %v1087 = vadd.f32 %v1086, 1.0
  %v1088 = vrcp.pop %v1087
  %v1089 = vmul.f32 1.0, %v1088
  %v1090 = vadd.f32 %v746, %v1010
  %v1091 = vxor.u32 %v1090, 2147483648
  %v1092 = vmul.f32 %v1091, 1.442695
  %v1093 = vpow.pop %v1092
  %v1094 = vadd.f32 %v1093, 1.0
  %v1095 = vrcp.pop %v1094
  %v1096 = vmul.f32 1.0, %v1095
  %v1097 = vmul.f32 %v1089, %v1080
  %v1098 = vadd.f32 %v836, %v1097
  %v1099 = vtanh.pop %v1098
  %v1100 = vsub.f32 1.0, %v1096
  %v1101 = vmul.f32 %v1100, %v1099
  %v1102 = vmul.f32 %v1096, %v869
  %v1103 = vadd.f32 %v1101, %v1102
  %v1105 = vsel %vm518, %v1103, 0
  %1107 = vmatprep.subr.mxu0 0.0
  %1108 = vmatpush1.msra.mxu0 0.0
  %1109 = vmatprep.subr.mxu0 0.0
  %1110 = vmatpush1.msra.mxu0 0.0
  %1111 = vmatprep.subr.mxu0 0.0
  %1112 = vmatpush1.msra.mxu0 0.0
  %1113 = vmatprep.subr.mxu0 0.0
  %1114 = vmatpush1.msra.mxu0 0.0
  %1115 = vmatprep.subr.mxu0 0.0
  %1116 = vmatpush1.msra.mxu0 0.0
  %1117 = vmatprep.subr.mxu0 0.0
  %1118 = vmatpush1.msra.mxu0 0.0
  %1119 = vmatprep.subr.mxu0 0.0
  %1120 = vmatpush1.msra.mxu0 0.0
  %1121 = vmatprep.subr.mxu0 0.0
  %1122 = vmatpush1.msra.mxu0 0.0
  %1123 = vmatprep.subr.mxu0 0.0
  %1124 = vmatpush1.msra.mxu0 0.0
  %1125 = vmatprep.subr.mxu0 0.0
  %1126 = vmatpush1.msra.mxu0 0.0
  %1127 = vmatprep.subr.mxu0 0.0
  %1128 = vmatpush1.msra.mxu0 %v849
  %1129 = vmatprep.subr.mxu0 0.0
  %1130 = vmatpush1.msra.mxu0 %v848
  %1131 = vmatprep.subr.mxu0 0.0
  %1132 = vmatpush1.msra.mxu0 %v847
  %1133 = vmatprep.subr.mxu0 0.0
  %1134 = vmatpush1.msra.mxu0 %v846
  %1135 = vmatprep.subr.mxu0 0.0
  %1136 = vmatpush1.msra.mxu0 %v845
  %1137 = vmatprep.subr.mxu0 0.0
  %1138 = vmatpush1.msra.mxu0 %v844
  %1139 = vmatprep.subr.mxu0 0.0
  %1140 = vmatpush2.msra.mxu0 0.0
  %1141 = vmatprep.subr.mxu0 0.0
  %1142 = vmatpush2.msra.mxu0 0.0
  %1143 = vmatprep.subr.mxu0 0.0
  %1144 = vmatpush2.msra.mxu0 0.0
  %1145 = vmatprep.subr.mxu0 0.0
  %1146 = vmatpush2.msra.mxu0 0.0
  %1147 = vmatprep.subr.mxu0 0.0
  %1148 = vmatpush2.msra.mxu0 0.0
  %1149 = vmatprep.subr.mxu0 0.0
  %1150 = vmatpush2.msra.mxu0 0.0
  %1151 = vmatprep.subr.mxu0 0.0
  %1152 = vmatpush2.msra.mxu0 0.0
  %1153 = vmatprep.subr.mxu0 0.0
  %1154 = vmatpush2.msra.mxu0 0.0
  %1155 = vmatprep.subr.mxu0 0.0
  %1156 = vmatpush2.msra.mxu0 0.0
  %1157 = vmatprep.subr.mxu0 0.0
  %1158 = vmatpush2.msra.mxu0 0.0
  %1159 = vmatprep.subr.mxu0 0.0
  %1160 = vmatpush2.msra.mxu0 0.0
  %1161 = vmatprep.subr.mxu0 0.0
  %1162 = vmatpush2.msra.mxu0 0.0
  %1163 = vmatprep.subr.mxu0 0.0
  %1164 = vmatpush2.msra.mxu0 0.0
  %1165 = vmatprep.subr.mxu0 0.0
  %1166 = vmatpush2.msra.mxu0 0.0
  %1167 = vmatprep.subr.mxu0 0.0
  %1168 = vmatpush2.msra.mxu0 0.0
  %1169 = vmatprep.subr.mxu0 0.0
  %1170 = vmatpush2.msra.mxu0 0.0
  %1171 = vmatprep.mubr.f32.mxu0 0.0
  %1172 = vmatmul.mubr.f32.gmra.mxu0 %v1105
  %v1173 = vpop.f32.mrf.mxu0
  %v1174 = vadd.f32 %v864, %v1173
  %v1175 = vpop.f32.mrf.mxu0
  %1176 = vdwg.mxu0
  %1177 = vmatprep.subr.mxu0 0.0
  %1178 = vmatpush1.msra.mxu0 0.0
  %1179 = vmatprep.subr.mxu0 0.0
  %1180 = vmatpush1.msra.mxu0 0.0
  %1181 = vmatprep.subr.mxu0 0.0
  %1182 = vmatpush1.msra.mxu0 0.0
  %1183 = vmatprep.subr.mxu0 0.0
  %1184 = vmatpush1.msra.mxu0 0.0
  %1185 = vmatprep.subr.mxu0 0.0
  %1186 = vmatpush1.msra.mxu0 0.0
  %1187 = vmatprep.subr.mxu0 0.0
  %1188 = vmatpush1.msra.mxu0 0.0
  %1189 = vmatprep.subr.mxu0 0.0
  %1190 = vmatpush1.msra.mxu0 0.0
  %1191 = vmatprep.subr.mxu0 0.0
  %1192 = vmatpush1.msra.mxu0 0.0
  %1193 = vmatprep.subr.mxu0 0.0
  %1194 = vmatpush1.msra.mxu0 0.0
  %1195 = vmatprep.subr.mxu0 0.0
  %1196 = vmatpush1.msra.mxu0 0.0
  %1197 = vmatprep.subr.mxu0 0.0
  %1198 = vmatpush1.msra.mxu0 %v856
  %1199 = vmatprep.subr.mxu0 0.0
  %1200 = vmatpush1.msra.mxu0 %v855
  %1201 = vmatprep.subr.mxu0 0.0
  %1202 = vmatpush1.msra.mxu0 %v854
  %1203 = vmatprep.subr.mxu0 0.0
  %1204 = vmatpush1.msra.mxu0 %v853
  %1205 = vmatprep.subr.mxu0 0.0
  %1206 = vmatpush1.msra.mxu0 %v852
  %1207 = vmatprep.subr.mxu0 0.0
  %1208 = vmatpush1.msra.mxu0 %v851
  %1209 = vmatprep.subr.mxu0 0.0
  %1210 = vmatpush2.msra.mxu0 0.0
  %1211 = vmatprep.subr.mxu0 0.0
  %1212 = vmatpush2.msra.mxu0 0.0
  %1213 = vmatprep.subr.mxu0 0.0
  %1214 = vmatpush2.msra.mxu0 0.0
  %1215 = vmatprep.subr.mxu0 0.0
  %1216 = vmatpush2.msra.mxu0 0.0
  %1217 = vmatprep.subr.mxu0 0.0
  %1218 = vmatpush2.msra.mxu0 0.0
  %1219 = vmatprep.subr.mxu0 0.0
  %1220 = vmatpush2.msra.mxu0 0.0
  %1221 = vmatprep.subr.mxu0 0.0
  %1222 = vmatpush2.msra.mxu0 0.0
  %1223 = vmatprep.subr.mxu0 0.0
  %1224 = vmatpush2.msra.mxu0 0.0
  %1225 = vmatprep.subr.mxu0 0.0
  %1226 = vmatpush2.msra.mxu0 0.0
  %1227 = vmatprep.subr.mxu0 0.0
  %1228 = vmatpush2.msra.mxu0 0.0
  %1229 = vmatprep.subr.mxu0 0.0
  %1230 = vmatpush2.msra.mxu0 0.0
  %1231 = vmatprep.subr.mxu0 0.0
  %1232 = vmatpush2.msra.mxu0 0.0
  %1233 = vmatprep.subr.mxu0 0.0
  %1234 = vmatpush2.msra.mxu0 0.0
  %1235 = vmatprep.subr.mxu0 0.0
  %1236 = vmatpush2.msra.mxu0 0.0
  %1237 = vmatprep.subr.mxu0 0.0
  %1238 = vmatpush2.msra.mxu0 0.0
  %1239 = vmatprep.subr.mxu0 0.0
  %1240 = vmatpush2.msra.mxu0 0.0
  %1241 = vmatprep.mubr.f32.mxu0 0.0
  %1242 = vmatmul.mubr.f32.gmra.mxu0 %v1105
  %v1243 = vpop.f32.mrf.mxu0
  %v1244 = vadd.f32 %v866, %v1243
  %v1245 = vpop.f32.mrf.mxu0
  %1246 = vdwg.mxu0
  %1247 = vmatprep.subr.mxu0 0.0
  %1248 = vmatpush1.msra.mxu0 0.0
  %1249 = vmatprep.subr.mxu0 0.0
  %1250 = vmatpush1.msra.mxu0 0.0
  %1251 = vmatprep.subr.mxu0 0.0
  %1252 = vmatpush1.msra.mxu0 0.0
  %1253 = vmatprep.subr.mxu0 0.0
  %1254 = vmatpush1.msra.mxu0 0.0
  %1255 = vmatprep.subr.mxu0 0.0
  %1256 = vmatpush1.msra.mxu0 0.0
  %1257 = vmatprep.subr.mxu0 0.0
  %1258 = vmatpush1.msra.mxu0 0.0
  %1259 = vmatprep.subr.mxu0 0.0
  %1260 = vmatpush1.msra.mxu0 0.0
  %1261 = vmatprep.subr.mxu0 0.0
  %1262 = vmatpush1.msra.mxu0 0.0
  %1263 = vmatprep.subr.mxu0 0.0
  %1264 = vmatpush1.msra.mxu0 0.0
  %1265 = vmatprep.subr.mxu0 0.0
  %1266 = vmatpush1.msra.mxu0 0.0
  %1267 = vmatprep.subr.mxu0 0.0
  %1268 = vmatpush1.msra.mxu0 %v863
  %1269 = vmatprep.subr.mxu0 0.0
  %1270 = vmatpush1.msra.mxu0 %v862
  %1271 = vmatprep.subr.mxu0 0.0
  %1272 = vmatpush1.msra.mxu0 %v861
  %1273 = vmatprep.subr.mxu0 0.0
  %1274 = vmatpush1.msra.mxu0 %v860
  %1275 = vmatprep.subr.mxu0 0.0
  %1276 = vmatpush1.msra.mxu0 %v859
  %1277 = vmatprep.subr.mxu0 0.0
  %1278 = vmatpush1.msra.mxu0 %v858
  %1279 = vmatprep.subr.mxu0 0.0
  %1280 = vmatpush2.msra.mxu0 0.0
  %1281 = vmatprep.subr.mxu0 0.0
  %1282 = vmatpush2.msra.mxu0 0.0
  %1283 = vmatprep.subr.mxu0 0.0
  %1284 = vmatpush2.msra.mxu0 0.0
  %1285 = vmatprep.subr.mxu0 0.0
  %1286 = vmatpush2.msra.mxu0 0.0
  %1287 = vmatprep.subr.mxu0 0.0
  %1288 = vmatpush2.msra.mxu0 0.0
  %1289 = vmatprep.subr.mxu0 0.0
  %1290 = vmatpush2.msra.mxu0 0.0
  %1291 = vmatprep.subr.mxu0 0.0
  %1292 = vmatpush2.msra.mxu0 0.0
  %1293 = vmatprep.subr.mxu0 0.0
  %1294 = vmatpush2.msra.mxu0 0.0
  %1295 = vmatprep.subr.mxu0 0.0
  %1296 = vmatpush2.msra.mxu0 0.0
  %1297 = vmatprep.subr.mxu0 0.0
  %1298 = vmatpush2.msra.mxu0 0.0
  %1299 = vmatprep.subr.mxu0 0.0
  %1300 = vmatpush2.msra.mxu0 0.0
  %1301 = vmatprep.subr.mxu0 0.0
  %1302 = vmatpush2.msra.mxu0 0.0
  %1303 = vmatprep.subr.mxu0 0.0
  %1304 = vmatpush2.msra.mxu0 0.0
  %1305 = vmatprep.subr.mxu0 0.0
  %1306 = vmatpush2.msra.mxu0 0.0
  %1307 = vmatprep.subr.mxu0 0.0
  %1308 = vmatpush2.msra.mxu0 0.0
  %1309 = vmatprep.subr.mxu0 0.0
  %1310 = vmatpush2.msra.mxu0 0.0
  %1311 = vmatprep.mubr.f32.mxu0 0.0
  %1312 = vmatmul.mubr.f32.gmra.mxu0 %v1105
  %v1313 = vpop.f32.mrf.mxu0
  %v1314 = vadd.f32 %v868, %v1313
  %v1315 = vpop.f32.mrf.mxu0
  %1316 = vdwg.mxu0
  %v1318 = vrot.slane %v1174, 7
  %v1320 = vadd.f32 %v656, %v1318
  %v1321 = vxor.u32 %v1320, 2147483648
  %v1322 = vmul.f32 %v1321, 1.442695
  %v1323 = vpow.pop %v1322
  %v1324 = vadd.f32 %v1323, 1.0
  %v1325 = vrcp.pop %v1324
  %v1326 = vmul.f32 1.0, %v1325
  %v1328 = vrot.slane %v1244, 7
  %v1330 = vadd.f32 %v746, %v1328
  %v1331 = vxor.u32 %v1330, 2147483648
  %v1332 = vmul.f32 %v1331, 1.442695
  %v1333 = vpow.pop %v1332
  %v1334 = vadd.f32 %v1333, 1.0
  %v1335 = vrcp.pop %v1334
  %v1336 = vmul.f32 1.0, %v1335
  %v1338 = vrot.slane %v1314, 7
  %v1340 = vmul.f32 %v1326, %v1338
  %v1341 = vadd.f32 %v836, %v1340
  %v1342 = vtanh.pop %v1341
  %v1343 = vsub.f32 1.0, %v1336
  %v1344 = vmul.f32 %v1343, %v1342
  %v1345 = vrot.slane %v1103, 7
  %v1347 = vmul.f32 %v1336, %v1345
  %v1348 = vadd.f32 %v1344, %v1347
  %v1350 = vrot.slane %v1348, 1
  %v1351 = vsel %vm518, %v1350, 0
  %1353 = vmatprep.subr.mxu0 0.0
  %1354 = vmatpush1.msra.mxu0 0.0
  %1355 = vmatprep.subr.mxu0 0.0
  %1356 = vmatpush1.msra.mxu0 0.0
  %1357 = vmatprep.subr.mxu0 0.0
  %1358 = vmatpush1.msra.mxu0 0.0
  %1359 = vmatprep.subr.mxu0 0.0
  %1360 = vmatpush1.msra.mxu0 0.0
  %1361 = vmatprep.subr.mxu0 0.0
  %1362 = vmatpush1.msra.mxu0 0.0
  %1363 = vmatprep.subr.mxu0 0.0
  %1364 = vmatpush1.msra.mxu0 0.0
  %1365 = vmatprep.subr.mxu0 0.0
  %1366 = vmatpush1.msra.mxu0 0.0
  %1367 = vmatprep.subr.mxu0 0.0
  %1368 = vmatpush1.msra.mxu0 0.0
  %1369 = vmatprep.subr.mxu0 0.0
  %1370 = vmatpush1.msra.mxu0 0.0
  %1371 = vmatprep.subr.mxu0 0.0
  %1372 = vmatpush1.msra.mxu0 0.0
  %1373 = vmatprep.subr.mxu0 0.0
  %1374 = vmatpush1.msra.mxu0 %v849
  %1375 = vmatprep.subr.mxu0 0.0
  %1376 = vmatpush1.msra.mxu0 %v848
  %1377 = vmatprep.subr.mxu0 0.0
  %1378 = vmatpush1.msra.mxu0 %v847
  %1379 = vmatprep.subr.mxu0 0.0
  %1380 = vmatpush1.msra.mxu0 %v846
  %1381 = vmatprep.subr.mxu0 0.0
  %1382 = vmatpush1.msra.mxu0 %v845
  %1383 = vmatprep.subr.mxu0 0.0
  %1384 = vmatpush1.msra.mxu0 %v844
  %1385 = vmatprep.subr.mxu0 0.0
  %1386 = vmatpush2.msra.mxu0 0.0
  %1387 = vmatprep.subr.mxu0 0.0
  %1388 = vmatpush2.msra.mxu0 0.0
  %1389 = vmatprep.subr.mxu0 0.0
  %1390 = vmatpush2.msra.mxu0 0.0
  %1391 = vmatprep.subr.mxu0 0.0
  %1392 = vmatpush2.msra.mxu0 0.0
  %1393 = vmatprep.subr.mxu0 0.0
  %1394 = vmatpush2.msra.mxu0 0.0
  %1395 = vmatprep.subr.mxu0 0.0
  %1396 = vmatpush2.msra.mxu0 0.0
  %1397 = vmatprep.subr.mxu0 0.0
  %1398 = vmatpush2.msra.mxu0 0.0
  %1399 = vmatprep.subr.mxu0 0.0
  %1400 = vmatpush2.msra.mxu0 0.0
  %1401 = vmatprep.subr.mxu0 0.0
  %1402 = vmatpush2.msra.mxu0 0.0
  %1403 = vmatprep.subr.mxu0 0.0
  %1404 = vmatpush2.msra.mxu0 0.0
  %1405 = vmatprep.subr.mxu0 0.0
  %1406 = vmatpush2.msra.mxu0 0.0
  %1407 = vmatprep.subr.mxu0 0.0
  %1408 = vmatpush2.msra.mxu0 0.0
  %1409 = vmatprep.subr.mxu0 0.0
  %1410 = vmatpush2.msra.mxu0 0.0
  %1411 = vmatprep.subr.mxu0 0.0
  %1412 = vmatpush2.msra.mxu0 0.0
  %1413 = vmatprep.subr.mxu0 0.0
  %1414 = vmatpush2.msra.mxu0 0.0
  %1415 = vmatprep.subr.mxu0 0.0
  %1416 = vmatpush2.msra.mxu0 0.0
  %1417 = vmatprep.mubr.f32.mxu0 0.0
  %1418 = vmatmul.mubr.f32.gmra.mxu0 %v1351
  %v1419 = vpop.f32.mrf.mxu0
  %v1420 = vadd.f32 %v864, %v1419
  %v1421 = vpop.f32.mrf.mxu0
  %1422 = vdwg.mxu0
  %1423 = vmatprep.subr.mxu0 0.0
  %1424 = vmatpush1.msra.mxu0 0.0
  %1425 = vmatprep.subr.mxu0 0.0
  %1426 = vmatpush1.msra.mxu0 0.0
  %1427 = vmatprep.subr.mxu0 0.0
  %1428 = vmatpush1.msra.mxu0 0.0
  %1429 = vmatprep.subr.mxu0 0.0
  %1430 = vmatpush1.msra.mxu0 0.0
  %1431 = vmatprep.subr.mxu0 0.0
  %1432 = vmatpush1.msra.mxu0 0.0
  %1433 = vmatprep.subr.mxu0 0.0
  %1434 = vmatpush1.msra.mxu0 0.0
  %1435 = vmatprep.subr.mxu0 0.0
  %1436 = vmatpush1.msra.mxu0 0.0
  %1437 = vmatprep.subr.mxu0 0.0
  %1438 = vmatpush1.msra.mxu0 0.0
  %1439 = vmatprep.subr.mxu0 0.0
  %1440 = vmatpush1.msra.mxu0 0.0
  %1441 = vmatprep.subr.mxu0 0.0
  %1442 = vmatpush1.msra.mxu0 0.0
  %1443 = vmatprep.subr.mxu0 0.0
  %1444 = vmatpush1.msra.mxu0 %v856
  %1445 = vmatprep.subr.mxu0 0.0
  %1446 = vmatpush1.msra.mxu0 %v855
  %1447 = vmatprep.subr.mxu0 0.0
  %1448 = vmatpush1.msra.mxu0 %v854
  %1449 = vmatprep.subr.mxu0 0.0
  %1450 = vmatpush1.msra.mxu0 %v853
  %1451 = vmatprep.subr.mxu0 0.0
  %1452 = vmatpush1.msra.mxu0 %v852
  %1453 = vmatprep.subr.mxu0 0.0
  %1454 = vmatpush1.msra.mxu0 %v851
  %1455 = vmatprep.subr.mxu0 0.0
  %1456 = vmatpush2.msra.mxu0 0.0
  %1457 = vmatprep.subr.mxu0 0.0
  %1458 = vmatpush2.msra.mxu0 0.0
  %1459 = vmatprep.subr.mxu0 0.0
  %1460 = vmatpush2.msra.mxu0 0.0
  %1461 = vmatprep.subr.mxu0 0.0
  %1462 = vmatpush2.msra.mxu0 0.0
  %1463 = vmatprep.subr.mxu0 0.0
  %1464 = vmatpush2.msra.mxu0 0.0
  %1465 = vmatprep.subr.mxu0 0.0
  %1466 = vmatpush2.msra.mxu0 0.0
  %1467 = vmatprep.subr.mxu0 0.0
  %1468 = vmatpush2.msra.mxu0 0.0
  %1469 = vmatprep.subr.mxu0 0.0
  %1470 = vmatpush2.msra.mxu0 0.0
  %1471 = vmatprep.subr.mxu0 0.0
  %1472 = vmatpush2.msra.mxu0 0.0
  %1473 = vmatprep.subr.mxu0 0.0
  %1474 = vmatpush2.msra.mxu0 0.0
  %1475 = vmatprep.subr.mxu0 0.0
  %1476 = vmatpush2.msra.mxu0 0.0
  %1477 = vmatprep.subr.mxu0 0.0
  %1478 = vmatpush2.msra.mxu0 0.0
  %1479 = vmatprep.subr.mxu0 0.0
  %1480 = vmatpush2.msra.mxu0 0.0
  %1481 = vmatprep.subr.mxu0 0.0
  %1482 = vmatpush2.msra.mxu0 0.0
  %1483 = vmatprep.subr.mxu0 0.0
  %1484 = vmatpush2.msra.mxu0 0.0
  %1485 = vmatprep.subr.mxu0 0.0
  %1486 = vmatpush2.msra.mxu0 0.0
  %1487 = vmatprep.mubr.f32.mxu0 0.0
  %1488 = vmatmul.mubr.f32.gmra.mxu0 %v1351
  %v1489 = vpop.f32.mrf.mxu0
  %v1490 = vadd.f32 %v866, %v1489
  %v1491 = vpop.f32.mrf.mxu0
  %1492 = vdwg.mxu0
  %1493 = vmatprep.subr.mxu0 0.0
  %1494 = vmatpush1.msra.mxu0 0.0
  %1495 = vmatprep.subr.mxu0 0.0
  %1496 = vmatpush1.msra.mxu0 0.0
  %1497 = vmatprep.subr.mxu0 0.0
  %1498 = vmatpush1.msra.mxu0 0.0
  %1499 = vmatprep.subr.mxu0 0.0
  %1500 = vmatpush1.msra.mxu0 0.0
  %1501 = vmatprep.subr.mxu0 0.0
  %1502 = vmatpush1.msra.mxu0 0.0
  %1503 = vmatprep.subr.mxu0 0.0
  %1504 = vmatpush1.msra.mxu0 0.0
  %1505 = vmatprep.subr.mxu0 0.0
  %1506 = vmatpush1.msra.mxu0 0.0
  %1507 = vmatprep.subr.mxu0 0.0
  %1508 = vmatpush1.msra.mxu0 0.0
  %1509 = vmatprep.subr.mxu0 0.0
  %1510 = vmatpush1.msra.mxu0 0.0
  %1511 = vmatprep.subr.mxu0 0.0
  %1512 = vmatpush1.msra.mxu0 0.0
  %1513 = vmatprep.subr.mxu0 0.0
  %1514 = vmatpush1.msra.mxu0 %v863
  %1515 = vmatprep.subr.mxu0 0.0
  %1516 = vmatpush1.msra.mxu0 %v862
  %1517 = vmatprep.subr.mxu0 0.0
  %1518 = vmatpush1.msra.mxu0 %v861
  %1519 = vmatprep.subr.mxu0 0.0
  %1520 = vmatpush1.msra.mxu0 %v860
  %1521 = vmatprep.subr.mxu0 0.0
  %1522 = vmatpush1.msra.mxu0 %v859
  %1523 = vmatprep.subr.mxu0 0.0
  %1524 = vmatpush1.msra.mxu0 %v858
  %1525 = vmatprep.subr.mxu0 0.0
  %1526 = vmatpush2.msra.mxu0 0.0
  %1527 = vmatprep.subr.mxu0 0.0
  %1528 = vmatpush2.msra.mxu0 0.0
  %1529 = vmatprep.subr.mxu0 0.0
  %1530 = vmatpush2.msra.mxu0 0.0
  %1531 = vmatprep.subr.mxu0 0.0
  %1532 = vmatpush2.msra.mxu0 0.0
  %1533 = vmatprep.subr.mxu0 0.0
  %1534 = vmatpush2.msra.mxu0 0.0
  %1535 = vmatprep.subr.mxu0 0.0
  %1536 = vmatpush2.msra.mxu0 0.0
  %1537 = vmatprep.subr.mxu0 0.0
  %1538 = vmatpush2.msra.mxu0 0.0
  %1539 = vmatprep.subr.mxu0 0.0
  %1540 = vmatpush2.msra.mxu0 0.0
  %1541 = vmatprep.subr.mxu0 0.0
  %1542 = vmatpush2.msra.mxu0 0.0
  %1543 = vmatprep.subr.mxu0 0.0
  %1544 = vmatpush2.msra.mxu0 0.0
  %1545 = vmatprep.subr.mxu0 0.0
  %1546 = vmatpush2.msra.mxu0 0.0
  %1547 = vmatprep.subr.mxu0 0.0
  %1548 = vmatpush2.msra.mxu0 0.0
  %1549 = vmatprep.subr.mxu0 0.0
  %1550 = vmatpush2.msra.mxu0 0.0
  %1551 = vmatprep.subr.mxu0 0.0
  %1552 = vmatpush2.msra.mxu0 0.0
  %1553 = vmatprep.subr.mxu0 0.0
  %1554 = vmatpush2.msra.mxu0 0.0
  %1555 = vmatprep.subr.mxu0 0.0
  %1556 = vmatpush2.msra.mxu0 0.0
  %1557 = vmatprep.mubr.f32.mxu0 0.0
  %1558 = vmatmul.mubr.f32.gmra.mxu0 %v1351
  %v1559 = vpop.f32.mrf.mxu0
  %v1560 = vadd.f32 %v868, %v1559
  %v1561 = vpop.f32.mrf.mxu0
  %1562 = vdwg.mxu0
  %v1564 = vrot.slane %v1420, 6
  %v1566 = vadd.f32 %v656, %v1564
  %v1567 = vxor.u32 %v1566, 2147483648
  %v1568 = vmul.f32 %v1567, 1.442695
  %v1569 = vpow.pop %v1568
  %v1570 = vadd.f32 %v1569, 1.0
  %v1571 = vrcp.pop %v1570
  %v1572 = vmul.f32 1.0, %v1571
  %v1574 = vrot.slane %v1490, 6
  %v1576 = vadd.f32 %v746, %v1574
  %v1577 = vxor.u32 %v1576, 2147483648
  %v1578 = vmul.f32 %v1577, 1.442695
  %v1579 = vpow.pop %v1578
  %v1580 = vadd.f32 %v1579, 1.0
  %v1581 = vrcp.pop %v1580
  %v1582 = vmul.f32 1.0, %v1581
  %v1584 = vrot.slane %v1560, 6
  %v1586 = vmul.f32 %v1572, %v1584
  %v1587 = vadd.f32 %v836, %v1586
  %v1588 = vtanh.pop %v1587
  %v1589 = vsub.f32 1.0, %v1582
  %v1590 = vmul.f32 %v1589, %v1588
  %v1591 = vrot.slane %v1348, 7
  %v1593 = vmul.f32 %v1582, %v1591
  %v1594 = vadd.f32 %v1590, %v1593
  %v1596 = vrot.slane %v1594, 2
  %v1597 = vsel %vm518, %v1596, 0
  %1599 = vmatprep.subr.mxu0 0.0
  %1600 = vmatpush1.msra.mxu0 0.0
  %1601 = vmatprep.subr.mxu0 0.0
  %1602 = vmatpush1.msra.mxu0 0.0
  %1603 = vmatprep.subr.mxu0 0.0
  %1604 = vmatpush1.msra.mxu0 0.0
  %1605 = vmatprep.subr.mxu0 0.0
  %1606 = vmatpush1.msra.mxu0 0.0
  %1607 = vmatprep.subr.mxu0 0.0
  %1608 = vmatpush1.msra.mxu0 0.0
  %1609 = vmatprep.subr.mxu0 0.0
  %1610 = vmatpush1.msra.mxu0 0.0
  %1611 = vmatprep.subr.mxu0 0.0
  %1612 = vmatpush1.msra.mxu0 0.0
  %1613 = vmatprep.subr.mxu0 0.0
  %1614 = vmatpush1.msra.mxu0 0.0
  %1615 = vmatprep.subr.mxu0 0.0
  %1616 = vmatpush1.msra.mxu0 0.0
  %1617 = vmatprep.subr.mxu0 0.0
  %1618 = vmatpush1.msra.mxu0 0.0
  %1619 = vmatprep.subr.mxu0 0.0
  %1620 = vmatpush1.msra.mxu0 %v849
  %1621 = vmatprep.subr.mxu0 0.0
  %1622 = vmatpush1.msra.mxu0 %v848
  %1623 = vmatprep.subr.mxu0 0.0
  %1624 = vmatpush1.msra.mxu0 %v847
  %1625 = vmatprep.subr.mxu0 0.0
  %1626 = vmatpush1.msra.mxu0 %v846
  %1627 = vmatprep.subr.mxu0 0.0
  %1628 = vmatpush1.msra.mxu0 %v845
  %1629 = vmatprep.subr.mxu0 0.0
  %1630 = vmatpush1.msra.mxu0 %v844
  %1631 = vmatprep.subr.mxu0 0.0
  %1632 = vmatpush2.msra.mxu0 0.0
  %1633 = vmatprep.subr.mxu0 0.0
  %1634 = vmatpush2.msra.mxu0 0.0
  %1635 = vmatprep.subr.mxu0 0.0
  %1636 = vmatpush2.msra.mxu0 0.0
  %1637 = vmatprep.subr.mxu0 0.0
  %1638 = vmatpush2.msra.mxu0 0.0
  %1639 = vmatprep.subr.mxu0 0.0
  %1640 = vmatpush2.msra.mxu0 0.0
  %1641 = vmatprep.subr.mxu0 0.0
  %1642 = vmatpush2.msra.mxu0 0.0
  %1643 = vmatprep.subr.mxu0 0.0
  %1644 = vmatpush2.msra.mxu0 0.0
  %1645 = vmatprep.subr.mxu0 0.0
  %1646 = vmatpush2.msra.mxu0 0.0
  %1647 = vmatprep.subr.mxu0 0.0
  %1648 = vmatpush2.msra.mxu0 0.0
  %1649 = vmatprep.subr.mxu0 0.0
  %1650 = vmatpush2.msra.mxu0 0.0
  %1651 = vmatprep.subr.mxu0 0.0
  %1652 = vmatpush2.msra.mxu0 0.0
  %1653 = vmatprep.subr.mxu0 0.0
  %1654 = vmatpush2.msra.mxu0 0.0
  %1655 = vmatprep.subr.mxu0 0.0
  %1656 = vmatpush2.msra.mxu0 0.0
  %1657 = vmatprep.subr.mxu0 0.0
  %1658 = vmatpush2.msra.mxu0 0.0
  %1659 = vmatprep.subr.mxu0 0.0
  %1660 = vmatpush2.msra.mxu0 0.0
  %1661 = vmatprep.subr.mxu0 0.0
  %1662 = vmatpush2.msra.mxu0 0.0
  %1663 = vmatprep.mubr.f32.mxu0 0.0
  %1664 = vmatmul.mubr.f32.gmra.mxu0 %v1597
  %v1665 = vpop.f32.mrf.mxu0
  %v1666 = vadd.f32 %v864, %v1665
  %v1667 = vpop.f32.mrf.mxu0
  %1668 = vdwg.mxu0
  %1669 = vmatprep.subr.mxu0 0.0
  %1670 = vmatpush1.msra.mxu0 0.0
  %1671 = vmatprep.subr.mxu0 0.0
  %1672 = vmatpush1.msra.mxu0 0.0
  %1673 = vmatprep.subr.mxu0 0.0
  %1674 = vmatpush1.msra.mxu0 0.0
  %1675 = vmatprep.subr.mxu0 0.0
  %1676 = vmatpush1.msra.mxu0 0.0
  %1677 = vmatprep.subr.mxu0 0.0
  %1678 = vmatpush1.msra.mxu0 0.0
  %1679 = vmatprep.subr.mxu0 0.0
  %1680 = vmatpush1.msra.mxu0 0.0
  %1681 = vmatprep.subr.mxu0 0.0
  %1682 = vmatpush1.msra.mxu0 0.0
  %1683 = vmatprep.subr.mxu0 0.0
  %1684 = vmatpush1.msra.mxu0 0.0
  %1685 = vmatprep.subr.mxu0 0.0
  %1686 = vmatpush1.msra.mxu0 0.0
  %1687 = vmatprep.subr.mxu0 0.0
  %1688 = vmatpush1.msra.mxu0 0.0
  %1689 = vmatprep.subr.mxu0 0.0
  %1690 = vmatpush1.msra.mxu0 %v856
  %1691 = vmatprep.subr.mxu0 0.0
  %1692 = vmatpush1.msra.mxu0 %v855
  %1693 = vmatprep.subr.mxu0 0.0
  %1694 = vmatpush1.msra.mxu0 %v854
  %1695 = vmatprep.subr.mxu0 0.0
  %1696 = vmatpush1.msra.mxu0 %v853
  %1697 = vmatprep.subr.mxu0 0.0
  %1698 = vmatpush1.msra.mxu0 %v852
  %1699 = vmatprep.subr.mxu0 0.0
  %1700 = vmatpush1.msra.mxu0 %v851
  %1701 = vmatprep.subr.mxu0 0.0
  %1702 = vmatpush2.msra.mxu0 0.0
  %1703 = vmatprep.subr.mxu0 0.0
  %1704 = vmatpush2.msra.mxu0 0.0
  %1705 = vmatprep.subr.mxu0 0.0
  %1706 = vmatpush2.msra.mxu0 0.0
  %1707 = vmatprep.subr.mxu0 0.0
  %1708 = vmatpush2.msra.mxu0 0.0
  %1709 = vmatprep.subr.mxu0 0.0
  %1710 = vmatpush2.msra.mxu0 0.0
  %1711 = vmatprep.subr.mxu0 0.0
  %1712 = vmatpush2.msra.mxu0 0.0
  %1713 = vmatprep.subr.mxu0 0.0
  %1714 = vmatpush2.msra.mxu0 0.0
  %1715 = vmatprep.subr.mxu0 0.0
  %1716 = vmatpush2.msra.mxu0 0.0
  %1717 = vmatprep.subr.mxu0 0.0
  %1718 = vmatpush2.msra.mxu0 0.0
  %1719 = vmatprep.subr.mxu0 0.0
  %1720 = vmatpush2.msra.mxu0 0.0
  %1721 = vmatprep.subr.mxu0 0.0
  %1722 = vmatpush2.msra.mxu0 0.0
  %1723 = vmatprep.subr.mxu0 0.0
  %1724 = vmatpush2.msra.mxu0 0.0
  %1725 = vmatprep.subr.mxu0 0.0
  %1726 = vmatpush2.msra.mxu0 0.0
  %1727 = vmatprep.subr.mxu0 0.0
  %1728 = vmatpush2.msra.mxu0 0.0
  %1729 = vmatprep.subr.mxu0 0.0
  %1730 = vmatpush2.msra.mxu0 0.0
  %1731 = vmatprep.subr.mxu0 0.0
  %1732 = vmatpush2.msra.mxu0 0.0
  %1733 = vmatprep.mubr.f32.mxu0 0.0
  %1734 = vmatmul.mubr.f32.gmra.mxu0 %v1597
  %v1735 = vpop.f32.mrf.mxu0
  %v1736 = vadd.f32 %v866, %v1735
  %v1737 = vpop.f32.mrf.mxu0
  %1738 = vdwg.mxu0
  %1739 = vmatprep.subr.mxu0 0.0
  %1740 = vmatpush1.msra.mxu0 0.0
  %1741 = vmatprep.subr.mxu0 0.0
  %1742 = vmatpush1.msra.mxu0 0.0
  %1743 = vmatprep.subr.mxu0 0.0
  %1744 = vmatpush1.msra.mxu0 0.0
  %1745 = vmatprep.subr.mxu0 0.0
  %1746 = vmatpush1.msra.mxu0 0.0
  %1747 = vmatprep.subr.mxu0 0.0
  %1748 = vmatpush1.msra.mxu0 0.0
  %1749 = vmatprep.subr.mxu0 0.0
  %1750 = vmatpush1.msra.mxu0 0.0
  %1751 = vmatprep.subr.mxu0 0.0
  %1752 = vmatpush1.msra.mxu0 0.0
  %1753 = vmatprep.subr.mxu0 0.0
  %1754 = vmatpush1.msra.mxu0 0.0
  %1755 = vmatprep.subr.mxu0 0.0
  %1756 = vmatpush1.msra.mxu0 0.0
  %1757 = vmatprep.subr.mxu0 0.0
  %1758 = vmatpush1.msra.mxu0 0.0
  %1759 = vmatprep.subr.mxu0 0.0
  %1760 = vmatpush1.msra.mxu0 %v863
  %1761 = vmatprep.subr.mxu0 0.0
  %1762 = vmatpush1.msra.mxu0 %v862
  %1763 = vmatprep.subr.mxu0 0.0
  %1764 = vmatpush1.msra.mxu0 %v861
  %1765 = vmatprep.subr.mxu0 0.0
  %1766 = vmatpush1.msra.mxu0 %v860
  %1767 = vmatprep.subr.mxu0 0.0
  %1768 = vmatpush1.msra.mxu0 %v859
  %1769 = vmatprep.subr.mxu0 0.0
  %1770 = vmatpush1.msra.mxu0 %v858
  %1771 = vmatprep.subr.mxu0 0.0
  %1772 = vmatpush2.msra.mxu0 0.0
  %1773 = vmatprep.subr.mxu0 0.0
  %1774 = vmatpush2.msra.mxu0 0.0
  %1775 = vmatprep.subr.mxu0 0.0
  %1776 = vmatpush2.msra.mxu0 0.0
  %1777 = vmatprep.subr.mxu0 0.0
  %1778 = vmatpush2.msra.mxu0 0.0
  %1779 = vmatprep.subr.mxu0 0.0
  %1780 = vmatpush2.msra.mxu0 0.0
  %1781 = vmatprep.subr.mxu0 0.0
  %1782 = vmatpush2.msra.mxu0 0.0
  %1783 = vmatprep.subr.mxu0 0.0
  %1784 = vmatpush2.msra.mxu0 0.0
  %1785 = vmatprep.subr.mxu0 0.0
  %1786 = vmatpush2.msra.mxu0 0.0
  %1787 = vmatprep.subr.mxu0 0.0
  %1788 = vmatpush2.msra.mxu0 0.0
  %1789 = vmatprep.subr.mxu0 0.0
  %1790 = vmatpush2.msra.mxu0 0.0
  %1791 = vmatprep.subr.mxu0 0.0
  %1792 = vmatpush2.msra.mxu0 0.0
  %1793 = vmatprep.subr.mxu0 0.0
  %1794 = vmatpush2.msra.mxu0 0.0
  %1795 = vmatprep.subr.mxu0 0.0
  %1796 = vmatpush2.msra.mxu0 0.0
  %1797 = vmatprep.subr.mxu0 0.0
  %1798 = vmatpush2.msra.mxu0 0.0
  %1799 = vmatprep.subr.mxu0 0.0
  %1800 = vmatpush2.msra.mxu0 0.0
  %1801 = vmatprep.subr.mxu0 0.0
  %1802 = vmatpush2.msra.mxu0 0.0
  %1803 = vmatprep.mubr.f32.mxu0 0.0
  %1804 = vmatmul.mubr.f32.gmra.mxu0 %v1597
  %v1805 = vpop.f32.mrf.mxu0
  %v1806 = vadd.f32 %v868, %v1805
  %v1807 = vpop.f32.mrf.mxu0
  %1808 = vdwg.mxu0
  %v1810 = vrot.slane %v1666, 5
  %v1812 = vadd.f32 %v656, %v1810
  %v1813 = vxor.u32 %v1812, 2147483648
  %v1814 = vmul.f32 %v1813, 1.442695
  %v1815 = vpow.pop %v1814
  %v1816 = vadd.f32 %v1815, 1.0
  %v1817 = vrcp.pop %v1816
  %v1818 = vmul.f32 1.0, %v1817
  %v1820 = vrot.slane %v1736, 5
  %v1822 = vadd.f32 %v746, %v1820
  %v1823 = vxor.u32 %v1822, 2147483648
  %v1824 = vmul.f32 %v1823, 1.442695
  %v1825 = vpow.pop %v1824
  %v1826 = vadd.f32 %v1825, 1.0
  %v1827 = vrcp.pop %v1826
  %v1828 = vmul.f32 1.0, %v1827
  %v1830 = vrot.slane %v1806, 5
  %v1832 = vmul.f32 %v1818, %v1830
  %v1833 = vadd.f32 %v836, %v1832
  %v1834 = vtanh.pop %v1833
  %v1835 = vsub.f32 1.0, %v1828
  %v1836 = vmul.f32 %v1835, %v1834
  %v1837 = vrot.slane %v1594, 7
  %v1839 = vmul.f32 %v1828, %v1837
  %v1840 = vadd.f32 %v1836, %v1839
  %v1842 = vrot.slane %v1840, 3
  %v1843 = vsel %vm518, %v1842, 0
  %1845 = vmatprep.subr.mxu0 0.0
  %1846 = vmatpush1.msra.mxu0 0.0
  %1847 = vmatprep.subr.mxu0 0.0
  %1848 = vmatpush1.msra.mxu0 0.0
  %1849 = vmatprep.subr.mxu0 0.0
  %1850 = vmatpush1.msra.mxu0 0.0
  %1851 = vmatprep.subr.mxu0 0.0
  %1852 = vmatpush1.msra.mxu0 0.0
  %1853 = vmatprep.subr.mxu0 0.0
  %1854 = vmatpush1.msra.mxu0 0.0
  %1855 = vmatprep.subr.mxu0 0.0
  %1856 = vmatpush1.msra.mxu0 0.0
  %1857 = vmatprep.subr.mxu0 0.0
  %1858 = vmatpush1.msra.mxu0 0.0
  %1859 = vmatprep.subr.mxu0 0.0
  %1860 = vmatpush1.msra.mxu0 0.0
  %1861 = vmatprep.subr.mxu0 0.0
  %1862 = vmatpush1.msra.mxu0 0.0
  %1863 = vmatprep.subr.mxu0 0.0
  %1864 = vmatpush1.msra.mxu0 0.0
  %1865 = vmatprep.subr.mxu0 0.0
  %1866 = vmatpush1.msra.mxu0 %v849
  %1867 = vmatprep.subr.mxu0 0.0
  %1868 = vmatpush1.msra.mxu0 %v848
  %1869 = vmatprep.subr.mxu0 0.0
  %1870 = vmatpush1.msra.mxu0 %v847
  %1871 = vmatprep.subr.mxu0 0.0
  %1872 = vmatpush1.msra.mxu0 %v846
  %1873 = vmatprep.subr.mxu0 0.0
  %1874 = vmatpush1.msra.mxu0 %v845
  %1875 = vmatprep.subr.mxu0 0.0
  %1876 = vmatpush1.msra.mxu0 %v844
  %1877 = vmatprep.subr.mxu0 0.0
  %1878 = vmatpush2.msra.mxu0 0.0
  %1879 = vmatprep.subr.mxu0 0.0
  %1880 = vmatpush2.msra.mxu0 0.0
  %1881 = vmatprep.subr.mxu0 0.0
  %1882 = vmatpush2.msra.mxu0 0.0
  %1883 = vmatprep.subr.mxu0 0.0
  %1884 = vmatpush2.msra.mxu0 0.0
  %1885 = vmatprep.subr.mxu0 0.0
  %1886 = vmatpush2.msra.mxu0 0.0
  %1887 = vmatprep.subr.mxu0 0.0
  %1888 = vmatpush2.msra.mxu0 0.0
  %1889 = vmatprep.subr.mxu0 0.0
  %1890 = vmatpush2.msra.mxu0 0.0
  %1891 = vmatprep.subr.mxu0 0.0
  %1892 = vmatpush2.msra.mxu0 0.0
  %1893 = vmatprep.subr.mxu0 0.0
  %1894 = vmatpush2.msra.mxu0 0.0
  %1895 = vmatprep.subr.mxu0 0.0
  %1896 = vmatpush2.msra.mxu0 0.0
  %1897 = vmatprep.subr.mxu0 0.0
  %1898 = vmatpush2.msra.mxu0 0.0
  %1899 = vmatprep.subr.mxu0 0.0
  %1900 = vmatpush2.msra.mxu0 0.0
  %1901 = vmatprep.subr.mxu0 0.0
  %1902 = vmatpush2.msra.mxu0 0.0
  %1903 = vmatprep.subr.mxu0 0.0
  %1904 = vmatpush2.msra.mxu0 0.0
  %1905 = vmatprep.subr.mxu0 0.0
  %1906 = vmatpush2.msra.mxu0 0.0
  %1907 = vmatprep.subr.mxu0 0.0
  %1908 = vmatpush2.msra.mxu0 0.0
  %1909 = vmatprep.mubr.f32.mxu0 0.0
  %1910 = vmatmul.mubr.f32.gmra.mxu0 %v1843
  %v1911 = vpop.f32.mrf.mxu0
  %v1912 = vadd.f32 %v864, %v1911
  %v1913 = vpop.f32.mrf.mxu0
  %1914 = vdwg.mxu0
  %1915 = vmatprep.subr.mxu0 0.0
  %1916 = vmatpush1.msra.mxu0 0.0
  %1917 = vmatprep.subr.mxu0 0.0
  %1918 = vmatpush1.msra.mxu0 0.0
  %1919 = vmatprep.subr.mxu0 0.0
  %1920 = vmatpush1.msra.mxu0 0.0
  %1921 = vmatprep.subr.mxu0 0.0
  %1922 = vmatpush1.msra.mxu0 0.0
  %1923 = vmatprep.subr.mxu0 0.0
  %1924 = vmatpush1.msra.mxu0 0.0
  %1925 = vmatprep.subr.mxu0 0.0
  %1926 = vmatpush1.msra.mxu0 0.0
  %1927 = vmatprep.subr.mxu0 0.0
  %1928 = vmatpush1.msra.mxu0 0.0
  %1929 = vmatprep.subr.mxu0 0.0
  %1930 = vmatpush1.msra.mxu0 0.0
  %1931 = vmatprep.subr.mxu0 0.0
  %1932 = vmatpush1.msra.mxu0 0.0
  %1933 = vmatprep.subr.mxu0 0.0
  %1934 = vmatpush1.msra.mxu0 0.0
  %1935 = vmatprep.subr.mxu0 0.0
  %1936 = vmatpush1.msra.mxu0 %v856
  %1937 = vmatprep.subr.mxu0 0.0
  %1938 = vmatpush1.msra.mxu0 %v855
  %1939 = vmatprep.subr.mxu0 0.0
  %1940 = vmatpush1.msra.mxu0 %v854
  %1941 = vmatprep.subr.mxu0 0.0
  %1942 = vmatpush1.msra.mxu0 %v853
  %1943 = vmatprep.subr.mxu0 0.0
  %1944 = vmatpush1.msra.mxu0 %v852
  %1945 = vmatprep.subr.mxu0 0.0
  %1946 = vmatpush1.msra.mxu0 %v851
  %1947 = vmatprep.subr.mxu0 0.0
  %1948 = vmatpush2.msra.mxu0 0.0
  %1949 = vmatprep.subr.mxu0 0.0
  %1950 = vmatpush2.msra.mxu0 0.0
  %1951 = vmatprep.subr.mxu0 0.0
  %1952 = vmatpush2.msra.mxu0 0.0
  %1953 = vmatprep.subr.mxu0 0.0
  %1954 = vmatpush2.msra.mxu0 0.0
  %1955 = vmatprep.subr.mxu0 0.0
  %1956 = vmatpush2.msra.mxu0 0.0
  %1957 = vmatprep.subr.mxu0 0.0
  %1958 = vmatpush2.msra.mxu0 0.0
  %1959 = vmatprep.subr.mxu0 0.0
  %1960 = vmatpush2.msra.mxu0 0.0
  %1961 = vmatprep.subr.mxu0 0.0
  %1962 = vmatpush2.msra.mxu0 0.0
  %1963 = vmatprep.subr.mxu0 0.0
  %1964 = vmatpush2.msra.mxu0 0.0
  %1965 = vmatprep.subr.mxu0 0.0
  %1966 = vmatpush2.msra.mxu0 0.0
  %1967 = vmatprep.subr.mxu0 0.0
  %1968 = vmatpush2.msra.mxu0 0.0
  %1969 = vmatprep.subr.mxu0 0.0
  %1970 = vmatpush2.msra.mxu0 0.0
  %1971 = vmatprep.subr.mxu0 0.0
  %1972 = vmatpush2.msra.mxu0 0.0
  %1973 = vmatprep.subr.mxu0 0.0
  %1974 = vmatpush2.msra.mxu0 0.0
  %1975 = vmatprep.subr.mxu0 0.0
  %1976 = vmatpush2.msra.mxu0 0.0
  %1977 = vmatprep.subr.mxu0 0.0
  %1978 = vmatpush2.msra.mxu0 0.0
  %1979 = vmatprep.mubr.f32.mxu0 0.0
  %1980 = vmatmul.mubr.f32.gmra.mxu0 %v1843
  %v1981 = vpop.f32.mrf.mxu0
  %v1982 = vadd.f32 %v866, %v1981
  %v1983 = vpop.f32.mrf.mxu0
  %1984 = vdwg.mxu0
  %1985 = vmatprep.subr.mxu0 0.0
  %1986 = vmatpush1.msra.mxu0 0.0
  %1987 = vmatprep.subr.mxu0 0.0
  %1988 = vmatpush1.msra.mxu0 0.0
  %1989 = vmatprep.subr.mxu0 0.0
  %1990 = vmatpush1.msra.mxu0 0.0
  %1991 = vmatprep.subr.mxu0 0.0
  %1992 = vmatpush1.msra.mxu0 0.0
  %1993 = vmatprep.subr.mxu0 0.0
  %1994 = vmatpush1.msra.mxu0 0.0
  %1995 = vmatprep.subr.mxu0 0.0
  %1996 = vmatpush1.msra.mxu0 0.0
  %1997 = vmatprep.subr.mxu0 0.0
  %1998 = vmatpush1.msra.mxu0 0.0
  %1999 = vmatprep.subr.mxu0 0.0
  %2000 = vmatpush1.msra.mxu0 0.0
  %2001 = vmatprep.subr.mxu0 0.0
  %2002 = vmatpush1.msra.mxu0 0.0
  %2003 = vmatprep.subr.mxu0 0.0
  %2004 = vmatpush1.msra.mxu0 0.0
  %2005 = vmatprep.subr.mxu0 0.0
  %2006 = vmatpush1.msra.mxu0 %v863
  %2007 = vmatprep.subr.mxu0 0.0
  %2008 = vmatpush1.msra.mxu0 %v862
  %2009 = vmatprep.subr.mxu0 0.0
  %2010 = vmatpush1.msra.mxu0 %v861
  %2011 = vmatprep.subr.mxu0 0.0
  %2012 = vmatpush1.msra.mxu0 %v860
  %2013 = vmatprep.subr.mxu0 0.0
  %2014 = vmatpush1.msra.mxu0 %v859
  %2015 = vmatprep.subr.mxu0 0.0
  %2016 = vmatpush1.msra.mxu0 %v858
  %2017 = vmatprep.subr.mxu0 0.0
  %2018 = vmatpush2.msra.mxu0 0.0
  %2019 = vmatprep.subr.mxu0 0.0
  %2020 = vmatpush2.msra.mxu0 0.0
  %2021 = vmatprep.subr.mxu0 0.0
  %2022 = vmatpush2.msra.mxu0 0.0
  %2023 = vmatprep.subr.mxu0 0.0
  %2024 = vmatpush2.msra.mxu0 0.0
  %2025 = vmatprep.subr.mxu0 0.0
  %2026 = vmatpush2.msra.mxu0 0.0
  %2027 = vmatprep.subr.mxu0 0.0
  %2028 = vmatpush2.msra.mxu0 0.0
  %2029 = vmatprep.subr.mxu0 0.0
  %2030 = vmatpush2.msra.mxu0 0.0
  %2031 = vmatprep.subr.mxu0 0.0
  %2032 = vmatpush2.msra.mxu0 0.0
  %2033 = vmatprep.subr.mxu0 0.0
  %2034 = vmatpush2.msra.mxu0 0.0
  %2035 = vmatprep.subr.mxu0 0.0
  %2036 = vmatpush2.msra.mxu0 0.0
  %2037 = vmatprep.subr.mxu0 0.0
  %2038 = vmatpush2.msra.mxu0 0.0
  %2039 = vmatprep.subr.mxu0 0.0
  %2040 = vmatpush2.msra.mxu0 0.0
  %2041 = vmatprep.subr.mxu0 0.0
  %2042 = vmatpush2.msra.mxu0 0.0
  %2043 = vmatprep.subr.mxu0 0.0
  %2044 = vmatpush2.msra.mxu0 0.0
  %2045 = vmatprep.subr.mxu0 0.0
  %2046 = vmatpush2.msra.mxu0 0.0
  %2047 = vmatprep.subr.mxu0 0.0
  %2048 = vmatpush2.msra.mxu0 0.0
  %2049 = vmatprep.mubr.f32.mxu0 0.0
  %2050 = vmatmul.mubr.f32.gmra.mxu0 %v1843
  %v2051 = vpop.f32.mrf.mxu0
  %v2052 = vadd.f32 %v868, %v2051
  %v2053 = vpop.f32.mrf.mxu0
  %2054 = vdwg.mxu0
  %v2056 = vrot.slane %v1912, 4
  %v2058 = vadd.f32 %v656, %v2056
  %v2059 = vxor.u32 %v2058, 2147483648
  %v2060 = vmul.f32 %v2059, 1.442695
  %v2061 = vpow.pop %v2060
  %v2062 = vadd.f32 %v2061, 1.0
  %v2063 = vrcp.pop %v2062
  %v2064 = vmul.f32 1.0, %v2063
  %v2066 = vrot.slane %v1982, 4
  %v2068 = vadd.f32 %v746, %v2066
  %v2069 = vxor.u32 %v2068, 2147483648
  %v2070 = vmul.f32 %v2069, 1.442695
  %v2071 = vpow.pop %v2070
  %v2072 = vadd.f32 %v2071, 1.0
  %v2073 = vrcp.pop %v2072
  %v2074 = vmul.f32 1.0, %v2073
  %v2076 = vrot.slane %v2052, 4
  %v2078 = vmul.f32 %v2064, %v2076
  %v2079 = vadd.f32 %v836, %v2078
  %v2080 = vtanh.pop %v2079
  %v2081 = vsub.f32 1.0, %v2074
  %v2082 = vmul.f32 %v2081, %v2080
  %v2083 = vrot.slane %v1840, 7
  %v2085 = vmul.f32 %v2074, %v2083
  %v2086 = vadd.f32 %v2082, %v2085
  %v2088 = vrot.slane %v2086, 4
  %v2089 = vsel %vm518, %v2088, 0
  %2091 = vmatprep.subr.mxu0 0.0
  %2092 = vmatpush1.msra.mxu0 0.0
  %2093 = vmatprep.subr.mxu0 0.0
  %2094 = vmatpush1.msra.mxu0 0.0
  %2095 = vmatprep.subr.mxu0 0.0
  %2096 = vmatpush1.msra.mxu0 0.0
  %2097 = vmatprep.subr.mxu0 0.0
  %2098 = vmatpush1.msra.mxu0 0.0
  %2099 = vmatprep.subr.mxu0 0.0
  %2100 = vmatpush1.msra.mxu0 0.0
  %2101 = vmatprep.subr.mxu0 0.0
  %2102 = vmatpush1.msra.mxu0 0.0
  %2103 = vmatprep.subr.mxu0 0.0
  %2104 = vmatpush1.msra.mxu0 0.0
  %2105 = vmatprep.subr.mxu0 0.0
  %2106 = vmatpush1.msra.mxu0 0.0
  %2107 = vmatprep.subr.mxu0 0.0
  %2108 = vmatpush1.msra.mxu0 0.0
  %2109 = vmatprep.subr.mxu0 0.0
  %2110 = vmatpush1.msra.mxu0 0.0
  %2111 = vmatprep.subr.mxu0 0.0
  %2112 = vmatpush1.msra.mxu0 %v849
  %2113 = vmatprep.subr.mxu0 0.0
  %2114 = vmatpush1.msra.mxu0 %v848
  %2115 = vmatprep.subr.mxu0 0.0
  %2116 = vmatpush1.msra.mxu0 %v847
  %2117 = vmatprep.subr.mxu0 0.0
  %2118 = vmatpush1.msra.mxu0 %v846
  %2119 = vmatprep.subr.mxu0 0.0
  %2120 = vmatpush1.msra.mxu0 %v845
  %2121 = vmatprep.subr.mxu0 0.0
  %2122 = vmatpush1.msra.mxu0 %v844
  %2123 = vmatprep.subr.mxu0 0.0
  %2124 = vmatpush2.msra.mxu0 0.0
  %2125 = vmatprep.subr.mxu0 0.0
  %2126 = vmatpush2.msra.mxu0 0.0
  %2127 = vmatprep.subr.mxu0 0.0
  %2128 = vmatpush2.msra.mxu0 0.0
  %2129 = vmatprep.subr.mxu0 0.0
  %2130 = vmatpush2.msra.mxu0 0.0
  %2131 = vmatprep.subr.mxu0 0.0
  %2132 = vmatpush2.msra.mxu0 0.0
  %2133 = vmatprep.subr.mxu0 0.0
  %2134 = vmatpush2.msra.mxu0 0.0
  %2135 = vmatprep.subr.mxu0 0.0
  %2136 = vmatpush2.msra.mxu0 0.0
  %2137 = vmatprep.subr.mxu0 0.0
  %2138 = vmatpush2.msra.mxu0 0.0
  %2139 = vmatprep.subr.mxu0 0.0
  %2140 = vmatpush2.msra.mxu0 0.0
  %2141 = vmatprep.subr.mxu0 0.0
  %2142 = vmatpush2.msra.mxu0 0.0
  %2143 = vmatprep.subr.mxu0 0.0
  %2144 = vmatpush2.msra.mxu0 0.0
  %2145 = vmatprep.subr.mxu0 0.0
  %2146 = vmatpush2.msra.mxu0 0.0
  %2147 = vmatprep.subr.mxu0 0.0
  %2148 = vmatpush2.msra.mxu0 0.0
  %2149 = vmatprep.subr.mxu0 0.0
  %2150 = vmatpush2.msra.mxu0 0.0
  %2151 = vmatprep.subr.mxu0 0.0
  %2152 = vmatpush2.msra.mxu0 0.0
  %2153 = vmatprep.subr.mxu0 0.0
  %2154 = vmatpush2.msra.mxu0 0.0
  %2155 = vmatprep.mubr.f32.mxu0 0.0
  %2156 = vmatmul.mubr.f32.gmra.mxu0 %v2089
  %v2157 = vpop.f32.mrf.mxu0
  %v2158 = vadd.f32 %v864, %v2157
  %v2159 = vpop.f32.mrf.mxu0
  %2160 = vdwg.mxu0
  %2161 = vmatprep.subr.mxu0 0.0
  %2162 = vmatpush1.msra.mxu0 0.0
  %2163 = vmatprep.subr.mxu0 0.0
  %2164 = vmatpush1.msra.mxu0 0.0
  %2165 = vmatprep.subr.mxu0 0.0
  %2166 = vmatpush1.msra.mxu0 0.0
  %2167 = vmatprep.subr.mxu0 0.0
  %2168 = vmatpush1.msra.mxu0 0.0
  %2169 = vmatprep.subr.mxu0 0.0
  %2170 = vmatpush1.msra.mxu0 0.0
  %2171 = vmatprep.subr.mxu0 0.0
  %2172 = vmatpush1.msra.mxu0 0.0
  %2173 = vmatprep.subr.mxu0 0.0
  %2174 = vmatpush1.msra.mxu0 0.0
  %2175 = vmatprep.subr.mxu0 0.0
  %2176 = vmatpush1.msra.mxu0 0.0
  %2177 = vmatprep.subr.mxu0 0.0
  %2178 = vmatpush1.msra.mxu0 0.0
  %2179 = vmatprep.subr.mxu0 0.0
  %2180 = vmatpush1.msra.mxu0 0.0
  %2181 = vmatprep.subr.mxu0 0.0
  %2182 = vmatpush1.msra.mxu0 %v856
  %2183 = vmatprep.subr.mxu0 0.0
  %2184 = vmatpush1.msra.mxu0 %v855
  %2185 = vmatprep.subr.mxu0 0.0
  %2186 = vmatpush1.msra.mxu0 %v854
  %2187 = vmatprep.subr.mxu0 0.0
  %2188 = vmatpush1.msra.mxu0 %v853
  %2189 = vmatprep.subr.mxu0 0.0
  %2190 = vmatpush1.msra.mxu0 %v852
  %2191 = vmatprep.subr.mxu0 0.0
  %2192 = vmatpush1.msra.mxu0 %v851
  %2193 = vmatprep.subr.mxu0 0.0
  %2194 = vmatpush2.msra.mxu0 0.0
  %2195 = vmatprep.subr.mxu0 0.0
  %2196 = vmatpush2.msra.mxu0 0.0
  %2197 = vmatprep.subr.mxu0 0.0
  %2198 = vmatpush2.msra.mxu0 0.0
  %2199 = vmatprep.subr.mxu0 0.0
  %2200 = vmatpush2.msra.mxu0 0.0
  %2201 = vmatprep.subr.mxu0 0.0
  %2202 = vmatpush2.msra.mxu0 0.0
  %2203 = vmatprep.subr.mxu0 0.0
  %2204 = vmatpush2.msra.mxu0 0.0
  %2205 = vmatprep.subr.mxu0 0.0
  %2206 = vmatpush2.msra.mxu0 0.0
  %2207 = vmatprep.subr.mxu0 0.0
  %2208 = vmatpush2.msra.mxu0 0.0
  %2209 = vmatprep.subr.mxu0 0.0
  %2210 = vmatpush2.msra.mxu0 0.0
  %2211 = vmatprep.subr.mxu0 0.0
  %2212 = vmatpush2.msra.mxu0 0.0
  %2213 = vmatprep.subr.mxu0 0.0
  %2214 = vmatpush2.msra.mxu0 0.0
  %2215 = vmatprep.subr.mxu0 0.0
  %2216 = vmatpush2.msra.mxu0 0.0
  %2217 = vmatprep.subr.mxu0 0.0
  %2218 = vmatpush2.msra.mxu0 0.0
  %2219 = vmatprep.subr.mxu0 0.0
  %2220 = vmatpush2.msra.mxu0 0.0
  %2221 = vmatprep.subr.mxu0 0.0
  %2222 = vmatpush2.msra.mxu0 0.0
  %2223 = vmatprep.subr.mxu0 0.0
  %2224 = vmatpush2.msra.mxu0 0.0
  %2225 = vmatprep.mubr.f32.mxu0 0.0
  %2226 = vmatmul.mubr.f32.gmra.mxu0 %v2089
  %v2227 = vpop.f32.mrf.mxu0
  %v2228 = vadd.f32 %v866, %v2227
  %v2229 = vpop.f32.mrf.mxu0
  %2230 = vdwg.mxu0
  %2231 = vmatprep.subr.mxu0 0.0
  %2232 = vmatpush1.msra.mxu0 0.0
  %2233 = vmatprep.subr.mxu0 0.0
  %2234 = vmatpush1.msra.mxu0 0.0
  %2235 = vmatprep.subr.mxu0 0.0
  %2236 = vmatpush1.msra.mxu0 0.0
  %2237 = vmatprep.subr.mxu0 0.0
  %2238 = vmatpush1.msra.mxu0 0.0
  %2239 = vmatprep.subr.mxu0 0.0
  %2240 = vmatpush1.msra.mxu0 0.0
  %2241 = vmatprep.subr.mxu0 0.0
  %2242 = vmatpush1.msra.mxu0 0.0
  %2243 = vmatprep.subr.mxu0 0.0
  %2244 = vmatpush1.msra.mxu0 0.0
  %2245 = vmatprep.subr.mxu0 0.0
  %2246 = vmatpush1.msra.mxu0 0.0
  %2247 = vmatprep.subr.mxu0 0.0
  %2248 = vmatpush1.msra.mxu0 0.0
  %2249 = vmatprep.subr.mxu0 0.0
  %2250 = vmatpush1.msra.mxu0 0.0
  %2251 = vmatprep.subr.mxu0 0.0
  %2252 = vmatpush1.msra.mxu0 %v863
  %2253 = vmatprep.subr.mxu0 0.0
  %2254 = vmatpush1.msra.mxu0 %v862
  %2255 = vmatprep.subr.mxu0 0.0
  %2256 = vmatpush1.msra.mxu0 %v861
  %2257 = vmatprep.subr.mxu0 0.0
  %2258 = vmatpush1.msra.mxu0 %v860
  %2259 = vmatprep.subr.mxu0 0.0
  %2260 = vmatpush1.msra.mxu0 %v859
  %2261 = vmatprep.subr.mxu0 0.0
  %2262 = vmatpush1.msra.mxu0 %v858
  %2263 = vmatprep.subr.mxu0 0.0
  %2264 = vmatpush2.msra.mxu0 0.0
  %2265 = vmatprep.subr.mxu0 0.0
  %2266 = vmatpush2.msra.mxu0 0.0
  %2267 = vmatprep.subr.mxu0 0.0
  %2268 = vmatpush2.msra.mxu0 0.0
  %2269 = vmatprep.subr.mxu0 0.0
  %2270 = vmatpush2.msra.mxu0 0.0
  %2271 = vmatprep.subr.mxu0 0.0
  %2272 = vmatpush2.msra.mxu0 0.0
  %2273 = vmatprep.subr.mxu0 0.0
  %2274 = vmatpush2.msra.mxu0 0.0
  %2275 = vmatprep.subr.mxu0 0.0
  %2276 = vmatpush2.msra.mxu0 0.0
  %2277 = vmatprep.subr.mxu0 0.0
  %2278 = vmatpush2.msra.mxu0 0.0
  %2279 = vmatprep.subr.mxu0 0.0
  %2280 = vmatpush2.msra.mxu0 0.0
  %2281 = vmatprep.subr.mxu0 0.0
  %2282 = vmatpush2.msra.mxu0 0.0
  %2283 = vmatprep.subr.mxu0 0.0
  %2284 = vmatpush2.msra.mxu0 0.0
  %2285 = vmatprep.subr.mxu0 0.0
  %2286 = vmatpush2.msra.mxu0 0.0
  %2287 = vmatprep.subr.mxu0 0.0
  %2288 = vmatpush2.msra.mxu0 0.0
  %2289 = vmatprep.subr.mxu0 0.0
  %2290 = vmatpush2.msra.mxu0 0.0
  %2291 = vmatprep.subr.mxu0 0.0
  %2292 = vmatpush2.msra.mxu0 0.0
  %2293 = vmatprep.subr.mxu0 0.0
  %2294 = vmatpush2.msra.mxu0 0.0
  %2295 = vmatprep.mubr.f32.mxu0 0.0
  %2296 = vmatmul.mubr.f32.gmra.mxu0 %v2089
  %v2297 = vpop.f32.mrf.mxu0
  %v2298 = vadd.f32 %v868, %v2297
  %v2299 = vpop.f32.mrf.mxu0
  %2300 = vdwg.mxu0
  %v2302 = vrot.slane %v2158, 3
  %v2304 = vadd.f32 %v656, %v2302
  %v2305 = vxor.u32 %v2304, 2147483648
  %v2306 = vmul.f32 %v2305, 1.442695
  %v2307 = vpow.pop %v2306
  %v2308 = vadd.f32 %v2307, 1.0
  %v2309 = vrcp.pop %v2308
  %v2310 = vmul.f32 1.0, %v2309
  %v2312 = vrot.slane %v2228, 3
  %v2314 = vadd.f32 %v746, %v2312
  %v2315 = vxor.u32 %v2314, 2147483648
  %v2316 = vmul.f32 %v2315, 1.442695
  %v2317 = vpow.pop %v2316
  %v2318 = vadd.f32 %v2317, 1.0
  %v2319 = vrcp.pop %v2318
  %v2320 = vmul.f32 1.0, %v2319
  %v2322 = vrot.slane %v2298, 3
  %v2324 = vmul.f32 %v2310, %v2322
  %v2325 = vadd.f32 %v836, %v2324
  %v2326 = vtanh.pop %v2325
  %v2327 = vsub.f32 1.0, %v2320
  %v2328 = vmul.f32 %v2327, %v2326
  %v2329 = vrot.slane %v2086, 7
  %v2331 = vmul.f32 %v2320, %v2329
  %v2332 = vadd.f32 %v2328, %v2331
  %v2334 = vrot.slane %v2332, 5
  %v2335 = vsel %vm518, %v2334, 0
  %2337 = vmatprep.subr.mxu0 0.0
  %2338 = vmatpush1.msra.mxu0 0.0
  %2339 = vmatprep.subr.mxu0 0.0
  %2340 = vmatpush1.msra.mxu0 0.0
  %2341 = vmatprep.subr.mxu0 0.0
  %2342 = vmatpush1.msra.mxu0 0.0
  %2343 = vmatprep.subr.mxu0 0.0
  %2344 = vmatpush1.msra.mxu0 0.0
  %2345 = vmatprep.subr.mxu0 0.0
  %2346 = vmatpush1.msra.mxu0 0.0
  %2347 = vmatprep.subr.mxu0 0.0
  %2348 = vmatpush1.msra.mxu0 0.0
  %2349 = vmatprep.subr.mxu0 0.0
  %2350 = vmatpush1.msra.mxu0 0.0
  %2351 = vmatprep.subr.mxu0 0.0
  %2352 = vmatpush1.msra.mxu0 0.0
  %2353 = vmatprep.subr.mxu0 0.0
  %2354 = vmatpush1.msra.mxu0 0.0
  %2355 = vmatprep.subr.mxu0 0.0
  %2356 = vmatpush1.msra.mxu0 0.0
  %2357 = vmatprep.subr.mxu0 0.0
  %2358 = vmatpush1.msra.mxu0 %v849
  %2359 = vmatprep.subr.mxu0 0.0
  %2360 = vmatpush1.msra.mxu0 %v848
  %2361 = vmatprep.subr.mxu0 0.0
  %2362 = vmatpush1.msra.mxu0 %v847
  %2363 = vmatprep.subr.mxu0 0.0
  %2364 = vmatpush1.msra.mxu0 %v846
  %2365 = vmatprep.subr.mxu0 0.0
  %2366 = vmatpush1.msra.mxu0 %v845
  %2367 = vmatprep.subr.mxu0 0.0
  %2368 = vmatpush1.msra.mxu0 %v844
  %2369 = vmatprep.subr.mxu0 0.0
  %2370 = vmatpush2.msra.mxu0 0.0
  %2371 = vmatprep.subr.mxu0 0.0
  %2372 = vmatpush2.msra.mxu0 0.0
  %2373 = vmatprep.subr.mxu0 0.0
  %2374 = vmatpush2.msra.mxu0 0.0
  %2375 = vmatprep.subr.mxu0 0.0
  %2376 = vmatpush2.msra.mxu0 0.0
  %2377 = vmatprep.subr.mxu0 0.0
  %2378 = vmatpush2.msra.mxu0 0.0
  %2379 = vmatprep.subr.mxu0 0.0
  %2380 = vmatpush2.msra.mxu0 0.0
  %2381 = vmatprep.subr.mxu0 0.0
  %2382 = vmatpush2.msra.mxu0 0.0
  %2383 = vmatprep.subr.mxu0 0.0
  %2384 = vmatpush2.msra.mxu0 0.0
  %2385 = vmatprep.subr.mxu0 0.0
  %2386 = vmatpush2.msra.mxu0 0.0
  %2387 = vmatprep.subr.mxu0 0.0
  %2388 = vmatpush2.msra.mxu0 0.0
  %2389 = vmatprep.subr.mxu0 0.0
  %2390 = vmatpush2.msra.mxu0 0.0
  %2391 = vmatprep.subr.mxu0 0.0
  %2392 = vmatpush2.msra.mxu0 0.0
  %2393 = vmatprep.subr.mxu0 0.0
  %2394 = vmatpush2.msra.mxu0 0.0
  %2395 = vmatprep.subr.mxu0 0.0
  %2396 = vmatpush2.msra.mxu0 0.0
  %2397 = vmatprep.subr.mxu0 0.0
  %2398 = vmatpush2.msra.mxu0 0.0
  %2399 = vmatprep.subr.mxu0 0.0
  %2400 = vmatpush2.msra.mxu0 0.0
  %2401 = vmatprep.mubr.f32.mxu0 0.0
  %2402 = vmatmul.mubr.f32.gmra.mxu0 %v2335
  %v2403 = vpop.f32.mrf.mxu0
  %v2404 = vadd.f32 %v864, %v2403
  %v2405 = vpop.f32.mrf.mxu0
  %2406 = vdwg.mxu0
  %2407 = vmatprep.subr.mxu0 0.0
  %2408 = vmatpush1.msra.mxu0 0.0
  %2409 = vmatprep.subr.mxu0 0.0
  %2410 = vmatpush1.msra.mxu0 0.0
  %2411 = vmatprep.subr.mxu0 0.0
  %2412 = vmatpush1.msra.mxu0 0.0
  %2413 = vmatprep.subr.mxu0 0.0
  %2414 = vmatpush1.msra.mxu0 0.0
  %2415 = vmatprep.subr.mxu0 0.0
  %2416 = vmatpush1.msra.mxu0 0.0
  %2417 = vmatprep.subr.mxu0 0.0
  %2418 = vmatpush1.msra.mxu0 0.0
  %2419 = vmatprep.subr.mxu0 0.0
  %2420 = vmatpush1.msra.mxu0 0.0
  %2421 = vmatprep.subr.mxu0 0.0
  %2422 = vmatpush1.msra.mxu0 0.0
  %2423 = vmatprep.subr.mxu0 0.0
  %2424 = vmatpush1.msra.mxu0 0.0
  %2425 = vmatprep.subr.mxu0 0.0
  %2426 = vmatpush1.msra.mxu0 0.0
  %2427 = vmatprep.subr.mxu0 0.0
  %2428 = vmatpush1.msra.mxu0 %v856
  %2429 = vmatprep.subr.mxu0 0.0
  %2430 = vmatpush1.msra.mxu0 %v855
  %2431 = vmatprep.subr.mxu0 0.0
  %2432 = vmatpush1.msra.mxu0 %v854
  %2433 = vmatprep.subr.mxu0 0.0
  %2434 = vmatpush1.msra.mxu0 %v853
  %2435 = vmatprep.subr.mxu0 0.0
  %2436 = vmatpush1.msra.mxu0 %v852
  %2437 = vmatprep.subr.mxu0 0.0
  %2438 = vmatpush1.msra.mxu0 %v851
  %2439 = vmatprep.subr.mxu0 0.0
  %2440 = vmatpush2.msra.mxu0 0.0
  %2441 = vmatprep.subr.mxu0 0.0
  %2442 = vmatpush2.msra.mxu0 0.0
  %2443 = vmatprep.subr.mxu0 0.0
  %2444 = vmatpush2.msra.mxu0 0.0
  %2445 = vmatprep.subr.mxu0 0.0
  %2446 = vmatpush2.msra.mxu0 0.0
  %2447 = vmatprep.subr.mxu0 0.0
  %2448 = vmatpush2.msra.mxu0 0.0
  %2449 = vmatprep.subr.mxu0 0.0
  %2450 = vmatpush2.msra.mxu0 0.0
  %2451 = vmatprep.subr.mxu0 0.0
  %2452 = vmatpush2.msra.mxu0 0.0
  %2453 = vmatprep.subr.mxu0 0.0
  %2454 = vmatpush2.msra.mxu0 0.0
  %2455 = vmatprep.subr.mxu0 0.0
  %2456 = vmatpush2.msra.mxu0 0.0
  %2457 = vmatprep.subr.mxu0 0.0
  %2458 = vmatpush2.msra.mxu0 0.0
  %2459 = vmatprep.subr.mxu0 0.0
  %2460 = vmatpush2.msra.mxu0 0.0
  %2461 = vmatprep.subr.mxu0 0.0
  %2462 = vmatpush2.msra.mxu0 0.0
  %2463 = vmatprep.subr.mxu0 0.0
  %2464 = vmatpush2.msra.mxu0 0.0
  %2465 = vmatprep.subr.mxu0 0.0
  %2466 = vmatpush2.msra.mxu0 0.0
  %2467 = vmatprep.subr.mxu0 0.0
  %2468 = vmatpush2.msra.mxu0 0.0
  %2469 = vmatprep.subr.mxu0 0.0
  %2470 = vmatpush2.msra.mxu0 0.0
  %2471 = vmatprep.mubr.f32.mxu0 0.0
  %2472 = vmatmul.mubr.f32.gmra.mxu0 %v2335
  %v2473 = vpop.f32.mrf.mxu0
  %v2474 = vadd.f32 %v866, %v2473
  %v2475 = vpop.f32.mrf.mxu0
  %2476 = vdwg.mxu0
  %2477 = vmatprep.subr.mxu0 0.0
  %2478 = vmatpush1.msra.mxu0 0.0
  %2479 = vmatprep.subr.mxu0 0.0
  %2480 = vmatpush1.msra.mxu0 0.0
  %2481 = vmatprep.subr.mxu0 0.0
  %2482 = vmatpush1.msra.mxu0 0.0
  %2483 = vmatprep.subr.mxu0 0.0
  %2484 = vmatpush1.msra.mxu0 0.0
  %2485 = vmatprep.subr.mxu0 0.0
  %2486 = vmatpush1.msra.mxu0 0.0
  %2487 = vmatprep.subr.mxu0 0.0
  %2488 = vmatpush1.msra.mxu0 0.0
  %2489 = vmatprep.subr.mxu0 0.0
  %2490 = vmatpush1.msra.mxu0 0.0
  %2491 = vmatprep.subr.mxu0 0.0
  %2492 = vmatpush1.msra.mxu0 0.0
  %2493 = vmatprep.subr.mxu0 0.0
  %2494 = vmatpush1.msra.mxu0 0.0
  %2495 = vmatprep.subr.mxu0 0.0
  %2496 = vmatpush1.msra.mxu0 0.0
  %2497 = vmatprep.subr.mxu0 0.0
  %2498 = vmatpush1.msra.mxu0 %v863
  %2499 = vmatprep.subr.mxu0 0.0
  %2500 = vmatpush1.msra.mxu0 %v862
  %2501 = vmatprep.subr.mxu0 0.0
  %2502 = vmatpush1.msra.mxu0 %v861
  %2503 = vmatprep.subr.mxu0 0.0
  %2504 = vmatpush1.msra.mxu0 %v860
  %2505 = vmatprep.subr.mxu0 0.0
  %2506 = vmatpush1.msra.mxu0 %v859
  %2507 = vmatprep.subr.mxu0 0.0
  %2508 = vmatpush1.msra.mxu0 %v858
  %2509 = vmatprep.subr.mxu0 0.0
  %2510 = vmatpush2.msra.mxu0 0.0
  %2511 = vmatprep.subr.mxu0 0.0
  %2512 = vmatpush2.msra.mxu0 0.0
  %2513 = vmatprep.subr.mxu0 0.0
  %2514 = vmatpush2.msra.mxu0 0.0
  %2515 = vmatprep.subr.mxu0 0.0
  %2516 = vmatpush2.msra.mxu0 0.0
  %2517 = vmatprep.subr.mxu0 0.0
  %2518 = vmatpush2.msra.mxu0 0.0
  %2519 = vmatprep.subr.mxu0 0.0
  %2520 = vmatpush2.msra.mxu0 0.0
  %2521 = vmatprep.subr.mxu0 0.0
  %2522 = vmatpush2.msra.mxu0 0.0
  %2523 = vmatprep.subr.mxu0 0.0
  %2524 = vmatpush2.msra.mxu0 0.0
  %2525 = vmatprep.subr.mxu0 0.0
  %2526 = vmatpush2.msra.mxu0 0.0
  %2527 = vmatprep.subr.mxu0 0.0
  %2528 = vmatpush2.msra.mxu0 0.0
  %2529 = vmatprep.subr.mxu0 0.0
  %2530 = vmatpush2.msra.mxu0 0.0
  %2531 = vmatprep.subr.mxu0 0.0
  %2532 = vmatpush2.msra.mxu0 0.0
  %2533 = vmatprep.subr.mxu0 0.0
  %2534 = vmatpush2.msra.mxu0 0.0
  %2535 = vmatprep.subr.mxu0 0.0
  %2536 = vmatpush2.msra.mxu0 0.0
  %2537 = vmatprep.subr.mxu0 0.0
  %2538 = vmatpush2.msra.mxu0 0.0
  %2539 = vmatprep.subr.mxu0 0.0
  %2540 = vmatpush2.msra.mxu0 0.0
  %2541 = vmatprep.mubr.f32.mxu0 0.0
  %2542 = vmatmul.mubr.f32.gmra.mxu0 %v2335
  %v2543 = vpop.f32.mrf.mxu0
  %v2544 = vadd.f32 %v868, %v2543
  %v2545 = vpop.f32.mrf.mxu0
  %2546 = vdwg.mxu0
  %v2548 = vrot.slane %v2404, 2
  %v2550 = vadd.f32 %v656, %v2548
  %v2551 = vxor.u32 %v2550, 2147483648
  %v2552 = vmul.f32 %v2551, 1.442695
  %v2553 = vpow.pop %v2552
  %v2554 = vadd.f32 %v2553, 1.0
  %v2555 = vrcp.pop %v2554
  %v2556 = vmul.f32 1.0, %v2555
  %v2558 = vrot.slane %v2474, 2
  %v2560 = vadd.f32 %v746, %v2558
  %v2561 = vxor.u32 %v2560, 2147483648
  %v2562 = vmul.f32 %v2561, 1.442695
  %v2563 = vpow.pop %v2562
  %v2564 = vadd.f32 %v2563, 1.0
  %v2565 = vrcp.pop %v2564
  %v2566 = vmul.f32 1.0, %v2565
  %v2568 = vrot.slane %v2544, 2
  %v2570 = vmul.f32 %v2556, %v2568
  %v2571 = vadd.f32 %v836, %v2570
  %v2572 = vtanh.pop %v2571
  %v2573 = vsub.f32 1.0, %v2566
  %v2574 = vmul.f32 %v2573, %v2572
  %v2575 = vrot.slane %v2332, 7
  %v2577 = vmul.f32 %v2566, %v2575
  %v2578 = vadd.f32 %v2574, %v2577
  %v2580 = vrot.slane %v2578, 6
  %v2581 = vsel %vm518, %v2580, 0
  %2583 = vmatprep.subr.mxu0 0.0
  %2584 = vmatpush1.msra.mxu0 0.0
  %2585 = vmatprep.subr.mxu0 0.0
  %2586 = vmatpush1.msra.mxu0 0.0
  %2587 = vmatprep.subr.mxu0 0.0
  %2588 = vmatpush1.msra.mxu0 0.0
  %2589 = vmatprep.subr.mxu0 0.0
  %2590 = vmatpush1.msra.mxu0 0.0
  %2591 = vmatprep.subr.mxu0 0.0
  %2592 = vmatpush1.msra.mxu0 0.0
  %2593 = vmatprep.subr.mxu0 0.0
  %2594 = vmatpush1.msra.mxu0 0.0
  %2595 = vmatprep.subr.mxu0 0.0
  %2596 = vmatpush1.msra.mxu0 0.0
  %2597 = vmatprep.subr.mxu0 0.0
  %2598 = vmatpush1.msra.mxu0 0.0
  %2599 = vmatprep.subr.mxu0 0.0
  %2600 = vmatpush1.msra.mxu0 0.0
  %2601 = vmatprep.subr.mxu0 0.0
  %2602 = vmatpush1.msra.mxu0 0.0
  %2603 = vmatprep.subr.mxu0 0.0
  %2604 = vmatpush1.msra.mxu0 %v849
  %2605 = vmatprep.subr.mxu0 0.0
  %2606 = vmatpush1.msra.mxu0 %v848
  %2607 = vmatprep.subr.mxu0 0.0
  %2608 = vmatpush1.msra.mxu0 %v847
  %2609 = vmatprep.subr.mxu0 0.0
  %2610 = vmatpush1.msra.mxu0 %v846
  %2611 = vmatprep.subr.mxu0 0.0
  %2612 = vmatpush1.msra.mxu0 %v845
  %2613 = vmatprep.subr.mxu0 0.0
  %2614 = vmatpush1.msra.mxu0 %v844
  %2615 = vmatprep.subr.mxu0 0.0
  %2616 = vmatpush2.msra.mxu0 0.0
  %2617 = vmatprep.subr.mxu0 0.0
  %2618 = vmatpush2.msra.mxu0 0.0
  %2619 = vmatprep.subr.mxu0 0.0
  %2620 = vmatpush2.msra.mxu0 0.0
  %2621 = vmatprep.subr.mxu0 0.0
  %2622 = vmatpush2.msra.mxu0 0.0
  %2623 = vmatprep.subr.mxu0 0.0
  %2624 = vmatpush2.msra.mxu0 0.0
  %2625 = vmatprep.subr.mxu0 0.0
  %2626 = vmatpush2.msra.mxu0 0.0
  %2627 = vmatprep.subr.mxu0 0.0
  %2628 = vmatpush2.msra.mxu0 0.0
  %2629 = vmatprep.subr.mxu0 0.0
  %2630 = vmatpush2.msra.mxu0 0.0
  %2631 = vmatprep.subr.mxu0 0.0
  %2632 = vmatpush2.msra.mxu0 0.0
  %2633 = vmatprep.subr.mxu0 0.0
  %2634 = vmatpush2.msra.mxu0 0.0
  %2635 = vmatprep.subr.mxu0 0.0
  %2636 = vmatpush2.msra.mxu0 0.0
  %2637 = vmatprep.subr.mxu0 0.0
  %2638 = vmatpush2.msra.mxu0 0.0
  %2639 = vmatprep.subr.mxu0 0.0
  %2640 = vmatpush2.msra.mxu0 0.0
  %2641 = vmatprep.subr.mxu0 0.0
  %2642 = vmatpush2.msra.mxu0 0.0
  %2643 = vmatprep.subr.mxu0 0.0
  %2644 = vmatpush2.msra.mxu0 0.0
  %2645 = vmatprep.subr.mxu0 0.0
  %2646 = vmatpush2.msra.mxu0 0.0
  %2647 = vmatprep.mubr.f32.mxu0 0.0
  %2648 = vmatmul.mubr.f32.gmra.mxu0 %v2581
  %v2649 = vpop.f32.mrf.mxu0
  %v2650 = vadd.f32 %v864, %v2649
  %v2651 = vpop.f32.mrf.mxu0
  %2652 = vdwg.mxu0
  %2653 = vmatprep.subr.mxu0 0.0
  %2654 = vmatpush1.msra.mxu0 0.0
  %2655 = vmatprep.subr.mxu0 0.0
  %2656 = vmatpush1.msra.mxu0 0.0
  %2657 = vmatprep.subr.mxu0 0.0
  %2658 = vmatpush1.msra.mxu0 0.0
  %2659 = vmatprep.subr.mxu0 0.0
  %2660 = vmatpush1.msra.mxu0 0.0
  %2661 = vmatprep.subr.mxu0 0.0
  %2662 = vmatpush1.msra.mxu0 0.0
  %2663 = vmatprep.subr.mxu0 0.0
  %2664 = vmatpush1.msra.mxu0 0.0
  %2665 = vmatprep.subr.mxu0 0.0
  %2666 = vmatpush1.msra.mxu0 0.0
  %2667 = vmatprep.subr.mxu0 0.0
  %2668 = vmatpush1.msra.mxu0 0.0
  %2669 = vmatprep.subr.mxu0 0.0
  %2670 = vmatpush1.msra.mxu0 0.0
  %2671 = vmatprep.subr.mxu0 0.0
  %2672 = vmatpush1.msra.mxu0 0.0
  %2673 = vmatprep.subr.mxu0 0.0
  %2674 = vmatpush1.msra.mxu0 %v856
  %2675 = vmatprep.subr.mxu0 0.0
  %2676 = vmatpush1.msra.mxu0 %v855
  %2677 = vmatprep.subr.mxu0 0.0
  %2678 = vmatpush1.msra.mxu0 %v854
  %2679 = vmatprep.subr.mxu0 0.0
  %2680 = vmatpush1.msra.mxu0 %v853
  %2681 = vmatprep.subr.mxu0 0.0
  %2682 = vmatpush1.msra.mxu0 %v852
  %2683 = vmatprep.subr.mxu0 0.0
  %2684 = vmatpush1.msra.mxu0 %v851
  %2685 = vmatprep.subr.mxu0 0.0
  %2686 = vmatpush2.msra.mxu0 0.0
  %2687 = vmatprep.subr.mxu0 0.0
  %2688 = vmatpush2.msra.mxu0 0.0
  %2689 = vmatprep.subr.mxu0 0.0
  %2690 = vmatpush2.msra.mxu0 0.0
  %2691 = vmatprep.subr.mxu0 0.0
  %2692 = vmatpush2.msra.mxu0 0.0
  %2693 = vmatprep.subr.mxu0 0.0
  %2694 = vmatpush2.msra.mxu0 0.0
  %2695 = vmatprep.subr.mxu0 0.0
  %2696 = vmatpush2.msra.mxu0 0.0
  %2697 = vmatprep.subr.mxu0 0.0
  %2698 = vmatpush2.msra.mxu0 0.0
  %2699 = vmatprep.subr.mxu0 0.0
  %2700 = vmatpush2.msra.mxu0 0.0
  %2701 = vmatprep.subr.mxu0 0.0
  %2702 = vmatpush2.msra.mxu0 0.0
  %2703 = vmatprep.subr.mxu0 0.0
  %2704 = vmatpush2.msra.mxu0 0.0
  %2705 = vmatprep.subr.mxu0 0.0
  %2706 = vmatpush2.msra.mxu0 0.0
  %2707 = vmatprep.subr.mxu0 0.0
  %2708 = vmatpush2.msra.mxu0 0.0
  %2709 = vmatprep.subr.mxu0 0.0
  %2710 = vmatpush2.msra.mxu0 0.0
  %2711 = vmatprep.subr.mxu0 0.0
  %2712 = vmatpush2.msra.mxu0 0.0
  %2713 = vmatprep.subr.mxu0 0.0
  %2714 = vmatpush2.msra.mxu0 0.0
  %2715 = vmatprep.subr.mxu0 0.0
  %2716 = vmatpush2.msra.mxu0 0.0
  %2717 = vmatprep.mubr.f32.mxu0 0.0
  %2718 = vmatmul.mubr.f32.gmra.mxu0 %v2581
  %v2719 = vpop.f32.mrf.mxu0
  %v2720 = vadd.f32 %v866, %v2719
  %v2721 = vpop.f32.mrf.mxu0
  %2722 = vdwg.mxu0
  %2723 = vmatprep.subr.mxu0 0.0
  %2724 = vmatpush1.msra.mxu0 0.0
  %2725 = vmatprep.subr.mxu0 0.0
  %2726 = vmatpush1.msra.mxu0 0.0
  %2727 = vmatprep.subr.mxu0 0.0
  %2728 = vmatpush1.msra.mxu0 0.0
  %2729 = vmatprep.subr.mxu0 0.0
  %2730 = vmatpush1.msra.mxu0 0.0
  %2731 = vmatprep.subr.mxu0 0.0
  %2732 = vmatpush1.msra.mxu0 0.0
  %2733 = vmatprep.subr.mxu0 0.0
  %2734 = vmatpush1.msra.mxu0 0.0
  %2735 = vmatprep.subr.mxu0 0.0
  %2736 = vmatpush1.msra.mxu0 0.0
  %2737 = vmatprep.subr.mxu0 0.0
  %2738 = vmatpush1.msra.mxu0 0.0
  %2739 = vmatprep.subr.mxu0 0.0
  %2740 = vmatpush1.msra.mxu0 0.0
  %2741 = vmatprep.subr.mxu0 0.0
  %2742 = vmatpush1.msra.mxu0 0.0
  %2743 = vmatprep.subr.mxu0 0.0
  %2744 = vmatpush1.msra.mxu0 %v863
  %2745 = vmatprep.subr.mxu0 0.0
  %2746 = vmatpush1.msra.mxu0 %v862
  %2747 = vmatprep.subr.mxu0 0.0
  %2748 = vmatpush1.msra.mxu0 %v861
  %2749 = vmatprep.subr.mxu0 0.0
  %2750 = vmatpush1.msra.mxu0 %v860
  %2751 = vmatprep.subr.mxu0 0.0
  %2752 = vmatpush1.msra.mxu0 %v859
  %2753 = vmatprep.subr.mxu0 0.0
  %2754 = vmatpush1.msra.mxu0 %v858
  %2755 = vmatprep.subr.mxu0 0.0
  %2756 = vmatpush2.msra.mxu0 0.0
  %2757 = vmatprep.subr.mxu0 0.0
  %2758 = vmatpush2.msra.mxu0 0.0
  %2759 = vmatprep.subr.mxu0 0.0
  %2760 = vmatpush2.msra.mxu0 0.0
  %2761 = vmatprep.subr.mxu0 0.0
  %2762 = vmatpush2.msra.mxu0 0.0
  %2763 = vmatprep.subr.mxu0 0.0
  %2764 = vmatpush2.msra.mxu0 0.0
  %2765 = vmatprep.subr.mxu0 0.0
  %2766 = vmatpush2.msra.mxu0 0.0
  %2767 = vmatprep.subr.mxu0 0.0
  %2768 = vmatpush2.msra.mxu0 0.0
  %2769 = vmatprep.subr.mxu0 0.0
  %2770 = vmatpush2.msra.mxu0 0.0
  %2771 = vmatprep.subr.mxu0 0.0
  %2772 = vmatpush2.msra.mxu0 0.0
  %2773 = vmatprep.subr.mxu0 0.0
  %2774 = vmatpush2.msra.mxu0 0.0
  %2775 = vmatprep.subr.mxu0 0.0
  %2776 = vmatpush2.msra.mxu0 0.0
  %2777 = vmatprep.subr.mxu0 0.0
  %2778 = vmatpush2.msra.mxu0 0.0
  %2779 = vmatprep.subr.mxu0 0.0
  %2780 = vmatpush2.msra.mxu0 0.0
  %2781 = vmatprep.subr.mxu0 0.0
  %2782 = vmatpush2.msra.mxu0 0.0
  %2783 = vmatprep.subr.mxu0 0.0
  %2784 = vmatpush2.msra.mxu0 0.0
  %2785 = vmatprep.subr.mxu0 0.0
  %2786 = vmatpush2.msra.mxu0 0.0
  %2787 = vmatprep.mubr.f32.mxu0 0.0
  %2788 = vmatmul.mubr.f32.gmra.mxu0 %v2581
  %v2789 = vpop.f32.mrf.mxu0
  %v2790 = vadd.f32 %v868, %v2789
  %v2791 = vpop.f32.mrf.mxu0
  %2792 = vdwg.mxu0
  %v2794 = vrot.slane %v2650, 1
  %v2796 = vadd.f32 %v656, %v2794
  %v2797 = vxor.u32 %v2796, 2147483648
  %v2798 = vmul.f32 %v2797, 1.442695
  %v2799 = vpow.pop %v2798
  %v2800 = vadd.f32 %v2799, 1.0
  %v2801 = vrcp.pop %v2800
  %v2802 = vmul.f32 1.0, %v2801
  %v2804 = vrot.slane %v2720, 1
  %v2806 = vadd.f32 %v746, %v2804
  %v2807 = vxor.u32 %v2806, 2147483648
  %v2808 = vmul.f32 %v2807, 1.442695
  %v2809 = vpow.pop %v2808
  %v2810 = vadd.f32 %v2809, 1.0
  %v2811 = vrcp.pop %v2810
  %v2812 = vmul.f32 1.0, %v2811
  %v2814 = vrot.slane %v2790, 1
  %v2816 = vmul.f32 %v2802, %v2814
  %v2817 = vadd.f32 %v836, %v2816
  %v2818 = vtanh.pop %v2817
  %v2819 = vsub.f32 1.0, %v2812
  %v2820 = vmul.f32 %v2819, %v2818
  %v2821 = vrot.slane %v2578, 7
  %v2823 = vmul.f32 %v2812, %v2821
  %v2824 = vadd.f32 %v2820, %v2823
  %v2826 = vrot.slane %v2824, 7
  %v2827 = vsel %vm518, %v2826, 0
  %2829 = vmatprep.subr.mxu0 0.0
  %2830 = vmatpush1.msra.mxu0 0.0
  %2831 = vmatprep.subr.mxu0 0.0
  %2832 = vmatpush1.msra.mxu0 0.0
  %2833 = vmatprep.subr.mxu0 0.0
  %2834 = vmatpush1.msra.mxu0 0.0
  %2835 = vmatprep.subr.mxu0 0.0
  %2836 = vmatpush1.msra.mxu0 0.0
  %2837 = vmatprep.subr.mxu0 0.0
  %2838 = vmatpush1.msra.mxu0 0.0
  %2839 = vmatprep.subr.mxu0 0.0
  %2840 = vmatpush1.msra.mxu0 0.0
  %2841 = vmatprep.subr.mxu0 0.0
  %2842 = vmatpush1.msra.mxu0 0.0
  %2843 = vmatprep.subr.mxu0 0.0
  %2844 = vmatpush1.msra.mxu0 0.0
  %2845 = vmatprep.subr.mxu0 0.0
  %2846 = vmatpush1.msra.mxu0 0.0
  %2847 = vmatprep.subr.mxu0 0.0
  %2848 = vmatpush1.msra.mxu0 0.0
  %2849 = vmatprep.subr.mxu0 0.0
  %2850 = vmatpush1.msra.mxu0 %v849
  %2851 = vmatprep.subr.mxu0 0.0
  %2852 = vmatpush1.msra.mxu0 %v848
  %2853 = vmatprep.subr.mxu0 0.0
  %2854 = vmatpush1.msra.mxu0 %v847
  %2855 = vmatprep.subr.mxu0 0.0
  %2856 = vmatpush1.msra.mxu0 %v846
  %2857 = vmatprep.subr.mxu0 0.0
  %2858 = vmatpush1.msra.mxu0 %v845
  %2859 = vmatprep.subr.mxu0 0.0
  %2860 = vmatpush1.msra.mxu0 %v844
  %2861 = vmatprep.subr.mxu0 0.0
  %2862 = vmatpush2.msra.mxu0 0.0
  %2863 = vmatprep.subr.mxu0 0.0
  %2864 = vmatpush2.msra.mxu0 0.0
  %2865 = vmatprep.subr.mxu0 0.0
  %2866 = vmatpush2.msra.mxu0 0.0
  %2867 = vmatprep.subr.mxu0 0.0
  %2868 = vmatpush2.msra.mxu0 0.0
  %2869 = vmatprep.subr.mxu0 0.0
  %2870 = vmatpush2.msra.mxu0 0.0
  %2871 = vmatprep.subr.mxu0 0.0
  %2872 = vmatpush2.msra.mxu0 0.0
  %2873 = vmatprep.subr.mxu0 0.0
  %2874 = vmatpush2.msra.mxu0 0.0
  %2875 = vmatprep.subr.mxu0 0.0
  %2876 = vmatpush2.msra.mxu0 0.0
  %2877 = vmatprep.subr.mxu0 0.0
  %2878 = vmatpush2.msra.mxu0 0.0
  %2879 = vmatprep.subr.mxu0 0.0
  %2880 = vmatpush2.msra.mxu0 0.0
  %2881 = vmatprep.subr.mxu0 0.0
  %2882 = vmatpush2.msra.mxu0 0.0
  %2883 = vmatprep.subr.mxu0 0.0
  %2884 = vmatpush2.msra.mxu0 0.0
  %2885 = vmatprep.subr.mxu0 0.0
  %2886 = vmatpush2.msra.mxu0 0.0
  %2887 = vmatprep.subr.mxu0 0.0
  %2888 = vmatpush2.msra.mxu0 0.0
  %2889 = vmatprep.subr.mxu0 0.0
  %2890 = vmatpush2.msra.mxu0 0.0
  %2891 = vmatprep.subr.mxu0 0.0
  %2892 = vmatpush2.msra.mxu0 0.0
  %2893 = vmatprep.mubr.f32.mxu0 0.0
  %2894 = vmatmul.mubr.f32.gmra.mxu0 %v2827
  %v2895 = vpop.f32.mrf.mxu0
  %v2896 = vadd.f32 %v864, %v2895
  %v2897 = vpop.f32.mrf.mxu0
  %2898 = vdwg.mxu0
  %2899 = vmatprep.subr.mxu0 0.0
  %2900 = vmatpush1.msra.mxu0 0.0
  %2901 = vmatprep.subr.mxu0 0.0
  %2902 = vmatpush1.msra.mxu0 0.0
  %2903 = vmatprep.subr.mxu0 0.0
  %2904 = vmatpush1.msra.mxu0 0.0
  %2905 = vmatprep.subr.mxu0 0.0
  %2906 = vmatpush1.msra.mxu0 0.0
  %2907 = vmatprep.subr.mxu0 0.0
  %2908 = vmatpush1.msra.mxu0 0.0
  %2909 = vmatprep.subr.mxu0 0.0
  %2910 = vmatpush1.msra.mxu0 0.0
  %2911 = vmatprep.subr.mxu0 0.0
  %2912 = vmatpush1.msra.mxu0 0.0
  %2913 = vmatprep.subr.mxu0 0.0
  %2914 = vmatpush1.msra.mxu0 0.0
  %2915 = vmatprep.subr.mxu0 0.0
  %2916 = vmatpush1.msra.mxu0 0.0
  %2917 = vmatprep.subr.mxu0 0.0
  %2918 = vmatpush1.msra.mxu0 0.0
  %2919 = vmatprep.subr.mxu0 0.0
  %2920 = vmatpush1.msra.mxu0 %v856
  %2921 = vmatprep.subr.mxu0 0.0
  %2922 = vmatpush1.msra.mxu0 %v855
  %2923 = vmatprep.subr.mxu0 0.0
  %2924 = vmatpush1.msra.mxu0 %v854
  %2925 = vmatprep.subr.mxu0 0.0
  %2926 = vmatpush1.msra.mxu0 %v853
  %2927 = vmatprep.subr.mxu0 0.0
  %2928 = vmatpush1.msra.mxu0 %v852
  %2929 = vmatprep.subr.mxu0 0.0
  %2930 = vmatpush1.msra.mxu0 %v851
  %2931 = vmatprep.subr.mxu0 0.0
  %2932 = vmatpush2.msra.mxu0 0.0
  %2933 = vmatprep.subr.mxu0 0.0
  %2934 = vmatpush2.msra.mxu0 0.0
  %2935 = vmatprep.subr.mxu0 0.0
  %2936 = vmatpush2.msra.mxu0 0.0
  %2937 = vmatprep.subr.mxu0 0.0
  %2938 = vmatpush2.msra.mxu0 0.0
  %2939 = vmatprep.subr.mxu0 0.0
  %2940 = vmatpush2.msra.mxu0 0.0
  %2941 = vmatprep.subr.mxu0 0.0
  %2942 = vmatpush2.msra.mxu0 0.0
  %2943 = vmatprep.subr.mxu0 0.0
  %2944 = vmatpush2.msra.mxu0 0.0
  %2945 = vmatprep.subr.mxu0 0.0
  %2946 = vmatpush2.msra.mxu0 0.0
  %2947 = vmatprep.subr.mxu0 0.0
  %2948 = vmatpush2.msra.mxu0 0.0
  %2949 = vmatprep.subr.mxu0 0.0
  %2950 = vmatpush2.msra.mxu0 0.0
  %2951 = vmatprep.subr.mxu0 0.0
  %2952 = vmatpush2.msra.mxu0 0.0
  %2953 = vmatprep.subr.mxu0 0.0
  %2954 = vmatpush2.msra.mxu0 0.0
  %2955 = vmatprep.subr.mxu0 0.0
  %2956 = vmatpush2.msra.mxu0 0.0
  %2957 = vmatprep.subr.mxu0 0.0
  %2958 = vmatpush2.msra.mxu0 0.0
  %2959 = vmatprep.subr.mxu0 0.0
  %2960 = vmatpush2.msra.mxu0 0.0
  %2961 = vmatprep.subr.mxu0 0.0
  %2962 = vmatpush2.msra.mxu0 0.0
  %2963 = vmatprep.mubr.f32.mxu0 0.0
  %2964 = vmatmul.mubr.f32.gmra.mxu0 %v2827
  %v2965 = vpop.f32.mrf.mxu0
  %v2966 = vadd.f32 %v866, %v2965
  %v2967 = vpop.f32.mrf.mxu0
  %2968 = vdwg.mxu0
  %2969 = vmatprep.subr.mxu0 0.0
  %2970 = vmatpush1.msra.mxu0 0.0
  %2971 = vmatprep.subr.mxu0 0.0
  %2972 = vmatpush1.msra.mxu0 0.0
  %2973 = vmatprep.subr.mxu0 0.0
  %2974 = vmatpush1.msra.mxu0 0.0
  %2975 = vmatprep.subr.mxu0 0.0
  %2976 = vmatpush1.msra.mxu0 0.0
  %2977 = vmatprep.subr.mxu0 0.0
  %2978 = vmatpush1.msra.mxu0 0.0
  %2979 = vmatprep.subr.mxu0 0.0
  %2980 = vmatpush1.msra.mxu0 0.0
  %2981 = vmatprep.subr.mxu0 0.0
  %2982 = vmatpush1.msra.mxu0 0.0
  %2983 = vmatprep.subr.mxu0 0.0
  %2984 = vmatpush1.msra.mxu0 0.0
  %2985 = vmatprep.subr.mxu0 0.0
  %2986 = vmatpush1.msra.mxu0 0.0
  %2987 = vmatprep.subr.mxu0 0.0
  %2988 = vmatpush1.msra.mxu0 0.0
  %2989 = vmatprep.subr.mxu0 0.0
  %2990 = vmatpush1.msra.mxu0 %v863
  %2991 = vmatprep.subr.mxu0 0.0
  %2992 = vmatpush1.msra.mxu0 %v862
  %2993 = vmatprep.subr.mxu0 0.0
  %2994 = vmatpush1.msra.mxu0 %v861
  %2995 = vmatprep.subr.mxu0 0.0
  %2996 = vmatpush1.msra.mxu0 %v860
  %2997 = vmatprep.subr.mxu0 0.0
  %2998 = vmatpush1.msra.mxu0 %v859
  %2999 = vmatprep.subr.mxu0 0.0
  %3000 = vmatpush1.msra.mxu0 %v858
  %3001 = vmatprep.subr.mxu0 0.0
  %3002 = vmatpush2.msra.mxu0 0.0
  %3003 = vmatprep.subr.mxu0 0.0
  %3004 = vmatpush2.msra.mxu0 0.0
  %3005 = vmatprep.subr.mxu0 0.0
  %3006 = vmatpush2.msra.mxu0 0.0
  %3007 = vmatprep.subr.mxu0 0.0
  %3008 = vmatpush2.msra.mxu0 0.0
  %3009 = vmatprep.subr.mxu0 0.0
  %3010 = vmatpush2.msra.mxu0 0.0
  %3011 = vmatprep.subr.mxu0 0.0
  %3012 = vmatpush2.msra.mxu0 0.0
  %3013 = vmatprep.subr.mxu0 0.0
  %3014 = vmatpush2.msra.mxu0 0.0
  %3015 = vmatprep.subr.mxu0 0.0
  %3016 = vmatpush2.msra.mxu0 0.0
  %3017 = vmatprep.subr.mxu0 0.0
  %3018 = vmatpush2.msra.mxu0 0.0
  %3019 = vmatprep.subr.mxu0 0.0
  %3020 = vmatpush2.msra.mxu0 0.0
  %3021 = vmatprep.subr.mxu0 0.0
  %3022 = vmatpush2.msra.mxu0 0.0
  %3023 = vmatprep.subr.mxu0 0.0
  %3024 = vmatpush2.msra.mxu0 0.0
  %3025 = vmatprep.subr.mxu0 0.0
  %3026 = vmatpush2.msra.mxu0 0.0
  %3027 = vmatprep.subr.mxu0 0.0
  %3028 = vmatpush2.msra.mxu0 0.0
  %3029 = vmatprep.subr.mxu0 0.0
  %3030 = vmatpush2.msra.mxu0 0.0
  %3031 = vmatprep.subr.mxu0 0.0
  %3032 = vmatpush2.msra.mxu0 0.0
  %3033 = vmatprep.mubr.f32.mxu0 0.0
  %3034 = vmatmul.mubr.f32.gmra.mxu0 %v2827
  %v3035 = vpop.f32.mrf.mxu0
  %v3036 = vadd.f32 %v868, %v3035
  %v3037 = vpop.f32.mrf.mxu0
  %3038 = vdwg.mxu0
  %v3039 = vadd.f32 %v661, %v2896
  %v3040 = vxor.u32 %v3039, 2147483648
  %v3041 = vmul.f32 %v3040, 1.442695
  %v3042 = vpow.pop %v3041
  %v3043 = vadd.f32 %v3042, 1.0
  %v3044 = vrcp.pop %v3043
  %v3045 = vmul.f32 1.0, %v3044
  %v3046 = vadd.f32 %v751, %v2966
  %v3047 = vxor.u32 %v3046, 2147483648
  %v3048 = vmul.f32 %v3047, 1.442695
  %v3049 = vpow.pop %v3048
  %v3050 = vadd.f32 %v3049, 1.0
  %v3051 = vrcp.pop %v3050
  %v3052 = vmul.f32 1.0, %v3051
  %v3053 = vmul.f32 %v3045, %v3036
  %v3054 = vadd.f32 %v841, %v3053
  %v3055 = vtanh.pop %v3054
  %v3056 = vsub.f32 1.0, %v3052
  %v3057 = vmul.f32 %v3056, %v3055
  %v3059 = vmul.f32 %v3052, %v2826
  %v3060 = vadd.f32 %v3057, %v3059
  %v3062 = vsel %vm518, %v3060, 0
  %3064 = vmatprep.subr.mxu0 0.0
  %3065 = vmatpush1.msra.mxu0 0.0
  %3066 = vmatprep.subr.mxu0 0.0
  %3067 = vmatpush1.msra.mxu0 0.0
  %3068 = vmatprep.subr.mxu0 0.0
  %3069 = vmatpush1.msra.mxu0 0.0
  %3070 = vmatprep.subr.mxu0 0.0
  %3071 = vmatpush1.msra.mxu0 0.0
  %3072 = vmatprep.subr.mxu0 0.0
  %3073 = vmatpush1.msra.mxu0 0.0
  %3074 = vmatprep.subr.mxu0 0.0
  %3075 = vmatpush1.msra.mxu0 0.0
  %3076 = vmatprep.subr.mxu0 0.0
  %3077 = vmatpush1.msra.mxu0 0.0
  %3078 = vmatprep.subr.mxu0 0.0
  %3079 = vmatpush1.msra.mxu0 0.0
  %3080 = vmatprep.subr.mxu0 0.0
  %3081 = vmatpush1.msra.mxu0 0.0
  %3082 = vmatprep.subr.mxu0 0.0
  %3083 = vmatpush1.msra.mxu0 0.0
  %3084 = vmatprep.subr.mxu0 0.0
  %3085 = vmatpush1.msra.mxu0 %v849
  %3086 = vmatprep.subr.mxu0 0.0
  %3087 = vmatpush1.msra.mxu0 %v848
  %3088 = vmatprep.subr.mxu0 0.0
  %3089 = vmatpush1.msra.mxu0 %v847
  %3090 = vmatprep.subr.mxu0 0.0
  %3091 = vmatpush1.msra.mxu0 %v846
  %3092 = vmatprep.subr.mxu0 0.0
  %3093 = vmatpush1.msra.mxu0 %v845
  %3094 = vmatprep.subr.mxu0 0.0
  %3095 = vmatpush1.msra.mxu0 %v844
  %3096 = vmatprep.subr.mxu0 0.0
  %3097 = vmatpush2.msra.mxu0 0.0
  %3098 = vmatprep.subr.mxu0 0.0
  %3099 = vmatpush2.msra.mxu0 0.0
  %3100 = vmatprep.subr.mxu0 0.0
  %3101 = vmatpush2.msra.mxu0 0.0
  %3102 = vmatprep.subr.mxu0 0.0
  %3103 = vmatpush2.msra.mxu0 0.0
  %3104 = vmatprep.subr.mxu0 0.0
  %3105 = vmatpush2.msra.mxu0 0.0
  %3106 = vmatprep.subr.mxu0 0.0
  %3107 = vmatpush2.msra.mxu0 0.0
  %3108 = vmatprep.subr.mxu0 0.0
  %3109 = vmatpush2.msra.mxu0 0.0
  %3110 = vmatprep.subr.mxu0 0.0
  %3111 = vmatpush2.msra.mxu0 0.0
  %3112 = vmatprep.subr.mxu0 0.0
  %3113 = vmatpush2.msra.mxu0 0.0
  %3114 = vmatprep.subr.mxu0 0.0
  %3115 = vmatpush2.msra.mxu0 0.0
  %3116 = vmatprep.subr.mxu0 0.0
  %3117 = vmatpush2.msra.mxu0 0.0
  %3118 = vmatprep.subr.mxu0 0.0
  %3119 = vmatpush2.msra.mxu0 0.0
  %3120 = vmatprep.subr.mxu0 0.0
  %3121 = vmatpush2.msra.mxu0 0.0
  %3122 = vmatprep.subr.mxu0 0.0
  %3123 = vmatpush2.msra.mxu0 0.0
  %3124 = vmatprep.subr.mxu0 0.0
  %3125 = vmatpush2.msra.mxu0 0.0
  %3126 = vmatprep.subr.mxu0 0.0
  %3127 = vmatpush2.msra.mxu0 0.0
  %3128 = vmatprep.mubr.f32.mxu0 0.0
  %3129 = vmatmul.mubr.f32.gmra.mxu0 %v3062
  %v3130 = vpop.f32.mrf.mxu0
  %v3131 = vadd.f32 %v864, %v3130
  %v3132 = vpop.f32.mrf.mxu0
  %3133 = vdwg.mxu0
  %3134 = vmatprep.subr.mxu0 0.0
  %3135 = vmatpush1.msra.mxu0 0.0
  %3136 = vmatprep.subr.mxu0 0.0
  %3137 = vmatpush1.msra.mxu0 0.0
  %3138 = vmatprep.subr.mxu0 0.0
  %3139 = vmatpush1.msra.mxu0 0.0
  %3140 = vmatprep.subr.mxu0 0.0
  %3141 = vmatpush1.msra.mxu0 0.0
  %3142 = vmatprep.subr.mxu0 0.0
  %3143 = vmatpush1.msra.mxu0 0.0
  %3144 = vmatprep.subr.mxu0 0.0
  %3145 = vmatpush1.msra.mxu0 0.0
  %3146 = vmatprep.subr.mxu0 0.0
  %3147 = vmatpush1.msra.mxu0 0.0
  %3148 = vmatprep.subr.mxu0 0.0
  %3149 = vmatpush1.msra.mxu0 0.0
  %3150 = vmatprep.subr.mxu0 0.0
  %3151 = vmatpush1.msra.mxu0 0.0
  %3152 = vmatprep.subr.mxu0 0.0
  %3153 = vmatpush1.msra.mxu0 0.0
  %3154 = vmatprep.subr.mxu0 0.0
  %3155 = vmatpush1.msra.mxu0 %v856
  %3156 = vmatprep.subr.mxu0 0.0
  %3157 = vmatpush1.msra.mxu0 %v855
  %3158 = vmatprep.subr.mxu0 0.0
  %3159 = vmatpush1.msra.mxu0 %v854
  %3160 = vmatprep.subr.mxu0 0.0
  %3161 = vmatpush1.msra.mxu0 %v853
  %3162 = vmatprep.subr.mxu0 0.0
  %3163 = vmatpush1.msra.mxu0 %v852
  %3164 = vmatprep.subr.mxu0 0.0
  %3165 = vmatpush1.msra.mxu0 %v851
  %3166 = vmatprep.subr.mxu0 0.0
  %3167 = vmatpush2.msra.mxu0 0.0
  %3168 = vmatprep.subr.mxu0 0.0
  %3169 = vmatpush2.msra.mxu0 0.0
  %3170 = vmatprep.subr.mxu0 0.0
  %3171 = vmatpush2.msra.mxu0 0.0
  %3172 = vmatprep.subr.mxu0 0.0
  %3173 = vmatpush2.msra.mxu0 0.0
  %3174 = vmatprep.subr.mxu0 0.0
  %3175 = vmatpush2.msra.mxu0 0.0
  %3176 = vmatprep.subr.mxu0 0.0
  %3177 = vmatpush2.msra.mxu0 0.0
  %3178 = vmatprep.subr.mxu0 0.0
  %3179 = vmatpush2.msra.mxu0 0.0
  %3180 = vmatprep.subr.mxu0 0.0
  %3181 = vmatpush2.msra.mxu0 0.0
  %3182 = vmatprep.subr.mxu0 0.0
  %3183 = vmatpush2.msra.mxu0 0.0
  %3184 = vmatprep.subr.mxu0 0.0
  %3185 = vmatpush2.msra.mxu0 0.0
  %3186 = vmatprep.subr.mxu0 0.0
  %3187 = vmatpush2.msra.mxu0 0.0
  %3188 = vmatprep.subr.mxu0 0.0
  %3189 = vmatpush2.msra.mxu0 0.0
  %3190 = vmatprep.subr.mxu0 0.0
  %3191 = vmatpush2.msra.mxu0 0.0
  %3192 = vmatprep.subr.mxu0 0.0
  %3193 = vmatpush2.msra.mxu0 0.0
  %3194 = vmatprep.subr.mxu0 0.0
  %3195 = vmatpush2.msra.mxu0 0.0
  %3196 = vmatprep.subr.mxu0 0.0
  %3197 = vmatpush2.msra.mxu0 0.0
  %3198 = vmatprep.mubr.f32.mxu0 0.0
  %3199 = vmatmul.mubr.f32.gmra.mxu0 %v3062
  %v3200 = vpop.f32.mrf.mxu0
  %v3201 = vadd.f32 %v866, %v3200
  %v3202 = vpop.f32.mrf.mxu0
  %3203 = vdwg.mxu0
  %3204 = vmatprep.subr.mxu0 0.0
  %3205 = vmatpush1.msra.mxu0 0.0
  %3206 = vmatprep.subr.mxu0 0.0
  %3207 = vmatpush1.msra.mxu0 0.0
  %3208 = vmatprep.subr.mxu0 0.0
  %3209 = vmatpush1.msra.mxu0 0.0
  %3210 = vmatprep.subr.mxu0 0.0
  %3211 = vmatpush1.msra.mxu0 0.0
  %3212 = vmatprep.subr.mxu0 0.0
  %3213 = vmatpush1.msra.mxu0 0.0
  %3214 = vmatprep.subr.mxu0 0.0
  %3215 = vmatpush1.msra.mxu0 0.0
  %3216 = vmatprep.subr.mxu0 0.0
  %3217 = vmatpush1.msra.mxu0 0.0
  %3218 = vmatprep.subr.mxu0 0.0
  %3219 = vmatpush1.msra.mxu0 0.0
  %3220 = vmatprep.subr.mxu0 0.0
  %3221 = vmatpush1.msra.mxu0 0.0
  %3222 = vmatprep.subr.mxu0 0.0
  %3223 = vmatpush1.msra.mxu0 0.0
  %3224 = vmatprep.subr.mxu0 0.0
  %3225 = vmatpush1.msra.mxu0 %v863
  %3226 = vmatprep.subr.mxu0 0.0
  %3227 = vmatpush1.msra.mxu0 %v862
  %3228 = vmatprep.subr.mxu0 0.0
  %3229 = vmatpush1.msra.mxu0 %v861
  %3230 = vmatprep.subr.mxu0 0.0
  %3231 = vmatpush1.msra.mxu0 %v860
  %3232 = vmatprep.subr.mxu0 0.0
  %3233 = vmatpush1.msra.mxu0 %v859
  %3234 = vmatprep.subr.mxu0 0.0
  %3235 = vmatpush1.msra.mxu0 %v858
  %3236 = vmatprep.subr.mxu0 0.0
  %3237 = vmatpush2.msra.mxu0 0.0
  %3238 = vmatprep.subr.mxu0 0.0
  %3239 = vmatpush2.msra.mxu0 0.0
  %3240 = vmatprep.subr.mxu0 0.0
  %3241 = vmatpush2.msra.mxu0 0.0
  %3242 = vmatprep.subr.mxu0 0.0
  %3243 = vmatpush2.msra.mxu0 0.0
  %3244 = vmatprep.subr.mxu0 0.0
  %3245 = vmatpush2.msra.mxu0 0.0
  %3246 = vmatprep.subr.mxu0 0.0
  %3247 = vmatpush2.msra.mxu0 0.0
  %3248 = vmatprep.subr.mxu0 0.0
  %3249 = vmatpush2.msra.mxu0 0.0
  %3250 = vmatprep.subr.mxu0 0.0
  %3251 = vmatpush2.msra.mxu0 0.0
  %3252 = vmatprep.subr.mxu0 0.0
  %3253 = vmatpush2.msra.mxu0 0.0
  %3254 = vmatprep.subr.mxu0 0.0
  %3255 = vmatpush2.msra.mxu0 0.0
  %3256 = vmatprep.subr.mxu0 0.0
  %3257 = vmatpush2.msra.mxu0 0.0
  %3258 = vmatprep.subr.mxu0 0.0
  %3259 = vmatpush2.msra.mxu0 0.0
  %3260 = vmatprep.subr.mxu0 0.0
  %3261 = vmatpush2.msra.mxu0 0.0
  %3262 = vmatprep.subr.mxu0 0.0
  %3263 = vmatpush2.msra.mxu0 0.0
  %3264 = vmatprep.subr.mxu0 0.0
  %3265 = vmatpush2.msra.mxu0 0.0
  %3266 = vmatprep.subr.mxu0 0.0
  %3267 = vmatpush2.msra.mxu0 0.0
  %3268 = vmatprep.mubr.f32.mxu0 0.0
  %3269 = vmatmul.mubr.f32.gmra.mxu0 %v3062
  %v3270 = vpop.f32.mrf.mxu0
  %v3271 = vadd.f32 %v868, %v3270
  %v3272 = vpop.f32.mrf.mxu0
  %3273 = vdwg.mxu0
  %v3275 = vrot.slane %v3131, 7
  %v3277 = vadd.f32 %v661, %v3275
  %v3278 = vxor.u32 %v3277, 2147483648
  %v3279 = vmul.f32 %v3278, 1.442695
  %v3280 = vpow.pop %v3279
  %v3281 = vadd.f32 %v3280, 1.0
  %v3282 = vrcp.pop %v3281
  %v3283 = vmul.f32 1.0, %v3282
  %v3285 = vrot.slane %v3201, 7
  %v3287 = vadd.f32 %v751, %v3285
  %v3288 = vxor.u32 %v3287, 2147483648
  %v3289 = vmul.f32 %v3288, 1.442695
  %v3290 = vpow.pop %v3289
  %v3291 = vadd.f32 %v3290, 1.0
  %v3292 = vrcp.pop %v3291
  %v3293 = vmul.f32 1.0, %v3292
  %v3295 = vrot.slane %v3271, 7
  %v3297 = vmul.f32 %v3283, %v3295
  %v3298 = vadd.f32 %v841, %v3297
  %v3299 = vtanh.pop %v3298
  %v3300 = vsub.f32 1.0, %v3293
  %v3301 = vmul.f32 %v3300, %v3299
  %v3302 = vrot.slane %v3060, 7
  %v3304 = vmul.f32 %v3293, %v3302
  %v3305 = vadd.f32 %v3301, %v3304
  %v3307 = vrot.slane %v3305, 1
  %v3308 = vsel %vm518, %v3307, 0
  %3310 = vmatprep.subr.mxu0 0.0
  %3311 = vmatpush1.msra.mxu0 0.0
  %3312 = vmatprep.subr.mxu0 0.0
  %3313 = vmatpush1.msra.mxu0 0.0
  %3314 = vmatprep.subr.mxu0 0.0
  %3315 = vmatpush1.msra.mxu0 0.0
  %3316 = vmatprep.subr.mxu0 0.0
  %3317 = vmatpush1.msra.mxu0 0.0
  %3318 = vmatprep.subr.mxu0 0.0
  %3319 = vmatpush1.msra.mxu0 0.0
  %3320 = vmatprep.subr.mxu0 0.0
  %3321 = vmatpush1.msra.mxu0 0.0
  %3322 = vmatprep.subr.mxu0 0.0
  %3323 = vmatpush1.msra.mxu0 0.0
  %3324 = vmatprep.subr.mxu0 0.0
  %3325 = vmatpush1.msra.mxu0 0.0
  %3326 = vmatprep.subr.mxu0 0.0
  %3327 = vmatpush1.msra.mxu0 0.0
  %3328 = vmatprep.subr.mxu0 0.0
  %3329 = vmatpush1.msra.mxu0 0.0
  %3330 = vmatprep.subr.mxu0 0.0
  %3331 = vmatpush1.msra.mxu0 %v849
  %3332 = vmatprep.subr.mxu0 0.0
  %3333 = vmatpush1.msra.mxu0 %v848
  %3334 = vmatprep.subr.mxu0 0.0
  %3335 = vmatpush1.msra.mxu0 %v847
  %3336 = vmatprep.subr.mxu0 0.0
  %3337 = vmatpush1.msra.mxu0 %v846
  %3338 = vmatprep.subr.mxu0 0.0
  %3339 = vmatpush1.msra.mxu0 %v845
  %3340 = vmatprep.subr.mxu0 0.0
  %3341 = vmatpush1.msra.mxu0 %v844
  %3342 = vmatprep.subr.mxu0 0.0
  %3343 = vmatpush2.msra.mxu0 0.0
  %3344 = vmatprep.subr.mxu0 0.0
  %3345 = vmatpush2.msra.mxu0 0.0
  %3346 = vmatprep.subr.mxu0 0.0
  %3347 = vmatpush2.msra.mxu0 0.0
  %3348 = vmatprep.subr.mxu0 0.0
  %3349 = vmatpush2.msra.mxu0 0.0
  %3350 = vmatprep.subr.mxu0 0.0
  %3351 = vmatpush2.msra.mxu0 0.0
  %3352 = vmatprep.subr.mxu0 0.0
  %3353 = vmatpush2.msra.mxu0 0.0
  %3354 = vmatprep.subr.mxu0 0.0
  %3355 = vmatpush2.msra.mxu0 0.0
  %3356 = vmatprep.subr.mxu0 0.0
  %3357 = vmatpush2.msra.mxu0 0.0
  %3358 = vmatprep.subr.mxu0 0.0
  %3359 = vmatpush2.msra.mxu0 0.0
  %3360 = vmatprep.subr.mxu0 0.0
  %3361 = vmatpush2.msra.mxu0 0.0
  %3362 = vmatprep.subr.mxu0 0.0
  %3363 = vmatpush2.msra.mxu0 0.0
  %3364 = vmatprep.subr.mxu0 0.0
  %3365 = vmatpush2.msra.mxu0 0.0
  %3366 = vmatprep.subr.mxu0 0.0
  %3367 = vmatpush2.msra.mxu0 0.0
  %3368 = vmatprep.subr.mxu0 0.0
  %3369 = vmatpush2.msra.mxu0 0.0
  %3370 = vmatprep.subr.mxu0 0.0
  %3371 = vmatpush2.msra.mxu0 0.0
  %3372 = vmatprep.subr.mxu0 0.0
  %3373 = vmatpush2.msra.mxu0 0.0
  %3374 = vmatprep.mubr.f32.mxu0 0.0
  %3375 = vmatmul.mubr.f32.gmra.mxu0 %v3308
  %v3376 = vpop.f32.mrf.mxu0
  %v3377 = vadd.f32 %v864, %v3376
  %v3378 = vpop.f32.mrf.mxu0
  %3379 = vdwg.mxu0
  %3380 = vmatprep.subr.mxu0 0.0
  %3381 = vmatpush1.msra.mxu0 0.0
  %3382 = vmatprep.subr.mxu0 0.0
  %3383 = vmatpush1.msra.mxu0 0.0
  %3384 = vmatprep.subr.mxu0 0.0
  %3385 = vmatpush1.msra.mxu0 0.0
  %3386 = vmatprep.subr.mxu0 0.0
  %3387 = vmatpush1.msra.mxu0 0.0
  %3388 = vmatprep.subr.mxu0 0.0
  %3389 = vmatpush1.msra.mxu0 0.0
  %3390 = vmatprep.subr.mxu0 0.0
  %3391 = vmatpush1.msra.mxu0 0.0
  %3392 = vmatprep.subr.mxu0 0.0
  %3393 = vmatpush1.msra.mxu0 0.0
  %3394 = vmatprep.subr.mxu0 0.0
  %3395 = vmatpush1.msra.mxu0 0.0
  %3396 = vmatprep.subr.mxu0 0.0
  %3397 = vmatpush1.msra.mxu0 0.0
  %3398 = vmatprep.subr.mxu0 0.0
  %3399 = vmatpush1.msra.mxu0 0.0
  %3400 = vmatprep.subr.mxu0 0.0
  %3401 = vmatpush1.msra.mxu0 %v856
  %3402 = vmatprep.subr.mxu0 0.0
  %3403 = vmatpush1.msra.mxu0 %v855
  %3404 = vmatprep.subr.mxu0 0.0
  %3405 = vmatpush1.msra.mxu0 %v854
  %3406 = vmatprep.subr.mxu0 0.0
  %3407 = vmatpush1.msra.mxu0 %v853
  %3408 = vmatprep.subr.mxu0 0.0
  %3409 = vmatpush1.msra.mxu0 %v852
  %3410 = vmatprep.subr.mxu0 0.0
  %3411 = vmatpush1.msra.mxu0 %v851
  %3412 = vmatprep.subr.mxu0 0.0
  %3413 = vmatpush2.msra.mxu0 0.0
  %3414 = vmatprep.subr.mxu0 0.0
  %3415 = vmatpush2.msra.mxu0 0.0
  %3416 = vmatprep.subr.mxu0 0.0
  %3417 = vmatpush2.msra.mxu0 0.0
  %3418 = vmatprep.subr.mxu0 0.0
  %3419 = vmatpush2.msra.mxu0 0.0
  %3420 = vmatprep.subr.mxu0 0.0
  %3421 = vmatpush2.msra.mxu0 0.0
  %3422 = vmatprep.subr.mxu0 0.0
  %3423 = vmatpush2.msra.mxu0 0.0
  %3424 = vmatprep.subr.mxu0 0.0
  %3425 = vmatpush2.msra.mxu0 0.0
  %3426 = vmatprep.subr.mxu0 0.0
  %3427 = vmatpush2.msra.mxu0 0.0
  %3428 = vmatprep.subr.mxu0 0.0
  %3429 = vmatpush2.msra.mxu0 0.0
  %3430 = vmatprep.subr.mxu0 0.0
  %3431 = vmatpush2.msra.mxu0 0.0
  %3432 = vmatprep.subr.mxu0 0.0
  %3433 = vmatpush2.msra.mxu0 0.0
  %3434 = vmatprep.subr.mxu0 0.0
  %3435 = vmatpush2.msra.mxu0 0.0
  %3436 = vmatprep.subr.mxu0 0.0
  %3437 = vmatpush2.msra.mxu0 0.0
  %3438 = vmatprep.subr.mxu0 0.0
  %3439 = vmatpush2.msra.mxu0 0.0
  %3440 = vmatprep.subr.mxu0 0.0
  %3441 = vmatpush2.msra.mxu0 0.0
  %3442 = vmatprep.subr.mxu0 0.0
  %3443 = vmatpush2.msra.mxu0 0.0
  %3444 = vmatprep.mubr.f32.mxu0 0.0
  %3445 = vmatmul.mubr.f32.gmra.mxu0 %v3308
  %v3446 = vpop.f32.mrf.mxu0
  %v3447 = vadd.f32 %v866, %v3446
  %v3448 = vpop.f32.mrf.mxu0
  %3449 = vdwg.mxu0
  %3450 = vmatprep.subr.mxu0 0.0
  %3451 = vmatpush1.msra.mxu0 0.0
  %3452 = vmatprep.subr.mxu0 0.0
  %3453 = vmatpush1.msra.mxu0 0.0
  %3454 = vmatprep.subr.mxu0 0.0
  %3455 = vmatpush1.msra.mxu0 0.0
  %3456 = vmatprep.subr.mxu0 0.0
  %3457 = vmatpush1.msra.mxu0 0.0
  %3458 = vmatprep.subr.mxu0 0.0
  %3459 = vmatpush1.msra.mxu0 0.0
  %3460 = vmatprep.subr.mxu0 0.0
  %3461 = vmatpush1.msra.mxu0 0.0
  %3462 = vmatprep.subr.mxu0 0.0
  %3463 = vmatpush1.msra.mxu0 0.0
  %3464 = vmatprep.subr.mxu0 0.0
  %3465 = vmatpush1.msra.mxu0 0.0
  %3466 = vmatprep.subr.mxu0 0.0
  %3467 = vmatpush1.msra.mxu0 0.0
  %3468 = vmatprep.subr.mxu0 0.0
  %3469 = vmatpush1.msra.mxu0 0.0
  %3470 = vmatprep.subr.mxu0 0.0
  %3471 = vmatpush1.msra.mxu0 %v863
  %3472 = vmatprep.subr.mxu0 0.0
  %3473 = vmatpush1.msra.mxu0 %v862
  %3474 = vmatprep.subr.mxu0 0.0
  %3475 = vmatpush1.msra.mxu0 %v861
  %3476 = vmatprep.subr.mxu0 0.0
  %3477 = vmatpush1.msra.mxu0 %v860
  %3478 = vmatprep.subr.mxu0 0.0
  %3479 = vmatpush1.msra.mxu0 %v859
  %3480 = vmatprep.subr.mxu0 0.0
  %3481 = vmatpush1.msra.mxu0 %v858
  %3482 = vmatprep.subr.mxu0 0.0
  %3483 = vmatpush2.msra.mxu0 0.0
  %3484 = vmatprep.subr.mxu0 0.0
  %3485 = vmatpush2.msra.mxu0 0.0
  %3486 = vmatprep.subr.mxu0 0.0
  %3487 = vmatpush2.msra.mxu0 0.0
  %3488 = vmatprep.subr.mxu0 0.0
  %3489 = vmatpush2.msra.mxu0 0.0
  %3490 = vmatprep.subr.mxu0 0.0
  %3491 = vmatpush2.msra.mxu0 0.0
  %3492 = vmatprep.subr.mxu0 0.0
  %3493 = vmatpush2.msra.mxu0 0.0
  %3494 = vmatprep.subr.mxu0 0.0
  %3495 = vmatpush2.msra.mxu0 0.0
  %3496 = vmatprep.subr.mxu0 0.0
  %3497 = vmatpush2.msra.mxu0 0.0
  %3498 = vmatprep.subr.mxu0 0.0
  %3499 = vmatpush2.msra.mxu0 0.0
  %3500 = vmatprep.subr.mxu0 0.0
  %3501 = vmatpush2.msra.mxu0 0.0
  %3502 = vmatprep.subr.mxu0 0.0
  %3503 = vmatpush2.msra.mxu0 0.0
  %3504 = vmatprep.subr.mxu0 0.0
  %3505 = vmatpush2.msra.mxu0 0.0
  %3506 = vmatprep.subr.mxu0 0.0
  %3507 = vmatpush2.msra.mxu0 0.0
  %3508 = vmatprep.subr.mxu0 0.0
  %3509 = vmatpush2.msra.mxu0 0.0
  %3510 = vmatprep.subr.mxu0 0.0
  %3511 = vmatpush2.msra.mxu0 0.0
  %3512 = vmatprep.subr.mxu0 0.0
  %3513 = vmatpush2.msra.mxu0 0.0
  %3514 = vmatprep.mubr.f32.mxu0 0.0
  %3515 = vmatmul.mubr.f32.gmra.mxu0 %v3308
  %v3516 = vpop.f32.mrf.mxu0
  %v3517 = vadd.f32 %v868, %v3516
  %v3518 = vpop.f32.mrf.mxu0
  %3519 = vdwg.mxu0
  %v3521 = vrot.slane %v3377, 6
  %v3523 = vadd.f32 %v661, %v3521
  %v3524 = vxor.u32 %v3523, 2147483648
  %v3525 = vmul.f32 %v3524, 1.442695
  %v3526 = vpow.pop %v3525
  %v3527 = vadd.f32 %v3526, 1.0
  %v3528 = vrcp.pop %v3527
  %v3529 = vmul.f32 1.0, %v3528
  %v3531 = vrot.slane %v3447, 6
  %v3533 = vadd.f32 %v751, %v3531
  %v3534 = vxor.u32 %v3533, 2147483648
  %v3535 = vmul.f32 %v3534, 1.442695
  %v3536 = vpow.pop %v3535
  %v3537 = vadd.f32 %v3536, 1.0
  %v3538 = vrcp.pop %v3537
  %v3539 = vmul.f32 1.0, %v3538
  %v3541 = vrot.slane %v3517, 6
  %v3543 = vmul.f32 %v3529, %v3541
  %v3544 = vadd.f32 %v841, %v3543
  %v3545 = vtanh.pop %v3544
  %v3546 = vsub.f32 1.0, %v3539
  %v3547 = vmul.f32 %v3546, %v3545
  %v3548 = vrot.slane %v3305, 7
  %v3550 = vmul.f32 %v3539, %v3548
  %v3551 = vadd.f32 %v3547, %v3550
  %v3553 = vrot.slane %v3551, 2
  %v3554 = vsel %vm518, %v3553, 0
  %3556 = vmatprep.subr.mxu0 0.0
  %3557 = vmatpush1.msra.mxu0 0.0
  %3558 = vmatprep.subr.mxu0 0.0
  %3559 = vmatpush1.msra.mxu0 0.0
  %3560 = vmatprep.subr.mxu0 0.0
  %3561 = vmatpush1.msra.mxu0 0.0
  %3562 = vmatprep.subr.mxu0 0.0
  %3563 = vmatpush1.msra.mxu0 0.0
  %3564 = vmatprep.subr.mxu0 0.0
  %3565 = vmatpush1.msra.mxu0 0.0
  %3566 = vmatprep.subr.mxu0 0.0
  %3567 = vmatpush1.msra.mxu0 0.0
  %3568 = vmatprep.subr.mxu0 0.0
  %3569 = vmatpush1.msra.mxu0 0.0
  %3570 = vmatprep.subr.mxu0 0.0
  %3571 = vmatpush1.msra.mxu0 0.0
  %3572 = vmatprep.subr.mxu0 0.0
  %3573 = vmatpush1.msra.mxu0 0.0
  %3574 = vmatprep.subr.mxu0 0.0
  %3575 = vmatpush1.msra.mxu0 0.0
  %3576 = vmatprep.subr.mxu0 0.0
  %3577 = vmatpush1.msra.mxu0 %v849
  %3578 = vmatprep.subr.mxu0 0.0
  %3579 = vmatpush1.msra.mxu0 %v848
  %3580 = vmatprep.subr.mxu0 0.0
  %3581 = vmatpush1.msra.mxu0 %v847
  %3582 = vmatprep.subr.mxu0 0.0
  %3583 = vmatpush1.msra.mxu0 %v846
  %3584 = vmatprep.subr.mxu0 0.0
  %3585 = vmatpush1.msra.mxu0 %v845
  %3586 = vmatprep.subr.mxu0 0.0
  %3587 = vmatpush1.msra.mxu0 %v844
  %3588 = vmatprep.subr.mxu0 0.0
  %3589 = vmatpush2.msra.mxu0 0.0
  %3590 = vmatprep.subr.mxu0 0.0
  %3591 = vmatpush2.msra.mxu0 0.0
  %3592 = vmatprep.subr.mxu0 0.0
  %3593 = vmatpush2.msra.mxu0 0.0
  %3594 = vmatprep.subr.mxu0 0.0
  %3595 = vmatpush2.msra.mxu0 0.0
  %3596 = vmatprep.subr.mxu0 0.0
  %3597 = vmatpush2.msra.mxu0 0.0
  %3598 = vmatprep.subr.mxu0 0.0
  %3599 = vmatpush2.msra.mxu0 0.0
  %3600 = vmatprep.subr.mxu0 0.0
  %3601 = vmatpush2.msra.mxu0 0.0
  %3602 = vmatprep.subr.mxu0 0.0
  %3603 = vmatpush2.msra.mxu0 0.0
  %3604 = vmatprep.subr.mxu0 0.0
  %3605 = vmatpush2.msra.mxu0 0.0
  %3606 = vmatprep.subr.mxu0 0.0
  %3607 = vmatpush2.msra.mxu0 0.0
  %3608 = vmatprep.subr.mxu0 0.0
  %3609 = vmatpush2.msra.mxu0 0.0
  %3610 = vmatprep.subr.mxu0 0.0
  %3611 = vmatpush2.msra.mxu0 0.0
  %3612 = vmatprep.subr.mxu0 0.0
  %3613 = vmatpush2.msra.mxu0 0.0
  %3614 = vmatprep.subr.mxu0 0.0
  %3615 = vmatpush2.msra.mxu0 0.0
  %3616 = vmatprep.subr.mxu0 0.0
  %3617 = vmatpush2.msra.mxu0 0.0
  %3618 = vmatprep.subr.mxu0 0.0
  %3619 = vmatpush2.msra.mxu0 0.0
  %3620 = vmatprep.mubr.f32.mxu0 0.0
  %3621 = vmatmul.mubr.f32.gmra.mxu0 %v3554
  %v3622 = vpop.f32.mrf.mxu0
  %v3623 = vadd.f32 %v864, %v3622
  %v3624 = vpop.f32.mrf.mxu0
  %3625 = vdwg.mxu0
  %3626 = vmatprep.subr.mxu0 0.0
  %3627 = vmatpush1.msra.mxu0 0.0
  %3628 = vmatprep.subr.mxu0 0.0
  %3629 = vmatpush1.msra.mxu0 0.0
  %3630 = vmatprep.subr.mxu0 0.0
  %3631 = vmatpush1.msra.mxu0 0.0
  %3632 = vmatprep.subr.mxu0 0.0
  %3633 = vmatpush1.msra.mxu0 0.0
  %3634 = vmatprep.subr.mxu0 0.0
  %3635 = vmatpush1.msra.mxu0 0.0
  %3636 = vmatprep.subr.mxu0 0.0
  %3637 = vmatpush1.msra.mxu0 0.0
  %3638 = vmatprep.subr.mxu0 0.0
  %3639 = vmatpush1.msra.mxu0 0.0
  %3640 = vmatprep.subr.mxu0 0.0
  %3641 = vmatpush1.msra.mxu0 0.0
  %3642 = vmatprep.subr.mxu0 0.0
  %3643 = vmatpush1.msra.mxu0 0.0
  %3644 = vmatprep.subr.mxu0 0.0
  %3645 = vmatpush1.msra.mxu0 0.0
  %3646 = vmatprep.subr.mxu0 0.0
  %3647 = vmatpush1.msra.mxu0 %v856
  %3648 = vmatprep.subr.mxu0 0.0
  %3649 = vmatpush1.msra.mxu0 %v855
  %3650 = vmatprep.subr.mxu0 0.0
  %3651 = vmatpush1.msra.mxu0 %v854
  %3652 = vmatprep.subr.mxu0 0.0
  %3653 = vmatpush1.msra.mxu0 %v853
  %3654 = vmatprep.subr.mxu0 0.0
  %3655 = vmatpush1.msra.mxu0 %v852
  %3656 = vmatprep.subr.mxu0 0.0
  %3657 = vmatpush1.msra.mxu0 %v851
  %3658 = vmatprep.subr.mxu0 0.0
  %3659 = vmatpush2.msra.mxu0 0.0
  %3660 = vmatprep.subr.mxu0 0.0
  %3661 = vmatpush2.msra.mxu0 0.0
  %3662 = vmatprep.subr.mxu0 0.0
  %3663 = vmatpush2.msra.mxu0 0.0
  %3664 = vmatprep.subr.mxu0 0.0
  %3665 = vmatpush2.msra.mxu0 0.0
  %3666 = vmatprep.subr.mxu0 0.0
  %3667 = vmatpush2.msra.mxu0 0.0
  %3668 = vmatprep.subr.mxu0 0.0
  %3669 = vmatpush2.msra.mxu0 0.0
  %3670 = vmatprep.subr.mxu0 0.0
  %3671 = vmatpush2.msra.mxu0 0.0
  %3672 = vmatprep.subr.mxu0 0.0
  %3673 = vmatpush2.msra.mxu0 0.0
  %3674 = vmatprep.subr.mxu0 0.0
  %3675 = vmatpush2.msra.mxu0 0.0
  %3676 = vmatprep.subr.mxu0 0.0
  %3677 = vmatpush2.msra.mxu0 0.0
  %3678 = vmatprep.subr.mxu0 0.0
  %3679 = vmatpush2.msra.mxu0 0.0
  %3680 = vmatprep.subr.mxu0 0.0
  %3681 = vmatpush2.msra.mxu0 0.0
  %3682 = vmatprep.subr.mxu0 0.0
  %3683 = vmatpush2.msra.mxu0 0.0
  %3684 = vmatprep.subr.mxu0 0.0
  %3685 = vmatpush2.msra.mxu0 0.0
  %3686 = vmatprep.subr.mxu0 0.0
  %3687 = vmatpush2.msra.mxu0 0.0
  %3688 = vmatprep.subr.mxu0 0.0
  %3689 = vmatpush2.msra.mxu0 0.0
  %3690 = vmatprep.mubr.f32.mxu0 0.0
  %3691 = vmatmul.mubr.f32.gmra.mxu0 %v3554
  %v3692 = vpop.f32.mrf.mxu0
  %v3693 = vadd.f32 %v866, %v3692
  %v3694 = vpop.f32.mrf.mxu0
  %3695 = vdwg.mxu0
  %3696 = vmatprep.subr.mxu0 0.0
  %3697 = vmatpush1.msra.mxu0 0.0
  %3698 = vmatprep.subr.mxu0 0.0
  %3699 = vmatpush1.msra.mxu0 0.0
  %3700 = vmatprep.subr.mxu0 0.0
  %3701 = vmatpush1.msra.mxu0 0.0
  %3702 = vmatprep.subr.mxu0 0.0
  %3703 = vmatpush1.msra.mxu0 0.0
  %3704 = vmatprep.subr.mxu0 0.0
  %3705 = vmatpush1.msra.mxu0 0.0
  %3706 = vmatprep.subr.mxu0 0.0
  %3707 = vmatpush1.msra.mxu0 0.0
  %3708 = vmatprep.subr.mxu0 0.0
  %3709 = vmatpush1.msra.mxu0 0.0
  %3710 = vmatprep.subr.mxu0 0.0
  %3711 = vmatpush1.msra.mxu0 0.0
  %3712 = vmatprep.subr.mxu0 0.0
  %3713 = vmatpush1.msra.mxu0 0.0
  %3714 = vmatprep.subr.mxu0 0.0
  %3715 = vmatpush1.msra.mxu0 0.0
  %3716 = vmatprep.subr.mxu0 0.0
  %3717 = vmatpush1.msra.mxu0 %v863
  %3718 = vmatprep.subr.mxu0 0.0
  %3719 = vmatpush1.msra.mxu0 %v862
  %3720 = vmatprep.subr.mxu0 0.0
  %3721 = vmatpush1.msra.mxu0 %v861
  %3722 = vmatprep.subr.mxu0 0.0
  %3723 = vmatpush1.msra.mxu0 %v860
  %3724 = vmatprep.subr.mxu0 0.0
  %3725 = vmatpush1.msra.mxu0 %v859
  %3726 = vmatprep.subr.mxu0 0.0
  %3727 = vmatpush1.msra.mxu0 %v858
  %3728 = vmatprep.subr.mxu0 0.0
  %3729 = vmatpush2.msra.mxu0 0.0
  %3730 = vmatprep.subr.mxu0 0.0
  %3731 = vmatpush2.msra.mxu0 0.0
  %3732 = vmatprep.subr.mxu0 0.0
  %3733 = vmatpush2.msra.mxu0 0.0
  %3734 = vmatprep.subr.mxu0 0.0
  %3735 = vmatpush2.msra.mxu0 0.0
  %3736 = vmatprep.subr.mxu0 0.0
  %3737 = vmatpush2.msra.mxu0 0.0
  %3738 = vmatprep.subr.mxu0 0.0
  %3739 = vmatpush2.msra.mxu0 0.0
  %3740 = vmatprep.subr.mxu0 0.0
  %3741 = vmatpush2.msra.mxu0 0.0
  %3742 = vmatprep.subr.mxu0 0.0
  %3743 = vmatpush2.msra.mxu0 0.0
  %3744 = vmatprep.subr.mxu0 0.0
  %3745 = vmatpush2.msra.mxu0 0.0
  %3746 = vmatprep.subr.mxu0 0.0
  %3747 = vmatpush2.msra.mxu0 0.0
  %3748 = vmatprep.subr.mxu0 0.0
  %3749 = vmatpush2.msra.mxu0 0.0
  %3750 = vmatprep.subr.mxu0 0.0
  %3751 = vmatpush2.msra.mxu0 0.0
  %3752 = vmatprep.subr.mxu0 0.0
  %3753 = vmatpush2.msra.mxu0 0.0
  %3754 = vmatprep.subr.mxu0 0.0
  %3755 = vmatpush2.msra.mxu0 0.0
  %3756 = vmatprep.subr.mxu0 0.0
  %3757 = vmatpush2.msra.mxu0 0.0
  %3758 = vmatprep.subr.mxu0 0.0
  %3759 = vmatpush2.msra.mxu0 0.0
  %3760 = vmatprep.mubr.f32.mxu0 0.0
  %3761 = vmatmul.mubr.f32.gmra.mxu0 %v3554
  %v3762 = vpop.f32.mrf.mxu0
  %v3763 = vadd.f32 %v868, %v3762
  %v3764 = vpop.f32.mrf.mxu0
  %3765 = vdwg.mxu0
  %v3767 = vrot.slane %v3623, 5
  %v3769 = vadd.f32 %v661, %v3767
  %v3770 = vxor.u32 %v3769, 2147483648
  %v3771 = vmul.f32 %v3770, 1.442695
  %v3772 = vpow.pop %v3771
  %v3773 = vadd.f32 %v3772, 1.0
  %v3774 = vrcp.pop %v3773
  %v3775 = vmul.f32 1.0, %v3774
  %v3777 = vrot.slane %v3693, 5
  %v3779 = vadd.f32 %v751, %v3777
  %v3780 = vxor.u32 %v3779, 2147483648
  %v3781 = vmul.f32 %v3780, 1.442695
  %v3782 = vpow.pop %v3781
  %v3783 = vadd.f32 %v3782, 1.0
  %v3784 = vrcp.pop %v3783
  %v3785 = vmul.f32 1.0, %v3784
  %v3787 = vrot.slane %v3763, 5
  %v3789 = vmul.f32 %v3775, %v3787
  %v3790 = vadd.f32 %v841, %v3789
  %v3791 = vtanh.pop %v3790
  %v3792 = vsub.f32 1.0, %v3785
  %v3793 = vmul.f32 %v3792, %v3791
  %v3794 = vrot.slane %v3551, 7
  %v3796 = vmul.f32 %v3785, %v3794
  %v3797 = vadd.f32 %v3793, %v3796
  %v3799 = vrot.slane %v3797, 3
  %v3800 = vsel %vm518, %v3799, 0
  %3802 = vmatprep.subr.mxu0 0.0
  %3803 = vmatpush1.msra.mxu0 0.0
  %3804 = vmatprep.subr.mxu0 0.0
  %3805 = vmatpush1.msra.mxu0 0.0
  %3806 = vmatprep.subr.mxu0 0.0
  %3807 = vmatpush1.msra.mxu0 0.0
  %3808 = vmatprep.subr.mxu0 0.0
  %3809 = vmatpush1.msra.mxu0 0.0
  %3810 = vmatprep.subr.mxu0 0.0
  %3811 = vmatpush1.msra.mxu0 0.0
  %3812 = vmatprep.subr.mxu0 0.0
  %3813 = vmatpush1.msra.mxu0 0.0
  %3814 = vmatprep.subr.mxu0 0.0
  %3815 = vmatpush1.msra.mxu0 0.0
  %3816 = vmatprep.subr.mxu0 0.0
  %3817 = vmatpush1.msra.mxu0 0.0
  %3818 = vmatprep.subr.mxu0 0.0
  %3819 = vmatpush1.msra.mxu0 0.0
  %3820 = vmatprep.subr.mxu0 0.0
  %3821 = vmatpush1.msra.mxu0 0.0
  %3822 = vmatprep.subr.mxu0 0.0
  %3823 = vmatpush1.msra.mxu0 %v849
  %3824 = vmatprep.subr.mxu0 0.0
  %3825 = vmatpush1.msra.mxu0 %v848
  %3826 = vmatprep.subr.mxu0 0.0
  %3827 = vmatpush1.msra.mxu0 %v847
  %3828 = vmatprep.subr.mxu0 0.0
  %3829 = vmatpush1.msra.mxu0 %v846
  %3830 = vmatprep.subr.mxu0 0.0
  %3831 = vmatpush1.msra.mxu0 %v845
  %3832 = vmatprep.subr.mxu0 0.0
  %3833 = vmatpush1.msra.mxu0 %v844
  %3834 = vmatprep.subr.mxu0 0.0
  %3835 = vmatpush2.msra.mxu0 0.0
  %3836 = vmatprep.subr.mxu0 0.0
  %3837 = vmatpush2.msra.mxu0 0.0
  %3838 = vmatprep.subr.mxu0 0.0
  %3839 = vmatpush2.msra.mxu0 0.0
  %3840 = vmatprep.subr.mxu0 0.0
  %3841 = vmatpush2.msra.mxu0 0.0
  %3842 = vmatprep.subr.mxu0 0.0
  %3843 = vmatpush2.msra.mxu0 0.0
  %3844 = vmatprep.subr.mxu0 0.0
  %3845 = vmatpush2.msra.mxu0 0.0
  %3846 = vmatprep.subr.mxu0 0.0
  %3847 = vmatpush2.msra.mxu0 0.0
  %3848 = vmatprep.subr.mxu0 0.0
  %3849 = vmatpush2.msra.mxu0 0.0
  %3850 = vmatprep.subr.mxu0 0.0
  %3851 = vmatpush2.msra.mxu0 0.0
  %3852 = vmatprep.subr.mxu0 0.0
  %3853 = vmatpush2.msra.mxu0 0.0
  %3854 = vmatprep.subr.mxu0 0.0
  %3855 = vmatpush2.msra.mxu0 0.0
  %3856 = vmatprep.subr.mxu0 0.0
  %3857 = vmatpush2.msra.mxu0 0.0
  %3858 = vmatprep.subr.mxu0 0.0
  %3859 = vmatpush2.msra.mxu0 0.0
  %3860 = vmatprep.subr.mxu0 0.0
  %3861 = vmatpush2.msra.mxu0 0.0
  %3862 = vmatprep.subr.mxu0 0.0
  %3863 = vmatpush2.msra.mxu0 0.0
  %3864 = vmatprep.subr.mxu0 0.0
  %3865 = vmatpush2.msra.mxu0 0.0
  %3866 = vmatprep.mubr.f32.mxu0 0.0
  %3867 = vmatmul.mubr.f32.gmra.mxu0 %v3800
  %v3868 = vpop.f32.mrf.mxu0
  %v3869 = vadd.f32 %v864, %v3868
  %v3870 = vpop.f32.mrf.mxu0
  %3871 = vdwg.mxu0
  %3872 = vmatprep.subr.mxu0 0.0
  %3873 = vmatpush1.msra.mxu0 0.0
  %3874 = vmatprep.subr.mxu0 0.0
  %3875 = vmatpush1.msra.mxu0 0.0
  %3876 = vmatprep.subr.mxu0 0.0
  %3877 = vmatpush1.msra.mxu0 0.0
  %3878 = vmatprep.subr.mxu0 0.0
  %3879 = vmatpush1.msra.mxu0 0.0
  %3880 = vmatprep.subr.mxu0 0.0
  %3881 = vmatpush1.msra.mxu0 0.0
  %3882 = vmatprep.subr.mxu0 0.0
  %3883 = vmatpush1.msra.mxu0 0.0
  %3884 = vmatprep.subr.mxu0 0.0
  %3885 = vmatpush1.msra.mxu0 0.0
  %3886 = vmatprep.subr.mxu0 0.0
  %3887 = vmatpush1.msra.mxu0 0.0
  %3888 = vmatprep.subr.mxu0 0.0
  %3889 = vmatpush1.msra.mxu0 0.0
  %3890 = vmatprep.subr.mxu0 0.0
  %3891 = vmatpush1.msra.mxu0 0.0
  %3892 = vmatprep.subr.mxu0 0.0
  %3893 = vmatpush1.msra.mxu0 %v856
  %3894 = vmatprep.subr.mxu0 0.0
  %3895 = vmatpush1.msra.mxu0 %v855
  %3896 = vmatprep.subr.mxu0 0.0
  %3897 = vmatpush1.msra.mxu0 %v854
  %3898 = vmatprep.subr.mxu0 0.0
  %3899 = vmatpush1.msra.mxu0 %v853
  %3900 = vmatprep.subr.mxu0 0.0
  %3901 = vmatpush1.msra.mxu0 %v852
  %3902 = vmatprep.subr.mxu0 0.0
  %3903 = vmatpush1.msra.mxu0 %v851
  %3904 = vmatprep.subr.mxu0 0.0
  %3905 = vmatpush2.msra.mxu0 0.0
  %3906 = vmatprep.subr.mxu0 0.0
  %3907 = vmatpush2.msra.mxu0 0.0
  %3908 = vmatprep.subr.mxu0 0.0
  %3909 = vmatpush2.msra.mxu0 0.0
  %3910 = vmatprep.subr.mxu0 0.0
  %3911 = vmatpush2.msra.mxu0 0.0
  %3912 = vmatprep.subr.mxu0 0.0
  %3913 = vmatpush2.msra.mxu0 0.0
  %3914 = vmatprep.subr.mxu0 0.0
  %3915 = vmatpush2.msra.mxu0 0.0
  %3916 = vmatprep.subr.mxu0 0.0
  %3917 = vmatpush2.msra.mxu0 0.0
  %3918 = vmatprep.subr.mxu0 0.0
  %3919 = vmatpush2.msra.mxu0 0.0
  %3920 = vmatprep.subr.mxu0 0.0
  %3921 = vmatpush2.msra.mxu0 0.0
  %3922 = vmatprep.subr.mxu0 0.0
  %3923 = vmatpush2.msra.mxu0 0.0
  %3924 = vmatprep.subr.mxu0 0.0
  %3925 = vmatpush2.msra.mxu0 0.0
  %3926 = vmatprep.subr.mxu0 0.0
  %3927 = vmatpush2.msra.mxu0 0.0
  %3928 = vmatprep.subr.mxu0 0.0
  %3929 = vmatpush2.msra.mxu0 0.0
  %3930 = vmatprep.subr.mxu0 0.0
  %3931 = vmatpush2.msra.mxu0 0.0
  %3932 = vmatprep.subr.mxu0 0.0
  %3933 = vmatpush2.msra.mxu0 0.0
  %3934 = vmatprep.subr.mxu0 0.0
  %3935 = vmatpush2.msra.mxu0 0.0
  %3936 = vmatprep.mubr.f32.mxu0 0.0
  %3937 = vmatmul.mubr.f32.gmra.mxu0 %v3800
  %v3938 = vpop.f32.mrf.mxu0
  %v3939 = vadd.f32 %v866, %v3938
  %v3940 = vpop.f32.mrf.mxu0
  %3941 = vdwg.mxu0
  %3942 = vmatprep.subr.mxu0 0.0
  %3943 = vmatpush1.msra.mxu0 0.0
  %3944 = vmatprep.subr.mxu0 0.0
  %3945 = vmatpush1.msra.mxu0 0.0
  %3946 = vmatprep.subr.mxu0 0.0
  %3947 = vmatpush1.msra.mxu0 0.0
  %3948 = vmatprep.subr.mxu0 0.0
  %3949 = vmatpush1.msra.mxu0 0.0
  %3950 = vmatprep.subr.mxu0 0.0
  %3951 = vmatpush1.msra.mxu0 0.0
  %3952 = vmatprep.subr.mxu0 0.0
  %3953 = vmatpush1.msra.mxu0 0.0
  %3954 = vmatprep.subr.mxu0 0.0
  %3955 = vmatpush1.msra.mxu0 0.0
  %3956 = vmatprep.subr.mxu0 0.0
  %3957 = vmatpush1.msra.mxu0 0.0
  %3958 = vmatprep.subr.mxu0 0.0
  %3959 = vmatpush1.msra.mxu0 0.0
  %3960 = vmatprep.subr.mxu0 0.0
  %3961 = vmatpush1.msra.mxu0 0.0
  %3962 = vmatprep.subr.mxu0 0.0
  %3963 = vmatpush1.msra.mxu0 %v863
  %3964 = vmatprep.subr.mxu0 0.0
  %3965 = vmatpush1.msra.mxu0 %v862
  %3966 = vmatprep.subr.mxu0 0.0
  %3967 = vmatpush1.msra.mxu0 %v861
  %3968 = vmatprep.subr.mxu0 0.0
  %3969 = vmatpush1.msra.mxu0 %v860
  %3970 = vmatprep.subr.mxu0 0.0
  %3971 = vmatpush1.msra.mxu0 %v859
  %3972 = vmatprep.subr.mxu0 0.0
  %3973 = vmatpush1.msra.mxu0 %v858
  %3974 = vmatprep.subr.mxu0 0.0
  %3975 = vmatpush2.msra.mxu0 0.0
  %3976 = vmatprep.subr.mxu0 0.0
  %3977 = vmatpush2.msra.mxu0 0.0
  %3978 = vmatprep.subr.mxu0 0.0
  %3979 = vmatpush2.msra.mxu0 0.0
  %3980 = vmatprep.subr.mxu0 0.0
  %3981 = vmatpush2.msra.mxu0 0.0
  %3982 = vmatprep.subr.mxu0 0.0
  %3983 = vmatpush2.msra.mxu0 0.0
  %3984 = vmatprep.subr.mxu0 0.0
  %3985 = vmatpush2.msra.mxu0 0.0
  %3986 = vmatprep.subr.mxu0 0.0
  %3987 = vmatpush2.msra.mxu0 0.0
  %3988 = vmatprep.subr.mxu0 0.0
  %3989 = vmatpush2.msra.mxu0 0.0
  %3990 = vmatprep.subr.mxu0 0.0
  %3991 = vmatpush2.msra.mxu0 0.0
  %3992 = vmatprep.subr.mxu0 0.0
  %3993 = vmatpush2.msra.mxu0 0.0
  %3994 = vmatprep.subr.mxu0 0.0
  %3995 = vmatpush2.msra.mxu0 0.0
  %3996 = vmatprep.subr.mxu0 0.0
  %3997 = vmatpush2.msra.mxu0 0.0
  %3998 = vmatprep.subr.mxu0 0.0
  %3999 = vmatpush2.msra.mxu0 0.0
  %4000 = vmatprep.subr.mxu0 0.0
  %4001 = vmatpush2.msra.mxu0 0.0
  %4002 = vmatprep.subr.mxu0 0.0
  %4003 = vmatpush2.msra.mxu0 0.0
  %4004 = vmatprep.subr.mxu0 0.0
  %4005 = vmatpush2.msra.mxu0 0.0
  %4006 = vmatprep.mubr.f32.mxu0 0.0
  %4007 = vmatmul.mubr.f32.gmra.mxu0 %v3800
  %v4008 = vpop.f32.mrf.mxu0
  %v4009 = vadd.f32 %v868, %v4008
  %v4010 = vpop.f32.mrf.mxu0
  %4011 = vdwg.mxu0
  %v4013 = vrot.slane %v3869, 4
  %v4015 = vadd.f32 %v661, %v4013
  %v4016 = vxor.u32 %v4015, 2147483648
  %v4017 = vmul.f32 %v4016, 1.442695
  %v4018 = vpow.pop %v4017
  %v4019 = vadd.f32 %v4018, 1.0
  %v4020 = vrcp.pop %v4019
  %v4021 = vmul.f32 1.0, %v4020
  %v4023 = vrot.slane %v3939, 4
  %v4025 = vadd.f32 %v751, %v4023
  %v4026 = vxor.u32 %v4025, 2147483648
  %v4027 = vmul.f32 %v4026, 1.442695
  %v4028 = vpow.pop %v4027
  %v4029 = vadd.f32 %v4028, 1.0
  %v4030 = vrcp.pop %v4029
  %v4031 = vmul.f32 1.0, %v4030
  %v4033 = vrot.slane %v4009, 4
  %v4035 = vmul.f32 %v4021, %v4033
  %v4036 = vadd.f32 %v841, %v4035
  %v4037 = vtanh.pop %v4036
  %v4038 = vsub.f32 1.0, %v4031
  %v4039 = vmul.f32 %v4038, %v4037
  %v4040 = vrot.slane %v3797, 7
  %v4042 = vmul.f32 %v4031, %v4040
  %v4043 = vadd.f32 %v4039, %v4042
  %v4045 = vrot.slane %v4043, 4
  %v4046 = vsel %vm518, %v4045, 0
  %4048 = vmatprep.subr.mxu0 0.0
  %4049 = vmatpush1.msra.mxu0 0.0
  %4050 = vmatprep.subr.mxu0 0.0
  %4051 = vmatpush1.msra.mxu0 0.0
  %4052 = vmatprep.subr.mxu0 0.0
  %4053 = vmatpush1.msra.mxu0 0.0
  %4054 = vmatprep.subr.mxu0 0.0
  %4055 = vmatpush1.msra.mxu0 0.0
  %4056 = vmatprep.subr.mxu0 0.0
  %4057 = vmatpush1.msra.mxu0 0.0
  %4058 = vmatprep.subr.mxu0 0.0
  %4059 = vmatpush1.msra.mxu0 0.0
  %4060 = vmatprep.subr.mxu0 0.0
  %4061 = vmatpush1.msra.mxu0 0.0
  %4062 = vmatprep.subr.mxu0 0.0
  %4063 = vmatpush1.msra.mxu0 0.0
  %4064 = vmatprep.subr.mxu0 0.0
  %4065 = vmatpush1.msra.mxu0 0.0
  %4066 = vmatprep.subr.mxu0 0.0
  %4067 = vmatpush1.msra.mxu0 0.0
  %4068 = vmatprep.subr.mxu0 0.0
  %4069 = vmatpush1.msra.mxu0 %v849
  %4070 = vmatprep.subr.mxu0 0.0
  %4071 = vmatpush1.msra.mxu0 %v848
  %4072 = vmatprep.subr.mxu0 0.0
  %4073 = vmatpush1.msra.mxu0 %v847
  %4074 = vmatprep.subr.mxu0 0.0
  %4075 = vmatpush1.msra.mxu0 %v846
  %4076 = vmatprep.subr.mxu0 0.0
  %4077 = vmatpush1.msra.mxu0 %v845
  %4078 = vmatprep.subr.mxu0 0.0
  %4079 = vmatpush1.msra.mxu0 %v844
  %4080 = vmatprep.subr.mxu0 0.0
  %4081 = vmatpush2.msra.mxu0 0.0
  %4082 = vmatprep.subr.mxu0 0.0
  %4083 = vmatpush2.msra.mxu0 0.0
  %4084 = vmatprep.subr.mxu0 0.0
  %4085 = vmatpush2.msra.mxu0 0.0
  %4086 = vmatprep.subr.mxu0 0.0
  %4087 = vmatpush2.msra.mxu0 0.0
  %4088 = vmatprep.subr.mxu0 0.0
  %4089 = vmatpush2.msra.mxu0 0.0
  %4090 = vmatprep.subr.mxu0 0.0
  %4091 = vmatpush2.msra.mxu0 0.0
  %4092 = vmatprep.subr.mxu0 0.0
  %4093 = vmatpush2.msra.mxu0 0.0
  %4094 = vmatprep.subr.mxu0 0.0
  %4095 = vmatpush2.msra.mxu0 0.0
  %4096 = vmatprep.subr.mxu0 0.0
  %4097 = vmatpush2.msra.mxu0 0.0
  %4098 = vmatprep.subr.mxu0 0.0
  %4099 = vmatpush2.msra.mxu0 0.0
  %4100 = vmatprep.subr.mxu0 0.0
  %4101 = vmatpush2.msra.mxu0 0.0
  %4102 = vmatprep.subr.mxu0 0.0
  %4103 = vmatpush2.msra.mxu0 0.0
  %4104 = vmatprep.subr.mxu0 0.0
  %4105 = vmatpush2.msra.mxu0 0.0
  %4106 = vmatprep.subr.mxu0 0.0
  %4107 = vmatpush2.msra.mxu0 0.0
  %4108 = vmatprep.subr.mxu0 0.0
  %4109 = vmatpush2.msra.mxu0 0.0
  %4110 = vmatprep.subr.mxu0 0.0
  %4111 = vmatpush2.msra.mxu0 0.0
  %4112 = vmatprep.mubr.f32.mxu0 0.0
  %4113 = vmatmul.mubr.f32.gmra.mxu0 %v4046
  %v4114 = vpop.f32.mrf.mxu0
  %v4115 = vadd.f32 %v864, %v4114
  %v4116 = vpop.f32.mrf.mxu0
  %4117 = vdwg.mxu0
  %4118 = vmatprep.subr.mxu0 0.0
  %4119 = vmatpush1.msra.mxu0 0.0
  %4120 = vmatprep.subr.mxu0 0.0
  %4121 = vmatpush1.msra.mxu0 0.0
  %4122 = vmatprep.subr.mxu0 0.0
  %4123 = vmatpush1.msra.mxu0 0.0
  %4124 = vmatprep.subr.mxu0 0.0
  %4125 = vmatpush1.msra.mxu0 0.0
  %4126 = vmatprep.subr.mxu0 0.0
  %4127 = vmatpush1.msra.mxu0 0.0
  %4128 = vmatprep.subr.mxu0 0.0
  %4129 = vmatpush1.msra.mxu0 0.0
  %4130 = vmatprep.subr.mxu0 0.0
  %4131 = vmatpush1.msra.mxu0 0.0
  %4132 = vmatprep.subr.mxu0 0.0
  %4133 = vmatpush1.msra.mxu0 0.0
  %4134 = vmatprep.subr.mxu0 0.0
  %4135 = vmatpush1.msra.mxu0 0.0
  %4136 = vmatprep.subr.mxu0 0.0
  %4137 = vmatpush1.msra.mxu0 0.0
  %4138 = vmatprep.subr.mxu0 0.0
  %4139 = vmatpush1.msra.mxu0 %v856
  %4140 = vmatprep.subr.mxu0 0.0
  %4141 = vmatpush1.msra.mxu0 %v855
  %4142 = vmatprep.subr.mxu0 0.0
  %4143 = vmatpush1.msra.mxu0 %v854
  %4144 = vmatprep.subr.mxu0 0.0
  %4145 = vmatpush1.msra.mxu0 %v853
  %4146 = vmatprep.subr.mxu0 0.0
  %4147 = vmatpush1.msra.mxu0 %v852
  %4148 = vmatprep.subr.mxu0 0.0
  %4149 = vmatpush1.msra.mxu0 %v851
  %4150 = vmatprep.subr.mxu0 0.0
  %4151 = vmatpush2.msra.mxu0 0.0
  %4152 = vmatprep.subr.mxu0 0.0
  %4153 = vmatpush2.msra.mxu0 0.0
  %4154 = vmatprep.subr.mxu0 0.0
  %4155 = vmatpush2.msra.mxu0 0.0
  %4156 = vmatprep.subr.mxu0 0.0
  %4157 = vmatpush2.msra.mxu0 0.0
  %4158 = vmatprep.subr.mxu0 0.0
  %4159 = vmatpush2.msra.mxu0 0.0
  %4160 = vmatprep.subr.mxu0 0.0
  %4161 = vmatpush2.msra.mxu0 0.0
  %4162 = vmatprep.subr.mxu0 0.0
  %4163 = vmatpush2.msra.mxu0 0.0
  %4164 = vmatprep.subr.mxu0 0.0
  %4165 = vmatpush2.msra.mxu0 0.0
  %4166 = vmatprep.subr.mxu0 0.0
  %4167 = vmatpush2.msra.mxu0 0.0
  %4168 = vmatprep.subr.mxu0 0.0
  %4169 = vmatpush2.msra.mxu0 0.0
  %4170 = vmatprep.subr.mxu0 0.0
  %4171 = vmatpush2.msra.mxu0 0.0
  %4172 = vmatprep.subr.mxu0 0.0
  %4173 = vmatpush2.msra.mxu0 0.0
  %4174 = vmatprep.subr.mxu0 0.0
  %4175 = vmatpush2.msra.mxu0 0.0
  %4176 = vmatprep.subr.mxu0 0.0
  %4177 = vmatpush2.msra.mxu0 0.0
  %4178 = vmatprep.subr.mxu0 0.0
  %4179 = vmatpush2.msra.mxu0 0.0
  %4180 = vmatprep.subr.mxu0 0.0
  %4181 = vmatpush2.msra.mxu0 0.0
  %4182 = vmatprep.mubr.f32.mxu0 0.0
  %4183 = vmatmul.mubr.f32.gmra.mxu0 %v4046
  %v4184 = vpop.f32.mrf.mxu0
  %v4185 = vadd.f32 %v866, %v4184
  %v4186 = vpop.f32.mrf.mxu0
  %4187 = vdwg.mxu0
  %4188 = vmatprep.subr.mxu0 0.0
  %4189 = vmatpush1.msra.mxu0 0.0
  %4190 = vmatprep.subr.mxu0 0.0
  %4191 = vmatpush1.msra.mxu0 0.0
  %4192 = vmatprep.subr.mxu0 0.0
  %4193 = vmatpush1.msra.mxu0 0.0
  %4194 = vmatprep.subr.mxu0 0.0
  %4195 = vmatpush1.msra.mxu0 0.0
  %4196 = vmatprep.subr.mxu0 0.0
  %4197 = vmatpush1.msra.mxu0 0.0
  %4198 = vmatprep.subr.mxu0 0.0
  %4199 = vmatpush1.msra.mxu0 0.0
  %4200 = vmatprep.subr.mxu0 0.0
  %4201 = vmatpush1.msra.mxu0 0.0
  %4202 = vmatprep.subr.mxu0 0.0
  %4203 = vmatpush1.msra.mxu0 0.0
  %4204 = vmatprep.subr.mxu0 0.0
  %4205 = vmatpush1.msra.mxu0 0.0
  %4206 = vmatprep.subr.mxu0 0.0
  %4207 = vmatpush1.msra.mxu0 0.0
  %4208 = vmatprep.subr.mxu0 0.0
  %4209 = vmatpush1.msra.mxu0 %v863
  %4210 = vmatprep.subr.mxu0 0.0
  %4211 = vmatpush1.msra.mxu0 %v862
  %4212 = vmatprep.subr.mxu0 0.0
  %4213 = vmatpush1.msra.mxu0 %v861
  %4214 = vmatprep.subr.mxu0 0.0
  %4215 = vmatpush1.msra.mxu0 %v860
  %4216 = vmatprep.subr.mxu0 0.0
  %4217 = vmatpush1.msra.mxu0 %v859
  %4218 = vmatprep.subr.mxu0 0.0
  %4219 = vmatpush1.msra.mxu0 %v858
  %4220 = vmatprep.subr.mxu0 0.0
  %4221 = vmatpush2.msra.mxu0 0.0
  %4222 = vmatprep.subr.mxu0 0.0
  %4223 = vmatpush2.msra.mxu0 0.0
  %4224 = vmatprep.subr.mxu0 0.0
  %4225 = vmatpush2.msra.mxu0 0.0
  %4226 = vmatprep.subr.mxu0 0.0
  %4227 = vmatpush2.msra.mxu0 0.0
  %4228 = vmatprep.subr.mxu0 0.0
  %4229 = vmatpush2.msra.mxu0 0.0
  %4230 = vmatprep.subr.mxu0 0.0
  %4231 = vmatpush2.msra.mxu0 0.0
  %4232 = vmatprep.subr.mxu0 0.0
  %4233 = vmatpush2.msra.mxu0 0.0
  %4234 = vmatprep.subr.mxu0 0.0
  %4235 = vmatpush2.msra.mxu0 0.0
  %4236 = vmatprep.subr.mxu0 0.0
  %4237 = vmatpush2.msra.mxu0 0.0
  %4238 = vmatprep.subr.mxu0 0.0
  %4239 = vmatpush2.msra.mxu0 0.0
  %4240 = vmatprep.subr.mxu0 0.0
  %4241 = vmatpush2.msra.mxu0 0.0
  %4242 = vmatprep.subr.mxu0 0.0
  %4243 = vmatpush2.msra.mxu0 0.0
  %4244 = vmatprep.subr.mxu0 0.0
  %4245 = vmatpush2.msra.mxu0 0.0
  %4246 = vmatprep.subr.mxu0 0.0
  %4247 = vmatpush2.msra.mxu0 0.0
  %4248 = vmatprep.subr.mxu0 0.0
  %4249 = vmatpush2.msra.mxu0 0.0
  %4250 = vmatprep.subr.mxu0 0.0
  %4251 = vmatpush2.msra.mxu0 0.0
  %4252 = vmatprep.mubr.f32.mxu0 0.0
  %4253 = vmatmul.mubr.f32.gmra.mxu0 %v4046
  %v4254 = vpop.f32.mrf.mxu0
  %v4255 = vadd.f32 %v868, %v4254
  %v4256 = vpop.f32.mrf.mxu0
  %4257 = vdwg.mxu0
  %v4259 = vrot.slane %v4115, 3
  %v4261 = vadd.f32 %v661, %v4259
  %v4262 = vxor.u32 %v4261, 2147483648
  %v4263 = vmul.f32 %v4262, 1.442695
  %v4264 = vpow.pop %v4263
  %v4265 = vadd.f32 %v4264, 1.0
  %v4266 = vrcp.pop %v4265
  %v4267 = vmul.f32 1.0, %v4266
  %v4269 = vrot.slane %v4185, 3
  %v4271 = vadd.f32 %v751, %v4269
  %v4272 = vxor.u32 %v4271, 2147483648
  %v4273 = vmul.f32 %v4272, 1.442695
  %v4274 = vpow.pop %v4273
  %v4275 = vadd.f32 %v4274, 1.0
  %v4276 = vrcp.pop %v4275
  %v4277 = vmul.f32 1.0, %v4276
  %v4279 = vrot.slane %v4255, 3
  %v4281 = vmul.f32 %v4267, %v4279
  %v4282 = vadd.f32 %v841, %v4281
  %v4283 = vtanh.pop %v4282
  %v4284 = vsub.f32 1.0, %v4277
  %v4285 = vmul.f32 %v4284, %v4283
  %v4286 = vrot.slane %v4043, 7
  %v4288 = vmul.f32 %v4277, %v4286
  %v4289 = vadd.f32 %v4285, %v4288
  %v4291 = vrot.slane %v4289, 5
  %v4292 = vsel %vm518, %v4291, 0
  %4294 = vmatprep.subr.mxu0 0.0
  %4295 = vmatpush1.msra.mxu0 0.0
  %4296 = vmatprep.subr.mxu0 0.0
  %4297 = vmatpush1.msra.mxu0 0.0
  %4298 = vmatprep.subr.mxu0 0.0
  %4299 = vmatpush1.msra.mxu0 0.0
  %4300 = vmatprep.subr.mxu0 0.0
  %4301 = vmatpush1.msra.mxu0 0.0
  %4302 = vmatprep.subr.mxu0 0.0
  %4303 = vmatpush1.msra.mxu0 0.0
  %4304 = vmatprep.subr.mxu0 0.0
  %4305 = vmatpush1.msra.mxu0 0.0
  %4306 = vmatprep.subr.mxu0 0.0
  %4307 = vmatpush1.msra.mxu0 0.0
  %4308 = vmatprep.subr.mxu0 0.0
  %4309 = vmatpush1.msra.mxu0 0.0
  %4310 = vmatprep.subr.mxu0 0.0
  %4311 = vmatpush1.msra.mxu0 0.0
  %4312 = vmatprep.subr.mxu0 0.0
  %4313 = vmatpush1.msra.mxu0 0.0
  %4314 = vmatprep.subr.mxu0 0.0
  %4315 = vmatpush1.msra.mxu0 %v849
  %4316 = vmatprep.subr.mxu0 0.0
  %4317 = vmatpush1.msra.mxu0 %v848
  %4318 = vmatprep.subr.mxu0 0.0
  %4319 = vmatpush1.msra.mxu0 %v847
  %4320 = vmatprep.subr.mxu0 0.0
  %4321 = vmatpush1.msra.mxu0 %v846
  %4322 = vmatprep.subr.mxu0 0.0
  %4323 = vmatpush1.msra.mxu0 %v845
  %4324 = vmatprep.subr.mxu0 0.0
  %4325 = vmatpush1.msra.mxu0 %v844
  %4326 = vmatprep.subr.mxu0 0.0
  %4327 = vmatpush2.msra.mxu0 0.0
  %4328 = vmatprep.subr.mxu0 0.0
  %4329 = vmatpush2.msra.mxu0 0.0
  %4330 = vmatprep.subr.mxu0 0.0
  %4331 = vmatpush2.msra.mxu0 0.0
  %4332 = vmatprep.subr.mxu0 0.0
  %4333 = vmatpush2.msra.mxu0 0.0
  %4334 = vmatprep.subr.mxu0 0.0
  %4335 = vmatpush2.msra.mxu0 0.0
  %4336 = vmatprep.subr.mxu0 0.0
  %4337 = vmatpush2.msra.mxu0 0.0
  %4338 = vmatprep.subr.mxu0 0.0
  %4339 = vmatpush2.msra.mxu0 0.0
  %4340 = vmatprep.subr.mxu0 0.0
  %4341 = vmatpush2.msra.mxu0 0.0
  %4342 = vmatprep.subr.mxu0 0.0
  %4343 = vmatpush2.msra.mxu0 0.0
  %4344 = vmatprep.subr.mxu0 0.0
  %4345 = vmatpush2.msra.mxu0 0.0
  %4346 = vmatprep.subr.mxu0 0.0
  %4347 = vmatpush2.msra.mxu0 0.0
  %4348 = vmatprep.subr.mxu0 0.0
  %4349 = vmatpush2.msra.mxu0 0.0
  %4350 = vmatprep.subr.mxu0 0.0
  %4351 = vmatpush2.msra.mxu0 0.0
  %4352 = vmatprep.subr.mxu0 0.0
  %4353 = vmatpush2.msra.mxu0 0.0
  %4354 = vmatprep.subr.mxu0 0.0
  %4355 = vmatpush2.msra.mxu0 0.0
  %4356 = vmatprep.subr.mxu0 0.0
  %4357 = vmatpush2.msra.mxu0 0.0
  %4358 = vmatprep.mubr.f32.mxu0 0.0
  %4359 = vmatmul.mubr.f32.gmra.mxu0 %v4292
  %v4360 = vpop.f32.mrf.mxu0
  %v4361 = vadd.f32 %v864, %v4360
  %v4362 = vpop.f32.mrf.mxu0
  %4363 = vdwg.mxu0
  %4364 = vmatprep.subr.mxu0 0.0
  %4365 = vmatpush1.msra.mxu0 0.0
  %4366 = vmatprep.subr.mxu0 0.0
  %4367 = vmatpush1.msra.mxu0 0.0
  %4368 = vmatprep.subr.mxu0 0.0
  %4369 = vmatpush1.msra.mxu0 0.0
  %4370 = vmatprep.subr.mxu0 0.0
  %4371 = vmatpush1.msra.mxu0 0.0
  %4372 = vmatprep.subr.mxu0 0.0
  %4373 = vmatpush1.msra.mxu0 0.0
  %4374 = vmatprep.subr.mxu0 0.0
  %4375 = vmatpush1.msra.mxu0 0.0
  %4376 = vmatprep.subr.mxu0 0.0
  %4377 = vmatpush1.msra.mxu0 0.0
  %4378 = vmatprep.subr.mxu0 0.0
  %4379 = vmatpush1.msra.mxu0 0.0
  %4380 = vmatprep.subr.mxu0 0.0
  %4381 = vmatpush1.msra.mxu0 0.0
  %4382 = vmatprep.subr.mxu0 0.0
  %4383 = vmatpush1.msra.mxu0 0.0
  %4384 = vmatprep.subr.mxu0 0.0
  %4385 = vmatpush1.msra.mxu0 %v856
  %4386 = vmatprep.subr.mxu0 0.0
  %4387 = vmatpush1.msra.mxu0 %v855
  %4388 = vmatprep.subr.mxu0 0.0
  %4389 = vmatpush1.msra.mxu0 %v854
  %4390 = vmatprep.subr.mxu0 0.0
  %4391 = vmatpush1.msra.mxu0 %v853
  %4392 = vmatprep.subr.mxu0 0.0
  %4393 = vmatpush1.msra.mxu0 %v852
  %4394 = vmatprep.subr.mxu0 0.0
  %4395 = vmatpush1.msra.mxu0 %v851
  %4396 = vmatprep.subr.mxu0 0.0
  %4397 = vmatpush2.msra.mxu0 0.0
  %4398 = vmatprep.subr.mxu0 0.0
  %4399 = vmatpush2.msra.mxu0 0.0
  %4400 = vmatprep.subr.mxu0 0.0
  %4401 = vmatpush2.msra.mxu0 0.0
  %4402 = vmatprep.subr.mxu0 0.0
  %4403 = vmatpush2.msra.mxu0 0.0
  %4404 = vmatprep.subr.mxu0 0.0
  %4405 = vmatpush2.msra.mxu0 0.0
  %4406 = vmatprep.subr.mxu0 0.0
  %4407 = vmatpush2.msra.mxu0 0.0
  %4408 = vmatprep.subr.mxu0 0.0
  %4409 = vmatpush2.msra.mxu0 0.0
  %4410 = vmatprep.subr.mxu0 0.0
  %4411 = vmatpush2.msra.mxu0 0.0
  %4412 = vmatprep.subr.mxu0 0.0
  %4413 = vmatpush2.msra.mxu0 0.0
  %4414 = vmatprep.subr.mxu0 0.0
  %4415 = vmatpush2.msra.mxu0 0.0
  %4416 = vmatprep.subr.mxu0 0.0
  %4417 = vmatpush2.msra.mxu0 0.0
  %4418 = vmatprep.subr.mxu0 0.0
  %4419 = vmatpush2.msra.mxu0 0.0
  %4420 = vmatprep.subr.mxu0 0.0
  %4421 = vmatpush2.msra.mxu0 0.0
  %4422 = vmatprep.subr.mxu0 0.0
  %4423 = vmatpush2.msra.mxu0 0.0
  %4424 = vmatprep.subr.mxu0 0.0
  %4425 = vmatpush2.msra.mxu0 0.0
  %4426 = vmatprep.subr.mxu0 0.0
  %4427 = vmatpush2.msra.mxu0 0.0
  %4428 = vmatprep.mubr.f32.mxu0 0.0
  %4429 = vmatmul.mubr.f32.gmra.mxu0 %v4292
  %v4430 = vpop.f32.mrf.mxu0
  %v4431 = vadd.f32 %v866, %v4430
  %v4432 = vpop.f32.mrf.mxu0
  %4433 = vdwg.mxu0
  %4434 = vmatprep.subr.mxu0 0.0
  %4435 = vmatpush1.msra.mxu0 0.0
  %4436 = vmatprep.subr.mxu0 0.0
  %4437 = vmatpush1.msra.mxu0 0.0
  %4438 = vmatprep.subr.mxu0 0.0
  %4439 = vmatpush1.msra.mxu0 0.0
  %4440 = vmatprep.subr.mxu0 0.0
  %4441 = vmatpush1.msra.mxu0 0.0
  %4442 = vmatprep.subr.mxu0 0.0
  %4443 = vmatpush1.msra.mxu0 0.0
  %4444 = vmatprep.subr.mxu0 0.0
  %4445 = vmatpush1.msra.mxu0 0.0
  %4446 = vmatprep.subr.mxu0 0.0
  %4447 = vmatpush1.msra.mxu0 0.0
  %4448 = vmatprep.subr.mxu0 0.0
  %4449 = vmatpush1.msra.mxu0 0.0
  %4450 = vmatprep.subr.mxu0 0.0
  %4451 = vmatpush1.msra.mxu0 0.0
  %4452 = vmatprep.subr.mxu0 0.0
  %4453 = vmatpush1.msra.mxu0 0.0
  %4454 = vmatprep.subr.mxu0 0.0
  %4455 = vmatpush1.msra.mxu0 %v863
  %4456 = vmatprep.subr.mxu0 0.0
  %4457 = vmatpush1.msra.mxu0 %v862
  %4458 = vmatprep.subr.mxu0 0.0
  %4459 = vmatpush1.msra.mxu0 %v861
  %4460 = vmatprep.subr.mxu0 0.0
  %4461 = vmatpush1.msra.mxu0 %v860
  %4462 = vmatprep.subr.mxu0 0.0
  %4463 = vmatpush1.msra.mxu0 %v859
  %4464 = vmatprep.subr.mxu0 0.0
  %4465 = vmatpush1.msra.mxu0 %v858
  %4466 = vmatprep.subr.mxu0 0.0
  %4467 = vmatpush2.msra.mxu0 0.0
  %4468 = vmatprep.subr.mxu0 0.0
  %4469 = vmatpush2.msra.mxu0 0.0
  %4470 = vmatprep.subr.mxu0 0.0
  %4471 = vmatpush2.msra.mxu0 0.0
  %4472 = vmatprep.subr.mxu0 0.0
  %4473 = vmatpush2.msra.mxu0 0.0
  %4474 = vmatprep.subr.mxu0 0.0
  %4475 = vmatpush2.msra.mxu0 0.0
  %4476 = vmatprep.subr.mxu0 0.0
  %4477 = vmatpush2.msra.mxu0 0.0
  %4478 = vmatprep.subr.mxu0 0.0
  %4479 = vmatpush2.msra.mxu0 0.0
  %4480 = vmatprep.subr.mxu0 0.0
  %4481 = vmatpush2.msra.mxu0 0.0
  %4482 = vmatprep.subr.mxu0 0.0
  %4483 = vmatpush2.msra.mxu0 0.0
  %4484 = vmatprep.subr.mxu0 0.0
  %4485 = vmatpush2.msra.mxu0 0.0
  %4486 = vmatprep.subr.mxu0 0.0
  %4487 = vmatpush2.msra.mxu0 0.0
  %4488 = vmatprep.subr.mxu0 0.0
  %4489 = vmatpush2.msra.mxu0 0.0
  %4490 = vmatprep.subr.mxu0 0.0
  %4491 = vmatpush2.msra.mxu0 0.0
  %4492 = vmatprep.subr.mxu0 0.0
  %4493 = vmatpush2.msra.mxu0 0.0
  %4494 = vmatprep.subr.mxu0 0.0
  %4495 = vmatpush2.msra.mxu0 0.0
  %4496 = vmatprep.subr.mxu0 0.0
  %4497 = vmatpush2.msra.mxu0 0.0
  %4498 = vmatprep.mubr.f32.mxu0 0.0
  %4499 = vmatmul.mubr.f32.gmra.mxu0 %v4292
  %v4500 = vpop.f32.mrf.mxu0
  %v4501 = vadd.f32 %v868, %v4500
  %v4502 = vpop.f32.mrf.mxu0
  %4503 = vdwg.mxu0
  %v4505 = vrot.slane %v4361, 2
  %v4507 = vadd.f32 %v661, %v4505
  %v4508 = vxor.u32 %v4507, 2147483648
  %v4509 = vmul.f32 %v4508, 1.442695
  %v4510 = vpow.pop %v4509
  %v4511 = vadd.f32 %v4510, 1.0
  %v4512 = vrcp.pop %v4511
  %v4513 = vmul.f32 1.0, %v4512
  %v4515 = vrot.slane %v4431, 2
  %v4517 = vadd.f32 %v751, %v4515
  %v4518 = vxor.u32 %v4517, 2147483648
  %v4519 = vmul.f32 %v4518, 1.442695
  %v4520 = vpow.pop %v4519
  %v4521 = vadd.f32 %v4520, 1.0
  %v4522 = vrcp.pop %v4521
  %v4523 = vmul.f32 1.0, %v4522
  %v4525 = vrot.slane %v4501, 2
  %v4527 = vmul.f32 %v4513, %v4525
  %v4528 = vadd.f32 %v841, %v4527
  %v4529 = vtanh.pop %v4528
  %v4530 = vsub.f32 1.0, %v4523
  %v4531 = vmul.f32 %v4530, %v4529
  %v4532 = vrot.slane %v4289, 7
  %v4534 = vmul.f32 %v4523, %v4532
  %v4535 = vadd.f32 %v4531, %v4534
  %v4537 = vrot.slane %v4535, 6
  %v4538 = vsel %vm518, %v4537, 0
  %4540 = vmatprep.subr.mxu0 0.0
  %4541 = vmatpush1.msra.mxu0 0.0
  %4542 = vmatprep.subr.mxu0 0.0
  %4543 = vmatpush1.msra.mxu0 0.0
  %4544 = vmatprep.subr.mxu0 0.0
  %4545 = vmatpush1.msra.mxu0 0.0
  %4546 = vmatprep.subr.mxu0 0.0
  %4547 = vmatpush1.msra.mxu0 0.0
  %4548 = vmatprep.subr.mxu0 0.0
  %4549 = vmatpush1.msra.mxu0 0.0
  %4550 = vmatprep.subr.mxu0 0.0
  %4551 = vmatpush1.msra.mxu0 0.0
  %4552 = vmatprep.subr.mxu0 0.0
  %4553 = vmatpush1.msra.mxu0 0.0
  %4554 = vmatprep.subr.mxu0 0.0
  %4555 = vmatpush1.msra.mxu0 0.0
  %4556 = vmatprep.subr.mxu0 0.0
  %4557 = vmatpush1.msra.mxu0 0.0
  %4558 = vmatprep.subr.mxu0 0.0
  %4559 = vmatpush1.msra.mxu0 0.0
  %4560 = vmatprep.subr.mxu0 0.0
  %4561 = vmatpush1.msra.mxu0 %v849
  %4562 = vmatprep.subr.mxu0 0.0
  %4563 = vmatpush1.msra.mxu0 %v848
  %4564 = vmatprep.subr.mxu0 0.0
  %4565 = vmatpush1.msra.mxu0 %v847
  %4566 = vmatprep.subr.mxu0 0.0
  %4567 = vmatpush1.msra.mxu0 %v846
  %4568 = vmatprep.subr.mxu0 0.0
  %4569 = vmatpush1.msra.mxu0 %v845
  %4570 = vmatprep.subr.mxu0 0.0
  %4571 = vmatpush1.msra.mxu0 %v844
  %4572 = vmatprep.subr.mxu0 0.0
  %4573 = vmatpush2.msra.mxu0 0.0
  %4574 = vmatprep.subr.mxu0 0.0
  %4575 = vmatpush2.msra.mxu0 0.0
  %4576 = vmatprep.subr.mxu0 0.0
  %4577 = vmatpush2.msra.mxu0 0.0
  %4578 = vmatprep.subr.mxu0 0.0
  %4579 = vmatpush2.msra.mxu0 0.0
  %4580 = vmatprep.subr.mxu0 0.0
  %4581 = vmatpush2.msra.mxu0 0.0
  %4582 = vmatprep.subr.mxu0 0.0
  %4583 = vmatpush2.msra.mxu0 0.0
  %4584 = vmatprep.subr.mxu0 0.0
  %4585 = vmatpush2.msra.mxu0 0.0
  %4586 = vmatprep.subr.mxu0 0.0
  %4587 = vmatpush2.msra.mxu0 0.0
  %4588 = vmatprep.subr.mxu0 0.0
  %4589 = vmatpush2.msra.mxu0 0.0
  %4590 = vmatprep.subr.mxu0 0.0
  %4591 = vmatpush2.msra.mxu0 0.0
  %4592 = vmatprep.subr.mxu0 0.0
  %4593 = vmatpush2.msra.mxu0 0.0
  %4594 = vmatprep.subr.mxu0 0.0
  %4595 = vmatpush2.msra.mxu0 0.0
  %4596 = vmatprep.subr.mxu0 0.0
  %4597 = vmatpush2.msra.mxu0 0.0
  %4598 = vmatprep.subr.mxu0 0.0
  %4599 = vmatpush2.msra.mxu0 0.0
  %4600 = vmatprep.subr.mxu0 0.0
  %4601 = vmatpush2.msra.mxu0 0.0
  %4602 = vmatprep.subr.mxu0 0.0
  %4603 = vmatpush2.msra.mxu0 0.0
  %4604 = vmatprep.mubr.f32.mxu0 0.0
  %4605 = vmatmul.mubr.f32.gmra.mxu0 %v4538
  %v4606 = vpop.f32.mrf.mxu0
  %v4607 = vadd.f32 %v864, %v4606
  %v4608 = vpop.f32.mrf.mxu0
  %4609 = vdwg.mxu0
  %4610 = vmatprep.subr.mxu0 0.0
  %4611 = vmatpush1.msra.mxu0 0.0
  %4612 = vmatprep.subr.mxu0 0.0
  %4613 = vmatpush1.msra.mxu0 0.0
  %4614 = vmatprep.subr.mxu0 0.0
  %4615 = vmatpush1.msra.mxu0 0.0
  %4616 = vmatprep.subr.mxu0 0.0
  %4617 = vmatpush1.msra.mxu0 0.0
  %4618 = vmatprep.subr.mxu0 0.0
  %4619 = vmatpush1.msra.mxu0 0.0
  %4620 = vmatprep.subr.mxu0 0.0
  %4621 = vmatpush1.msra.mxu0 0.0
  %4622 = vmatprep.subr.mxu0 0.0
  %4623 = vmatpush1.msra.mxu0 0.0
  %4624 = vmatprep.subr.mxu0 0.0
  %4625 = vmatpush1.msra.mxu0 0.0
  %4626 = vmatprep.subr.mxu0 0.0
  %4627 = vmatpush1.msra.mxu0 0.0
  %4628 = vmatprep.subr.mxu0 0.0
  %4629 = vmatpush1.msra.mxu0 0.0
  %4630 = vmatprep.subr.mxu0 0.0
  %4631 = vmatpush1.msra.mxu0 %v856
  %4632 = vmatprep.subr.mxu0 0.0
  %4633 = vmatpush1.msra.mxu0 %v855
  %4634 = vmatprep.subr.mxu0 0.0
  %4635 = vmatpush1.msra.mxu0 %v854
  %4636 = vmatprep.subr.mxu0 0.0
  %4637 = vmatpush1.msra.mxu0 %v853
  %4638 = vmatprep.subr.mxu0 0.0
  %4639 = vmatpush1.msra.mxu0 %v852
  %4640 = vmatprep.subr.mxu0 0.0
  %4641 = vmatpush1.msra.mxu0 %v851
  %4642 = vmatprep.subr.mxu0 0.0
  %4643 = vmatpush2.msra.mxu0 0.0
  %4644 = vmatprep.subr.mxu0 0.0
  %4645 = vmatpush2.msra.mxu0 0.0
  %4646 = vmatprep.subr.mxu0 0.0
  %4647 = vmatpush2.msra.mxu0 0.0
  %4648 = vmatprep.subr.mxu0 0.0
  %4649 = vmatpush2.msra.mxu0 0.0
  %4650 = vmatprep.subr.mxu0 0.0
  %4651 = vmatpush2.msra.mxu0 0.0
  %4652 = vmatprep.subr.mxu0 0.0
  %4653 = vmatpush2.msra.mxu0 0.0
  %4654 = vmatprep.subr.mxu0 0.0
  %4655 = vmatpush2.msra.mxu0 0.0
  %4656 = vmatprep.subr.mxu0 0.0
  %4657 = vmatpush2.msra.mxu0 0.0
  %4658 = vmatprep.subr.mxu0 0.0
  %4659 = vmatpush2.msra.mxu0 0.0
  %4660 = vmatprep.subr.mxu0 0.0
  %4661 = vmatpush2.msra.mxu0 0.0
  %4662 = vmatprep.subr.mxu0 0.0
  %4663 = vmatpush2.msra.mxu0 0.0
  %4664 = vmatprep.subr.mxu0 0.0
  %4665 = vmatpush2.msra.mxu0 0.0
  %4666 = vmatprep.subr.mxu0 0.0
  %4667 = vmatpush2.msra.mxu0 0.0
  %4668 = vmatprep.subr.mxu0 0.0
  %4669 = vmatpush2.msra.mxu0 0.0
  %4670 = vmatprep.subr.mxu0 0.0
  %4671 = vmatpush2.msra.mxu0 0.0
  %4672 = vmatprep.subr.mxu0 0.0
  %4673 = vmatpush2.msra.mxu0 0.0
  %4674 = vmatprep.mubr.f32.mxu0 0.0
  %4675 = vmatmul.mubr.f32.gmra.mxu0 %v4538
  %v4676 = vpop.f32.mrf.mxu0
  %v4677 = vadd.f32 %v866, %v4676
  %v4678 = vpop.f32.mrf.mxu0
  %4679 = vdwg.mxu0
  %4680 = vmatprep.subr.mxu0 0.0
  %4681 = vmatpush1.msra.mxu0 0.0
  %4682 = vmatprep.subr.mxu0 0.0
  %4683 = vmatpush1.msra.mxu0 0.0
  %4684 = vmatprep.subr.mxu0 0.0
  %4685 = vmatpush1.msra.mxu0 0.0
  %4686 = vmatprep.subr.mxu0 0.0
  %4687 = vmatpush1.msra.mxu0 0.0
  %4688 = vmatprep.subr.mxu0 0.0
  %4689 = vmatpush1.msra.mxu0 0.0
  %4690 = vmatprep.subr.mxu0 0.0
  %4691 = vmatpush1.msra.mxu0 0.0
  %4692 = vmatprep.subr.mxu0 0.0
  %4693 = vmatpush1.msra.mxu0 0.0
  %4694 = vmatprep.subr.mxu0 0.0
  %4695 = vmatpush1.msra.mxu0 0.0
  %4696 = vmatprep.subr.mxu0 0.0
  %4697 = vmatpush1.msra.mxu0 0.0
  %4698 = vmatprep.subr.mxu0 0.0
  %4699 = vmatpush1.msra.mxu0 0.0
  %4700 = vmatprep.subr.mxu0 0.0
  %4701 = vmatpush1.msra.mxu0 %v863
  %4702 = vmatprep.subr.mxu0 0.0
  %4703 = vmatpush1.msra.mxu0 %v862
  %4704 = vmatprep.subr.mxu0 0.0
  %4705 = vmatpush1.msra.mxu0 %v861
  %4706 = vmatprep.subr.mxu0 0.0
  %4707 = vmatpush1.msra.mxu0 %v860
  %4708 = vmatprep.subr.mxu0 0.0
  %4709 = vmatpush1.msra.mxu0 %v859
  %4710 = vmatprep.subr.mxu0 0.0
  %4711 = vmatpush1.msra.mxu0 %v858
  %4712 = vmatprep.subr.mxu0 0.0
  %4713 = vmatpush2.msra.mxu0 0.0
  %4714 = vmatprep.subr.mxu0 0.0
  %4715 = vmatpush2.msra.mxu0 0.0
  %4716 = vmatprep.subr.mxu0 0.0
  %4717 = vmatpush2.msra.mxu0 0.0
  %4718 = vmatprep.subr.mxu0 0.0
  %4719 = vmatpush2.msra.mxu0 0.0
  %4720 = vmatprep.subr.mxu0 0.0
  %4721 = vmatpush2.msra.mxu0 0.0
  %4722 = vmatprep.subr.mxu0 0.0
  %4723 = vmatpush2.msra.mxu0 0.0
  %4724 = vmatprep.subr.mxu0 0.0
  %4725 = vmatpush2.msra.mxu0 0.0
  %4726 = vmatprep.subr.mxu0 0.0
  %4727 = vmatpush2.msra.mxu0 0.0
  %4728 = vmatprep.subr.mxu0 0.0
  %4729 = vmatpush2.msra.mxu0 0.0
  %4730 = vmatprep.subr.mxu0 0.0
  %4731 = vmatpush2.msra.mxu0 0.0
  %4732 = vmatprep.subr.mxu0 0.0
  %4733 = vmatpush2.msra.mxu0 0.0
  %4734 = vmatprep.subr.mxu0 0.0
  %4735 = vmatpush2.msra.mxu0 0.0
  %4736 = vmatprep.subr.mxu0 0.0
  %4737 = vmatpush2.msra.mxu0 0.0
  %4738 = vmatprep.subr.mxu0 0.0
  %4739 = vmatpush2.msra.mxu0 0.0
  %4740 = vmatprep.subr.mxu0 0.0
  %4741 = vmatpush2.msra.mxu0 0.0
  %4742 = vmatprep.subr.mxu0 0.0
  %4743 = vmatpush2.msra.mxu0 0.0
  %4744 = vmatprep.mubr.f32.mxu0 0.0
  %4745 = vmatmul.mubr.f32.gmra.mxu0 %v4538
  %v4746 = vpop.f32.mrf.mxu0
  %v4747 = vadd.f32 %v868, %v4746
  %v4748 = vpop.f32.mrf.mxu0
  %4749 = vdwg.mxu0
  %v4751 = vrot.slane %v4607, 1
  %v4753 = vadd.f32 %v661, %v4751
  %v4754 = vxor.u32 %v4753, 2147483648
  %v4755 = vmul.f32 %v4754, 1.442695
  %v4756 = vpow.pop %v4755
  %v4757 = vadd.f32 %v4756, 1.0
  %v4758 = vrcp.pop %v4757
  %v4759 = vmul.f32 1.0, %v4758
  %v4761 = vrot.slane %v4677, 1
  %v4763 = vadd.f32 %v751, %v4761
  %v4764 = vxor.u32 %v4763, 2147483648
  %v4765 = vmul.f32 %v4764, 1.442695
  %v4766 = vpow.pop %v4765
  %v4767 = vadd.f32 %v4766, 1.0
  %v4768 = vrcp.pop %v4767
  %v4769 = vmul.f32 1.0, %v4768
  %v4771 = vrot.slane %v4747, 1
  %v4773 = vmul.f32 %v4759, %v4771
  %v4774 = vadd.f32 %v841, %v4773
  %v4775 = vtanh.pop %v4774
  %v4776 = vsub.f32 1.0, %v4769
  %v4777 = vmul.f32 %v4776, %v4775
  %v4778 = vrot.slane %v4535, 7
  %v4780 = vmul.f32 %v4769, %v4778
  %v4781 = vadd.f32 %v4777, %v4780
  %vm4782 = vcmask 392199
  %4783 = vst.msk [vmem:[%s67 - $0x7] sm:$0x80] %vm4782, %v4781
  %vm4784 = vcmask 1040384
  %v4785 = vsel %vm4784, %v1103, %v1348
  %vm4786 = vcmask 1041408
  %v4787 = vsel %vm4786, %v4785, %v1594
  %vm4788 = vcmask 1042432
  %v4789 = vsel %vm4788, %v4787, %v1840
  %vm4790 = vcmask 1043456
  %v4791 = vsel %vm4790, %v4789, %v2086
  %vm4792 = vcmask 1044480
  %v4793 = vsel %vm4792, %v4791, %v2332
  %vm4794 = vcmask 1045504
  %v4795 = vsel %vm4794, %v4793, %v2578
  %vm4796 = vcmask 1046528
  %v4797 = vsel %vm4796, %v4795, %v2824
  %v4798 = vsel %vm4784, %v3060, %v3305
  %v4799 = vsel %vm4786, %v4798, %v3551
  %v4800 = vsel %vm4788, %v4799, %v3797
  %v4801 = vsel %vm4790, %v4800, %v4043
  %v4802 = vsel %vm4792, %v4801, %v4289
  %v4803 = vsel %vm4794, %v4802, %v4535
  %v4804 = vsel %vm4796, %v4803, %v4781
  %v4805 = vld [vmem:[%s25] sm:$0xff]
  %v4806 = vld [vmem:[%s25 + $0x8] sm:$0xff]
  %v4807 = vld [vmem:[%s25 + $0x10] sm:$0xff]
  %v4808 = vld [vmem:[%s25 + $0x18] sm:$0xff]
  %v4809 = vld [vmem:[%s25 + $0x20] sm:$0xff]
  %v4810 = vld [vmem:[%s25 + $0x28] sm:$0xff]
  %v4811 = vld [vmem:[%s27] sm:$0x1]
  %v4813 = vlaneseq
  %v4814 = vshrl.u32 %v4813, 7
  %v4815 = vsub.s32 0, %v4814
  %v4816 = vrot.slane %v4811, %v4815
  %v4819 = vsel %vm518, %v4797, 0
  %v4822 = vsel %vm518, %v4804, 0
  %4824 = vmatprep.subr.mxu0 0.0
  %4825 = vmatpush1.msra.mxu0 0.0
  %4826 = vmatprep.subr.mxu0 0.0
  %4827 = vmatpush1.msra.mxu0 0.0
  %4828 = vmatprep.subr.mxu0 0.0
  %4829 = vmatpush1.msra.mxu0 0.0
  %4830 = vmatprep.subr.mxu0 0.0
  %4831 = vmatpush1.msra.mxu0 0.0
  %4832 = vmatprep.subr.mxu0 0.0
  %4833 = vmatpush1.msra.mxu0 0.0
  %4834 = vmatprep.subr.mxu0 0.0
  %4835 = vmatpush1.msra.mxu0 0.0
  %4836 = vmatprep.subr.mxu0 0.0
  %4837 = vmatpush1.msra.mxu0 0.0
  %4838 = vmatprep.subr.mxu0 0.0
  %4839 = vmatpush1.msra.mxu0 0.0
  %4840 = vmatprep.subr.mxu0 0.0
  %4841 = vmatpush1.msra.mxu0 0.0
  %4842 = vmatprep.subr.mxu0 0.0
  %4843 = vmatpush1.msra.mxu0 0.0
  %4844 = vmatprep.subr.mxu0 0.0
  %4845 = vmatpush1.msra.mxu0 %v4810
  %4846 = vmatprep.subr.mxu0 0.0
  %4847 = vmatpush1.msra.mxu0 %v4809
  %4848 = vmatprep.subr.mxu0 0.0
  %4849 = vmatpush1.msra.mxu0 %v4808
  %4850 = vmatprep.subr.mxu0 0.0
  %4851 = vmatpush1.msra.mxu0 %v4807
  %4852 = vmatprep.subr.mxu0 0.0
  %4853 = vmatpush1.msra.mxu0 %v4806
  %4854 = vmatprep.subr.mxu0 0.0
  %4855 = vmatpush1.msra.mxu0 %v4805
  %4856 = vmatprep.subr.mxu0 0.0
  %4857 = vmatpush2.msra.mxu0 0.0
  %4858 = vmatprep.subr.mxu0 0.0
  %4859 = vmatpush2.msra.mxu0 0.0
  %4860 = vmatprep.subr.mxu0 0.0
  %4861 = vmatpush2.msra.mxu0 0.0
  %4862 = vmatprep.subr.mxu0 0.0
  %4863 = vmatpush2.msra.mxu0 0.0
  %4864 = vmatprep.subr.mxu0 0.0
  %4865 = vmatpush2.msra.mxu0 0.0
  %4866 = vmatprep.subr.mxu0 0.0
  %4867 = vmatpush2.msra.mxu0 0.0
  %4868 = vmatprep.subr.mxu0 0.0
  %4869 = vmatpush2.msra.mxu0 0.0
  %4870 = vmatprep.subr.mxu0 0.0
  %4871 = vmatpush2.msra.mxu0 0.0
  %4872 = vmatprep.subr.mxu0 0.0
  %4873 = vmatpush2.msra.mxu0 0.0
  %4874 = vmatprep.subr.mxu0 0.0
  %4875 = vmatpush2.msra.mxu0 0.0
  %4876 = vmatprep.subr.mxu0 0.0
  %4877 = vmatpush2.msra.mxu0 0.0
  %4878 = vmatprep.subr.mxu0 0.0
  %4879 = vmatpush2.msra.mxu0 0.0
  %4880 = vmatprep.subr.mxu0 0.0
  %4881 = vmatpush2.msra.mxu0 0.0
  %4882 = vmatprep.subr.mxu0 0.0
  %4883 = vmatpush2.msra.mxu0 0.0
  %4884 = vmatprep.subr.mxu0 0.0
  %4885 = vmatpush2.msra.mxu0 0.0
  %4886 = vmatprep.subr.mxu0 0.0
  %4887 = vmatpush2.msra.mxu0 0.0
  %4888 = vmatprep.mubr.f32.mxu0 0.0
  %4889 = vmatmul.mubr.f32.gmra.mxu0 %v4819
  %v4890 = vpop.f32.mrf.mxu0
  %v4891 = vadd.f32 %v4816, %v4890
  %v4892 = vpop.f32.mrf.mxu0
  %4893 = vmatprep.mubr.f32.mxu0 0.0
  %4894 = vmatmul.mubr.f32.gmra.mxu0 %v4822
  %v4895 = vpop.f32.mrf.mxu0
  %v4896 = vadd.f32 %v4816, %v4895
  %v4897 = vpop.f32.mrf.mxu0
  %4898 = vdwg.mxu0
  %v4899 = vmul.f32 %v4797, %v4891
  %v4900 = vmul.f32 %v4804, %v4896
  %v4901 = vld [vmem:[%s29] sm:$0xff]
  %v4902 = vld [vmem:[%s29 + $0x8] sm:$0xff]
  %v4903 = vld [vmem:[%s29 + $0x10] sm:$0xff]
  %v4904 = vld [vmem:[%s29 + $0x18] sm:$0xff]
  %v4905 = vld [vmem:[%s29 + $0x20] sm:$0xff]
  %v4906 = vld [vmem:[%s29 + $0x28] sm:$0xff]
  %v4908 = vsel %vm518, %v4899, 0
  %v4911 = vsel %vm518, %v4900, 0
  %4913 = vmatprep.subr.mxu0 0.0
  %4914 = vmatpush1.msra.mxu0 0.0
  %4915 = vmatprep.subr.mxu0 0.0
  %4916 = vmatpush1.msra.mxu0 0.0
  %4917 = vmatprep.subr.mxu0 0.0
  %4918 = vmatpush1.msra.mxu0 0.0
  %4919 = vmatprep.subr.mxu0 0.0
  %4920 = vmatpush1.msra.mxu0 0.0
  %4921 = vmatprep.subr.mxu0 0.0
  %4922 = vmatpush1.msra.mxu0 0.0
  %4923 = vmatprep.subr.mxu0 0.0
  %4924 = vmatpush1.msra.mxu0 0.0
  %4925 = vmatprep.subr.mxu0 0.0
  %4926 = vmatpush1.msra.mxu0 0.0
  %4927 = vmatprep.subr.mxu0 0.0
  %4928 = vmatpush1.msra.mxu0 0.0
  %4929 = vmatprep.subr.mxu0 0.0
  %4930 = vmatpush1.msra.mxu0 0.0
  %4931 = vmatprep.subr.mxu0 0.0
  %4932 = vmatpush1.msra.mxu0 0.0
  %4933 = vmatprep.subr.mxu0 0.0
  %4934 = vmatpush1.msra.mxu0 %v4906
  %4935 = vmatprep.subr.mxu0 0.0
  %4936 = vmatpush1.msra.mxu0 %v4905
  %4937 = vmatprep.subr.mxu0 0.0
  %4938 = vmatpush1.msra.mxu0 %v4904
  %4939 = vmatprep.subr.mxu0 0.0
  %4940 = vmatpush1.msra.mxu0 %v4903
  %4941 = vmatprep.subr.mxu0 0.0
  %4942 = vmatpush1.msra.mxu0 %v4902
  %4943 = vmatprep.subr.mxu0 0.0
  %4944 = vmatpush1.msra.mxu0 %v4901
  %4945 = vmatprep.subr.mxu0 0.0
  %4946 = vmatpush2.msra.mxu0 0.0
  %4947 = vmatprep.subr.mxu0 0.0
  %4948 = vmatpush2.msra.mxu0 0.0
  %4949 = vmatprep.subr.mxu0 0.0
  %4950 = vmatpush2.msra.mxu0 0.0
  %4951 = vmatprep.subr.mxu0 0.0
  %4952 = vmatpush2.msra.mxu0 0.0
  %4953 = vmatprep.subr.mxu0 0.0
  %4954 = vmatpush2.msra.mxu0 0.0
  %4955 = vmatprep.subr.mxu0 0.0
  %4956 = vmatpush2.msra.mxu0 0.0
  %4957 = vmatprep.subr.mxu0 0.0
  %4958 = vmatpush2.msra.mxu0 0.0
  %4959 = vmatprep.subr.mxu0 0.0
  %4960 = vmatpush2.msra.mxu0 0.0
  %4961 = vmatprep.subr.mxu0 0.0
  %4962 = vmatpush2.msra.mxu0 0.0
  %4963 = vmatprep.subr.mxu0 0.0
  %4964 = vmatpush2.msra.mxu0 0.0
  %4965 = vmatprep.subr.mxu0 0.0
  %4966 = vmatpush2.msra.mxu0 0.0
  %4967 = vmatprep.subr.mxu0 0.0
  %4968 = vmatpush2.msra.mxu0 0.0
  %4969 = vmatprep.subr.mxu0 0.0
  %4970 = vmatpush2.msra.mxu0 0.0
  %4971 = vmatprep.subr.mxu0 0.0
  %4972 = vmatpush2.msra.mxu0 0.0
  %4973 = vmatprep.subr.mxu0 0.0
  %4974 = vmatpush2.msra.mxu0 0.0
  %4975 = vmatprep.subr.mxu0 0.0
  %4976 = vmatpush2.msra.mxu0 0.0
  %4977 = vmatprep.mubr.f32.mxu0 0.0
  %4978 = vmatmul.mubr.f32.gmra.mxu0 %v4908
  %v4979 = vpop.f32.mrf.mxu0
  %v4980 = vadd.f32 0.0, %v4979
  %v4981 = vpop.f32.mrf.mxu0
  %4982 = vmatprep.mubr.f32.mxu0 0.0
  %4983 = vmatmul.mubr.f32.gmra.mxu0 %v4911
  %v4984 = vpop.f32.mrf.mxu0
  %v4985 = vadd.f32 0.0, %v4984
  %v4986 = vpop.f32.mrf.mxu0
  %4987 = vdwg.mxu0
  %v4988 = vtanh.pop %v4980
  %v4989 = vtanh.pop %v4985
  %vm4990 = vcmask 23552
  %v4991 = vsel %vm4990, %v4988, -inf
  %4992 = vmax.xlane.f32.xlu0 %v4991
  %v4993 = vpop.xlane.xlu0 %4992
  %v4994 = vsel %vm4990, %v4989, -inf
  %4995 = vmax.xlane.f32.xlu0 %v4994
  %v4996 = vpop.xlane.xlu0 %4995
  %v4997 = vsub.f32 %v4988, %v4993
  %v4998 = vsub.f32 %v4989, %v4996
  %v4999 = vmul.f32 %v4997, 1.442695
  %v5000 = vpow.pop %v4999
  %v5001 = vmul.f32 %v4998, 1.442695
  %v5002 = vpow.pop %v5001
  %v5003 = vsel %vm4990, %v5000, 0.0
  %5004 = vadd.xlane.f32.xlu0 %v5003
  %v5005 = vpop.xlane.xlu0 %5004
  %v5006 = vsel %vm4990, %v5002, 0.0
  %5007 = vadd.xlane.f32.xlu0 %v5006
  %v5008 = vpop.xlane.xlu0 %5007
  %v5009 = vrcp.pop %v5005
  %v5010 = vrcp.pop %v5008
  %v5011 = vmul.f32 %v5000, %v5009
  %v5012 = vmul.f32 %v5002, %v5010
  %v5013 = vld [vmem:[%s31] sm:$0x7]
  %v5015 = vsel %vm4990, %v5011, 0
  %v5018 = vsel %vm4990, %v5012, 0
  %v5021 = vsel %vm4788, %v5013, 0
  %5023 = vmatprep.subr.mxu0 0.0
  %5024 = vmatpush1.msra.mxu0 0.0
  %5025 = vmatprep.subr.mxu0 0.0
  %5026 = vmatpush1.msra.mxu0 0.0
  %5027 = vmatprep.subr.mxu0 0.0
  %5028 = vmatpush1.msra.mxu0 0.0
  %5029 = vmatprep.subr.mxu0 0.0
  %5030 = vmatpush1.msra.mxu0 0.0
  %5031 = vmatprep.subr.mxu0 0.0
  %5032 = vmatpush1.msra.mxu0 0.0
  %5033 = vmatprep.subr.mxu0 0.0
  %5034 = vmatpush1.msra.mxu0 0.0
  %5035 = vmatprep.subr.mxu0 0.0
  %5036 = vmatpush1.msra.mxu0 0.0
  %5037 = vmatprep.subr.mxu0 0.0
  %5038 = vmatpush1.msra.mxu0 0.0
  %5039 = vmatprep.subr.mxu0 0.0
  %5040 = vmatpush1.msra.mxu0 0.0
  %5041 = vmatprep.subr.mxu0 0.0
  %5042 = vmatpush1.msra.mxu0 0.0
  %5043 = vmatprep.subr.mxu0 0.0
  %5044 = vmatpush1.msra.mxu0 0.0
  %5045 = vmatprep.subr.mxu0 0.0
  %5046 = vmatpush1.msra.mxu0 0.0
  %5047 = vmatprep.subr.mxu0 0.0
  %5048 = vmatpush1.msra.mxu0 0.0
  %5049 = vmatprep.subr.mxu0 0.0
  %5050 = vmatpush1.msra.mxu0 0.0
  %5051 = vmatprep.subr.mxu0 0.0
  %5052 = vmatpush1.msra.mxu0 0.0
  %5053 = vmatprep.subr.mxu0 0.0
  %5054 = vmatpush1.msra.mxu0 %v5021
  %5055 = vmatprep.subr.mxu0 0.0
  %5056 = vmatpush2.msra.mxu0 0.0
  %5057 = vmatprep.subr.mxu0 0.0
  %5058 = vmatpush2.msra.mxu0 0.0
  %5059 = vmatprep.subr.mxu0 0.0
  %5060 = vmatpush2.msra.mxu0 0.0
  %5061 = vmatprep.subr.mxu0 0.0
  %5062 = vmatpush2.msra.mxu0 0.0
  %5063 = vmatprep.subr.mxu0 0.0
  %5064 = vmatpush2.msra.mxu0 0.0
  %5065 = vmatprep.subr.mxu0 0.0
  %5066 = vmatpush2.msra.mxu0 0.0
  %5067 = vmatprep.subr.mxu0 0.0
  %5068 = vmatpush2.msra.mxu0 0.0
  %5069 = vmatprep.subr.mxu0 0.0
  %5070 = vmatpush2.msra.mxu0 0.0
  %5071 = vmatprep.subr.mxu0 0.0
  %5072 = vmatpush2.msra.mxu0 0.0
  %5073 = vmatprep.subr.mxu0 0.0
  %5074 = vmatpush2.msra.mxu0 0.0
  %5075 = vmatprep.subr.mxu0 0.0
  %5076 = vmatpush2.msra.mxu0 0.0
  %5077 = vmatprep.subr.mxu0 0.0
  %5078 = vmatpush2.msra.mxu0 0.0
  %5079 = vmatprep.subr.mxu0 0.0
  %5080 = vmatpush2.msra.mxu0 0.0
  %5081 = vmatprep.subr.mxu0 0.0
  %5082 = vmatpush2.msra.mxu0 0.0
  %5083 = vmatprep.subr.mxu0 0.0
  %5084 = vmatpush2.msra.mxu0 0.0
  %5085 = vmatprep.subr.mxu0 0.0
  %5086 = vmatpush2.msra.mxu0 0.0
  %5087 = vmatprep.mubr.f32.mxu0 0.0
  %5088 = vmatmul.mubr.f32.gmra.mxu0 %v5015
  %v5089 = vpop.f32.mrf.mxu0
  %v5090 = vadd.f32 0.0, %v5089
  %v5091 = vpop.f32.mrf.mxu0
  %5092 = vmatprep.mubr.f32.mxu0 0.0
  %5093 = vmatmul.mubr.f32.gmra.mxu0 %v5018
  %v5094 = vpop.f32.mrf.mxu0
  %v5095 = vadd.f32 0.0, %v5094
  %v5096 = vpop.f32.mrf.mxu0
  %5097 = vdwg.mxu0
  %v5098 = vmul.f32 %v5090, %v4797
  %v5099 = vmul.f32 %v5095, %v4804
  %v5100 = vld [vmem:[%s33] sm:$0xff]
  %v5101 = vld [vmem:[%s33 + $0x8] sm:$0xff]
  %v5102 = vld [vmem:[%s33 + $0x10] sm:$0xff]
  %v5103 = vld [vmem:[%s33 + $0x18] sm:$0xff]
  %v5104 = vld [vmem:[%s33 + $0x20] sm:$0xff]
  %v5105 = vld [vmem:[%s33 + $0x28] sm:$0xff]
  %v5107 = vsel %vm518, %v5098, 0
  %v5110 = vsel %vm518, %v5099, 0
  %5112 = vmatprep.subr.mxu0 0.0
  %5113 = vmatpush1.msra.mxu0 0.0
  %5114 = vmatprep.subr.mxu0 0.0
  %5115 = vmatpush1.msra.mxu0 0.0
  %5116 = vmatprep.subr.mxu0 0.0
  %5117 = vmatpush1.msra.mxu0 0.0
  %5118 = vmatprep.subr.mxu0 0.0
  %5119 = vmatpush1.msra.mxu0 0.0
  %5120 = vmatprep.subr.mxu0 0.0
  %5121 = vmatpush1.msra.mxu0 0.0
  %5122 = vmatprep.subr.mxu0 0.0
  %5123 = vmatpush1.msra.mxu0 0.0
  %5124 = vmatprep.subr.mxu0 0.0
  %5125 = vmatpush1.msra.mxu0 0.0
  %5126 = vmatprep.subr.mxu0 0.0
  %5127 = vmatpush1.msra.mxu0 0.0
  %5128 = vmatprep.subr.mxu0 0.0
  %5129 = vmatpush1.msra.mxu0 0.0
  %5130 = vmatprep.subr.mxu0 0.0
  %5131 = vmatpush1.msra.mxu0 0.0
  %5132 = vmatprep.subr.mxu0 0.0
  %5133 = vmatpush1.msra.mxu0 %v5105
  %5134 = vmatprep.subr.mxu0 0.0
  %5135 = vmatpush1.msra.mxu0 %v5104
  %5136 = vmatprep.subr.mxu0 0.0
  %5137 = vmatpush1.msra.mxu0 %v5103
  %5138 = vmatprep.subr.mxu0 0.0
  %5139 = vmatpush1.msra.mxu0 %v5102
  %5140 = vmatprep.subr.mxu0 0.0
  %5141 = vmatpush1.msra.mxu0 %v5101
  %5142 = vmatprep.subr.mxu0 0.0
  %5143 = vmatpush1.msra.mxu0 %v5100
  %5144 = vmatprep.subr.mxu0 0.0
  %5145 = vmatpush2.msra.mxu0 0.0
  %5146 = vmatprep.subr.mxu0 0.0
  %5147 = vmatpush2.msra.mxu0 0.0
  %5148 = vmatprep.subr.mxu0 0.0
  %5149 = vmatpush2.msra.mxu0 0.0
  %5150 = vmatprep.subr.mxu0 0.0
  %5151 = vmatpush2.msra.mxu0 0.0
  %5152 = vmatprep.subr.mxu0 0.0
  %5153 = vmatpush2.msra.mxu0 0.0
  %5154 = vmatprep.subr.mxu0 0.0
  %5155 = vmatpush2.msra.mxu0 0.0
  %5156 = vmatprep.subr.mxu0 0.0
  %5157 = vmatpush2.msra.mxu0 0.0
  %5158 = vmatprep.subr.mxu0 0.0
  %5159 = vmatpush2.msra.mxu0 0.0
  %5160 = vmatprep.subr.mxu0 0.0
  %5161 = vmatpush2.msra.mxu0 0.0
  %5162 = vmatprep.subr.mxu0 0.0
  %5163 = vmatpush2.msra.mxu0 0.0
  %5164 = vmatprep.subr.mxu0 0.0
  %5165 = vmatpush2.msra.mxu0 0.0
  %5166 = vmatprep.subr.mxu0 0.0
  %5167 = vmatpush2.msra.mxu0 0.0
  %5168 = vmatprep.subr.mxu0 0.0
  %5169 = vmatpush2.msra.mxu0 0.0
  %5170 = vmatprep.subr.mxu0 0.0
  %5171 = vmatpush2.msra.mxu0 0.0
  %5172 = vmatprep.subr.mxu0 0.0
  %5173 = vmatpush2.msra.mxu0 0.0
  %5174 = vmatprep.subr.mxu0 0.0
  %5175 = vmatpush2.msra.mxu0 0.0
  %5176 = vmatprep.mubr.f32.mxu0 0.0
  %5177 = vmatmul.mubr.f32.gmra.mxu0 %v5107
  %v5178 = vpop.f32.mrf.mxu0
  %v5179 = vadd.f32 0.0, %v5178
  %v5180 = vpop.f32.mrf.mxu0
  %5181 = vmatprep.mubr.f32.mxu0 0.0
  %5182 = vmatmul.mubr.f32.gmra.mxu0 %v5110
  %v5183 = vpop.f32.mrf.mxu0
  %v5184 = vadd.f32 0.0, %v5183
  %v5185 = vpop.f32.mrf.mxu0
  %5186 = vdwg.mxu0
  %v5187 = vadd.f32 %v4797, %v5179
  %v5188 = vadd.f32 %v4804, %v5184
  %v5189 = vld [vmem:[%s35] sm:$0xff]
  %v5190 = vld [vmem:[%s35 + $0x8] sm:$0xff]
  %v5191 = vld [vmem:[%s35 + $0x10] sm:$0xff]
  %v5192 = vld [vmem:[%s35 + $0x18] sm:$0xff]
  %v5193 = vld [vmem:[%s35 + $0x20] sm:$0xff]
  %v5194 = vld [vmem:[%s35 + $0x28] sm:$0xff]
  %v5196 = vsel %vm518, %v5187, 0
  %v5199 = vsel %vm518, %v5188, 0
  %5201 = vmatprep.subr.mxu0 0.0
  %5202 = vmatpush1.msra.mxu0 0.0
  %5203 = vmatprep.subr.mxu0 0.0
  %5204 = vmatpush1.msra.mxu0 0.0
  %5205 = vmatprep.subr.mxu0 0.0
  %5206 = vmatpush1.msra.mxu0 0.0
  %5207 = vmatprep.subr.mxu0 0.0
  %5208 = vmatpush1.msra.mxu0 0.0
  %5209 = vmatprep.subr.mxu0 0.0
  %5210 = vmatpush1.msra.mxu0 0.0
  %5211 = vmatprep.subr.mxu0 0.0
  %5212 = vmatpush1.msra.mxu0 0.0
  %5213 = vmatprep.subr.mxu0 0.0
  %5214 = vmatpush1.msra.mxu0 0.0
  %5215 = vmatprep.subr.mxu0 0.0
  %5216 = vmatpush1.msra.mxu0 0.0
  %5217 = vmatprep.subr.mxu0 0.0
  %5218 = vmatpush1.msra.mxu0 0.0
  %5219 = vmatprep.subr.mxu0 0.0
  %5220 = vmatpush1.msra.mxu0 0.0
  %5221 = vmatprep.subr.mxu0 0.0
  %5222 = vmatpush1.msra.mxu0 %v5194
  %5223 = vmatprep.subr.mxu0 0.0
  %5224 = vmatpush1.msra.mxu0 %v5193
  %5225 = vmatprep.subr.mxu0 0.0
  %5226 = vmatpush1.msra.mxu0 %v5192
  %5227 = vmatprep.subr.mxu0 0.0
  %5228 = vmatpush1.msra.mxu0 %v5191
  %5229 = vmatprep.subr.mxu0 0.0
  %5230 = vmatpush1.msra.mxu0 %v5190
  %5231 = vmatprep.subr.mxu0 0.0
  %5232 = vmatpush1.msra.mxu0 %v5189
  %5233 = vmatprep.subr.mxu0 0.0
  %5234 = vmatpush2.msra.mxu0 0.0
  %5235 = vmatprep.subr.mxu0 0.0
  %5236 = vmatpush2.msra.mxu0 0.0
  %5237 = vmatprep.subr.mxu0 0.0
  %5238 = vmatpush2.msra.mxu0 0.0
  %5239 = vmatprep.subr.mxu0 0.0
  %5240 = vmatpush2.msra.mxu0 0.0
  %5241 = vmatprep.subr.mxu0 0.0
  %5242 = vmatpush2.msra.mxu0 0.0
  %5243 = vmatprep.subr.mxu0 0.0
  %5244 = vmatpush2.msra.mxu0 0.0
  %5245 = vmatprep.subr.mxu0 0.0
  %5246 = vmatpush2.msra.mxu0 0.0
  %5247 = vmatprep.subr.mxu0 0.0
  %5248 = vmatpush2.msra.mxu0 0.0
  %5249 = vmatprep.subr.mxu0 0.0
  %5250 = vmatpush2.msra.mxu0 0.0
  %5251 = vmatprep.subr.mxu0 0.0
  %5252 = vmatpush2.msra.mxu0 0.0
  %5253 = vmatprep.subr.mxu0 0.0
  %5254 = vmatpush2.msra.mxu0 0.0
  %5255 = vmatprep.subr.mxu0 0.0
  %5256 = vmatpush2.msra.mxu0 0.0
  %5257 = vmatprep.subr.mxu0 0.0
  %5258 = vmatpush2.msra.mxu0 0.0
  %5259 = vmatprep.subr.mxu0 0.0
  %5260 = vmatpush2.msra.mxu0 0.0
  %5261 = vmatprep.subr.mxu0 0.0
  %5262 = vmatpush2.msra.mxu0 0.0
  %5263 = vmatprep.subr.mxu0 0.0
  %5264 = vmatpush2.msra.mxu0 0.0
  %5265 = vmatprep.mubr.f32.mxu0 0.0
  %5266 = vmatmul.mubr.f32.gmra.mxu0 %v5196
  %v5267 = vpop.f32.mrf.mxu0
  %v5268 = vadd.f32 0.0, %v5267
  %v5269 = vpop.f32.mrf.mxu0
  %5270 = vmatprep.mubr.f32.mxu0 0.0
  %5271 = vmatmul.mubr.f32.gmra.mxu0 %v5199
  %v5272 = vpop.f32.mrf.mxu0
  %v5273 = vadd.f32 0.0, %v5272
  %v5274 = vpop.f32.mrf.mxu0
  %5275 = vdwg.mxu0
  %v5276 = vld [vmem:[%s1] sm:$0xff]
  %v5277 = vld [vmem:[%s1 + $0x8] sm:$0xff]
  %v5278 = vld [vmem:[%s43] sm:$0x1]
  %v5280 = vlaneseq
  %v5281 = vshrl.u32 %v5280, 7
  %v5282 = vsub.s32 0, %v5281
  %v5283 = vrot.slane %v5278, %v5282
  %v5285 = vmul.f32 %v5268, %v5283
  %v5286 = vmul.f32 %v5273, %v5283
  %v5287 = vld [vmem:[%s237] sm:$0xff]
  %v5288 = vld [vmem:[%s237 + $0x8] sm:$0xff]
  %s5289 = scalar_lea.vmem %s43, 1
  %v5290 = vld [vmem:[%s5289] sm:$0x1]
  %v5292 = vlaneseq
  %v5293 = vshrl.u32 %v5292, 7
  %v5294 = vsub.s32 0, %v5293
  %v5295 = vrot.slane %v5290, %v5294
  %v5297 = vmul.f32 %v5268, %v5295
  %v5298 = vmul.f32 %v5273, %v5295
  %v5300 = vsel %vm250, %v5287, 0
  %v5303 = vsel %vm250, %v5288, 0
  %5305 = vmatprep.subr.mxu0 0.0
  %5306 = vmatpush1.msra.mxu0 0.0
  %5307 = vmatprep.subr.mxu0 0.0
  %5308 = vmatpush1.msra.mxu0 0.0
  %5309 = vmatprep.subr.mxu0 0.0
  %5310 = vmatpush1.msra.mxu0 0.0
  %5311 = vmatprep.subr.mxu0 0.0
  %5312 = vmatpush1.msra.mxu0 0.0
  %5313 = vmatprep.subr.mxu0 0.0
  %5314 = vmatpush1.msra.mxu0 0.0
  %5315 = vmatprep.subr.mxu0 0.0
  %5316 = vmatpush1.msra.mxu0 0.0
  %5317 = vmatprep.subr.mxu0 0.0
  %5318 = vmatpush1.msra.mxu0 0.0
  %5319 = vmatprep.subr.mxu0 0.0
  %5320 = vmatpush1.msra.mxu0 0.0
  %5321 = vmatprep.subr.mxu0 0.0
  %5322 = vmatpush1.msra.mxu0 0.0
  %5323 = vmatprep.subr.mxu0 0.0
  %5324 = vmatpush1.msra.mxu0 0.0
  %5325 = vmatprep.subr.mxu0 0.0
  %5326 = vmatpush1.msra.mxu0 0.0
  %5327 = vmatprep.subr.mxu0 0.0
  %5328 = vmatpush1.msra.mxu0 0.0
  %5329 = vmatprep.subr.mxu0 0.0
  %5330 = vmatpush1.msra.mxu0 0.0
  %5331 = vmatprep.subr.mxu0 0.0
  %5332 = vmatpush1.msra.mxu0 0.0
  %5333 = vmatprep.subr.mxu0 0.0
  %5334 = vmatpush1.msra.mxu0 %v5298
  %5335 = vmatprep.subr.mxu0 0.0
  %5336 = vmatpush1.msra.mxu0 %v5297
  %5337 = vmatprep.subr.mxu0 0.0
  %5338 = vmatpush2.msra.mxu0 0.0
  %5339 = vmatprep.subr.mxu0 0.0
  %5340 = vmatpush2.msra.mxu0 0.0
  %5341 = vmatprep.subr.mxu0 0.0
  %5342 = vmatpush2.msra.mxu0 0.0
  %5343 = vmatprep.subr.mxu0 0.0
  %5344 = vmatpush2.msra.mxu0 0.0
  %5345 = vmatprep.subr.mxu0 0.0
  %5346 = vmatpush2.msra.mxu0 0.0
  %5347 = vmatprep.subr.mxu0 0.0
  %5348 = vmatpush2.msra.mxu0 0.0
  %5349 = vmatprep.subr.mxu0 0.0
  %5350 = vmatpush2.msra.mxu0 0.0
  %5351 = vmatprep.subr.mxu0 0.0
  %5352 = vmatpush2.msra.mxu0 0.0
  %5353 = vmatprep.subr.mxu0 0.0
  %5354 = vmatpush2.msra.mxu0 0.0
  %5355 = vmatprep.subr.mxu0 0.0
  %5356 = vmatpush2.msra.mxu0 0.0
  %5357 = vmatprep.subr.mxu0 0.0
  %5358 = vmatpush2.msra.mxu0 0.0
  %5359 = vmatprep.subr.mxu0 0.0
  %5360 = vmatpush2.msra.mxu0 0.0
  %5361 = vmatprep.subr.mxu0 0.0
  %5362 = vmatpush2.msra.mxu0 0.0
  %5363 = vmatprep.subr.mxu0 0.0
  %5364 = vmatpush2.msra.mxu0 0.0
  %5365 = vmatprep.subr.mxu0 0.0
  %5366 = vmatpush2.msra.mxu0 0.0
  %5367 = vmatprep.subr.mxu0 0.0
  %5368 = vmatpush2.msra.mxu0 0.0
  %5369 = vmatprep.mubr.f32.mxu0 0.0
  %5370 = vmatmul.mubr.f32.gmra.mxu0 %v5300
  %v5371 = vpop.f32.mrf.mxu0
  %v5372 = vadd.f32 0.0, %v5371
  %v5373 = vpop.f32.mrf.mxu0
  %5374 = vmatprep.mubr.f32.mxu0 0.0
  %5375 = vmatmul.mubr.f32.gmra.mxu0 %v5303
  %v5376 = vpop.f32.mrf.mxu0
  %v5377 = vadd.f32 0.0, %v5376
  %v5378 = vpop.f32.mrf.mxu0
  %5379 = vdwg.mxu0
  %v5381 = vsel %vm250, %v5276, 0
  %v5384 = vsel %vm250, %v5277, 0
  %5386 = vmatprep.subr.mxu0 0.0
  %5387 = vmatpush1.msra.mxu0 0.0
  %5388 = vmatprep.subr.mxu0 0.0
  %5389 = vmatpush1.msra.mxu0 0.0
  %5390 = vmatprep.subr.mxu0 0.0
  %5391 = vmatpush1.msra.mxu0 0.0
  %5392 = vmatprep.subr.mxu0 0.0
  %5393 = vmatpush1.msra.mxu0 0.0
  %5394 = vmatprep.subr.mxu0 0.0
  %5395 = vmatpush1.msra.mxu0 0.0
  %5396 = vmatprep.subr.mxu0 0.0
  %5397 = vmatpush1.msra.mxu0 0.0
  %5398 = vmatprep.subr.mxu0 0.0
  %5399 = vmatpush1.msra.mxu0 0.0
  %5400 = vmatprep.subr.mxu0 0.0
  %5401 = vmatpush1.msra.mxu0 0.0
  %5402 = vmatprep.subr.mxu0 0.0
  %5403 = vmatpush1.msra.mxu0 0.0
  %5404 = vmatprep.subr.mxu0 0.0
  %5405 = vmatpush1.msra.mxu0 0.0
  %5406 = vmatprep.subr.mxu0 0.0
  %5407 = vmatpush1.msra.mxu0 0.0
  %5408 = vmatprep.subr.mxu0 0.0
  %5409 = vmatpush1.msra.mxu0 0.0
  %5410 = vmatprep.subr.mxu0 0.0
  %5411 = vmatpush1.msra.mxu0 0.0
  %5412 = vmatprep.subr.mxu0 0.0
  %5413 = vmatpush1.msra.mxu0 0.0
  %5414 = vmatprep.subr.mxu0 0.0
  %5415 = vmatpush1.msra.mxu0 %v5286
  %5416 = vmatprep.subr.mxu0 0.0
  %5417 = vmatpush1.msra.mxu0 %v5285
  %5418 = vmatprep.subr.mxu0 0.0
  %5419 = vmatpush2.msra.mxu0 0.0
  %5420 = vmatprep.subr.mxu0 0.0
  %5421 = vmatpush2.msra.mxu0 0.0
  %5422 = vmatprep.subr.mxu0 0.0
  %5423 = vmatpush2.msra.mxu0 0.0
  %5424 = vmatprep.subr.mxu0 0.0
  %5425 = vmatpush2.msra.mxu0 0.0
  %5426 = vmatprep.subr.mxu0 0.0
  %5427 = vmatpush2.msra.mxu0 0.0
  %5428 = vmatprep.subr.mxu0 0.0
  %5429 = vmatpush2.msra.mxu0 0.0
  %5430 = vmatprep.subr.mxu0 0.0
  %5431 = vmatpush2.msra.mxu0 0.0
  %5432 = vmatprep.subr.mxu0 0.0
  %5433 = vmatpush2.msra.mxu0 0.0
  %5434 = vmatprep.subr.mxu0 0.0
  %5435 = vmatpush2.msra.mxu0 0.0
  %5436 = vmatprep.subr.mxu0 0.0
  %5437 = vmatpush2.msra.mxu0 0.0
  %5438 = vmatprep.subr.mxu0 0.0
  %5439 = vmatpush2.msra.mxu0 0.0
  %5440 = vmatprep.subr.mxu0 0.0
  %5441 = vmatpush2.msra.mxu0 0.0
  %5442 = vmatprep.subr.mxu0 0.0
  %5443 = vmatpush2.msra.mxu0 0.0
  %5444 = vmatprep.subr.mxu0 0.0
  %5445 = vmatpush2.msra.mxu0 0.0
  %5446 = vmatprep.subr.mxu0 0.0
  %5447 = vmatpush2.msra.mxu0 0.0
  %5448 = vmatprep.subr.mxu0 0.0
  %5449 = vmatpush2.msra.mxu0 0.0
  %5450 = vmatprep.mubr.f32.mxu0 0.0
  %5451 = vmatmul.mubr.f32.gmra.mxu0 %v5381
  %v5452 = vpop.f32.mrf.mxu0
  %v5453 = vadd.f32 %v5372, %v5452
  %v5454 = vpop.f32.mrf.mxu0
  %5455 = vmatprep.mubr.f32.mxu0 0.0
  %5456 = vmatmul.mubr.f32.gmra.mxu0 %v5384
  %v5457 = vpop.f32.mrf.mxu0
  %v5458 = vadd.f32 %v5377, %v5457
  %v5459 = vpop.f32.mrf.mxu0
  %5460 = vdwg.mxu0
  %v5461 = vld [vmem:[%s413] sm:$0xff]
  %v5462 = vld [vmem:[%s413 + $0x8] sm:$0xff]
  %s5463 = scalar_lea.vmem %s43, 2
  %v5464 = vld [vmem:[%s5463] sm:$0x1]
  %v5466 = vlaneseq
  %v5467 = vshrl.u32 %v5466, 7
  %v5468 = vsub.s32 0, %v5467
  %v5469 = vrot.slane %v5464, %v5468
  %v5471 = vmul.f32 %v5268, %v5469
  %v5472 = vmul.f32 %v5273, %v5469
  %v5474 = vsel %vm250, %v5461, 0
  %v5477 = vsel %vm250, %v5462, 0
  %5479 = vmatprep.subr.mxu0 0.0
  %5480 = vmatpush1.msra.mxu0 0.0
  %5481 = vmatprep.subr.mxu0 0.0
  %5482 = vmatpush1.msra.mxu0 0.0
  %5483 = vmatprep.subr.mxu0 0.0
  %5484 = vmatpush1.msra.mxu0 0.0
  %5485 = vmatprep.subr.mxu0 0.0
  %5486 = vmatpush1.msra.mxu0 0.0
  %5487 = vmatprep.subr.mxu0 0.0
  %5488 = vmatpush1.msra.mxu0 0.0
  %5489 = vmatprep.subr.mxu0 0.0
  %5490 = vmatpush1.msra.mxu0 0.0
  %5491 = vmatprep.subr.mxu0 0.0
  %5492 = vmatpush1.msra.mxu0 0.0
  %5493 = vmatprep.subr.mxu0 0.0
  %5494 = vmatpush1.msra.mxu0 0.0
  %5495 = vmatprep.subr.mxu0 0.0
  %5496 = vmatpush1.msra.mxu0 0.0
  %5497 = vmatprep.subr.mxu0 0.0
  %5498 = vmatpush1.msra.mxu0 0.0
  %5499 = vmatprep.subr.mxu0 0.0
  %5500 = vmatpush1.msra.mxu0 0.0
  %5501 = vmatprep.subr.mxu0 0.0
  %5502 = vmatpush1.msra.mxu0 0.0
  %5503 = vmatprep.subr.mxu0 0.0
  %5504 = vmatpush1.msra.mxu0 0.0
  %5505 = vmatprep.subr.mxu0 0.0
  %5506 = vmatpush1.msra.mxu0 0.0
  %5507 = vmatprep.subr.mxu0 0.0
  %5508 = vmatpush1.msra.mxu0 %v5472
  %5509 = vmatprep.subr.mxu0 0.0
  %5510 = vmatpush1.msra.mxu0 %v5471
  %5511 = vmatprep.subr.mxu0 0.0
  %5512 = vmatpush2.msra.mxu0 0.0
  %5513 = vmatprep.subr.mxu0 0.0
  %5514 = vmatpush2.msra.mxu0 0.0
  %5515 = vmatprep.subr.mxu0 0.0
  %5516 = vmatpush2.msra.mxu0 0.0
  %5517 = vmatprep.subr.mxu0 0.0
  %5518 = vmatpush2.msra.mxu0 0.0
  %5519 = vmatprep.subr.mxu0 0.0
  %5520 = vmatpush2.msra.mxu0 0.0
  %5521 = vmatprep.subr.mxu0 0.0
  %5522 = vmatpush2.msra.mxu0 0.0
  %5523 = vmatprep.subr.mxu0 0.0
  %5524 = vmatpush2.msra.mxu0 0.0
  %5525 = vmatprep.subr.mxu0 0.0
  %5526 = vmatpush2.msra.mxu0 0.0
  %5527 = vmatprep.subr.mxu0 0.0
  %5528 = vmatpush2.msra.mxu0 0.0
  %5529 = vmatprep.subr.mxu0 0.0
  %5530 = vmatpush2.msra.mxu0 0.0
  %5531 = vmatprep.subr.mxu0 0.0
  %5532 = vmatpush2.msra.mxu0 0.0
  %5533 = vmatprep.subr.mxu0 0.0
  %5534 = vmatpush2.msra.mxu0 0.0
  %5535 = vmatprep.subr.mxu0 0.0
  %5536 = vmatpush2.msra.mxu0 0.0
  %5537 = vmatprep.subr.mxu0 0.0
  %5538 = vmatpush2.msra.mxu0 0.0
  %5539 = vmatprep.subr.mxu0 0.0
  %5540 = vmatpush2.msra.mxu0 0.0
  %5541 = vmatprep.subr.mxu0 0.0
  %5542 = vmatpush2.msra.mxu0 0.0
  %5543 = vmatprep.mubr.f32.mxu0 0.0
  %5544 = vmatmul.mubr.f32.gmra.mxu0 %v5474
  %v5545 = vpop.f32.mrf.mxu0
  %v5546 = vadd.f32 0.0, %v5545
  %v5547 = vpop.f32.mrf.mxu0
  %5548 = vmatprep.mubr.f32.mxu0 0.0
  %5549 = vmatmul.mubr.f32.gmra.mxu0 %v5477
  %v5550 = vpop.f32.mrf.mxu0
  %v5551 = vadd.f32 0.0, %v5550
  %v5552 = vpop.f32.mrf.mxu0
  %5553 = vdwg.mxu0
  %v5554 = vadd.f32 %v5453, %v5546
  %v5555 = vadd.f32 %v5458, %v5551
  %v5556 = vld [vmem:[%s37] sm:$0x1]
  %v5558 = vlaneseq
  %v5559 = vshrl.u32 %v5558, 7
  %v5560 = vsub.s32 0, %v5559
  %v5561 = vrot.slane %v5556, %v5560
  %v5563 = vadd.f32 %v5554, %v5561
  %v5564 = vadd.f32 %v5555, %v5561
  %v5565 = vsel %vm518, %v5563, 0.0
  %v5566 = vsel %vm518, %v5564, 0.0
  %v5567 = vadd.f32 %v5565, %v5566
  %v5568 = vrot.slane %v5567, 4
  %v5569 = vadd.f32 %v5567, %v5568
  %v5570 = vrot.slane %v5569, 2
  %v5571 = vadd.f32 %v5569, %v5570
  %v5572 = vrot.slane %v5571, 1
  %v5573 = vadd.f32 %v5571, %v5572
  %v5574 = vmul.f32 %v5573, %v528
  %v5575 = vmul.f32 %v5563, %v5563
  %v5576 = vmul.f32 %v5564, %v5564
  %v5577 = vsel %vm518, %v5575, 0.0
  %v5578 = vsel %vm518, %v5576, 0.0
  %v5579 = vadd.f32 %v5577, %v5578
  %v5580 = vrot.slane %v5579, 4
  %v5581 = vadd.f32 %v5579, %v5580
  %v5582 = vrot.slane %v5581, 2
  %v5583 = vadd.f32 %v5581, %v5582
  %v5584 = vrot.slane %v5583, 1
  %v5585 = vadd.f32 %v5583, %v5584
  %v5586 = vmul.f32 %v5585, %v528
  %v5587 = vmul.f32 %v5574, %v5574
  %v5588 = vsub.f32 %v5586, %v5587
  %v5589 = vsub.f32 %v5563, %v5574
  %v5590 = vsub.f32 %v5564, %v5574
  %v5591 = vadd.f32 %v5588, 1e-05
  %v5592 = vrsqrt.pop %v5591
  %v5593 = vmul.f32 %v5589, %v5592
  %v5594 = vmul.f32 %v5590, %v5592
  %v5595 = vld [vmem:[%s39] sm:$0x1]
  %v5597 = vlaneseq
  %v5598 = vshrl.u32 %v5597, 7
  %v5599 = vsub.s32 0, %v5598
  %v5600 = vrot.slane %v5595, %v5599
  %v5602 = vmul.f32 %v5593, %v5600
  %v5603 = vmul.f32 %v5594, %v5600
  %v5604 = vld [vmem:[%s41] sm:$0x1]
  %v5606 = vlaneseq
  %v5607 = vshrl.u32 %v5606, 7
  %v5608 = vsub.s32 0, %v5607
  %v5609 = vrot.slane %v5604, %v5608
  %v5611 = vadd.f32 %v5602, %v5609
  %v5612 = vadd.f32 %v5603, %v5609
  %v5613 = vmax.f32 %v5611, 0.0
  %v5614 = vmax.f32 %v5612, 0.0
  %v5615 = vld [vmem:[%s47] sm:$0xff]
  %v5616 = vld [vmem:[%s47 + $0x8] sm:$0xff]
  %v5617 = vld [vmem:[%s47 + $0x10] sm:$0xff]
  %v5618 = vld [vmem:[%s47 + $0x18] sm:$0xff]
  %v5619 = vld [vmem:[%s47 + $0x20] sm:$0xff]
  %v5620 = vld [vmem:[%s47 + $0x28] sm:$0xff]
  %v5621 = vld [vmem:[%s49] sm:$0x1]
  %v5623 = vlaneseq
  %v5624 = vshrl.u32 %v5623, 7
  %v5625 = vsub.s32 0, %v5624
  %v5626 = vrot.slane %v5621, %v5625
  %v5629 = vsel %vm518, %v5613, 0
  %v5632 = vsel %vm518, %v5614, 0
  %5634 = vmatprep.subr.mxu0 0.0
  %5635 = vmatpush1.msra.mxu0 0.0
  %5636 = vmatprep.subr.mxu0 0.0
  %5637 = vmatpush1.msra.mxu0 0.0
  %5638 = vmatprep.subr.mxu0 0.0
  %5639 = vmatpush1.msra.mxu0 0.0
  %5640 = vmatprep.subr.mxu0 0.0
  %5641 = vmatpush1.msra.mxu0 0.0
  %5642 = vmatprep.subr.mxu0 0.0
  %5643 = vmatpush1.msra.mxu0 0.0
  %5644 = vmatprep.subr.mxu0 0.0
  %5645 = vmatpush1.msra.mxu0 0.0
  %5646 = vmatprep.subr.mxu0 0.0
  %5647 = vmatpush1.msra.mxu0 0.0
  %5648 = vmatprep.subr.mxu0 0.0
  %5649 = vmatpush1.msra.mxu0 0.0
  %5650 = vmatprep.subr.mxu0 0.0
  %5651 = vmatpush1.msra.mxu0 0.0
  %5652 = vmatprep.subr.mxu0 0.0
  %5653 = vmatpush1.msra.mxu0 0.0
  %5654 = vmatprep.subr.mxu0 0.0
  %5655 = vmatpush1.msra.mxu0 %v5620
  %5656 = vmatprep.subr.mxu0 0.0
  %5657 = vmatpush1.msra.mxu0 %v5619
  %5658 = vmatprep.subr.mxu0 0.0
  %5659 = vmatpush1.msra.mxu0 %v5618
  %5660 = vmatprep.subr.mxu0 0.0
  %5661 = vmatpush1.msra.mxu0 %v5617
  %5662 = vmatprep.subr.mxu0 0.0
  %5663 = vmatpush1.msra.mxu0 %v5616
  %5664 = vmatprep.subr.mxu0 0.0
  %5665 = vmatpush1.msra.mxu0 %v5615
  %5666 = vmatprep.subr.mxu0 0.0
  %5667 = vmatpush2.msra.mxu0 0.0
  %5668 = vmatprep.subr.mxu0 0.0
  %5669 = vmatpush2.msra.mxu0 0.0
  %5670 = vmatprep.subr.mxu0 0.0
  %5671 = vmatpush2.msra.mxu0 0.0
  %5672 = vmatprep.subr.mxu0 0.0
  %5673 = vmatpush2.msra.mxu0 0.0
  %5674 = vmatprep.subr.mxu0 0.0
  %5675 = vmatpush2.msra.mxu0 0.0
  %5676 = vmatprep.subr.mxu0 0.0
  %5677 = vmatpush2.msra.mxu0 0.0
  %5678 = vmatprep.subr.mxu0 0.0
  %5679 = vmatpush2.msra.mxu0 0.0
  %5680 = vmatprep.subr.mxu0 0.0
  %5681 = vmatpush2.msra.mxu0 0.0
  %5682 = vmatprep.subr.mxu0 0.0
  %5683 = vmatpush2.msra.mxu0 0.0
  %5684 = vmatprep.subr.mxu0 0.0
  %5685 = vmatpush2.msra.mxu0 0.0
  %5686 = vmatprep.subr.mxu0 0.0
  %5687 = vmatpush2.msra.mxu0 0.0
  %5688 = vmatprep.subr.mxu0 0.0
  %5689 = vmatpush2.msra.mxu0 0.0
  %5690 = vmatprep.subr.mxu0 0.0
  %5691 = vmatpush2.msra.mxu0 0.0
  %5692 = vmatprep.subr.mxu0 0.0
  %5693 = vmatpush2.msra.mxu0 0.0
  %5694 = vmatprep.subr.mxu0 0.0
  %5695 = vmatpush2.msra.mxu0 0.0
  %5696 = vmatprep.subr.mxu0 0.0
  %5697 = vmatpush2.msra.mxu0 0.0
  %5698 = vmatprep.mubr.f32.mxu0 0.0
  %5699 = vmatmul.mubr.f32.gmra.mxu0 %v5629
  %v5700 = vpop.f32.mrf.mxu0
  %v5701 = vadd.f32 %v5626, %v5700
  %v5702 = vpop.f32.mrf.mxu0
  %5703 = vmatprep.mubr.f32.mxu0 0.0
  %5704 = vmatmul.mubr.f32.gmra.mxu0 %v5632
  %v5705 = vpop.f32.mrf.mxu0
  %v5706 = vadd.f32 %v5626, %v5705
  %v5707 = vpop.f32.mrf.mxu0
  %5708 = vdwg.mxu0
  %s5709 = scalar_lea.vmem %s47, 48
  %v5710 = vld [vmem:[%s5709] sm:$0xff]
  %v5711 = vld [vmem:[%s5709 + $0x8] sm:$0xff]
  %v5712 = vld [vmem:[%s5709 + $0x10] sm:$0xff]
  %v5713 = vld [vmem:[%s5709 + $0x18] sm:$0xff]
  %v5714 = vld [vmem:[%s5709 + $0x20] sm:$0xff]
  %v5715 = vld [vmem:[%s5709 + $0x28] sm:$0xff]
  %s5716 = scalar_lea.vmem %s49, 1
  %v5717 = vld [vmem:[%s5716] sm:$0x1]
  %v5719 = vlaneseq
  %v5720 = vshrl.u32 %v5719, 7
  %v5721 = vsub.s32 0, %v5720
  %v5722 = vrot.slane %v5717, %v5721
  %5724 = vmatprep.subr.mxu0 0.0
  %5725 = vmatpush1.msra.mxu0 0.0
  %5726 = vmatprep.subr.mxu0 0.0
  %5727 = vmatpush1.msra.mxu0 0.0
  %5728 = vmatprep.subr.mxu0 0.0
  %5729 = vmatpush1.msra.mxu0 0.0
  %5730 = vmatprep.subr.mxu0 0.0
  %5731 = vmatpush1.msra.mxu0 0.0
  %5732 = vmatprep.subr.mxu0 0.0
  %5733 = vmatpush1.msra.mxu0 0.0
  %5734 = vmatprep.subr.mxu0 0.0
  %5735 = vmatpush1.msra.mxu0 0.0
  %5736 = vmatprep.subr.mxu0 0.0
  %5737 = vmatpush1.msra.mxu0 0.0
  %5738 = vmatprep.subr.mxu0 0.0
  %5739 = vmatpush1.msra.mxu0 0.0
  %5740 = vmatprep.subr.mxu0 0.0
  %5741 = vmatpush1.msra.mxu0 0.0
  %5742 = vmatprep.subr.mxu0 0.0
  %5743 = vmatpush1.msra.mxu0 0.0
  %5744 = vmatprep.subr.mxu0 0.0
  %5745 = vmatpush1.msra.mxu0 %v5715
  %5746 = vmatprep.subr.mxu0 0.0
  %5747 = vmatpush1.msra.mxu0 %v5714
  %5748 = vmatprep.subr.mxu0 0.0
  %5749 = vmatpush1.msra.mxu0 %v5713
  %5750 = vmatprep.subr.mxu0 0.0
  %5751 = vmatpush1.msra.mxu0 %v5712
  %5752 = vmatprep.subr.mxu0 0.0
  %5753 = vmatpush1.msra.mxu0 %v5711
  %5754 = vmatprep.subr.mxu0 0.0
  %5755 = vmatpush1.msra.mxu0 %v5710
  %5756 = vmatprep.subr.mxu0 0.0
  %5757 = vmatpush2.msra.mxu0 0.0
  %5758 = vmatprep.subr.mxu0 0.0
  %5759 = vmatpush2.msra.mxu0 0.0
  %5760 = vmatprep.subr.mxu0 0.0
  %5761 = vmatpush2.msra.mxu0 0.0
  %5762 = vmatprep.subr.mxu0 0.0
  %5763 = vmatpush2.msra.mxu0 0.0
  %5764 = vmatprep.subr.mxu0 0.0
  %5765 = vmatpush2.msra.mxu0 0.0
  %5766 = vmatprep.subr.mxu0 0.0
  %5767 = vmatpush2.msra.mxu0 0.0
  %5768 = vmatprep.subr.mxu0 0.0
  %5769 = vmatpush2.msra.mxu0 0.0
  %5770 = vmatprep.subr.mxu0 0.0
  %5771 = vmatpush2.msra.mxu0 0.0
  %5772 = vmatprep.subr.mxu0 0.0
  %5773 = vmatpush2.msra.mxu0 0.0
  %5774 = vmatprep.subr.mxu0 0.0
  %5775 = vmatpush2.msra.mxu0 0.0
  %5776 = vmatprep.subr.mxu0 0.0
  %5777 = vmatpush2.msra.mxu0 0.0
  %5778 = vmatprep.subr.mxu0 0.0
  %5779 = vmatpush2.msra.mxu0 0.0
  %5780 = vmatprep.subr.mxu0 0.0
  %5781 = vmatpush2.msra.mxu0 0.0
  %5782 = vmatprep.subr.mxu0 0.0
  %5783 = vmatpush2.msra.mxu0 0.0
  %5784 = vmatprep.subr.mxu0 0.0
  %5785 = vmatpush2.msra.mxu0 0.0
  %5786 = vmatprep.subr.mxu0 0.0
  %5787 = vmatpush2.msra.mxu0 0.0
  %5788 = vmatprep.mubr.f32.mxu0 0.0
  %5789 = vmatmul.mubr.f32.gmra.mxu0 %v5629
  %v5790 = vpop.f32.mrf.mxu0
  %v5791 = vadd.f32 %v5722, %v5790
  %v5792 = vpop.f32.mrf.mxu0
  %5793 = vmatprep.mubr.f32.mxu0 0.0
  %5794 = vmatmul.mubr.f32.gmra.mxu0 %v5632
  %v5795 = vpop.f32.mrf.mxu0
  %v5796 = vadd.f32 %v5722, %v5795
  %v5797 = vpop.f32.mrf.mxu0
  %5798 = vdwg.mxu0
  %s5799 = scalar_lea.vmem %s47, 96
  %v5800 = vld [vmem:[%s5799] sm:$0xff]
  %v5801 = vld [vmem:[%s5799 + $0x8] sm:$0xff]
  %v5802 = vld [vmem:[%s5799 + $0x10] sm:$0xff]
  %v5803 = vld [vmem:[%s5799 + $0x18] sm:$0xff]
  %v5804 = vld [vmem:[%s5799 + $0x20] sm:$0xff]
  %v5805 = vld [vmem:[%s5799 + $0x28] sm:$0xff]
  %s5806 = scalar_lea.vmem %s49, 2
  %v5807 = vld [vmem:[%s5806] sm:$0x1]
  %v5809 = vlaneseq
  %v5810 = vshrl.u32 %v5809, 7
  %v5811 = vsub.s32 0, %v5810
  %v5812 = vrot.slane %v5807, %v5811
  %5814 = vmatprep.subr.mxu0 0.0
  %5815 = vmatpush1.msra.mxu0 0.0
  %5816 = vmatprep.subr.mxu0 0.0
  %5817 = vmatpush1.msra.mxu0 0.0
  %5818 = vmatprep.subr.mxu0 0.0
  %5819 = vmatpush1.msra.mxu0 0.0
  %5820 = vmatprep.subr.mxu0 0.0
  %5821 = vmatpush1.msra.mxu0 0.0
  %5822 = vmatprep.subr.mxu0 0.0
  %5823 = vmatpush1.msra.mxu0 0.0
  %5824 = vmatprep.subr.mxu0 0.0
  %5825 = vmatpush1.msra.mxu0 0.0
  %5826 = vmatprep.subr.mxu0 0.0
  %5827 = vmatpush1.msra.mxu0 0.0
  %5828 = vmatprep.subr.mxu0 0.0
  %5829 = vmatpush1.msra.mxu0 0.0
  %5830 = vmatprep.subr.mxu0 0.0
  %5831 = vmatpush1.msra.mxu0 0.0
  %5832 = vmatprep.subr.mxu0 0.0
  %5833 = vmatpush1.msra.mxu0 0.0
  %5834 = vmatprep.subr.mxu0 0.0
  %5835 = vmatpush1.msra.mxu0 %v5805
  %5836 = vmatprep.subr.mxu0 0.0
  %5837 = vmatpush1.msra.mxu0 %v5804
  %5838 = vmatprep.subr.mxu0 0.0
  %5839 = vmatpush1.msra.mxu0 %v5803
  %5840 = vmatprep.subr.mxu0 0.0
  %5841 = vmatpush1.msra.mxu0 %v5802
  %5842 = vmatprep.subr.mxu0 0.0
  %5843 = vmatpush1.msra.mxu0 %v5801
  %5844 = vmatprep.subr.mxu0 0.0
  %5845 = vmatpush1.msra.mxu0 %v5800
  %5846 = vmatprep.subr.mxu0 0.0
  %5847 = vmatpush2.msra.mxu0 0.0
  %5848 = vmatprep.subr.mxu0 0.0
  %5849 = vmatpush2.msra.mxu0 0.0
  %5850 = vmatprep.subr.mxu0 0.0
  %5851 = vmatpush2.msra.mxu0 0.0
  %5852 = vmatprep.subr.mxu0 0.0
  %5853 = vmatpush2.msra.mxu0 0.0
  %5854 = vmatprep.subr.mxu0 0.0
  %5855 = vmatpush2.msra.mxu0 0.0
  %5856 = vmatprep.subr.mxu0 0.0
  %5857 = vmatpush2.msra.mxu0 0.0
  %5858 = vmatprep.subr.mxu0 0.0
  %5859 = vmatpush2.msra.mxu0 0.0
  %5860 = vmatprep.subr.mxu0 0.0
  %5861 = vmatpush2.msra.mxu0 0.0
  %5862 = vmatprep.subr.mxu0 0.0
  %5863 = vmatpush2.msra.mxu0 0.0
  %5864 = vmatprep.subr.mxu0 0.0
  %5865 = vmatpush2.msra.mxu0 0.0
  %5866 = vmatprep.subr.mxu0 0.0
  %5867 = vmatpush2.msra.mxu0 0.0
  %5868 = vmatprep.subr.mxu0 0.0
  %5869 = vmatpush2.msra.mxu0 0.0
  %5870 = vmatprep.subr.mxu0 0.0
  %5871 = vmatpush2.msra.mxu0 0.0
  %5872 = vmatprep.subr.mxu0 0.0
  %5873 = vmatpush2.msra.mxu0 0.0
  %5874 = vmatprep.subr.mxu0 0.0
  %5875 = vmatpush2.msra.mxu0 0.0
  %5876 = vmatprep.subr.mxu0 0.0
  %5877 = vmatpush2.msra.mxu0 0.0
  %5878 = vmatprep.mubr.f32.mxu0 0.0
  %5879 = vmatmul.mubr.f32.gmra.mxu0 %v5629
  %v5880 = vpop.f32.mrf.mxu0
  %v5881 = vadd.f32 %v5812, %v5880
  %v5882 = vpop.f32.mrf.mxu0
  %5883 = vmatprep.mubr.f32.mxu0 0.0
  %5884 = vmatmul.mubr.f32.gmra.mxu0 %v5632
  %v5885 = vpop.f32.mrf.mxu0
  %v5886 = vadd.f32 %v5812, %v5885
  %v5887 = vpop.f32.mrf.mxu0
  %5888 = vdwg.mxu0
  %v5889 = vld [vmem:[%s51] sm:$0xff]
  %v5890 = vld [vmem:[%s51 + $0x8] sm:$0xff]
  %v5891 = vld [vmem:[%s51 + $0x10] sm:$0xff]
  %v5892 = vld [vmem:[%s51 + $0x18] sm:$0xff]
  %v5893 = vld [vmem:[%s51 + $0x20] sm:$0xff]
  %v5894 = vld [vmem:[%s51 + $0x28] sm:$0xff]
  %s5895 = scalar_lea.vmem %s51, 48
  %v5896 = vld [vmem:[%s5895] sm:$0xff]
  %v5897 = vld [vmem:[%s5895 + $0x8] sm:$0xff]
  %v5898 = vld [vmem:[%s5895 + $0x10] sm:$0xff]
  %v5899 = vld [vmem:[%s5895 + $0x18] sm:$0xff]
  %v5900 = vld [vmem:[%s5895 + $0x20] sm:$0xff]
  %v5901 = vld [vmem:[%s5895 + $0x28] sm:$0xff]
  %s5902 = scalar_lea.vmem %s51, 96
  %v5903 = vld [vmem:[%s5902] sm:$0xff]
  %v5904 = vld [vmem:[%s5902 + $0x8] sm:$0xff]
  %v5905 = vld [vmem:[%s5902 + $0x10] sm:$0xff]
  %v5906 = vld [vmem:[%s5902 + $0x18] sm:$0xff]
  %v5907 = vld [vmem:[%s5902 + $0x20] sm:$0xff]
  %v5908 = vld [vmem:[%s5902 + $0x28] sm:$0xff]
  %v5909 = vld [vmem:[%s53] sm:$0x1]
  %s5910 = scalar_lea.vmem %s53, 1
  %v5911 = vld [vmem:[%s5910] sm:$0x1]
  %s5912 = scalar_lea.vmem %s53, 2
  %v5913 = vld [vmem:[%s5912] sm:$0x1]
  %v5914 = vld [vmem:[%s45] sm:$0x1]
  %v5916 = vsel %vm518, %v5914, 0
  %5918 = vmatprep.subr.mxu0 0.0
  %5919 = vmatpush1.msra.mxu0 0.0
  %5920 = vmatprep.subr.mxu0 0.0
  %5921 = vmatpush1.msra.mxu0 0.0
  %5922 = vmatprep.subr.mxu0 0.0
  %5923 = vmatpush1.msra.mxu0 0.0
  %5924 = vmatprep.subr.mxu0 0.0
  %5925 = vmatpush1.msra.mxu0 0.0
  %5926 = vmatprep.subr.mxu0 0.0
  %5927 = vmatpush1.msra.mxu0 0.0
  %5928 = vmatprep.subr.mxu0 0.0
  %5929 = vmatpush1.msra.mxu0 0.0
  %5930 = vmatprep.subr.mxu0 0.0
  %5931 = vmatpush1.msra.mxu0 0.0
  %5932 = vmatprep.subr.mxu0 0.0
  %5933 = vmatpush1.msra.mxu0 0.0
  %5934 = vmatprep.subr.mxu0 0.0
  %5935 = vmatpush1.msra.mxu0 0.0
  %5936 = vmatprep.subr.mxu0 0.0
  %5937 = vmatpush1.msra.mxu0 0.0
  %5938 = vmatprep.subr.mxu0 0.0
  %5939 = vmatpush1.msra.mxu0 %v5894
  %5940 = vmatprep.subr.mxu0 0.0
  %5941 = vmatpush1.msra.mxu0 %v5893
  %5942 = vmatprep.subr.mxu0 0.0
  %5943 = vmatpush1.msra.mxu0 %v5892
  %5944 = vmatprep.subr.mxu0 0.0
  %5945 = vmatpush1.msra.mxu0 %v5891
  %5946 = vmatprep.subr.mxu0 0.0
  %5947 = vmatpush1.msra.mxu0 %v5890
  %5948 = vmatprep.subr.mxu0 0.0
  %5949 = vmatpush1.msra.mxu0 %v5889
  %5950 = vmatprep.subr.mxu0 0.0
  %5951 = vmatpush2.msra.mxu0 0.0
  %5952 = vmatprep.subr.mxu0 0.0
  %5953 = vmatpush2.msra.mxu0 0.0
  %5954 = vmatprep.subr.mxu0 0.0
  %5955 = vmatpush2.msra.mxu0 0.0
  %5956 = vmatprep.subr.mxu0 0.0
  %5957 = vmatpush2.msra.mxu0 0.0
  %5958 = vmatprep.subr.mxu0 0.0
  %5959 = vmatpush2.msra.mxu0 0.0
  %5960 = vmatprep.subr.mxu0 0.0
  %5961 = vmatpush2.msra.mxu0 0.0
  %5962 = vmatprep.subr.mxu0 0.0
  %5963 = vmatpush2.msra.mxu0 0.0
  %5964 = vmatprep.subr.mxu0 0.0
  %5965 = vmatpush2.msra.mxu0 0.0
  %5966 = vmatprep.subr.mxu0 0.0
  %5967 = vmatpush2.msra.mxu0 0.0
  %5968 = vmatprep.subr.mxu0 0.0
  %5969 = vmatpush2.msra.mxu0 0.0
  %5970 = vmatprep.subr.mxu0 0.0
  %5971 = vmatpush2.msra.mxu0 0.0
  %5972 = vmatprep.subr.mxu0 0.0
  %5973 = vmatpush2.msra.mxu0 0.0
  %5974 = vmatprep.subr.mxu0 0.0
  %5975 = vmatpush2.msra.mxu0 0.0
  %5976 = vmatprep.subr.mxu0 0.0
  %5977 = vmatpush2.msra.mxu0 0.0
  %5978 = vmatprep.subr.mxu0 0.0
  %5979 = vmatpush2.msra.mxu0 0.0
  %5980 = vmatprep.subr.mxu0 0.0
  %5981 = vmatpush2.msra.mxu0 0.0
  %5982 = vmatprep.mubr.f32.mxu0 0.0
  %5983 = vmatmul.mubr.f32.gmra.mxu0 %v5916
  %v5984 = vpop.f32.mrf.mxu0
  %v5985 = vadd.f32 %v5909, %v5984
  %v5986 = vpop.f32.mrf.mxu0
  %5987 = vdwg.mxu0
  %5988 = vmatprep.subr.mxu0 0.0
  %5989 = vmatpush1.msra.mxu0 0.0
  %5990 = vmatprep.subr.mxu0 0.0
  %5991 = vmatpush1.msra.mxu0 0.0
  %5992 = vmatprep.subr.mxu0 0.0
  %5993 = vmatpush1.msra.mxu0 0.0
  %5994 = vmatprep.subr.mxu0 0.0
  %5995 = vmatpush1.msra.mxu0 0.0
  %5996 = vmatprep.subr.mxu0 0.0
  %5997 = vmatpush1.msra.mxu0 0.0
  %5998 = vmatprep.subr.mxu0 0.0
  %5999 = vmatpush1.msra.mxu0 0.0
  %6000 = vmatprep.subr.mxu0 0.0
  %6001 = vmatpush1.msra.mxu0 0.0
  %6002 = vmatprep.subr.mxu0 0.0
  %6003 = vmatpush1.msra.mxu0 0.0
  %6004 = vmatprep.subr.mxu0 0.0
  %6005 = vmatpush1.msra.mxu0 0.0
  %6006 = vmatprep.subr.mxu0 0.0
  %6007 = vmatpush1.msra.mxu0 0.0
  %6008 = vmatprep.subr.mxu0 0.0
  %6009 = vmatpush1.msra.mxu0 %v5901
  %6010 = vmatprep.subr.mxu0 0.0
  %6011 = vmatpush1.msra.mxu0 %v5900
  %6012 = vmatprep.subr.mxu0 0.0
  %6013 = vmatpush1.msra.mxu0 %v5899
  %6014 = vmatprep.subr.mxu0 0.0
  %6015 = vmatpush1.msra.mxu0 %v5898
  %6016 = vmatprep.subr.mxu0 0.0
  %6017 = vmatpush1.msra.mxu0 %v5897
  %6018 = vmatprep.subr.mxu0 0.0
  %6019 = vmatpush1.msra.mxu0 %v5896
  %6020 = vmatprep.subr.mxu0 0.0
  %6021 = vmatpush2.msra.mxu0 0.0
  %6022 = vmatprep.subr.mxu0 0.0
  %6023 = vmatpush2.msra.mxu0 0.0
  %6024 = vmatprep.subr.mxu0 0.0
  %6025 = vmatpush2.msra.mxu0 0.0
  %6026 = vmatprep.subr.mxu0 0.0
  %6027 = vmatpush2.msra.mxu0 0.0
  %6028 = vmatprep.subr.mxu0 0.0
  %6029 = vmatpush2.msra.mxu0 0.0
  %6030 = vmatprep.subr.mxu0 0.0
  %6031 = vmatpush2.msra.mxu0 0.0
  %6032 = vmatprep.subr.mxu0 0.0
  %6033 = vmatpush2.msra.mxu0 0.0
  %6034 = vmatprep.subr.mxu0 0.0
  %6035 = vmatpush2.msra.mxu0 0.0
  %6036 = vmatprep.subr.mxu0 0.0
  %6037 = vmatpush2.msra.mxu0 0.0
  %6038 = vmatprep.subr.mxu0 0.0
  %6039 = vmatpush2.msra.mxu0 0.0
  %6040 = vmatprep.subr.mxu0 0.0
  %6041 = vmatpush2.msra.mxu0 0.0
  %6042 = vmatprep.subr.mxu0 0.0
  %6043 = vmatpush2.msra.mxu0 0.0
  %6044 = vmatprep.subr.mxu0 0.0
  %6045 = vmatpush2.msra.mxu0 0.0
  %6046 = vmatprep.subr.mxu0 0.0
  %6047 = vmatpush2.msra.mxu0 0.0
  %6048 = vmatprep.subr.mxu0 0.0
  %6049 = vmatpush2.msra.mxu0 0.0
  %6050 = vmatprep.subr.mxu0 0.0
  %6051 = vmatpush2.msra.mxu0 0.0
  %6052 = vmatprep.mubr.f32.mxu0 0.0
  %6053 = vmatmul.mubr.f32.gmra.mxu0 %v5916
  %v6054 = vpop.f32.mrf.mxu0
  %v6055 = vadd.f32 %v5911, %v6054
  %v6056 = vpop.f32.mrf.mxu0
  %6057 = vdwg.mxu0
  %6058 = vmatprep.subr.mxu0 0.0
  %6059 = vmatpush1.msra.mxu0 0.0
  %6060 = vmatprep.subr.mxu0 0.0
  %6061 = vmatpush1.msra.mxu0 0.0
  %6062 = vmatprep.subr.mxu0 0.0
  %6063 = vmatpush1.msra.mxu0 0.0
  %6064 = vmatprep.subr.mxu0 0.0
  %6065 = vmatpush1.msra.mxu0 0.0
  %6066 = vmatprep.subr.mxu0 0.0
  %6067 = vmatpush1.msra.mxu0 0.0
  %6068 = vmatprep.subr.mxu0 0.0
  %6069 = vmatpush1.msra.mxu0 0.0
  %6070 = vmatprep.subr.mxu0 0.0
  %6071 = vmatpush1.msra.mxu0 0.0
  %6072 = vmatprep.subr.mxu0 0.0
  %6073 = vmatpush1.msra.mxu0 0.0
  %6074 = vmatprep.subr.mxu0 0.0
  %6075 = vmatpush1.msra.mxu0 0.0
  %6076 = vmatprep.subr.mxu0 0.0
  %6077 = vmatpush1.msra.mxu0 0.0
  %6078 = vmatprep.subr.mxu0 0.0
  %6079 = vmatpush1.msra.mxu0 %v5908
  %6080 = vmatprep.subr.mxu0 0.0
  %6081 = vmatpush1.msra.mxu0 %v5907
  %6082 = vmatprep.subr.mxu0 0.0
  %6083 = vmatpush1.msra.mxu0 %v5906
  %6084 = vmatprep.subr.mxu0 0.0
  %6085 = vmatpush1.msra.mxu0 %v5905
  %6086 = vmatprep.subr.mxu0 0.0
  %6087 = vmatpush1.msra.mxu0 %v5904
  %6088 = vmatprep.subr.mxu0 0.0
  %6089 = vmatpush1.msra.mxu0 %v5903
  %6090 = vmatprep.subr.mxu0 0.0
  %6091 = vmatpush2.msra.mxu0 0.0
  %6092 = vmatprep.subr.mxu0 0.0
  %6093 = vmatpush2.msra.mxu0 0.0
  %6094 = vmatprep.subr.mxu0 0.0
  %6095 = vmatpush2.msra.mxu0 0.0
  %6096 = vmatprep.subr.mxu0 0.0
  %6097 = vmatpush2.msra.mxu0 0.0
  %6098 = vmatprep.subr.mxu0 0.0
  %6099 = vmatpush2.msra.mxu0 0.0
  %6100 = vmatprep.subr.mxu0 0.0
  %6101 = vmatpush2.msra.mxu0 0.0
  %6102 = vmatprep.subr.mxu0 0.0
  %6103 = vmatpush2.msra.mxu0 0.0
  %6104 = vmatprep.subr.mxu0 0.0
  %6105 = vmatpush2.msra.mxu0 0.0
  %6106 = vmatprep.subr.mxu0 0.0
  %6107 = vmatpush2.msra.mxu0 0.0
  %6108 = vmatprep.subr.mxu0 0.0
  %6109 = vmatpush2.msra.mxu0 0.0
  %6110 = vmatprep.subr.mxu0 0.0
  %6111 = vmatpush2.msra.mxu0 0.0
  %6112 = vmatprep.subr.mxu0 0.0
  %6113 = vmatpush2.msra.mxu0 0.0
  %6114 = vmatprep.subr.mxu0 0.0
  %6115 = vmatpush2.msra.mxu0 0.0
  %6116 = vmatprep.subr.mxu0 0.0
  %6117 = vmatpush2.msra.mxu0 0.0
  %6118 = vmatprep.subr.mxu0 0.0
  %6119 = vmatpush2.msra.mxu0 0.0
  %6120 = vmatprep.subr.mxu0 0.0
  %6121 = vmatpush2.msra.mxu0 0.0
  %6122 = vmatprep.mubr.f32.mxu0 0.0
  %6123 = vmatmul.mubr.f32.gmra.mxu0 %v5916
  %v6124 = vpop.f32.mrf.mxu0
  %v6125 = vadd.f32 %v5913, %v6124
  %v6126 = vpop.f32.mrf.mxu0
  %6127 = vdwg.mxu0
  %v6128 = vadd.f32 %v5701, %v5985
  %v6129 = vxor.u32 %v6128, 2147483648
  %v6130 = vmul.f32 %v6129, 1.442695
  %v6131 = vpow.pop %v6130
  %v6132 = vadd.f32 %v6131, 1.0
  %v6133 = vrcp.pop %v6132
  %v6134 = vmul.f32 1.0, %v6133
  %v6135 = vadd.f32 %v5791, %v6055
  %v6136 = vxor.u32 %v6135, 2147483648
  %v6137 = vmul.f32 %v6136, 1.442695
  %v6138 = vpow.pop %v6137
  %v6139 = vadd.f32 %v6138, 1.0
  %v6140 = vrcp.pop %v6139
  %v6141 = vmul.f32 1.0, %v6140
  %v6142 = vmul.f32 %v6134, %v6125
  %v6143 = vadd.f32 %v5881, %v6142
  %v6144 = vtanh.pop %v6143
  %v6145 = vsub.f32 1.0, %v6141
  %v6146 = vmul.f32 %v6145, %v6144
  %v6147 = vmul.f32 %v6141, %v5914
  %v6148 = vadd.f32 %v6146, %v6147
  %v6150 = vsel %vm518, %v6148, 0
  %6152 = vmatprep.subr.mxu0 0.0
  %6153 = vmatpush1.msra.mxu0 0.0
  %6154 = vmatprep.subr.mxu0 0.0
  %6155 = vmatpush1.msra.mxu0 0.0
  %6156 = vmatprep.subr.mxu0 0.0
  %6157 = vmatpush1.msra.mxu0 0.0
  %6158 = vmatprep.subr.mxu0 0.0
  %6159 = vmatpush1.msra.mxu0 0.0
  %6160 = vmatprep.subr.mxu0 0.0
  %6161 = vmatpush1.msra.mxu0 0.0
  %6162 = vmatprep.subr.mxu0 0.0
  %6163 = vmatpush1.msra.mxu0 0.0
  %6164 = vmatprep.subr.mxu0 0.0
  %6165 = vmatpush1.msra.mxu0 0.0
  %6166 = vmatprep.subr.mxu0 0.0
  %6167 = vmatpush1.msra.mxu0 0.0
  %6168 = vmatprep.subr.mxu0 0.0
  %6169 = vmatpush1.msra.mxu0 0.0
  %6170 = vmatprep.subr.mxu0 0.0
  %6171 = vmatpush1.msra.mxu0 0.0
  %6172 = vmatprep.subr.mxu0 0.0
  %6173 = vmatpush1.msra.mxu0 %v5894
  %6174 = vmatprep.subr.mxu0 0.0
  %6175 = vmatpush1.msra.mxu0 %v5893
  %6176 = vmatprep.subr.mxu0 0.0
  %6177 = vmatpush1.msra.mxu0 %v5892
  %6178 = vmatprep.subr.mxu0 0.0
  %6179 = vmatpush1.msra.mxu0 %v5891
  %6180 = vmatprep.subr.mxu0 0.0
  %6181 = vmatpush1.msra.mxu0 %v5890
  %6182 = vmatprep.subr.mxu0 0.0
  %6183 = vmatpush1.msra.mxu0 %v5889
  %6184 = vmatprep.subr.mxu0 0.0
  %6185 = vmatpush2.msra.mxu0 0.0
  %6186 = vmatprep.subr.mxu0 0.0
  %6187 = vmatpush2.msra.mxu0 0.0
  %6188 = vmatprep.subr.mxu0 0.0
  %6189 = vmatpush2.msra.mxu0 0.0
  %6190 = vmatprep.subr.mxu0 0.0
  %6191 = vmatpush2.msra.mxu0 0.0
  %6192 = vmatprep.subr.mxu0 0.0
  %6193 = vmatpush2.msra.mxu0 0.0
  %6194 = vmatprep.subr.mxu0 0.0
  %6195 = vmatpush2.msra.mxu0 0.0
  %6196 = vmatprep.subr.mxu0 0.0
  %6197 = vmatpush2.msra.mxu0 0.0
  %6198 = vmatprep.subr.mxu0 0.0
  %6199 = vmatpush2.msra.mxu0 0.0
  %6200 = vmatprep.subr.mxu0 0.0
  %6201 = vmatpush2.msra.mxu0 0.0
  %6202 = vmatprep.subr.mxu0 0.0
  %6203 = vmatpush2.msra.mxu0 0.0
  %6204 = vmatprep.subr.mxu0 0.0
  %6205 = vmatpush2.msra.mxu0 0.0
  %6206 = vmatprep.subr.mxu0 0.0
  %6207 = vmatpush2.msra.mxu0 0.0
  %6208 = vmatprep.subr.mxu0 0.0
  %6209 = vmatpush2.msra.mxu0 0.0
  %6210 = vmatprep.subr.mxu0 0.0
  %6211 = vmatpush2.msra.mxu0 0.0
  %6212 = vmatprep.subr.mxu0 0.0
  %6213 = vmatpush2.msra.mxu0 0.0
  %6214 = vmatprep.subr.mxu0 0.0
  %6215 = vmatpush2.msra.mxu0 0.0
  %6216 = vmatprep.mubr.f32.mxu0 0.0
  %6217 = vmatmul.mubr.f32.gmra.mxu0 %v6150
  %v6218 = vpop.f32.mrf.mxu0
  %v6219 = vadd.f32 %v5909, %v6218
  %v6220 = vpop.f32.mrf.mxu0
  %6221 = vdwg.mxu0
  %6222 = vmatprep.subr.mxu0 0.0
  %6223 = vmatpush1.msra.mxu0 0.0
  %6224 = vmatprep.subr.mxu0 0.0
  %6225 = vmatpush1.msra.mxu0 0.0
  %6226 = vmatprep.subr.mxu0 0.0
  %6227 = vmatpush1.msra.mxu0 0.0
  %6228 = vmatprep.subr.mxu0 0.0
  %6229 = vmatpush1.msra.mxu0 0.0
  %6230 = vmatprep.subr.mxu0 0.0
  %6231 = vmatpush1.msra.mxu0 0.0
  %6232 = vmatprep.subr.mxu0 0.0
  %6233 = vmatpush1.msra.mxu0 0.0
  %6234 = vmatprep.subr.mxu0 0.0
  %6235 = vmatpush1.msra.mxu0 0.0
  %6236 = vmatprep.subr.mxu0 0.0
  %6237 = vmatpush1.msra.mxu0 0.0
  %6238 = vmatprep.subr.mxu0 0.0
  %6239 = vmatpush1.msra.mxu0 0.0
  %6240 = vmatprep.subr.mxu0 0.0
  %6241 = vmatpush1.msra.mxu0 0.0
  %6242 = vmatprep.subr.mxu0 0.0
  %6243 = vmatpush1.msra.mxu0 %v5901
  %6244 = vmatprep.subr.mxu0 0.0
  %6245 = vmatpush1.msra.mxu0 %v5900
  %6246 = vmatprep.subr.mxu0 0.0
  %6247 = vmatpush1.msra.mxu0 %v5899
  %6248 = vmatprep.subr.mxu0 0.0
  %6249 = vmatpush1.msra.mxu0 %v5898
  %6250 = vmatprep.subr.mxu0 0.0
  %6251 = vmatpush1.msra.mxu0 %v5897
  %6252 = vmatprep.subr.mxu0 0.0
  %6253 = vmatpush1.msra.mxu0 %v5896
  %6254 = vmatprep.subr.mxu0 0.0
  %6255 = vmatpush2.msra.mxu0 0.0
  %6256 = vmatprep.subr.mxu0 0.0
  %6257 = vmatpush2.msra.mxu0 0.0
  %6258 = vmatprep.subr.mxu0 0.0
  %6259 = vmatpush2.msra.mxu0 0.0
  %6260 = vmatprep.subr.mxu0 0.0
  %6261 = vmatpush2.msra.mxu0 0.0
  %6262 = vmatprep.subr.mxu0 0.0
  %6263 = vmatpush2.msra.mxu0 0.0
  %6264 = vmatprep.subr.mxu0 0.0
  %6265 = vmatpush2.msra.mxu0 0.0
  %6266 = vmatprep.subr.mxu0 0.0
  %6267 = vmatpush2.msra.mxu0 0.0
  %6268 = vmatprep.subr.mxu0 0.0
  %6269 = vmatpush2.msra.mxu0 0.0
  %6270 = vmatprep.subr.mxu0 0.0
  %6271 = vmatpush2.msra.mxu0 0.0
  %6272 = vmatprep.subr.mxu0 0.0
  %6273 = vmatpush2.msra.mxu0 0.0
  %6274 = vmatprep.subr.mxu0 0.0
  %6275 = vmatpush2.msra.mxu0 0.0
  %6276 = vmatprep.subr.mxu0 0.0
  %6277 = vmatpush2.msra.mxu0 0.0
  %6278 = vmatprep.subr.mxu0 0.0
  %6279 = vmatpush2.msra.mxu0 0.0
  %6280 = vmatprep.subr.mxu0 0.0
  %6281 = vmatpush2.msra.mxu0 0.0
  %6282 = vmatprep.subr.mxu0 0.0
  %6283 = vmatpush2.msra.mxu0 0.0
  %6284 = vmatprep.subr.mxu0 0.0
  %6285 = vmatpush2.msra.mxu0 0.0
  %6286 = vmatprep.mubr.f32.mxu0 0.0
  %6287 = vmatmul.mubr.f32.gmra.mxu0 %v6150
  %v6288 = vpop.f32.mrf.mxu0
  %v6289 = vadd.f32 %v5911, %v6288
  %v6290 = vpop.f32.mrf.mxu0
  %6291 = vdwg.mxu0
  %6292 = vmatprep.subr.mxu0 0.0
  %6293 = vmatpush1.msra.mxu0 0.0
  %6294 = vmatprep.subr.mxu0 0.0
  %6295 = vmatpush1.msra.mxu0 0.0
  %6296 = vmatprep.subr.mxu0 0.0
  %6297 = vmatpush1.msra.mxu0 0.0
  %6298 = vmatprep.subr.mxu0 0.0
  %6299 = vmatpush1.msra.mxu0 0.0
  %6300 = vmatprep.subr.mxu0 0.0
  %6301 = vmatpush1.msra.mxu0 0.0
  %6302 = vmatprep.subr.mxu0 0.0
  %6303 = vmatpush1.msra.mxu0 0.0
  %6304 = vmatprep.subr.mxu0 0.0
  %6305 = vmatpush1.msra.mxu0 0.0
  %6306 = vmatprep.subr.mxu0 0.0
  %6307 = vmatpush1.msra.mxu0 0.0
  %6308 = vmatprep.subr.mxu0 0.0
  %6309 = vmatpush1.msra.mxu0 0.0
  %6310 = vmatprep.subr.mxu0 0.0
  %6311 = vmatpush1.msra.mxu0 0.0
  %6312 = vmatprep.subr.mxu0 0.0
  %6313 = vmatpush1.msra.mxu0 %v5908
  %6314 = vmatprep.subr.mxu0 0.0
  %6315 = vmatpush1.msra.mxu0 %v5907
  %6316 = vmatprep.subr.mxu0 0.0
  %6317 = vmatpush1.msra.mxu0 %v5906
  %6318 = vmatprep.subr.mxu0 0.0
  %6319 = vmatpush1.msra.mxu0 %v5905
  %6320 = vmatprep.subr.mxu0 0.0
  %6321 = vmatpush1.msra.mxu0 %v5904
  %6322 = vmatprep.subr.mxu0 0.0
  %6323 = vmatpush1.msra.mxu0 %v5903
  %6324 = vmatprep.subr.mxu0 0.0
  %6325 = vmatpush2.msra.mxu0 0.0
  %6326 = vmatprep.subr.mxu0 0.0
  %6327 = vmatpush2.msra.mxu0 0.0
  %6328 = vmatprep.subr.mxu0 0.0
  %6329 = vmatpush2.msra.mxu0 0.0
  %6330 = vmatprep.subr.mxu0 0.0
  %6331 = vmatpush2.msra.mxu0 0.0
  %6332 = vmatprep.subr.mxu0 0.0
  %6333 = vmatpush2.msra.mxu0 0.0
  %6334 = vmatprep.subr.mxu0 0.0
  %6335 = vmatpush2.msra.mxu0 0.0
  %6336 = vmatprep.subr.mxu0 0.0
  %6337 = vmatpush2.msra.mxu0 0.0
  %6338 = vmatprep.subr.mxu0 0.0
  %6339 = vmatpush2.msra.mxu0 0.0
  %6340 = vmatprep.subr.mxu0 0.0
  %6341 = vmatpush2.msra.mxu0 0.0
  %6342 = vmatprep.subr.mxu0 0.0
  %6343 = vmatpush2.msra.mxu0 0.0
  %6344 = vmatprep.subr.mxu0 0.0
  %6345 = vmatpush2.msra.mxu0 0.0
  %6346 = vmatprep.subr.mxu0 0.0
  %6347 = vmatpush2.msra.mxu0 0.0
  %6348 = vmatprep.subr.mxu0 0.0
  %6349 = vmatpush2.msra.mxu0 0.0
  %6350 = vmatprep.subr.mxu0 0.0
  %6351 = vmatpush2.msra.mxu0 0.0
  %6352 = vmatprep.subr.mxu0 0.0
  %6353 = vmatpush2.msra.mxu0 0.0
  %6354 = vmatprep.subr.mxu0 0.0
  %6355 = vmatpush2.msra.mxu0 0.0
  %6356 = vmatprep.mubr.f32.mxu0 0.0
  %6357 = vmatmul.mubr.f32.gmra.mxu0 %v6150
  %v6358 = vpop.f32.mrf.mxu0
  %v6359 = vadd.f32 %v5913, %v6358
  %v6360 = vpop.f32.mrf.mxu0
  %6361 = vdwg.mxu0
  %v6363 = vrot.slane %v6219, 7
  %v6365 = vadd.f32 %v5701, %v6363
  %v6366 = vxor.u32 %v6365, 2147483648
  %v6367 = vmul.f32 %v6366, 1.442695
  %v6368 = vpow.pop %v6367
  %v6369 = vadd.f32 %v6368, 1.0
  %v6370 = vrcp.pop %v6369
  %v6371 = vmul.f32 1.0, %v6370
  %v6373 = vrot.slane %v6289, 7
  %v6375 = vadd.f32 %v5791, %v6373
  %v6376 = vxor.u32 %v6375, 2147483648
  %v6377 = vmul.f32 %v6376, 1.442695
  %v6378 = vpow.pop %v6377
  %v6379 = vadd.f32 %v6378, 1.0
  %v6380 = vrcp.pop %v6379
  %v6381 = vmul.f32 1.0, %v6380
  %v6383 = vrot.slane %v6359, 7
  %v6385 = vmul.f32 %v6371, %v6383
  %v6386 = vadd.f32 %v5881, %v6385
  %v6387 = vtanh.pop %v6386
  %v6388 = vsub.f32 1.0, %v6381
  %v6389 = vmul.f32 %v6388, %v6387
  %v6390 = vrot.slane %v6148, 7
  %v6392 = vmul.f32 %v6381, %v6390
  %v6393 = vadd.f32 %v6389, %v6392
  %v6395 = vrot.slane %v6393, 1
  %v6396 = vsel %vm518, %v6395, 0
  %6398 = vmatprep.subr.mxu0 0.0
  %6399 = vmatpush1.msra.mxu0 0.0
  %6400 = vmatprep.subr.mxu0 0.0
  %6401 = vmatpush1.msra.mxu0 0.0
  %6402 = vmatprep.subr.mxu0 0.0
  %6403 = vmatpush1.msra.mxu0 0.0
  %6404 = vmatprep.subr.mxu0 0.0
  %6405 = vmatpush1.msra.mxu0 0.0
  %6406 = vmatprep.subr.mxu0 0.0
  %6407 = vmatpush1.msra.mxu0 0.0
  %6408 = vmatprep.subr.mxu0 0.0
  %6409 = vmatpush1.msra.mxu0 0.0
  %6410 = vmatprep.subr.mxu0 0.0
  %6411 = vmatpush1.msra.mxu0 0.0
  %6412 = vmatprep.subr.mxu0 0.0
  %6413 = vmatpush1.msra.mxu0 0.0
  %6414 = vmatprep.subr.mxu0 0.0
  %6415 = vmatpush1.msra.mxu0 0.0
  %6416 = vmatprep.subr.mxu0 0.0
  %6417 = vmatpush1.msra.mxu0 0.0
  %6418 = vmatprep.subr.mxu0 0.0
  %6419 = vmatpush1.msra.mxu0 %v5894
  %6420 = vmatprep.subr.mxu0 0.0
  %6421 = vmatpush1.msra.mxu0 %v5893
  %6422 = vmatprep.subr.mxu0 0.0
  %6423 = vmatpush1.msra.mxu0 %v5892
  %6424 = vmatprep.subr.mxu0 0.0
  %6425 = vmatpush1.msra.mxu0 %v5891
  %6426 = vmatprep.subr.mxu0 0.0
  %6427 = vmatpush1.msra.mxu0 %v5890
  %6428 = vmatprep.subr.mxu0 0.0
  %6429 = vmatpush1.msra.mxu0 %v5889
  %6430 = vmatprep.subr.mxu0 0.0
  %6431 = vmatpush2.msra.mxu0 0.0
  %6432 = vmatprep.subr.mxu0 0.0
  %6433 = vmatpush2.msra.mxu0 0.0
  %6434 = vmatprep.subr.mxu0 0.0
  %6435 = vmatpush2.msra.mxu0 0.0
  %6436 = vmatprep.subr.mxu0 0.0
  %6437 = vmatpush2.msra.mxu0 0.0
  %6438 = vmatprep.subr.mxu0 0.0
  %6439 = vmatpush2.msra.mxu0 0.0
  %6440 = vmatprep.subr.mxu0 0.0
  %6441 = vmatpush2.msra.mxu0 0.0
  %6442 = vmatprep.subr.mxu0 0.0
  %6443 = vmatpush2.msra.mxu0 0.0
  %6444 = vmatprep.subr.mxu0 0.0
  %6445 = vmatpush2.msra.mxu0 0.0
  %6446 = vmatprep.subr.mxu0 0.0
  %6447 = vmatpush2.msra.mxu0 0.0
  %6448 = vmatprep.subr.mxu0 0.0
  %6449 = vmatpush2.msra.mxu0 0.0
  %6450 = vmatprep.subr.mxu0 0.0
  %6451 = vmatpush2.msra.mxu0 0.0
  %6452 = vmatprep.subr.mxu0 0.0
  %6453 = vmatpush2.msra.mxu0 0.0
  %6454 = vmatprep.subr.mxu0 0.0
  %6455 = vmatpush2.msra.mxu0 0.0
  %6456 = vmatprep.subr.mxu0 0.0
  %6457 = vmatpush2.msra.mxu0 0.0
  %6458 = vmatprep.subr.mxu0 0.0
  %6459 = vmatpush2.msra.mxu0 0.0
  %6460 = vmatprep.subr.mxu0 0.0
  %6461 = vmatpush2.msra.mxu0 0.0
  %6462 = vmatprep.mubr.f32.mxu0 0.0
  %6463 = vmatmul.mubr.f32.gmra.mxu0 %v6396
  %v6464 = vpop.f32.mrf.mxu0
  %v6465 = vadd.f32 %v5909, %v6464
  %v6466 = vpop.f32.mrf.mxu0
  %6467 = vdwg.mxu0
  %6468 = vmatprep.subr.mxu0 0.0
  %6469 = vmatpush1.msra.mxu0 0.0
  %6470 = vmatprep.subr.mxu0 0.0
  %6471 = vmatpush1.msra.mxu0 0.0
  %6472 = vmatprep.subr.mxu0 0.0
  %6473 = vmatpush1.msra.mxu0 0.0
  %6474 = vmatprep.subr.mxu0 0.0
  %6475 = vmatpush1.msra.mxu0 0.0
  %6476 = vmatprep.subr.mxu0 0.0
  %6477 = vmatpush1.msra.mxu0 0.0
  %6478 = vmatprep.subr.mxu0 0.0
  %6479 = vmatpush1.msra.mxu0 0.0
  %6480 = vmatprep.subr.mxu0 0.0
  %6481 = vmatpush1.msra.mxu0 0.0
  %6482 = vmatprep.subr.mxu0 0.0
  %6483 = vmatpush1.msra.mxu0 0.0
  %6484 = vmatprep.subr.mxu0 0.0
  %6485 = vmatpush1.msra.mxu0 0.0
  %6486 = vmatprep.subr.mxu0 0.0
  %6487 = vmatpush1.msra.mxu0 0.0
  %6488 = vmatprep.subr.mxu0 0.0
  %6489 = vmatpush1.msra.mxu0 %v5901
  %6490 = vmatprep.subr.mxu0 0.0
  %6491 = vmatpush1.msra.mxu0 %v5900
  %6492 = vmatprep.subr.mxu0 0.0
  %6493 = vmatpush1.msra.mxu0 %v5899
  %6494 = vmatprep.subr.mxu0 0.0
  %6495 = vmatpush1.msra.mxu0 %v5898
  %6496 = vmatprep.subr.mxu0 0.0
  %6497 = vmatpush1.msra.mxu0 %v5897
  %6498 = vmatprep.subr.mxu0 0.0
  %6499 = vmatpush1.msra.mxu0 %v5896
  %6500 = vmatprep.subr.mxu0 0.0
  %6501 = vmatpush2.msra.mxu0 0.0
  %6502 = vmatprep.subr.mxu0 0.0
  %6503 = vmatpush2.msra.mxu0 0.0
  %6504 = vmatprep.subr.mxu0 0.0
  %6505 = vmatpush2.msra.mxu0 0.0
  %6506 = vmatprep.subr.mxu0 0.0
  %6507 = vmatpush2.msra.mxu0 0.0
  %6508 = vmatprep.subr.mxu0 0.0
  %6509 = vmatpush2.msra.mxu0 0.0
  %6510 = vmatprep.subr.mxu0 0.0
  %6511 = vmatpush2.msra.mxu0 0.0
  %6512 = vmatprep.subr.mxu0 0.0
  %6513 = vmatpush2.msra.mxu0 0.0
  %6514 = vmatprep.subr.mxu0 0.0
  %6515 = vmatpush2.msra.mxu0 0.0
  %6516 = vmatprep.subr.mxu0 0.0
  %6517 = vmatpush2.msra.mxu0 0.0
  %6518 = vmatprep.subr.mxu0 0.0
  %6519 = vmatpush2.msra.mxu0 0.0
  %6520 = vmatprep.subr.mxu0 0.0
  %6521 = vmatpush2.msra.mxu0 0.0
  %6522 = vmatprep.subr.mxu0 0.0
  %6523 = vmatpush2.msra.mxu0 0.0
  %6524 = vmatprep.subr.mxu0 0.0
  %6525 = vmatpush2.msra.mxu0 0.0
  %6526 = vmatprep.subr.mxu0 0.0
  %6527 = vmatpush2.msra.mxu0 0.0
  %6528 = vmatprep.subr.mxu0 0.0
  %6529 = vmatpush2.msra.mxu0 0.0
  %6530 = vmatprep.subr.mxu0 0.0
  %6531 = vmatpush2.msra.mxu0 0.0
  %6532 = vmatprep.mubr.f32.mxu0 0.0
  %6533 = vmatmul.mubr.f32.gmra.mxu0 %v6396
  %v6534 = vpop.f32.mrf.mxu0
  %v6535 = vadd.f32 %v5911, %v6534
  %v6536 = vpop.f32.mrf.mxu0
  %6537 = vdwg.mxu0
  %6538 = vmatprep.subr.mxu0 0.0
  %6539 = vmatpush1.msra.mxu0 0.0
  %6540 = vmatprep.subr.mxu0 0.0
  %6541 = vmatpush1.msra.mxu0 0.0
  %6542 = vmatprep.subr.mxu0 0.0
  %6543 = vmatpush1.msra.mxu0 0.0
  %6544 = vmatprep.subr.mxu0 0.0
  %6545 = vmatpush1.msra.mxu0 0.0
  %6546 = vmatprep.subr.mxu0 0.0
  %6547 = vmatpush1.msra.mxu0 0.0
  %6548 = vmatprep.subr.mxu0 0.0
  %6549 = vmatpush1.msra.mxu0 0.0
  %6550 = vmatprep.subr.mxu0 0.0
  %6551 = vmatpush1.msra.mxu0 0.0
  %6552 = vmatprep.subr.mxu0 0.0
  %6553 = vmatpush1.msra.mxu0 0.0
  %6554 = vmatprep.subr.mxu0 0.0
  %6555 = vmatpush1.msra.mxu0 0.0
  %6556 = vmatprep.subr.mxu0 0.0
  %6557 = vmatpush1.msra.mxu0 0.0
  %6558 = vmatprep.subr.mxu0 0.0
  %6559 = vmatpush1.msra.mxu0 %v5908
  %6560 = vmatprep.subr.mxu0 0.0
  %6561 = vmatpush1.msra.mxu0 %v5907
  %6562 = vmatprep.subr.mxu0 0.0
  %6563 = vmatpush1.msra.mxu0 %v5906
  %6564 = vmatprep.subr.mxu0 0.0
  %6565 = vmatpush1.msra.mxu0 %v5905
  %6566 = vmatprep.subr.mxu0 0.0
  %6567 = vmatpush1.msra.mxu0 %v5904
  %6568 = vmatprep.subr.mxu0 0.0
  %6569 = vmatpush1.msra.mxu0 %v5903
  %6570 = vmatprep.subr.mxu0 0.0
  %6571 = vmatpush2.msra.mxu0 0.0
  %6572 = vmatprep.subr.mxu0 0.0
  %6573 = vmatpush2.msra.mxu0 0.0
  %6574 = vmatprep.subr.mxu0 0.0
  %6575 = vmatpush2.msra.mxu0 0.0
  %6576 = vmatprep.subr.mxu0 0.0
  %6577 = vmatpush2.msra.mxu0 0.0
  %6578 = vmatprep.subr.mxu0 0.0
  %6579 = vmatpush2.msra.mxu0 0.0
  %6580 = vmatprep.subr.mxu0 0.0
  %6581 = vmatpush2.msra.mxu0 0.0
  %6582 = vmatprep.subr.mxu0 0.0
  %6583 = vmatpush2.msra.mxu0 0.0
  %6584 = vmatprep.subr.mxu0 0.0
  %6585 = vmatpush2.msra.mxu0 0.0
  %6586 = vmatprep.subr.mxu0 0.0
  %6587 = vmatpush2.msra.mxu0 0.0
  %6588 = vmatprep.subr.mxu0 0.0
  %6589 = vmatpush2.msra.mxu0 0.0
  %6590 = vmatprep.subr.mxu0 0.0
  %6591 = vmatpush2.msra.mxu0 0.0
  %6592 = vmatprep.subr.mxu0 0.0
  %6593 = vmatpush2.msra.mxu0 0.0
  %6594 = vmatprep.subr.mxu0 0.0
  %6595 = vmatpush2.msra.mxu0 0.0
  %6596 = vmatprep.subr.mxu0 0.0
  %6597 = vmatpush2.msra.mxu0 0.0
  %6598 = vmatprep.subr.mxu0 0.0
  %6599 = vmatpush2.msra.mxu0 0.0
  %6600 = vmatprep.subr.mxu0 0.0
  %6601 = vmatpush2.msra.mxu0 0.0
  %6602 = vmatprep.mubr.f32.mxu0 0.0
  %6603 = vmatmul.mubr.f32.gmra.mxu0 %v6396
  %v6604 = vpop.f32.mrf.mxu0
  %v6605 = vadd.f32 %v5913, %v6604
  %v6606 = vpop.f32.mrf.mxu0
  %6607 = vdwg.mxu0
  %v6609 = vrot.slane %v6465, 6
  %v6611 = vadd.f32 %v5701, %v6609
  %v6612 = vxor.u32 %v6611, 2147483648
  %v6613 = vmul.f32 %v6612, 1.442695
  %v6614 = vpow.pop %v6613
  %v6615 = vadd.f32 %v6614, 1.0
  %v6616 = vrcp.pop %v6615
  %v6617 = vmul.f32 1.0, %v6616
  %v6619 = vrot.slane %v6535, 6
  %v6621 = vadd.f32 %v5791, %v6619
  %v6622 = vxor.u32 %v6621, 2147483648
  %v6623 = vmul.f32 %v6622, 1.442695
  %v6624 = vpow.pop %v6623
  %v6625 = vadd.f32 %v6624, 1.0
  %v6626 = vrcp.pop %v6625
  %v6627 = vmul.f32 1.0, %v6626
  %v6629 = vrot.slane %v6605, 6
  %v6631 = vmul.f32 %v6617, %v6629
  %v6632 = vadd.f32 %v5881, %v6631
  %v6633 = vtanh.pop %v6632
  %v6634 = vsub.f32 1.0, %v6627
  %v6635 = vmul.f32 %v6634, %v6633
  %v6636 = vrot.slane %v6393, 7
  %v6638 = vmul.f32 %v6627, %v6636
  %v6639 = vadd.f32 %v6635, %v6638
  %v6641 = vrot.slane %v6639, 2
  %v6642 = vsel %vm518, %v6641, 0
  %6644 = vmatprep.subr.mxu0 0.0
  %6645 = vmatpush1.msra.mxu0 0.0
  %6646 = vmatprep.subr.mxu0 0.0
  %6647 = vmatpush1.msra.mxu0 0.0
  %6648 = vmatprep.subr.mxu0 0.0
  %6649 = vmatpush1.msra.mxu0 0.0
  %6650 = vmatprep.subr.mxu0 0.0
  %6651 = vmatpush1.msra.mxu0 0.0
  %6652 = vmatprep.subr.mxu0 0.0
  %6653 = vmatpush1.msra.mxu0 0.0
  %6654 = vmatprep.subr.mxu0 0.0
  %6655 = vmatpush1.msra.mxu0 0.0
  %6656 = vmatprep.subr.mxu0 0.0
  %6657 = vmatpush1.msra.mxu0 0.0
  %6658 = vmatprep.subr.mxu0 0.0
  %6659 = vmatpush1.msra.mxu0 0.0
  %6660 = vmatprep.subr.mxu0 0.0
  %6661 = vmatpush1.msra.mxu0 0.0
  %6662 = vmatprep.subr.mxu0 0.0
  %6663 = vmatpush1.msra.mxu0 0.0
  %6664 = vmatprep.subr.mxu0 0.0
  %6665 = vmatpush1.msra.mxu0 %v5894
  %6666 = vmatprep.subr.mxu0 0.0
  %6667 = vmatpush1.msra.mxu0 %v5893
  %6668 = vmatprep.subr.mxu0 0.0
  %6669 = vmatpush1.msra.mxu0 %v5892
  %6670 = vmatprep.subr.mxu0 0.0
  %6671 = vmatpush1.msra.mxu0 %v5891
  %6672 = vmatprep.subr.mxu0 0.0
  %6673 = vmatpush1.msra.mxu0 %v5890
  %6674 = vmatprep.subr.mxu0 0.0
  %6675 = vmatpush1.msra.mxu0 %v5889
  %6676 = vmatprep.subr.mxu0 0.0
  %6677 = vmatpush2.msra.mxu0 0.0
  %6678 = vmatprep.subr.mxu0 0.0
  %6679 = vmatpush2.msra.mxu0 0.0
  %6680 = vmatprep.subr.mxu0 0.0
  %6681 = vmatpush2.msra.mxu0 0.0
  %6682 = vmatprep.subr.mxu0 0.0
  %6683 = vmatpush2.msra.mxu0 0.0
  %6684 = vmatprep.subr.mxu0 0.0
  %6685 = vmatpush2.msra.mxu0 0.0
  %6686 = vmatprep.subr.mxu0 0.0
  %6687 = vmatpush2.msra.mxu0 0.0
  %6688 = vmatprep.subr.mxu0 0.0
  %6689 = vmatpush2.msra.mxu0 0.0
  %6690 = vmatprep.subr.mxu0 0.0
  %6691 = vmatpush2.msra.mxu0 0.0
  %6692 = vmatprep.subr.mxu0 0.0
  %6693 = vmatpush2.msra.mxu0 0.0
  %6694 = vmatprep.subr.mxu0 0.0
  %6695 = vmatpush2.msra.mxu0 0.0
  %6696 = vmatprep.subr.mxu0 0.0
  %6697 = vmatpush2.msra.mxu0 0.0
  %6698 = vmatprep.subr.mxu0 0.0
  %6699 = vmatpush2.msra.mxu0 0.0
  %6700 = vmatprep.subr.mxu0 0.0
  %6701 = vmatpush2.msra.mxu0 0.0
  %6702 = vmatprep.subr.mxu0 0.0
  %6703 = vmatpush2.msra.mxu0 0.0
  %6704 = vmatprep.subr.mxu0 0.0
  %6705 = vmatpush2.msra.mxu0 0.0
  %6706 = vmatprep.subr.mxu0 0.0
  %6707 = vmatpush2.msra.mxu0 0.0
  %6708 = vmatprep.mubr.f32.mxu0 0.0
  %6709 = vmatmul.mubr.f32.gmra.mxu0 %v6642
  %v6710 = vpop.f32.mrf.mxu0
  %v6711 = vadd.f32 %v5909, %v6710
  %v6712 = vpop.f32.mrf.mxu0
  %6713 = vdwg.mxu0
  %6714 = vmatprep.subr.mxu0 0.0
  %6715 = vmatpush1.msra.mxu0 0.0
  %6716 = vmatprep.subr.mxu0 0.0
  %6717 = vmatpush1.msra.mxu0 0.0
  %6718 = vmatprep.subr.mxu0 0.0
  %6719 = vmatpush1.msra.mxu0 0.0
  %6720 = vmatprep.subr.mxu0 0.0
  %6721 = vmatpush1.msra.mxu0 0.0
  %6722 = vmatprep.subr.mxu0 0.0
  %6723 = vmatpush1.msra.mxu0 0.0
  %6724 = vmatprep.subr.mxu0 0.0
  %6725 = vmatpush1.msra.mxu0 0.0
  %6726 = vmatprep.subr.mxu0 0.0
  %6727 = vmatpush1.msra.mxu0 0.0
  %6728 = vmatprep.subr.mxu0 0.0
  %6729 = vmatpush1.msra.mxu0 0.0
  %6730 = vmatprep.subr.mxu0 0.0
  %6731 = vmatpush1.msra.mxu0 0.0
  %6732 = vmatprep.subr.mxu0 0.0
  %6733 = vmatpush1.msra.mxu0 0.0
  %6734 = vmatprep.subr.mxu0 0.0
  %6735 = vmatpush1.msra.mxu0 %v5901
  %6736 = vmatprep.subr.mxu0 0.0
  %6737 = vmatpush1.msra.mxu0 %v5900
  %6738 = vmatprep.subr.mxu0 0.0
  %6739 = vmatpush1.msra.mxu0 %v5899
  %6740 = vmatprep.subr.mxu0 0.0
  %6741 = vmatpush1.msra.mxu0 %v5898
  %6742 = vmatprep.subr.mxu0 0.0
  %6743 = vmatpush1.msra.mxu0 %v5897
  %6744 = vmatprep.subr.mxu0 0.0
  %6745 = vmatpush1.msra.mxu0 %v5896
  %6746 = vmatprep.subr.mxu0 0.0
  %6747 = vmatpush2.msra.mxu0 0.0
  %6748 = vmatprep.subr.mxu0 0.0
  %6749 = vmatpush2.msra.mxu0 0.0
  %6750 = vmatprep.subr.mxu0 0.0
  %6751 = vmatpush2.msra.mxu0 0.0
  %6752 = vmatprep.subr.mxu0 0.0
  %6753 = vmatpush2.msra.mxu0 0.0
  %6754 = vmatprep.subr.mxu0 0.0
  %6755 = vmatpush2.msra.mxu0 0.0
  %6756 = vmatprep.subr.mxu0 0.0
  %6757 = vmatpush2.msra.mxu0 0.0
  %6758 = vmatprep.subr.mxu0 0.0
  %6759 = vmatpush2.msra.mxu0 0.0
  %6760 = vmatprep.subr.mxu0 0.0
  %6761 = vmatpush2.msra.mxu0 0.0
  %6762 = vmatprep.subr.mxu0 0.0
  %6763 = vmatpush2.msra.mxu0 0.0
  %6764 = vmatprep.subr.mxu0 0.0
  %6765 = vmatpush2.msra.mxu0 0.0
  %6766 = vmatprep.subr.mxu0 0.0
  %6767 = vmatpush2.msra.mxu0 0.0
  %6768 = vmatprep.subr.mxu0 0.0
  %6769 = vmatpush2.msra.mxu0 0.0
  %6770 = vmatprep.subr.mxu0 0.0
  %6771 = vmatpush2.msra.mxu0 0.0
  %6772 = vmatprep.subr.mxu0 0.0
  %6773 = vmatpush2.msra.mxu0 0.0
  %6774 = vmatprep.subr.mxu0 0.0
  %6775 = vmatpush2.msra.mxu0 0.0
  %6776 = vmatprep.subr.mxu0 0.0
  %6777 = vmatpush2.msra.mxu0 0.0
  %6778 = vmatprep.mubr.f32.mxu0 0.0
  %6779 = vmatmul.mubr.f32.gmra.mxu0 %v6642
  %v6780 = vpop.f32.mrf.mxu0
  %v6781 = vadd.f32 %v5911, %v6780
  %v6782 = vpop.f32.mrf.mxu0
  %6783 = vdwg.mxu0
  %6784 = vmatprep.subr.mxu0 0.0
  %6785 = vmatpush1.msra.mxu0 0.0
  %6786 = vmatprep.subr.mxu0 0.0
  %6787 = vmatpush1.msra.mxu0 0.0
  %6788 = vmatprep.subr.mxu0 0.0
  %6789 = vmatpush1.msra.mxu0 0.0
  %6790 = vmatprep.subr.mxu0 0.0
  %6791 = vmatpush1.msra.mxu0 0.0
  %6792 = vmatprep.subr.mxu0 0.0
  %6793 = vmatpush1.msra.mxu0 0.0
  %6794 = vmatprep.subr.mxu0 0.0
  %6795 = vmatpush1.msra.mxu0 0.0
  %6796 = vmatprep.subr.mxu0 0.0
  %6797 = vmatpush1.msra.mxu0 0.0
  %6798 = vmatprep.subr.mxu0 0.0
  %6799 = vmatpush1.msra.mxu0 0.0
  %6800 = vmatprep.subr.mxu0 0.0
  %6801 = vmatpush1.msra.mxu0 0.0
  %6802 = vmatprep.subr.mxu0 0.0
  %6803 = vmatpush1.msra.mxu0 0.0
  %6804 = vmatprep.subr.mxu0 0.0
  %6805 = vmatpush1.msra.mxu0 %v5908
  %6806 = vmatprep.subr.mxu0 0.0
  %6807 = vmatpush1.msra.mxu0 %v5907
  %6808 = vmatprep.subr.mxu0 0.0
  %6809 = vmatpush1.msra.mxu0 %v5906
  %6810 = vmatprep.subr.mxu0 0.0
  %6811 = vmatpush1.msra.mxu0 %v5905
  %6812 = vmatprep.subr.mxu0 0.0
  %6813 = vmatpush1.msra.mxu0 %v5904
  %6814 = vmatprep.subr.mxu0 0.0
  %6815 = vmatpush1.msra.mxu0 %v5903
  %6816 = vmatprep.subr.mxu0 0.0
  %6817 = vmatpush2.msra.mxu0 0.0
  %6818 = vmatprep.subr.mxu0 0.0
  %6819 = vmatpush2.msra.mxu0 0.0
  %6820 = vmatprep.subr.mxu0 0.0
  %6821 = vmatpush2.msra.mxu0 0.0
  %6822 = vmatprep.subr.mxu0 0.0
  %6823 = vmatpush2.msra.mxu0 0.0
  %6824 = vmatprep.subr.mxu0 0.0
  %6825 = vmatpush2.msra.mxu0 0.0
  %6826 = vmatprep.subr.mxu0 0.0
  %6827 = vmatpush2.msra.mxu0 0.0
  %6828 = vmatprep.subr.mxu0 0.0
  %6829 = vmatpush2.msra.mxu0 0.0
  %6830 = vmatprep.subr.mxu0 0.0
  %6831 = vmatpush2.msra.mxu0 0.0
  %6832 = vmatprep.subr.mxu0 0.0
  %6833 = vmatpush2.msra.mxu0 0.0
  %6834 = vmatprep.subr.mxu0 0.0
  %6835 = vmatpush2.msra.mxu0 0.0
  %6836 = vmatprep.subr.mxu0 0.0
  %6837 = vmatpush2.msra.mxu0 0.0
  %6838 = vmatprep.subr.mxu0 0.0
  %6839 = vmatpush2.msra.mxu0 0.0
  %6840 = vmatprep.subr.mxu0 0.0
  %6841 = vmatpush2.msra.mxu0 0.0
  %6842 = vmatprep.subr.mxu0 0.0
  %6843 = vmatpush2.msra.mxu0 0.0
  %6844 = vmatprep.subr.mxu0 0.0
  %6845 = vmatpush2.msra.mxu0 0.0
  %6846 = vmatprep.subr.mxu0 0.0
  %6847 = vmatpush2.msra.mxu0 0.0
  %6848 = vmatprep.mubr.f32.mxu0 0.0
  %6849 = vmatmul.mubr.f32.gmra.mxu0 %v6642
  %v6850 = vpop.f32.mrf.mxu0
  %v6851 = vadd.f32 %v5913, %v6850
  %v6852 = vpop.f32.mrf.mxu0
  %6853 = vdwg.mxu0
  %v6855 = vrot.slane %v6711, 5
  %v6857 = vadd.f32 %v5701, %v6855
  %v6858 = vxor.u32 %v6857, 2147483648
  %v6859 = vmul.f32 %v6858, 1.442695
  %v6860 = vpow.pop %v6859
  %v6861 = vadd.f32 %v6860, 1.0
  %v6862 = vrcp.pop %v6861
  %v6863 = vmul.f32 1.0, %v6862
  %v6865 = vrot.slane %v6781, 5
  %v6867 = vadd.f32 %v5791, %v6865
  %v6868 = vxor.u32 %v6867, 2147483648
  %v6869 = vmul.f32 %v6868, 1.442695
  %v6870 = vpow.pop %v6869
  %v6871 = vadd.f32 %v6870, 1.0
  %v6872 = vrcp.pop %v6871
  %v6873 = vmul.f32 1.0, %v6872
  %v6875 = vrot.slane %v6851, 5
  %v6877 = vmul.f32 %v6863, %v6875
  %v6878 = vadd.f32 %v5881, %v6877
  %v6879 = vtanh.pop %v6878
  %v6880 = vsub.f32 1.0, %v6873
  %v6881 = vmul.f32 %v6880, %v6879
  %v6882 = vrot.slane %v6639, 7
  %v6884 = vmul.f32 %v6873, %v6882
  %v6885 = vadd.f32 %v6881, %v6884
  %v6887 = vrot.slane %v6885, 3
  %v6888 = vsel %vm518, %v6887, 0
  %6890 = vmatprep.subr.mxu0 0.0
  %6891 = vmatpush1.msra.mxu0 0.0
  %6892 = vmatprep.subr.mxu0 0.0
  %6893 = vmatpush1.msra.mxu0 0.0
  %6894 = vmatprep.subr.mxu0 0.0
  %6895 = vmatpush1.msra.mxu0 0.0
  %6896 = vmatprep.subr.mxu0 0.0
  %6897 = vmatpush1.msra.mxu0 0.0
  %6898 = vmatprep.subr.mxu0 0.0
  %6899 = vmatpush1.msra.mxu0 0.0
  %6900 = vmatprep.subr.mxu0 0.0
  %6901 = vmatpush1.msra.mxu0 0.0
  %6902 = vmatprep.subr.mxu0 0.0
  %6903 = vmatpush1.msra.mxu0 0.0
  %6904 = vmatprep.subr.mxu0 0.0
  %6905 = vmatpush1.msra.mxu0 0.0
  %6906 = vmatprep.subr.mxu0 0.0
  %6907 = vmatpush1.msra.mxu0 0.0
  %6908 = vmatprep.subr.mxu0 0.0
  %6909 = vmatpush1.msra.mxu0 0.0
  %6910 = vmatprep.subr.mxu0 0.0
  %6911 = vmatpush1.msra.mxu0 %v5894
  %6912 = vmatprep.subr.mxu0 0.0
  %6913 = vmatpush1.msra.mxu0 %v5893
  %6914 = vmatprep.subr.mxu0 0.0
  %6915 = vmatpush1.msra.mxu0 %v5892
  %6916 = vmatprep.subr.mxu0 0.0
  %6917 = vmatpush1.msra.mxu0 %v5891
  %6918 = vmatprep.subr.mxu0 0.0
  %6919 = vmatpush1.msra.mxu0 %v5890
  %6920 = vmatprep.subr.mxu0 0.0
  %6921 = vmatpush1.msra.mxu0 %v5889
  %6922 = vmatprep.subr.mxu0 0.0
  %6923 = vmatpush2.msra.mxu0 0.0
  %6924 = vmatprep.subr.mxu0 0.0
  %6925 = vmatpush2.msra.mxu0 0.0
  %6926 = vmatprep.subr.mxu0 0.0
  %6927 = vmatpush2.msra.mxu0 0.0
  %6928 = vmatprep.subr.mxu0 0.0
  %6929 = vmatpush2.msra.mxu0 0.0
  %6930 = vmatprep.subr.mxu0 0.0
  %6931 = vmatpush2.msra.mxu0 0.0
  %6932 = vmatprep.subr.mxu0 0.0
  %6933 = vmatpush2.msra.mxu0 0.0
  %6934 = vmatprep.subr.mxu0 0.0
  %6935 = vmatpush2.msra.mxu0 0.0
  %6936 = vmatprep.subr.mxu0 0.0
  %6937 = vmatpush2.msra.mxu0 0.0
  %6938 = vmatprep.subr.mxu0 0.0
  %6939 = vmatpush2.msra.mxu0 0.0
  %6940 = vmatprep.subr.mxu0 0.0
  %6941 = vmatpush2.msra.mxu0 0.0
  %6942 = vmatprep.subr.mxu0 0.0
  %6943 = vmatpush2.msra.mxu0 0.0
  %6944 = vmatprep.subr.mxu0 0.0
  %6945 = vmatpush2.msra.mxu0 0.0
  %6946 = vmatprep.subr.mxu0 0.0
  %6947 = vmatpush2.msra.mxu0 0.0
  %6948 = vmatprep.subr.mxu0 0.0
  %6949 = vmatpush2.msra.mxu0 0.0
  %6950 = vmatprep.subr.mxu0 0.0
  %6951 = vmatpush2.msra.mxu0 0.0
  %6952 = vmatprep.subr.mxu0 0.0
  %6953 = vmatpush2.msra.mxu0 0.0
  %6954 = vmatprep.mubr.f32.mxu0 0.0
  %6955 = vmatmul.mubr.f32.gmra.mxu0 %v6888
  %v6956 = vpop.f32.mrf.mxu0
  %v6957 = vadd.f32 %v5909, %v6956
  %v6958 = vpop.f32.mrf.mxu0
  %6959 = vdwg.mxu0
  %6960 = vmatprep.subr.mxu0 0.0
  %6961 = vmatpush1.msra.mxu0 0.0
  %6962 = vmatprep.subr.mxu0 0.0
  %6963 = vmatpush1.msra.mxu0 0.0
  %6964 = vmatprep.subr.mxu0 0.0
  %6965 = vmatpush1.msra.mxu0 0.0
  %6966 = vmatprep.subr.mxu0 0.0
  %6967 = vmatpush1.msra.mxu0 0.0
  %6968 = vmatprep.subr.mxu0 0.0
  %6969 = vmatpush1.msra.mxu0 0.0
  %6970 = vmatprep.subr.mxu0 0.0
  %6971 = vmatpush1.msra.mxu0 0.0
  %6972 = vmatprep.subr.mxu0 0.0
  %6973 = vmatpush1.msra.mxu0 0.0
  %6974 = vmatprep.subr.mxu0 0.0
  %6975 = vmatpush1.msra.mxu0 0.0
  %6976 = vmatprep.subr.mxu0 0.0
  %6977 = vmatpush1.msra.mxu0 0.0
  %6978 = vmatprep.subr.mxu0 0.0
  %6979 = vmatpush1.msra.mxu0 0.0
  %6980 = vmatprep.subr.mxu0 0.0
  %6981 = vmatpush1.msra.mxu0 %v5901
  %6982 = vmatprep.subr.mxu0 0.0
  %6983 = vmatpush1.msra.mxu0 %v5900
  %6984 = vmatprep.subr.mxu0 0.0
  %6985 = vmatpush1.msra.mxu0 %v5899
  %6986 = vmatprep.subr.mxu0 0.0
  %6987 = vmatpush1.msra.mxu0 %v5898
  %6988 = vmatprep.subr.mxu0 0.0
  %6989 = vmatpush1.msra.mxu0 %v5897
  %6990 = vmatprep.subr.mxu0 0.0
  %6991 = vmatpush1.msra.mxu0 %v5896
  %6992 = vmatprep.subr.mxu0 0.0
  %6993 = vmatpush2.msra.mxu0 0.0
  %6994 = vmatprep.subr.mxu0 0.0
  %6995 = vmatpush2.msra.mxu0 0.0
  %6996 = vmatprep.subr.mxu0 0.0
  %6997 = vmatpush2.msra.mxu0 0.0
  %6998 = vmatprep.subr.mxu0 0.0
  %6999 = vmatpush2.msra.mxu0 0.0
  %7000 = vmatprep.subr.mxu0 0.0
  %7001 = vmatpush2.msra.mxu0 0.0
  %7002 = vmatprep.subr.mxu0 0.0
  %7003 = vmatpush2.msra.mxu0 0.0
  %7004 = vmatprep.subr.mxu0 0.0
  %7005 = vmatpush2.msra.mxu0 0.0
  %7006 = vmatprep.subr.mxu0 0.0
  %7007 = vmatpush2.msra.mxu0 0.0
  %7008 = vmatprep.subr.mxu0 0.0
  %7009 = vmatpush2.msra.mxu0 0.0
  %7010 = vmatprep.subr.mxu0 0.0
  %7011 = vmatpush2.msra.mxu0 0.0
  %7012 = vmatprep.subr.mxu0 0.0
  %7013 = vmatpush2.msra.mxu0 0.0
  %7014 = vmatprep.subr.mxu0 0.0
  %7015 = vmatpush2.msra.mxu0 0.0
  %7016 = vmatprep.subr.mxu0 0.0
  %7017 = vmatpush2.msra.mxu0 0.0
  %7018 = vmatprep.subr.mxu0 0.0
  %7019 = vmatpush2.msra.mxu0 0.0
  %7020 = vmatprep.subr.mxu0 0.0
  %7021 = vmatpush2.msra.mxu0 0.0
  %7022 = vmatprep.subr.mxu0 0.0
  %7023 = vmatpush2.msra.mxu0 0.0
  %7024 = vmatprep.mubr.f32.mxu0 0.0
  %7025 = vmatmul.mubr.f32.gmra.mxu0 %v6888
  %v7026 = vpop.f32.mrf.mxu0
  %v7027 = vadd.f32 %v5911, %v7026
  %v7028 = vpop.f32.mrf.mxu0
  %7029 = vdwg.mxu0
  %7030 = vmatprep.subr.mxu0 0.0
  %7031 = vmatpush1.msra.mxu0 0.0
  %7032 = vmatprep.subr.mxu0 0.0
  %7033 = vmatpush1.msra.mxu0 0.0
  %7034 = vmatprep.subr.mxu0 0.0
  %7035 = vmatpush1.msra.mxu0 0.0
  %7036 = vmatprep.subr.mxu0 0.0
  %7037 = vmatpush1.msra.mxu0 0.0
  %7038 = vmatprep.subr.mxu0 0.0
  %7039 = vmatpush1.msra.mxu0 0.0
  %7040 = vmatprep.subr.mxu0 0.0
  %7041 = vmatpush1.msra.mxu0 0.0
  %7042 = vmatprep.subr.mxu0 0.0
  %7043 = vmatpush1.msra.mxu0 0.0
  %7044 = vmatprep.subr.mxu0 0.0
  %7045 = vmatpush1.msra.mxu0 0.0
  %7046 = vmatprep.subr.mxu0 0.0
  %7047 = vmatpush1.msra.mxu0 0.0
  %7048 = vmatprep.subr.mxu0 0.0
  %7049 = vmatpush1.msra.mxu0 0.0
  %7050 = vmatprep.subr.mxu0 0.0
  %7051 = vmatpush1.msra.mxu0 %v5908
  %7052 = vmatprep.subr.mxu0 0.0
  %7053 = vmatpush1.msra.mxu0 %v5907
  %7054 = vmatprep.subr.mxu0 0.0
  %7055 = vmatpush1.msra.mxu0 %v5906
  %7056 = vmatprep.subr.mxu0 0.0
  %7057 = vmatpush1.msra.mxu0 %v5905
  %7058 = vmatprep.subr.mxu0 0.0
  %7059 = vmatpush1.msra.mxu0 %v5904
  %7060 = vmatprep.subr.mxu0 0.0
  %7061 = vmatpush1.msra.mxu0 %v5903
  %7062 = vmatprep.subr.mxu0 0.0
  %7063 = vmatpush2.msra.mxu0 0.0
  %7064 = vmatprep.subr.mxu0 0.0
  %7065 = vmatpush2.msra.mxu0 0.0
  %7066 = vmatprep.subr.mxu0 0.0
  %7067 = vmatpush2.msra.mxu0 0.0
  %7068 = vmatprep.subr.mxu0 0.0
  %7069 = vmatpush2.msra.mxu0 0.0
  %7070 = vmatprep.subr.mxu0 0.0
  %7071 = vmatpush2.msra.mxu0 0.0
  %7072 = vmatprep.subr.mxu0 0.0
  %7073 = vmatpush2.msra.mxu0 0.0
  %7074 = vmatprep.subr.mxu0 0.0
  %7075 = vmatpush2.msra.mxu0 0.0
  %7076 = vmatprep.subr.mxu0 0.0
  %7077 = vmatpush2.msra.mxu0 0.0
  %7078 = vmatprep.subr.mxu0 0.0
  %7079 = vmatpush2.msra.mxu0 0.0
  %7080 = vmatprep.subr.mxu0 0.0
  %7081 = vmatpush2.msra.mxu0 0.0
  %7082 = vmatprep.subr.mxu0 0.0
  %7083 = vmatpush2.msra.mxu0 0.0
  %7084 = vmatprep.subr.mxu0 0.0
  %7085 = vmatpush2.msra.mxu0 0.0
  %7086 = vmatprep.subr.mxu0 0.0
  %7087 = vmatpush2.msra.mxu0 0.0
  %7088 = vmatprep.subr.mxu0 0.0
  %7089 = vmatpush2.msra.mxu0 0.0
  %7090 = vmatprep.subr.mxu0 0.0
  %7091 = vmatpush2.msra.mxu0 0.0
  %7092 = vmatprep.subr.mxu0 0.0
  %7093 = vmatpush2.msra.mxu0 0.0
  %7094 = vmatprep.mubr.f32.mxu0 0.0
  %7095 = vmatmul.mubr.f32.gmra.mxu0 %v6888
  %v7096 = vpop.f32.mrf.mxu0
  %v7097 = vadd.f32 %v5913, %v7096
  %v7098 = vpop.f32.mrf.mxu0
  %7099 = vdwg.mxu0
  %v7101 = vrot.slane %v6957, 4
  %v7103 = vadd.f32 %v5701, %v7101
  %v7104 = vxor.u32 %v7103, 2147483648
  %v7105 = vmul.f32 %v7104, 1.442695
  %v7106 = vpow.pop %v7105
  %v7107 = vadd.f32 %v7106, 1.0
  %v7108 = vrcp.pop %v7107
  %v7109 = vmul.f32 1.0, %v7108
  %v7111 = vrot.slane %v7027, 4
  %v7113 = vadd.f32 %v5791, %v7111
  %v7114 = vxor.u32 %v7113, 2147483648
  %v7115 = vmul.f32 %v7114, 1.442695
  %v7116 = vpow.pop %v7115
  %v7117 = vadd.f32 %v7116, 1.0
  %v7118 = vrcp.pop %v7117
  %v7119 = vmul.f32 1.0, %v7118
  %v7121 = vrot.slane %v7097, 4
  %v7123 = vmul.f32 %v7109, %v7121
  %v7124 = vadd.f32 %v5881, %v7123
  %v7125 = vtanh.pop %v7124
  %v7126 = vsub.f32 1.0, %v7119
  %v7127 = vmul.f32 %v7126, %v7125
  %v7128 = vrot.slane %v6885, 7
  %v7130 = vmul.f32 %v7119, %v7128
  %v7131 = vadd.f32 %v7127, %v7130
  %v7133 = vrot.slane %v7131, 4
  %v7134 = vsel %vm518, %v7133, 0
  %7136 = vmatprep.subr.mxu0 0.0
  %7137 = vmatpush1.msra.mxu0 0.0
  %7138 = vmatprep.subr.mxu0 0.0
  %7139 = vmatpush1.msra.mxu0 0.0
  %7140 = vmatprep.subr.mxu0 0.0
  %7141 = vmatpush1.msra.mxu0 0.0
  %7142 = vmatprep.subr.mxu0 0.0
  %7143 = vmatpush1.msra.mxu0 0.0
  %7144 = vmatprep.subr.mxu0 0.0
  %7145 = vmatpush1.msra.mxu0 0.0
  %7146 = vmatprep.subr.mxu0 0.0
  %7147 = vmatpush1.msra.mxu0 0.0
  %7148 = vmatprep.subr.mxu0 0.0
  %7149 = vmatpush1.msra.mxu0 0.0
  %7150 = vmatprep.subr.mxu0 0.0
  %7151 = vmatpush1.msra.mxu0 0.0
  %7152 = vmatprep.subr.mxu0 0.0
  %7153 = vmatpush1.msra.mxu0 0.0
  %7154 = vmatprep.subr.mxu0 0.0
  %7155 = vmatpush1.msra.mxu0 0.0
  %7156 = vmatprep.subr.mxu0 0.0
  %7157 = vmatpush1.msra.mxu0 %v5894
  %7158 = vmatprep.subr.mxu0 0.0
  %7159 = vmatpush1.msra.mxu0 %v5893
  %7160 = vmatprep.subr.mxu0 0.0
  %7161 = vmatpush1.msra.mxu0 %v5892
  %7162 = vmatprep.subr.mxu0 0.0
  %7163 = vmatpush1.msra.mxu0 %v5891
  %7164 = vmatprep.subr.mxu0 0.0
  %7165 = vmatpush1.msra.mxu0 %v5890
  %7166 = vmatprep.subr.mxu0 0.0
  %7167 = vmatpush1.msra.mxu0 %v5889
  %7168 = vmatprep.subr.mxu0 0.0
  %7169 = vmatpush2.msra.mxu0 0.0
  %7170 = vmatprep.subr.mxu0 0.0
  %7171 = vmatpush2.msra.mxu0 0.0
  %7172 = vmatprep.subr.mxu0 0.0
  %7173 = vmatpush2.msra.mxu0 0.0
  %7174 = vmatprep.subr.mxu0 0.0
  %7175 = vmatpush2.msra.mxu0 0.0
  %7176 = vmatprep.subr.mxu0 0.0
  %7177 = vmatpush2.msra.mxu0 0.0
  %7178 = vmatprep.subr.mxu0 0.0
  %7179 = vmatpush2.msra.mxu0 0.0
  %7180 = vmatprep.subr.mxu0 0.0
  %7181 = vmatpush2.msra.mxu0 0.0
  %7182 = vmatprep.subr.mxu0 0.0
  %7183 = vmatpush2.msra.mxu0 0.0
  %7184 = vmatprep.subr.mxu0 0.0
  %7185 = vmatpush2.msra.mxu0 0.0
  %7186 = vmatprep.subr.mxu0 0.0
  %7187 = vmatpush2.msra.mxu0 0.0
  %7188 = vmatprep.subr.mxu0 0.0
  %7189 = vmatpush2.msra.mxu0 0.0
  %7190 = vmatprep.subr.mxu0 0.0
  %7191 = vmatpush2.msra.mxu0 0.0
  %7192 = vmatprep.subr.mxu0 0.0
  %7193 = vmatpush2.msra.mxu0 0.0
  %7194 = vmatprep.subr.mxu0 0.0
  %7195 = vmatpush2.msra.mxu0 0.0
  %7196 = vmatprep.subr.mxu0 0.0
  %7197 = vmatpush2.msra.mxu0 0.0
  %7198 = vmatprep.subr.mxu0 0.0
  %7199 = vmatpush2.msra.mxu0 0.0
  %7200 = vmatprep.mubr.f32.mxu0 0.0
  %7201 = vmatmul.mubr.f32.gmra.mxu0 %v7134
  %v7202 = vpop.f32.mrf.mxu0
  %v7203 = vadd.f32 %v5909, %v7202
  %v7204 = vpop.f32.mrf.mxu0
  %7205 = vdwg.mxu0
  %7206 = vmatprep.subr.mxu0 0.0
  %7207 = vmatpush1.msra.mxu0 0.0
  %7208 = vmatprep.subr.mxu0 0.0
  %7209 = vmatpush1.msra.mxu0 0.0
  %7210 = vmatprep.subr.mxu0 0.0
  %7211 = vmatpush1.msra.mxu0 0.0
  %7212 = vmatprep.subr.mxu0 0.0
  %7213 = vmatpush1.msra.mxu0 0.0
  %7214 = vmatprep.subr.mxu0 0.0
  %7215 = vmatpush1.msra.mxu0 0.0
  %7216 = vmatprep.subr.mxu0 0.0
  %7217 = vmatpush1.msra.mxu0 0.0
  %7218 = vmatprep.subr.mxu0 0.0
  %7219 = vmatpush1.msra.mxu0 0.0
  %7220 = vmatprep.subr.mxu0 0.0
  %7221 = vmatpush1.msra.mxu0 0.0
  %7222 = vmatprep.subr.mxu0 0.0
  %7223 = vmatpush1.msra.mxu0 0.0
  %7224 = vmatprep.subr.mxu0 0.0
  %7225 = vmatpush1.msra.mxu0 0.0
  %7226 = vmatprep.subr.mxu0 0.0
  %7227 = vmatpush1.msra.mxu0 %v5901
  %7228 = vmatprep.subr.mxu0 0.0
  %7229 = vmatpush1.msra.mxu0 %v5900
  %7230 = vmatprep.subr.mxu0 0.0
  %7231 = vmatpush1.msra.mxu0 %v5899
  %7232 = vmatprep.subr.mxu0 0.0
  %7233 = vmatpush1.msra.mxu0 %v5898
  %7234 = vmatprep.subr.mxu0 0.0
  %7235 = vmatpush1.msra.mxu0 %v5897
  %7236 = vmatprep.subr.mxu0 0.0
  %7237 = vmatpush1.msra.mxu0 %v5896
  %7238 = vmatprep.subr.mxu0 0.0
  %7239 = vmatpush2.msra.mxu0 0.0
  %7240 = vmatprep.subr.mxu0 0.0
  %7241 = vmatpush2.msra.mxu0 0.0
  %7242 = vmatprep.subr.mxu0 0.0
  %7243 = vmatpush2.msra.mxu0 0.0
  %7244 = vmatprep.subr.mxu0 0.0
  %7245 = vmatpush2.msra.mxu0 0.0
  %7246 = vmatprep.subr.mxu0 0.0
  %7247 = vmatpush2.msra.mxu0 0.0
  %7248 = vmatprep.subr.mxu0 0.0
  %7249 = vmatpush2.msra.mxu0 0.0
  %7250 = vmatprep.subr.mxu0 0.0
  %7251 = vmatpush2.msra.mxu0 0.0
  %7252 = vmatprep.subr.mxu0 0.0
  %7253 = vmatpush2.msra.mxu0 0.0
  %7254 = vmatprep.subr.mxu0 0.0
  %7255 = vmatpush2.msra.mxu0 0.0
  %7256 = vmatprep.subr.mxu0 0.0
  %7257 = vmatpush2.msra.mxu0 0.0
  %7258 = vmatprep.subr.mxu0 0.0
  %7259 = vmatpush2.msra.mxu0 0.0
  %7260 = vmatprep.subr.mxu0 0.0
  %7261 = vmatpush2.msra.mxu0 0.0
  %7262 = vmatprep.subr.mxu0 0.0
  %7263 = vmatpush2.msra.mxu0 0.0
  %7264 = vmatprep.subr.mxu0 0.0
  %7265 = vmatpush2.msra.mxu0 0.0
  %7266 = vmatprep.subr.mxu0 0.0
  %7267 = vmatpush2.msra.mxu0 0.0
  %7268 = vmatprep.subr.mxu0 0.0
  %7269 = vmatpush2.msra.mxu0 0.0
  %7270 = vmatprep.mubr.f32.mxu0 0.0
  %7271 = vmatmul.mubr.f32.gmra.mxu0 %v7134
  %v7272 = vpop.f32.mrf.mxu0
  %v7273 = vadd.f32 %v5911, %v7272
  %v7274 = vpop.f32.mrf.mxu0
  %7275 = vdwg.mxu0
  %7276 = vmatprep.subr.mxu0 0.0
  %7277 = vmatpush1.msra.mxu0 0.0
  %7278 = vmatprep.subr.mxu0 0.0
  %7279 = vmatpush1.msra.mxu0 0.0
  %7280 = vmatprep.subr.mxu0 0.0
  %7281 = vmatpush1.msra.mxu0 0.0
  %7282 = vmatprep.subr.mxu0 0.0
  %7283 = vmatpush1.msra.mxu0 0.0
  %7284 = vmatprep.subr.mxu0 0.0
  %7285 = vmatpush1.msra.mxu0 0.0
  %7286 = vmatprep.subr.mxu0 0.0
  %7287 = vmatpush1.msra.mxu0 0.0
  %7288 = vmatprep.subr.mxu0 0.0
  %7289 = vmatpush1.msra.mxu0 0.0
  %7290 = vmatprep.subr.mxu0 0.0
  %7291 = vmatpush1.msra.mxu0 0.0
  %7292 = vmatprep.subr.mxu0 0.0
  %7293 = vmatpush1.msra.mxu0 0.0
  %7294 = vmatprep.subr.mxu0 0.0
  %7295 = vmatpush1.msra.mxu0 0.0
  %7296 = vmatprep.subr.mxu0 0.0
  %7297 = vmatpush1.msra.mxu0 %v5908
  %7298 = vmatprep.subr.mxu0 0.0
  %7299 = vmatpush1.msra.mxu0 %v5907
  %7300 = vmatprep.subr.mxu0 0.0
  %7301 = vmatpush1.msra.mxu0 %v5906
  %7302 = vmatprep.subr.mxu0 0.0
  %7303 = vmatpush1.msra.mxu0 %v5905
  %7304 = vmatprep.subr.mxu0 0.0
  %7305 = vmatpush1.msra.mxu0 %v5904
  %7306 = vmatprep.subr.mxu0 0.0
  %7307 = vmatpush1.msra.mxu0 %v5903
  %7308 = vmatprep.subr.mxu0 0.0
  %7309 = vmatpush2.msra.mxu0 0.0
  %7310 = vmatprep.subr.mxu0 0.0
  %7311 = vmatpush2.msra.mxu0 0.0
  %7312 = vmatprep.subr.mxu0 0.0
  %7313 = vmatpush2.msra.mxu0 0.0
  %7314 = vmatprep.subr.mxu0 0.0
  %7315 = vmatpush2.msra.mxu0 0.0
  %7316 = vmatprep.subr.mxu0 0.0
  %7317 = vmatpush2.msra.mxu0 0.0
  %7318 = vmatprep.subr.mxu0 0.0
  %7319 = vmatpush2.msra.mxu0 0.0
  %7320 = vmatprep.subr.mxu0 0.0
  %7321 = vmatpush2.msra.mxu0 0.0
  %7322 = vmatprep.subr.mxu0 0.0
  %7323 = vmatpush2.msra.mxu0 0.0
  %7324 = vmatprep.subr.mxu0 0.0
  %7325 = vmatpush2.msra.mxu0 0.0
  %7326 = vmatprep.subr.mxu0 0.0
  %7327 = vmatpush2.msra.mxu0 0.0
  %7328 = vmatprep.subr.mxu0 0.0
  %7329 = vmatpush2.msra.mxu0 0.0
  %7330 = vmatprep.subr.mxu0 0.0
  %7331 = vmatpush2.msra.mxu0 0.0
  %7332 = vmatprep.subr.mxu0 0.0
  %7333 = vmatpush2.msra.mxu0 0.0
  %7334 = vmatprep.subr.mxu0 0.0
  %7335 = vmatpush2.msra.mxu0 0.0
  %7336 = vmatprep.subr.mxu0 0.0
  %7337 = vmatpush2.msra.mxu0 0.0
  %7338 = vmatprep.subr.mxu0 0.0
  %7339 = vmatpush2.msra.mxu0 0.0
  %7340 = vmatprep.mubr.f32.mxu0 0.0
  %7341 = vmatmul.mubr.f32.gmra.mxu0 %v7134
  %v7342 = vpop.f32.mrf.mxu0
  %v7343 = vadd.f32 %v5913, %v7342
  %v7344 = vpop.f32.mrf.mxu0
  %7345 = vdwg.mxu0
  %v7347 = vrot.slane %v7203, 3
  %v7349 = vadd.f32 %v5701, %v7347
  %v7350 = vxor.u32 %v7349, 2147483648
  %v7351 = vmul.f32 %v7350, 1.442695
  %v7352 = vpow.pop %v7351
  %v7353 = vadd.f32 %v7352, 1.0
  %v7354 = vrcp.pop %v7353
  %v7355 = vmul.f32 1.0, %v7354
  %v7357 = vrot.slane %v7273, 3
  %v7359 = vadd.f32 %v5791, %v7357
  %v7360 = vxor.u32 %v7359, 2147483648
  %v7361 = vmul.f32 %v7360, 1.442695
  %v7362 = vpow.pop %v7361
  %v7363 = vadd.f32 %v7362, 1.0
  %v7364 = vrcp.pop %v7363
  %v7365 = vmul.f32 1.0, %v7364
  %v7367 = vrot.slane %v7343, 3
  %v7369 = vmul.f32 %v7355, %v7367
  %v7370 = vadd.f32 %v5881, %v7369
  %v7371 = vtanh.pop %v7370
  %v7372 = vsub.f32 1.0, %v7365
  %v7373 = vmul.f32 %v7372, %v7371
  %v7374 = vrot.slane %v7131, 7
  %v7376 = vmul.f32 %v7365, %v7374
  %v7377 = vadd.f32 %v7373, %v7376
  %v7379 = vrot.slane %v7377, 5
  %v7380 = vsel %vm518, %v7379, 0
  %7382 = vmatprep.subr.mxu0 0.0
  %7383 = vmatpush1.msra.mxu0 0.0
  %7384 = vmatprep.subr.mxu0 0.0
  %7385 = vmatpush1.msra.mxu0 0.0
  %7386 = vmatprep.subr.mxu0 0.0
  %7387 = vmatpush1.msra.mxu0 0.0
  %7388 = vmatprep.subr.mxu0 0.0
  %7389 = vmatpush1.msra.mxu0 0.0
  %7390 = vmatprep.subr.mxu0 0.0
  %7391 = vmatpush1.msra.mxu0 0.0
  %7392 = vmatprep.subr.mxu0 0.0
  %7393 = vmatpush1.msra.mxu0 0.0
  %7394 = vmatprep.subr.mxu0 0.0
  %7395 = vmatpush1.msra.mxu0 0.0
  %7396 = vmatprep.subr.mxu0 0.0
  %7397 = vmatpush1.msra.mxu0 0.0
  %7398 = vmatprep.subr.mxu0 0.0
  %7399 = vmatpush1.msra.mxu0 0.0
  %7400 = vmatprep.subr.mxu0 0.0
  %7401 = vmatpush1.msra.mxu0 0.0
  %7402 = vmatprep.subr.mxu0 0.0
  %7403 = vmatpush1.msra.mxu0 %v5894
  %7404 = vmatprep.subr.mxu0 0.0
  %7405 = vmatpush1.msra.mxu0 %v5893
  %7406 = vmatprep.subr.mxu0 0.0
  %7407 = vmatpush1.msra.mxu0 %v5892
  %7408 = vmatprep.subr.mxu0 0.0
  %7409 = vmatpush1.msra.mxu0 %v5891
  %7410 = vmatprep.subr.mxu0 0.0
  %7411 = vmatpush1.msra.mxu0 %v5890
  %7412 = vmatprep.subr.mxu0 0.0
  %7413 = vmatpush1.msra.mxu0 %v5889
  %7414 = vmatprep.subr.mxu0 0.0
  %7415 = vmatpush2.msra.mxu0 0.0
  %7416 = vmatprep.subr.mxu0 0.0
  %7417 = vmatpush2.msra.mxu0 0.0
  %7418 = vmatprep.subr.mxu0 0.0
  %7419 = vmatpush2.msra.mxu0 0.0
  %7420 = vmatprep.subr.mxu0 0.0
  %7421 = vmatpush2.msra.mxu0 0.0
  %7422 = vmatprep.subr.mxu0 0.0
  %7423 = vmatpush2.msra.mxu0 0.0
  %7424 = vmatprep.subr.mxu0 0.0
  %7425 = vmatpush2.msra.mxu0 0.0
  %7426 = vmatprep.subr.mxu0 0.0
  %7427 = vmatpush2.msra.mxu0 0.0
  %7428 = vmatprep.subr.mxu0 0.0
  %7429 = vmatpush2.msra.mxu0 0.0
  %7430 = vmatprep.subr.mxu0 0.0
  %7431 = vmatpush2.msra.mxu0 0.0
  %7432 = vmatprep.subr.mxu0 0.0
  %7433 = vmatpush2.msra.mxu0 0.0
  %7434 = vmatprep.subr.mxu0 0.0
  %7435 = vmatpush2.msra.mxu0 0.0
  %7436 = vmatprep.subr.mxu0 0.0
  %7437 = vmatpush2.msra.mxu0 0.0
  %7438 = vmatprep.subr.mxu0 0.0
  %7439 = vmatpush2.msra.mxu0 0.0
  %7440 = vmatprep.subr.mxu0 0.0
  %7441 = vmatpush2.msra.mxu0 0.0
  %7442 = vmatprep.subr.mxu0 0.0
  %7443 = vmatpush2.msra.mxu0 0.0
  %7444 = vmatprep.subr.mxu0 0.0
  %7445 = vmatpush2.msra.mxu0 0.0
  %7446 = vmatprep.mubr.f32.mxu0 0.0
  %7447 = vmatmul.mubr.f32.gmra.mxu0 %v7380
  %v7448 = vpop.f32.mrf.mxu0
  %v7449 = vadd.f32 %v5909, %v7448
  %v7450 = vpop.f32.mrf.mxu0
  %7451 = vdwg.mxu0
  %7452 = vmatprep.subr.mxu0 0.0
  %7453 = vmatpush1.msra.mxu0 0.0
  %7454 = vmatprep.subr.mxu0 0.0
  %7455 = vmatpush1.msra.mxu0 0.0
  %7456 = vmatprep.subr.mxu0 0.0
  %7457 = vmatpush1.msra.mxu0 0.0
  %7458 = vmatprep.subr.mxu0 0.0
  %7459 = vmatpush1.msra.mxu0 0.0
  %7460 = vmatprep.subr.mxu0 0.0
  %7461 = vmatpush1.msra.mxu0 0.0
  %7462 = vmatprep.subr.mxu0 0.0
  %7463 = vmatpush1.msra.mxu0 0.0
  %7464 = vmatprep.subr.mxu0 0.0
  %7465 = vmatpush1.msra.mxu0 0.0
  %7466 = vmatprep.subr.mxu0 0.0
  %7467 = vmatpush1.msra.mxu0 0.0
  %7468 = vmatprep.subr.mxu0 0.0
  %7469 = vmatpush1.msra.mxu0 0.0
  %7470 = vmatprep.subr.mxu0 0.0
  %7471 = vmatpush1.msra.mxu0 0.0
  %7472 = vmatprep.subr.mxu0 0.0
  %7473 = vmatpush1.msra.mxu0 %v5901
  %7474 = vmatprep.subr.mxu0 0.0
  %7475 = vmatpush1.msra.mxu0 %v5900
  %7476 = vmatprep.subr.mxu0 0.0
  %7477 = vmatpush1.msra.mxu0 %v5899
  %7478 = vmatprep.subr.mxu0 0.0
  %7479 = vmatpush1.msra.mxu0 %v5898
  %7480 = vmatprep.subr.mxu0 0.0
  %7481 = vmatpush1.msra.mxu0 %v5897
  %7482 = vmatprep.subr.mxu0 0.0
  %7483 = vmatpush1.msra.mxu0 %v5896
  %7484 = vmatprep.subr.mxu0 0.0
  %7485 = vmatpush2.msra.mxu0 0.0
  %7486 = vmatprep.subr.mxu0 0.0
  %7487 = vmatpush2.msra.mxu0 0.0
  %7488 = vmatprep.subr.mxu0 0.0
  %7489 = vmatpush2.msra.mxu0 0.0
  %7490 = vmatprep.subr.mxu0 0.0
  %7491 = vmatpush2.msra.mxu0 0.0
  %7492 = vmatprep.subr.mxu0 0.0
  %7493 = vmatpush2.msra.mxu0 0.0
  %7494 = vmatprep.subr.mxu0 0.0
  %7495 = vmatpush2.msra.mxu0 0.0
  %7496 = vmatprep.subr.mxu0 0.0
  %7497 = vmatpush2.msra.mxu0 0.0
  %7498 = vmatprep.subr.mxu0 0.0
  %7499 = vmatpush2.msra.mxu0 0.0
  %7500 = vmatprep.subr.mxu0 0.0
  %7501 = vmatpush2.msra.mxu0 0.0
  %7502 = vmatprep.subr.mxu0 0.0
  %7503 = vmatpush2.msra.mxu0 0.0
  %7504 = vmatprep.subr.mxu0 0.0
  %7505 = vmatpush2.msra.mxu0 0.0
  %7506 = vmatprep.subr.mxu0 0.0
  %7507 = vmatpush2.msra.mxu0 0.0
  %7508 = vmatprep.subr.mxu0 0.0
  %7509 = vmatpush2.msra.mxu0 0.0
  %7510 = vmatprep.subr.mxu0 0.0
  %7511 = vmatpush2.msra.mxu0 0.0
  %7512 = vmatprep.subr.mxu0 0.0
  %7513 = vmatpush2.msra.mxu0 0.0
  %7514 = vmatprep.subr.mxu0 0.0
  %7515 = vmatpush2.msra.mxu0 0.0
  %7516 = vmatprep.mubr.f32.mxu0 0.0
  %7517 = vmatmul.mubr.f32.gmra.mxu0 %v7380
  %v7518 = vpop.f32.mrf.mxu0
  %v7519 = vadd.f32 %v5911, %v7518
  %v7520 = vpop.f32.mrf.mxu0
  %7521 = vdwg.mxu0
  %7522 = vmatprep.subr.mxu0 0.0
  %7523 = vmatpush1.msra.mxu0 0.0
  %7524 = vmatprep.subr.mxu0 0.0
  %7525 = vmatpush1.msra.mxu0 0.0
  %7526 = vmatprep.subr.mxu0 0.0
  %7527 = vmatpush1.msra.mxu0 0.0
  %7528 = vmatprep.subr.mxu0 0.0
  %7529 = vmatpush1.msra.mxu0 0.0
  %7530 = vmatprep.subr.mxu0 0.0
  %7531 = vmatpush1.msra.mxu0 0.0
  %7532 = vmatprep.subr.mxu0 0.0
  %7533 = vmatpush1.msra.mxu0 0.0
  %7534 = vmatprep.subr.mxu0 0.0
  %7535 = vmatpush1.msra.mxu0 0.0
  %7536 = vmatprep.subr.mxu0 0.0
  %7537 = vmatpush1.msra.mxu0 0.0
  %7538 = vmatprep.subr.mxu0 0.0
  %7539 = vmatpush1.msra.mxu0 0.0
  %7540 = vmatprep.subr.mxu0 0.0
  %7541 = vmatpush1.msra.mxu0 0.0
  %7542 = vmatprep.subr.mxu0 0.0
  %7543 = vmatpush1.msra.mxu0 %v5908
  %7544 = vmatprep.subr.mxu0 0.0
  %7545 = vmatpush1.msra.mxu0 %v5907
  %7546 = vmatprep.subr.mxu0 0.0
  %7547 = vmatpush1.msra.mxu0 %v5906
  %7548 = vmatprep.subr.mxu0 0.0
  %7549 = vmatpush1.msra.mxu0 %v5905
  %7550 = vmatprep.subr.mxu0 0.0
  %7551 = vmatpush1.msra.mxu0 %v5904
  %7552 = vmatprep.subr.mxu0 0.0
  %7553 = vmatpush1.msra.mxu0 %v5903
  %7554 = vmatprep.subr.mxu0 0.0
  %7555 = vmatpush2.msra.mxu0 0.0
  %7556 = vmatprep.subr.mxu0 0.0
  %7557 = vmatpush2.msra.mxu0 0.0
  %7558 = vmatprep.subr.mxu0 0.0
  %7559 = vmatpush2.msra.mxu0 0.0
  %7560 = vmatprep.subr.mxu0 0.0
  %7561 = vmatpush2.msra.mxu0 0.0
  %7562 = vmatprep.subr.mxu0 0.0
  %7563 = vmatpush2.msra.mxu0 0.0
  %7564 = vmatprep.subr.mxu0 0.0
  %7565 = vmatpush2.msra.mxu0 0.0
  %7566 = vmatprep.subr.mxu0 0.0
  %7567 = vmatpush2.msra.mxu0 0.0
  %7568 = vmatprep.subr.mxu0 0.0
  %7569 = vmatpush2.msra.mxu0 0.0
  %7570 = vmatprep.subr.mxu0 0.0
  %7571 = vmatpush2.msra.mxu0 0.0
  %7572 = vmatprep.subr.mxu0 0.0
  %7573 = vmatpush2.msra.mxu0 0.0
  %7574 = vmatprep.subr.mxu0 0.0
  %7575 = vmatpush2.msra.mxu0 0.0
  %7576 = vmatprep.subr.mxu0 0.0
  %7577 = vmatpush2.msra.mxu0 0.0
  %7578 = vmatprep.subr.mxu0 0.0
  %7579 = vmatpush2.msra.mxu0 0.0
  %7580 = vmatprep.subr.mxu0 0.0
  %7581 = vmatpush2.msra.mxu0 0.0
  %7582 = vmatprep.subr.mxu0 0.0
  %7583 = vmatpush2.msra.mxu0 0.0
  %7584 = vmatprep.subr.mxu0 0.0
  %7585 = vmatpush2.msra.mxu0 0.0
  %7586 = vmatprep.mubr.f32.mxu0 0.0
  %7587 = vmatmul.mubr.f32.gmra.mxu0 %v7380
  %v7588 = vpop.f32.mrf.mxu0
  %v7589 = vadd.f32 %v5913, %v7588
  %v7590 = vpop.f32.mrf.mxu0
  %7591 = vdwg.mxu0
  %v7593 = vrot.slane %v7449, 2
  %v7595 = vadd.f32 %v5701, %v7593
  %v7596 = vxor.u32 %v7595, 2147483648
  %v7597 = vmul.f32 %v7596, 1.442695
  %v7598 = vpow.pop %v7597
  %v7599 = vadd.f32 %v7598, 1.0
  %v7600 = vrcp.pop %v7599
  %v7601 = vmul.f32 1.0, %v7600
  %v7603 = vrot.slane %v7519, 2
  %v7605 = vadd.f32 %v5791, %v7603
  %v7606 = vxor.u32 %v7605, 2147483648
  %v7607 = vmul.f32 %v7606, 1.442695
  %v7608 = vpow.pop %v7607
  %v7609 = vadd.f32 %v7608, 1.0
  %v7610 = vrcp.pop %v7609
  %v7611 = vmul.f32 1.0, %v7610
  %v7613 = vrot.slane %v7589, 2
  %v7615 = vmul.f32 %v7601, %v7613
  %v7616 = vadd.f32 %v5881, %v7615
  %v7617 = vtanh.pop %v7616
  %v7618 = vsub.f32 1.0, %v7611
  %v7619 = vmul.f32 %v7618, %v7617
  %v7620 = vrot.slane %v7377, 7
  %v7622 = vmul.f32 %v7611, %v7620
  %v7623 = vadd.f32 %v7619, %v7622
  %v7625 = vrot.slane %v7623, 6
  %v7626 = vsel %vm518, %v7625, 0
  %7628 = vmatprep.subr.mxu0 0.0
  %7629 = vmatpush1.msra.mxu0 0.0
  %7630 = vmatprep.subr.mxu0 0.0
  %7631 = vmatpush1.msra.mxu0 0.0
  %7632 = vmatprep.subr.mxu0 0.0
  %7633 = vmatpush1.msra.mxu0 0.0
  %7634 = vmatprep.subr.mxu0 0.0
  %7635 = vmatpush1.msra.mxu0 0.0
  %7636 = vmatprep.subr.mxu0 0.0
  %7637 = vmatpush1.msra.mxu0 0.0
  %7638 = vmatprep.subr.mxu0 0.0
  %7639 = vmatpush1.msra.mxu0 0.0
  %7640 = vmatprep.subr.mxu0 0.0
  %7641 = vmatpush1.msra.mxu0 0.0
  %7642 = vmatprep.subr.mxu0 0.0
  %7643 = vmatpush1.msra.mxu0 0.0
  %7644 = vmatprep.subr.mxu0 0.0
  %7645 = vmatpush1.msra.mxu0 0.0
  %7646 = vmatprep.subr.mxu0 0.0
  %7647 = vmatpush1.msra.mxu0 0.0
  %7648 = vmatprep.subr.mxu0 0.0
  %7649 = vmatpush1.msra.mxu0 %v5894
  %7650 = vmatprep.subr.mxu0 0.0
  %7651 = vmatpush1.msra.mxu0 %v5893
  %7652 = vmatprep.subr.mxu0 0.0
  %7653 = vmatpush1.msra.mxu0 %v5892
  %7654 = vmatprep.subr.mxu0 0.0
  %7655 = vmatpush1.msra.mxu0 %v5891
  %7656 = vmatprep.subr.mxu0 0.0
  %7657 = vmatpush1.msra.mxu0 %v5890
  %7658 = vmatprep.subr.mxu0 0.0
  %7659 = vmatpush1.msra.mxu0 %v5889
  %7660 = vmatprep.subr.mxu0 0.0
  %7661 = vmatpush2.msra.mxu0 0.0
  %7662 = vmatprep.subr.mxu0 0.0
  %7663 = vmatpush2.msra.mxu0 0.0
  %7664 = vmatprep.subr.mxu0 0.0
  %7665 = vmatpush2.msra.mxu0 0.0
  %7666 = vmatprep.subr.mxu0 0.0
  %7667 = vmatpush2.msra.mxu0 0.0
  %7668 = vmatprep.subr.mxu0 0.0
  %7669 = vmatpush2.msra.mxu0 0.0
  %7670 = vmatprep.subr.mxu0 0.0
  %7671 = vmatpush2.msra.mxu0 0.0
  %7672 = vmatprep.subr.mxu0 0.0
  %7673 = vmatpush2.msra.mxu0 0.0
  %7674 = vmatprep.subr.mxu0 0.0
  %7675 = vmatpush2.msra.mxu0 0.0
  %7676 = vmatprep.subr.mxu0 0.0
  %7677 = vmatpush2.msra.mxu0 0.0
  %7678 = vmatprep.subr.mxu0 0.0
  %7679 = vmatpush2.msra.mxu0 0.0
  %7680 = vmatprep.subr.mxu0 0.0
  %7681 = vmatpush2.msra.mxu0 0.0
  %7682 = vmatprep.subr.mxu0 0.0
  %7683 = vmatpush2.msra.mxu0 0.0
  %7684 = vmatprep.subr.mxu0 0.0
  %7685 = vmatpush2.msra.mxu0 0.0
  %7686 = vmatprep.subr.mxu0 0.0
  %7687 = vmatpush2.msra.mxu0 0.0
  %7688 = vmatprep.subr.mxu0 0.0
  %7689 = vmatpush2.msra.mxu0 0.0
  %7690 = vmatprep.subr.mxu0 0.0
  %7691 = vmatpush2.msra.mxu0 0.0
  %7692 = vmatprep.mubr.f32.mxu0 0.0
  %7693 = vmatmul.mubr.f32.gmra.mxu0 %v7626
  %v7694 = vpop.f32.mrf.mxu0
  %v7695 = vadd.f32 %v5909, %v7694
  %v7696 = vpop.f32.mrf.mxu0
  %7697 = vdwg.mxu0
  %7698 = vmatprep.subr.mxu0 0.0
  %7699 = vmatpush1.msra.mxu0 0.0
  %7700 = vmatprep.subr.mxu0 0.0
  %7701 = vmatpush1.msra.mxu0 0.0
  %7702 = vmatprep.subr.mxu0 0.0
  %7703 = vmatpush1.msra.mxu0 0.0
  %7704 = vmatprep.subr.mxu0 0.0
  %7705 = vmatpush1.msra.mxu0 0.0
  %7706 = vmatprep.subr.mxu0 0.0
  %7707 = vmatpush1.msra.mxu0 0.0
  %7708 = vmatprep.subr.mxu0 0.0
  %7709 = vmatpush1.msra.mxu0 0.0
  %7710 = vmatprep.subr.mxu0 0.0
  %7711 = vmatpush1.msra.mxu0 0.0
  %7712 = vmatprep.subr.mxu0 0.0
  %7713 = vmatpush1.msra.mxu0 0.0
  %7714 = vmatprep.subr.mxu0 0.0
  %7715 = vmatpush1.msra.mxu0 0.0
  %7716 = vmatprep.subr.mxu0 0.0
  %7717 = vmatpush1.msra.mxu0 0.0
  %7718 = vmatprep.subr.mxu0 0.0
  %7719 = vmatpush1.msra.mxu0 %v5901
  %7720 = vmatprep.subr.mxu0 0.0
  %7721 = vmatpush1.msra.mxu0 %v5900
  %7722 = vmatprep.subr.mxu0 0.0
  %7723 = vmatpush1.msra.mxu0 %v5899
  %7724 = vmatprep.subr.mxu0 0.0
  %7725 = vmatpush1.msra.mxu0 %v5898
  %7726 = vmatprep.subr.mxu0 0.0
  %7727 = vmatpush1.msra.mxu0 %v5897
  %7728 = vmatprep.subr.mxu0 0.0
  %7729 = vmatpush1.msra.mxu0 %v5896
  %7730 = vmatprep.subr.mxu0 0.0
  %7731 = vmatpush2.msra.mxu0 0.0
  %7732 = vmatprep.subr.mxu0 0.0
  %7733 = vmatpush2.msra.mxu0 0.0
  %7734 = vmatprep.subr.mxu0 0.0
  %7735 = vmatpush2.msra.mxu0 0.0
  %7736 = vmatprep.subr.mxu0 0.0
  %7737 = vmatpush2.msra.mxu0 0.0
  %7738 = vmatprep.subr.mxu0 0.0
  %7739 = vmatpush2.msra.mxu0 0.0
  %7740 = vmatprep.subr.mxu0 0.0
  %7741 = vmatpush2.msra.mxu0 0.0
  %7742 = vmatprep.subr.mxu0 0.0
  %7743 = vmatpush2.msra.mxu0 0.0
  %7744 = vmatprep.subr.mxu0 0.0
  %7745 = vmatpush2.msra.mxu0 0.0
  %7746 = vmatprep.subr.mxu0 0.0
  %7747 = vmatpush2.msra.mxu0 0.0
  %7748 = vmatprep.subr.mxu0 0.0
  %7749 = vmatpush2.msra.mxu0 0.0
  %7750 = vmatprep.subr.mxu0 0.0
  %7751 = vmatpush2.msra.mxu0 0.0
  %7752 = vmatprep.subr.mxu0 0.0
  %7753 = vmatpush2.msra.mxu0 0.0
  %7754 = vmatprep.subr.mxu0 0.0
  %7755 = vmatpush2.msra.mxu0 0.0
  %7756 = vmatprep.subr.mxu0 0.0
  %7757 = vmatpush2.msra.mxu0 0.0
  %7758 = vmatprep.subr.mxu0 0.0
  %7759 = vmatpush2.msra.mxu0 0.0
  %7760 = vmatprep.subr.mxu0 0.0
  %7761 = vmatpush2.msra.mxu0 0.0
  %7762 = vmatprep.mubr.f32.mxu0 0.0
  %7763 = vmatmul.mubr.f32.gmra.mxu0 %v7626
  %v7764 = vpop.f32.mrf.mxu0
  %v7765 = vadd.f32 %v5911, %v7764
  %v7766 = vpop.f32.mrf.mxu0
  %7767 = vdwg.mxu0
  %7768 = vmatprep.subr.mxu0 0.0
  %7769 = vmatpush1.msra.mxu0 0.0
  %7770 = vmatprep.subr.mxu0 0.0
  %7771 = vmatpush1.msra.mxu0 0.0
  %7772 = vmatprep.subr.mxu0 0.0
  %7773 = vmatpush1.msra.mxu0 0.0
  %7774 = vmatprep.subr.mxu0 0.0
  %7775 = vmatpush1.msra.mxu0 0.0
  %7776 = vmatprep.subr.mxu0 0.0
  %7777 = vmatpush1.msra.mxu0 0.0
  %7778 = vmatprep.subr.mxu0 0.0
  %7779 = vmatpush1.msra.mxu0 0.0
  %7780 = vmatprep.subr.mxu0 0.0
  %7781 = vmatpush1.msra.mxu0 0.0
  %7782 = vmatprep.subr.mxu0 0.0
  %7783 = vmatpush1.msra.mxu0 0.0
  %7784 = vmatprep.subr.mxu0 0.0
  %7785 = vmatpush1.msra.mxu0 0.0
  %7786 = vmatprep.subr.mxu0 0.0
  %7787 = vmatpush1.msra.mxu0 0.0
  %7788 = vmatprep.subr.mxu0 0.0
  %7789 = vmatpush1.msra.mxu0 %v5908
  %7790 = vmatprep.subr.mxu0 0.0
  %7791 = vmatpush1.msra.mxu0 %v5907
  %7792 = vmatprep.subr.mxu0 0.0
  %7793 = vmatpush1.msra.mxu0 %v5906
  %7794 = vmatprep.subr.mxu0 0.0
  %7795 = vmatpush1.msra.mxu0 %v5905
  %7796 = vmatprep.subr.mxu0 0.0
  %7797 = vmatpush1.msra.mxu0 %v5904
  %7798 = vmatprep.subr.mxu0 0.0
  %7799 = vmatpush1.msra.mxu0 %v5903
  %7800 = vmatprep.subr.mxu0 0.0
  %7801 = vmatpush2.msra.mxu0 0.0
  %7802 = vmatprep.subr.mxu0 0.0
  %7803 = vmatpush2.msra.mxu0 0.0
  %7804 = vmatprep.subr.mxu0 0.0
  %7805 = vmatpush2.msra.mxu0 0.0
  %7806 = vmatprep.subr.mxu0 0.0
  %7807 = vmatpush2.msra.mxu0 0.0
  %7808 = vmatprep.subr.mxu0 0.0
  %7809 = vmatpush2.msra.mxu0 0.0
  %7810 = vmatprep.subr.mxu0 0.0
  %7811 = vmatpush2.msra.mxu0 0.0
  %7812 = vmatprep.subr.mxu0 0.0
  %7813 = vmatpush2.msra.mxu0 0.0
  %7814 = vmatprep.subr.mxu0 0.0
  %7815 = vmatpush2.msra.mxu0 0.0
  %7816 = vmatprep.subr.mxu0 0.0
  %7817 = vmatpush2.msra.mxu0 0.0
  %7818 = vmatprep.subr.mxu0 0.0
  %7819 = vmatpush2.msra.mxu0 0.0
  %7820 = vmatprep.subr.mxu0 0.0
  %7821 = vmatpush2.msra.mxu0 0.0
  %7822 = vmatprep.subr.mxu0 0.0
  %7823 = vmatpush2.msra.mxu0 0.0
  %7824 = vmatprep.subr.mxu0 0.0
  %7825 = vmatpush2.msra.mxu0 0.0
  %7826 = vmatprep.subr.mxu0 0.0
  %7827 = vmatpush2.msra.mxu0 0.0
  %7828 = vmatprep.subr.mxu0 0.0
  %7829 = vmatpush2.msra.mxu0 0.0
  %7830 = vmatprep.subr.mxu0 0.0
  %7831 = vmatpush2.msra.mxu0 0.0
  %7832 = vmatprep.mubr.f32.mxu0 0.0
  %7833 = vmatmul.mubr.f32.gmra.mxu0 %v7626
  %v7834 = vpop.f32.mrf.mxu0
  %v7835 = vadd.f32 %v5913, %v7834
  %v7836 = vpop.f32.mrf.mxu0
  %7837 = vdwg.mxu0
  %v7839 = vrot.slane %v7695, 1
  %v7841 = vadd.f32 %v5701, %v7839
  %v7842 = vxor.u32 %v7841, 2147483648
  %v7843 = vmul.f32 %v7842, 1.442695
  %v7844 = vpow.pop %v7843
  %v7845 = vadd.f32 %v7844, 1.0
  %v7846 = vrcp.pop %v7845
  %v7847 = vmul.f32 1.0, %v7846
  %v7849 = vrot.slane %v7765, 1
  %v7851 = vadd.f32 %v5791, %v7849
  %v7852 = vxor.u32 %v7851, 2147483648
  %v7853 = vmul.f32 %v7852, 1.442695
  %v7854 = vpow.pop %v7853
  %v7855 = vadd.f32 %v7854, 1.0
  %v7856 = vrcp.pop %v7855
  %v7857 = vmul.f32 1.0, %v7856
  %v7859 = vrot.slane %v7835, 1
  %v7861 = vmul.f32 %v7847, %v7859
  %v7862 = vadd.f32 %v5881, %v7861
  %v7863 = vtanh.pop %v7862
  %v7864 = vsub.f32 1.0, %v7857
  %v7865 = vmul.f32 %v7864, %v7863
  %v7866 = vrot.slane %v7623, 7
  %v7868 = vmul.f32 %v7857, %v7866
  %v7869 = vadd.f32 %v7865, %v7868
  %v7871 = vrot.slane %v7869, 7
  %v7872 = vsel %vm518, %v7871, 0
  %7874 = vmatprep.subr.mxu0 0.0
  %7875 = vmatpush1.msra.mxu0 0.0
  %7876 = vmatprep.subr.mxu0 0.0
  %7877 = vmatpush1.msra.mxu0 0.0
  %7878 = vmatprep.subr.mxu0 0.0
  %7879 = vmatpush1.msra.mxu0 0.0
  %7880 = vmatprep.subr.mxu0 0.0
  %7881 = vmatpush1.msra.mxu0 0.0
  %7882 = vmatprep.subr.mxu0 0.0
  %7883 = vmatpush1.msra.mxu0 0.0
  %7884 = vmatprep.subr.mxu0 0.0
  %7885 = vmatpush1.msra.mxu0 0.0
  %7886 = vmatprep.subr.mxu0 0.0
  %7887 = vmatpush1.msra.mxu0 0.0
  %7888 = vmatprep.subr.mxu0 0.0
  %7889 = vmatpush1.msra.mxu0 0.0
  %7890 = vmatprep.subr.mxu0 0.0
  %7891 = vmatpush1.msra.mxu0 0.0
  %7892 = vmatprep.subr.mxu0 0.0
  %7893 = vmatpush1.msra.mxu0 0.0
  %7894 = vmatprep.subr.mxu0 0.0
  %7895 = vmatpush1.msra.mxu0 %v5894
  %7896 = vmatprep.subr.mxu0 0.0
  %7897 = vmatpush1.msra.mxu0 %v5893
  %7898 = vmatprep.subr.mxu0 0.0
  %7899 = vmatpush1.msra.mxu0 %v5892
  %7900 = vmatprep.subr.mxu0 0.0
  %7901 = vmatpush1.msra.mxu0 %v5891
  %7902 = vmatprep.subr.mxu0 0.0
  %7903 = vmatpush1.msra.mxu0 %v5890
  %7904 = vmatprep.subr.mxu0 0.0
  %7905 = vmatpush1.msra.mxu0 %v5889
  %7906 = vmatprep.subr.mxu0 0.0
  %7907 = vmatpush2.msra.mxu0 0.0
  %7908 = vmatprep.subr.mxu0 0.0
  %7909 = vmatpush2.msra.mxu0 0.0
  %7910 = vmatprep.subr.mxu0 0.0
  %7911 = vmatpush2.msra.mxu0 0.0
  %7912 = vmatprep.subr.mxu0 0.0
  %7913 = vmatpush2.msra.mxu0 0.0
  %7914 = vmatprep.subr.mxu0 0.0
  %7915 = vmatpush2.msra.mxu0 0.0
  %7916 = vmatprep.subr.mxu0 0.0
  %7917 = vmatpush2.msra.mxu0 0.0
  %7918 = vmatprep.subr.mxu0 0.0
  %7919 = vmatpush2.msra.mxu0 0.0
  %7920 = vmatprep.subr.mxu0 0.0
  %7921 = vmatpush2.msra.mxu0 0.0
  %7922 = vmatprep.subr.mxu0 0.0
  %7923 = vmatpush2.msra.mxu0 0.0
  %7924 = vmatprep.subr.mxu0 0.0
  %7925 = vmatpush2.msra.mxu0 0.0
  %7926 = vmatprep.subr.mxu0 0.0
  %7927 = vmatpush2.msra.mxu0 0.0
  %7928 = vmatprep.subr.mxu0 0.0
  %7929 = vmatpush2.msra.mxu0 0.0
  %7930 = vmatprep.subr.mxu0 0.0
  %7931 = vmatpush2.msra.mxu0 0.0
  %7932 = vmatprep.subr.mxu0 0.0
  %7933 = vmatpush2.msra.mxu0 0.0
  %7934 = vmatprep.subr.mxu0 0.0
  %7935 = vmatpush2.msra.mxu0 0.0
  %7936 = vmatprep.subr.mxu0 0.0
  %7937 = vmatpush2.msra.mxu0 0.0
  %7938 = vmatprep.mubr.f32.mxu0 0.0
  %7939 = vmatmul.mubr.f32.gmra.mxu0 %v7872
  %v7940 = vpop.f32.mrf.mxu0
  %v7941 = vadd.f32 %v5909, %v7940
  %v7942 = vpop.f32.mrf.mxu0
  %7943 = vdwg.mxu0
  %7944 = vmatprep.subr.mxu0 0.0
  %7945 = vmatpush1.msra.mxu0 0.0
  %7946 = vmatprep.subr.mxu0 0.0
  %7947 = vmatpush1.msra.mxu0 0.0
  %7948 = vmatprep.subr.mxu0 0.0
  %7949 = vmatpush1.msra.mxu0 0.0
  %7950 = vmatprep.subr.mxu0 0.0
  %7951 = vmatpush1.msra.mxu0 0.0
  %7952 = vmatprep.subr.mxu0 0.0
  %7953 = vmatpush1.msra.mxu0 0.0
  %7954 = vmatprep.subr.mxu0 0.0
  %7955 = vmatpush1.msra.mxu0 0.0
  %7956 = vmatprep.subr.mxu0 0.0
  %7957 = vmatpush1.msra.mxu0 0.0
  %7958 = vmatprep.subr.mxu0 0.0
  %7959 = vmatpush1.msra.mxu0 0.0
  %7960 = vmatprep.subr.mxu0 0.0
  %7961 = vmatpush1.msra.mxu0 0.0
  %7962 = vmatprep.subr.mxu0 0.0
  %7963 = vmatpush1.msra.mxu0 0.0
  %7964 = vmatprep.subr.mxu0 0.0
  %7965 = vmatpush1.msra.mxu0 %v5901
  %7966 = vmatprep.subr.mxu0 0.0
  %7967 = vmatpush1.msra.mxu0 %v5900
  %7968 = vmatprep.subr.mxu0 0.0
  %7969 = vmatpush1.msra.mxu0 %v5899
  %7970 = vmatprep.subr.mxu0 0.0
  %7971 = vmatpush1.msra.mxu0 %v5898
  %7972 = vmatprep.subr.mxu0 0.0
  %7973 = vmatpush1.msra.mxu0 %v5897
  %7974 = vmatprep.subr.mxu0 0.0
  %7975 = vmatpush1.msra.mxu0 %v5896
  %7976 = vmatprep.subr.mxu0 0.0
  %7977 = vmatpush2.msra.mxu0 0.0
  %7978 = vmatprep.subr.mxu0 0.0
  %7979 = vmatpush2.msra.mxu0 0.0
  %7980 = vmatprep.subr.mxu0 0.0
  %7981 = vmatpush2.msra.mxu0 0.0
  %7982 = vmatprep.subr.mxu0 0.0
  %7983 = vmatpush2.msra.mxu0 0.0
  %7984 = vmatprep.subr.mxu0 0.0
  %7985 = vmatpush2.msra.mxu0 0.0
  %7986 = vmatprep.subr.mxu0 0.0
  %7987 = vmatpush2.msra.mxu0 0.0
  %7988 = vmatprep.subr.mxu0 0.0
  %7989 = vmatpush2.msra.mxu0 0.0
  %7990 = vmatprep.subr.mxu0 0.0
  %7991 = vmatpush2.msra.mxu0 0.0
  %7992 = vmatprep.subr.mxu0 0.0
  %7993 = vmatpush2.msra.mxu0 0.0
  %7994 = vmatprep.subr.mxu0 0.0
  %7995 = vmatpush2.msra.mxu0 0.0
  %7996 = vmatprep.subr.mxu0 0.0
  %7997 = vmatpush2.msra.mxu0 0.0
  %7998 = vmatprep.subr.mxu0 0.0
  %7999 = vmatpush2.msra.mxu0 0.0
  %8000 = vmatprep.subr.mxu0 0.0
  %8001 = vmatpush2.msra.mxu0 0.0
  %8002 = vmatprep.subr.mxu0 0.0
  %8003 = vmatpush2.msra.mxu0 0.0
  %8004 = vmatprep.subr.mxu0 0.0
  %8005 = vmatpush2.msra.mxu0 0.0
  %8006 = vmatprep.subr.mxu0 0.0
  %8007 = vmatpush2.msra.mxu0 0.0
  %8008 = vmatprep.mubr.f32.mxu0 0.0
  %8009 = vmatmul.mubr.f32.gmra.mxu0 %v7872
  %v8010 = vpop.f32.mrf.mxu0
  %v8011 = vadd.f32 %v5911, %v8010
  %v8012 = vpop.f32.mrf.mxu0
  %8013 = vdwg.mxu0
  %8014 = vmatprep.subr.mxu0 0.0
  %8015 = vmatpush1.msra.mxu0 0.0
  %8016 = vmatprep.subr.mxu0 0.0
  %8017 = vmatpush1.msra.mxu0 0.0
  %8018 = vmatprep.subr.mxu0 0.0
  %8019 = vmatpush1.msra.mxu0 0.0
  %8020 = vmatprep.subr.mxu0 0.0
  %8021 = vmatpush1.msra.mxu0 0.0
  %8022 = vmatprep.subr.mxu0 0.0
  %8023 = vmatpush1.msra.mxu0 0.0
  %8024 = vmatprep.subr.mxu0 0.0
  %8025 = vmatpush1.msra.mxu0 0.0
  %8026 = vmatprep.subr.mxu0 0.0
  %8027 = vmatpush1.msra.mxu0 0.0
  %8028 = vmatprep.subr.mxu0 0.0
  %8029 = vmatpush1.msra.mxu0 0.0
  %8030 = vmatprep.subr.mxu0 0.0
  %8031 = vmatpush1.msra.mxu0 0.0
  %8032 = vmatprep.subr.mxu0 0.0
  %8033 = vmatpush1.msra.mxu0 0.0
  %8034 = vmatprep.subr.mxu0 0.0
  %8035 = vmatpush1.msra.mxu0 %v5908
  %8036 = vmatprep.subr.mxu0 0.0
  %8037 = vmatpush1.msra.mxu0 %v5907
  %8038 = vmatprep.subr.mxu0 0.0
  %8039 = vmatpush1.msra.mxu0 %v5906
  %8040 = vmatprep.subr.mxu0 0.0
  %8041 = vmatpush1.msra.mxu0 %v5905
  %8042 = vmatprep.subr.mxu0 0.0
  %8043 = vmatpush1.msra.mxu0 %v5904
  %8044 = vmatprep.subr.mxu0 0.0
  %8045 = vmatpush1.msra.mxu0 %v5903
  %8046 = vmatprep.subr.mxu0 0.0
  %8047 = vmatpush2.msra.mxu0 0.0
  %8048 = vmatprep.subr.mxu0 0.0
  %8049 = vmatpush2.msra.mxu0 0.0
  %8050 = vmatprep.subr.mxu0 0.0
  %8051 = vmatpush2.msra.mxu0 0.0
  %8052 = vmatprep.subr.mxu0 0.0
  %8053 = vmatpush2.msra.mxu0 0.0
  %8054 = vmatprep.subr.mxu0 0.0
  %8055 = vmatpush2.msra.mxu0 0.0
  %8056 = vmatprep.subr.mxu0 0.0
  %8057 = vmatpush2.msra.mxu0 0.0
  %8058 = vmatprep.subr.mxu0 0.0
  %8059 = vmatpush2.msra.mxu0 0.0
  %8060 = vmatprep.subr.mxu0 0.0
  %8061 = vmatpush2.msra.mxu0 0.0
  %8062 = vmatprep.subr.mxu0 0.0
  %8063 = vmatpush2.msra.mxu0 0.0
  %8064 = vmatprep.subr.mxu0 0.0
  %8065 = vmatpush2.msra.mxu0 0.0
  %8066 = vmatprep.subr.mxu0 0.0
  %8067 = vmatpush2.msra.mxu0 0.0
  %8068 = vmatprep.subr.mxu0 0.0
  %8069 = vmatpush2.msra.mxu0 0.0
  %8070 = vmatprep.subr.mxu0 0.0
  %8071 = vmatpush2.msra.mxu0 0.0
  %8072 = vmatprep.subr.mxu0 0.0
  %8073 = vmatpush2.msra.mxu0 0.0
  %8074 = vmatprep.subr.mxu0 0.0
  %8075 = vmatpush2.msra.mxu0 0.0
  %8076 = vmatprep.subr.mxu0 0.0
  %8077 = vmatpush2.msra.mxu0 0.0
  %8078 = vmatprep.mubr.f32.mxu0 0.0
  %8079 = vmatmul.mubr.f32.gmra.mxu0 %v7872
  %v8080 = vpop.f32.mrf.mxu0
  %v8081 = vadd.f32 %v5913, %v8080
  %v8082 = vpop.f32.mrf.mxu0
  %8083 = vdwg.mxu0
  %v8084 = vadd.f32 %v5706, %v7941
  %v8085 = vxor.u32 %v8084, 2147483648
  %v8086 = vmul.f32 %v8085, 1.442695
  %v8087 = vpow.pop %v8086
  %v8088 = vadd.f32 %v8087, 1.0
  %v8089 = vrcp.pop %v8088
  %v8090 = vmul.f32 1.0, %v8089
  %v8091 = vadd.f32 %v5796, %v8011
  %v8092 = vxor.u32 %v8091, 2147483648
  %v8093 = vmul.f32 %v8092, 1.442695
  %v8094 = vpow.pop %v8093
  %v8095 = vadd.f32 %v8094, 1.0
  %v8096 = vrcp.pop %v8095
  %v8097 = vmul.f32 1.0, %v8096
  %v8098 = vmul.f32 %v8090, %v8081
  %v8099 = vadd.f32 %v5886, %v8098
  %v8100 = vtanh.pop %v8099
  %v8101 = vsub.f32 1.0, %v8097
  %v8102 = vmul.f32 %v8101, %v8100
  %v8104 = vmul.f32 %v8097, %v7871
  %v8105 = vadd.f32 %v8102, %v8104
  %v8107 = vsel %vm518, %v8105, 0
  %8109 = vmatprep.subr.mxu0 0.0
  %8110 = vmatpush1.msra.mxu0 0.0
  %8111 = vmatprep.subr.mxu0 0.0
  %8112 = vmatpush1.msra.mxu0 0.0
  %8113 = vmatprep.subr.mxu0 0.0
  %8114 = vmatpush1.msra.mxu0 0.0
  %8115 = vmatprep.subr.mxu0 0.0
  %8116 = vmatpush1.msra.mxu0 0.0
  %8117 = vmatprep.subr.mxu0 0.0
  %8118 = vmatpush1.msra.mxu0 0.0
  %8119 = vmatprep.subr.mxu0 0.0
  %8120 = vmatpush1.msra.mxu0 0.0
  %8121 = vmatprep.subr.mxu0 0.0
  %8122 = vmatpush1.msra.mxu0 0.0
  %8123 = vmatprep.subr.mxu0 0.0
  %8124 = vmatpush1.msra.mxu0 0.0
  %8125 = vmatprep.subr.mxu0 0.0
  %8126 = vmatpush1.msra.mxu0 0.0
  %8127 = vmatprep.subr.mxu0 0.0
  %8128 = vmatpush1.msra.mxu0 0.0
  %8129 = vmatprep.subr.mxu0 0.0
  %8130 = vmatpush1.msra.mxu0 %v5894
  %8131 = vmatprep.subr.mxu0 0.0
  %8132 = vmatpush1.msra.mxu0 %v5893
  %8133 = vmatprep.subr.mxu0 0.0
  %8134 = vmatpush1.msra.mxu0 %v5892
  %8135 = vmatprep.subr.mxu0 0.0
  %8136 = vmatpush1.msra.mxu0 %v5891
  %8137 = vmatprep.subr.mxu0 0.0
  %8138 = vmatpush1.msra.mxu0 %v5890
  %8139 = vmatprep.subr.mxu0 0.0
  %8140 = vmatpush1.msra.mxu0 %v5889
  %8141 = vmatprep.subr.mxu0 0.0
  %8142 = vmatpush2.msra.mxu0 0.0
  %8143 = vmatprep.subr.mxu0 0.0
  %8144 = vmatpush2.msra.mxu0 0.0
  %8145 = vmatprep.subr.mxu0 0.0
  %8146 = vmatpush2.msra.mxu0 0.0
  %8147 = vmatprep.subr.mxu0 0.0
  %8148 = vmatpush2.msra.mxu0 0.0
  %8149 = vmatprep.subr.mxu0 0.0
  %8150 = vmatpush2.msra.mxu0 0.0
  %8151 = vmatprep.subr.mxu0 0.0
  %8152 = vmatpush2.msra.mxu0 0.0
  %8153 = vmatprep.subr.mxu0 0.0
  %8154 = vmatpush2.msra.mxu0 0.0
  %8155 = vmatprep.subr.mxu0 0.0
  %8156 = vmatpush2.msra.mxu0 0.0
  %8157 = vmatprep.subr.mxu0 0.0
  %8158 = vmatpush2.msra.mxu0 0.0
  %8159 = vmatprep.subr.mxu0 0.0
  %8160 = vmatpush2.msra.mxu0 0.0
  %8161 = vmatprep.subr.mxu0 0.0
  %8162 = vmatpush2.msra.mxu0 0.0
  %8163 = vmatprep.subr.mxu0 0.0
  %8164 = vmatpush2.msra.mxu0 0.0
  %8165 = vmatprep.subr.mxu0 0.0
  %8166 = vmatpush2.msra.mxu0 0.0
  %8167 = vmatprep.subr.mxu0 0.0
  %8168 = vmatpush2.msra.mxu0 0.0
  %8169 = vmatprep.subr.mxu0 0.0
  %8170 = vmatpush2.msra.mxu0 0.0
  %8171 = vmatprep.subr.mxu0 0.0
  %8172 = vmatpush2.msra.mxu0 0.0
  %8173 = vmatprep.mubr.f32.mxu0 0.0
  %8174 = vmatmul.mubr.f32.gmra.mxu0 %v8107
  %v8175 = vpop.f32.mrf.mxu0
  %v8176 = vadd.f32 %v5909, %v8175
  %v8177 = vpop.f32.mrf.mxu0
  %8178 = vdwg.mxu0
  %8179 = vmatprep.subr.mxu0 0.0
  %8180 = vmatpush1.msra.mxu0 0.0
  %8181 = vmatprep.subr.mxu0 0.0
  %8182 = vmatpush1.msra.mxu0 0.0
  %8183 = vmatprep.subr.mxu0 0.0
  %8184 = vmatpush1.msra.mxu0 0.0
  %8185 = vmatprep.subr.mxu0 0.0
  %8186 = vmatpush1.msra.mxu0 0.0
  %8187 = vmatprep.subr.mxu0 0.0
  %8188 = vmatpush1.msra.mxu0 0.0
  %8189 = vmatprep.subr.mxu0 0.0
  %8190 = vmatpush1.msra.mxu0 0.0
  %8191 = vmatprep.subr.mxu0 0.0
  %8192 = vmatpush1.msra.mxu0 0.0
  %8193 = vmatprep.subr.mxu0 0.0
  %8194 = vmatpush1.msra.mxu0 0.0
  %8195 = vmatprep.subr.mxu0 0.0
  %8196 = vmatpush1.msra.mxu0 0.0
  %8197 = vmatprep.subr.mxu0 0.0
  %8198 = vmatpush1.msra.mxu0 0.0
  %8199 = vmatprep.subr.mxu0 0.0
  %8200 = vmatpush1.msra.mxu0 %v5901
  %8201 = vmatprep.subr.mxu0 0.0
  %8202 = vmatpush1.msra.mxu0 %v5900
  %8203 = vmatprep.subr.mxu0 0.0
  %8204 = vmatpush1.msra.mxu0 %v5899
  %8205 = vmatprep.subr.mxu0 0.0
  %8206 = vmatpush1.msra.mxu0 %v5898
  %8207 = vmatprep.subr.mxu0 0.0
  %8208 = vmatpush1.msra.mxu0 %v5897
  %8209 = vmatprep.subr.mxu0 0.0
  %8210 = vmatpush1.msra.mxu0 %v5896
  %8211 = vmatprep.subr.mxu0 0.0
  %8212 = vmatpush2.msra.mxu0 0.0
  %8213 = vmatprep.subr.mxu0 0.0
  %8214 = vmatpush2.msra.mxu0 0.0
  %8215 = vmatprep.subr.mxu0 0.0
  %8216 = vmatpush2.msra.mxu0 0.0
  %8217 = vmatprep.subr.mxu0 0.0
  %8218 = vmatpush2.msra.mxu0 0.0
  %8219 = vmatprep.subr.mxu0 0.0
  %8220 = vmatpush2.msra.mxu0 0.0
  %8221 = vmatprep.subr.mxu0 0.0
  %8222 = vmatpush2.msra.mxu0 0.0
  %8223 = vmatprep.subr.mxu0 0.0
  %8224 = vmatpush2.msra.mxu0 0.0
  %8225 = vmatprep.subr.mxu0 0.0
  %8226 = vmatpush2.msra.mxu0 0.0
  %8227 = vmatprep.subr.mxu0 0.0
  %8228 = vmatpush2.msra.mxu0 0.0
  %8229 = vmatprep.subr.mxu0 0.0
  %8230 = vmatpush2.msra.mxu0 0.0
  %8231 = vmatprep.subr.mxu0 0.0
  %8232 = vmatpush2.msra.mxu0 0.0
  %8233 = vmatprep.subr.mxu0 0.0
  %8234 = vmatpush2.msra.mxu0 0.0
  %8235 = vmatprep.subr.mxu0 0.0
  %8236 = vmatpush2.msra.mxu0 0.0
  %8237 = vmatprep.subr.mxu0 0.0
  %8238 = vmatpush2.msra.mxu0 0.0
  %8239 = vmatprep.subr.mxu0 0.0
  %8240 = vmatpush2.msra.mxu0 0.0
  %8241 = vmatprep.subr.mxu0 0.0
  %8242 = vmatpush2.msra.mxu0 0.0
  %8243 = vmatprep.mubr.f32.mxu0 0.0
  %8244 = vmatmul.mubr.f32.gmra.mxu0 %v8107
  %v8245 = vpop.f32.mrf.mxu0
  %v8246 = vadd.f32 %v5911, %v8245
  %v8247 = vpop.f32.mrf.mxu0
  %8248 = vdwg.mxu0
  %8249 = vmatprep.subr.mxu0 0.0
  %8250 = vmatpush1.msra.mxu0 0.0
  %8251 = vmatprep.subr.mxu0 0.0
  %8252 = vmatpush1.msra.mxu0 0.0
  %8253 = vmatprep.subr.mxu0 0.0
  %8254 = vmatpush1.msra.mxu0 0.0
  %8255 = vmatprep.subr.mxu0 0.0
  %8256 = vmatpush1.msra.mxu0 0.0
  %8257 = vmatprep.subr.mxu0 0.0
  %8258 = vmatpush1.msra.mxu0 0.0
  %8259 = vmatprep.subr.mxu0 0.0
  %8260 = vmatpush1.msra.mxu0 0.0
  %8261 = vmatprep.subr.mxu0 0.0
  %8262 = vmatpush1.msra.mxu0 0.0
  %8263 = vmatprep.subr.mxu0 0.0
  %8264 = vmatpush1.msra.mxu0 0.0
  %8265 = vmatprep.subr.mxu0 0.0
  %8266 = vmatpush1.msra.mxu0 0.0
  %8267 = vmatprep.subr.mxu0 0.0
  %8268 = vmatpush1.msra.mxu0 0.0
  %8269 = vmatprep.subr.mxu0 0.0
  %8270 = vmatpush1.msra.mxu0 %v5908
  %8271 = vmatprep.subr.mxu0 0.0
  %8272 = vmatpush1.msra.mxu0 %v5907
  %8273 = vmatprep.subr.mxu0 0.0
  %8274 = vmatpush1.msra.mxu0 %v5906
  %8275 = vmatprep.subr.mxu0 0.0
  %8276 = vmatpush1.msra.mxu0 %v5905
  %8277 = vmatprep.subr.mxu0 0.0
  %8278 = vmatpush1.msra.mxu0 %v5904
  %8279 = vmatprep.subr.mxu0 0.0
  %8280 = vmatpush1.msra.mxu0 %v5903
  %8281 = vmatprep.subr.mxu0 0.0
  %8282 = vmatpush2.msra.mxu0 0.0
  %8283 = vmatprep.subr.mxu0 0.0
  %8284 = vmatpush2.msra.mxu0 0.0
  %8285 = vmatprep.subr.mxu0 0.0
  %8286 = vmatpush2.msra.mxu0 0.0
  %8287 = vmatprep.subr.mxu0 0.0
  %8288 = vmatpush2.msra.mxu0 0.0
  %8289 = vmatprep.subr.mxu0 0.0
  %8290 = vmatpush2.msra.mxu0 0.0
  %8291 = vmatprep.subr.mxu0 0.0
  %8292 = vmatpush2.msra.mxu0 0.0
  %8293 = vmatprep.subr.mxu0 0.0
  %8294 = vmatpush2.msra.mxu0 0.0
  %8295 = vmatprep.subr.mxu0 0.0
  %8296 = vmatpush2.msra.mxu0 0.0
  %8297 = vmatprep.subr.mxu0 0.0
  %8298 = vmatpush2.msra.mxu0 0.0
  %8299 = vmatprep.subr.mxu0 0.0
  %8300 = vmatpush2.msra.mxu0 0.0
  %8301 = vmatprep.subr.mxu0 0.0
  %8302 = vmatpush2.msra.mxu0 0.0
  %8303 = vmatprep.subr.mxu0 0.0
  %8304 = vmatpush2.msra.mxu0 0.0
  %8305 = vmatprep.subr.mxu0 0.0
  %8306 = vmatpush2.msra.mxu0 0.0
  %8307 = vmatprep.subr.mxu0 0.0
  %8308 = vmatpush2.msra.mxu0 0.0
  %8309 = vmatprep.subr.mxu0 0.0
  %8310 = vmatpush2.msra.mxu0 0.0
  %8311 = vmatprep.subr.mxu0 0.0
  %8312 = vmatpush2.msra.mxu0 0.0
  %8313 = vmatprep.mubr.f32.mxu0 0.0
  %8314 = vmatmul.mubr.f32.gmra.mxu0 %v8107
  %v8315 = vpop.f32.mrf.mxu0
  %v8316 = vadd.f32 %v5913, %v8315
  %v8317 = vpop.f32.mrf.mxu0
  %8318 = vdwg.mxu0
  %v8320 = vrot.slane %v8176, 7
  %v8322 = vadd.f32 %v5706, %v8320
  %v8323 = vxor.u32 %v8322, 2147483648
  %v8324 = vmul.f32 %v8323, 1.442695
  %v8325 = vpow.pop %v8324
  %v8326 = vadd.f32 %v8325, 1.0
  %v8327 = vrcp.pop %v8326
  %v8328 = vmul.f32 1.0, %v8327
  %v8330 = vrot.slane %v8246, 7
  %v8332 = vadd.f32 %v5796, %v8330
  %v8333 = vxor.u32 %v8332, 2147483648
  %v8334 = vmul.f32 %v8333, 1.442695
  %v8335 = vpow.pop %v8334
  %v8336 = vadd.f32 %v8335, 1.0
  %v8337 = vrcp.pop %v8336
  %v8338 = vmul.f32 1.0, %v8337
  %v8340 = vrot.slane %v8316, 7
  %v8342 = vmul.f32 %v8328, %v8340
  %v8343 = vadd.f32 %v5886, %v8342
  %v8344 = vtanh.pop %v8343
  %v8345 = vsub.f32 1.0, %v8338
  %v8346 = vmul.f32 %v8345, %v8344
  %v8347 = vrot.slane %v8105, 7
  %v8349 = vmul.f32 %v8338, %v8347
  %v8350 = vadd.f32 %v8346, %v8349
  %v8352 = vrot.slane %v8350, 1
  %v8353 = vsel %vm518, %v8352, 0
  %8355 = vmatprep.subr.mxu0 0.0
  %8356 = vmatpush1.msra.mxu0 0.0
  %8357 = vmatprep.subr.mxu0 0.0
  %8358 = vmatpush1.msra.mxu0 0.0
  %8359 = vmatprep.subr.mxu0 0.0
  %8360 = vmatpush1.msra.mxu0 0.0
  %8361 = vmatprep.subr.mxu0 0.0
  %8362 = vmatpush1.msra.mxu0 0.0
  %8363 = vmatprep.subr.mxu0 0.0
  %8364 = vmatpush1.msra.mxu0 0.0
  %8365 = vmatprep.subr.mxu0 0.0
  %8366 = vmatpush1.msra.mxu0 0.0
  %8367 = vmatprep.subr.mxu0 0.0
  %8368 = vmatpush1.msra.mxu0 0.0
  %8369 = vmatprep.subr.mxu0 0.0
  %8370 = vmatpush1.msra.mxu0 0.0
  %8371 = vmatprep.subr.mxu0 0.0
  %8372 = vmatpush1.msra.mxu0 0.0
  %8373 = vmatprep.subr.mxu0 0.0
  %8374 = vmatpush1.msra.mxu0 0.0
  %8375 = vmatprep.subr.mxu0 0.0
  %8376 = vmatpush1.msra.mxu0 %v5894
  %8377 = vmatprep.subr.mxu0 0.0
  %8378 = vmatpush1.msra.mxu0 %v5893
  %8379 = vmatprep.subr.mxu0 0.0
  %8380 = vmatpush1.msra.mxu0 %v5892
  %8381 = vmatprep.subr.mxu0 0.0
  %8382 = vmatpush1.msra.mxu0 %v5891
  %8383 = vmatprep.subr.mxu0 0.0
  %8384 = vmatpush1.msra.mxu0 %v5890
  %8385 = vmatprep.subr.mxu0 0.0
  %8386 = vmatpush1.msra.mxu0 %v5889
  %8387 = vmatprep.subr.mxu0 0.0
  %8388 = vmatpush2.msra.mxu0 0.0
  %8389 = vmatprep.subr.mxu0 0.0
  %8390 = vmatpush2.msra.mxu0 0.0
  %8391 = vmatprep.subr.mxu0 0.0
  %8392 = vmatpush2.msra.mxu0 0.0
  %8393 = vmatprep.subr.mxu0 0.0
  %8394 = vmatpush2.msra.mxu0 0.0
  %8395 = vmatprep.subr.mxu0 0.0
  %8396 = vmatpush2.msra.mxu0 0.0
  %8397 = vmatprep.subr.mxu0 0.0
  %8398 = vmatpush2.msra.mxu0 0.0
  %8399 = vmatprep.subr.mxu0 0.0
  %8400 = vmatpush2.msra.mxu0 0.0
  %8401 = vmatprep.subr.mxu0 0.0
  %8402 = vmatpush2.msra.mxu0 0.0
  %8403 = vmatprep.subr.mxu0 0.0
  %8404 = vmatpush2.msra.mxu0 0.0
  %8405 = vmatprep.subr.mxu0 0.0
  %8406 = vmatpush2.msra.mxu0 0.0
  %8407 = vmatprep.subr.mxu0 0.0
  %8408 = vmatpush2.msra.mxu0 0.0
  %8409 = vmatprep.subr.mxu0 0.0
  %8410 = vmatpush2.msra.mxu0 0.0
  %8411 = vmatprep.subr.mxu0 0.0
  %8412 = vmatpush2.msra.mxu0 0.0
  %8413 = vmatprep.subr.mxu0 0.0
  %8414 = vmatpush2.msra.mxu0 0.0
  %8415 = vmatprep.subr.mxu0 0.0
  %8416 = vmatpush2.msra.mxu0 0.0
  %8417 = vmatprep.subr.mxu0 0.0
  %8418 = vmatpush2.msra.mxu0 0.0
  %8419 = vmatprep.mubr.f32.mxu0 0.0
  %8420 = vmatmul.mubr.f32.gmra.mxu0 %v8353
  %v8421 = vpop.f32.mrf.mxu0
  %v8422 = vadd.f32 %v5909, %v8421
  %v8423 = vpop.f32.mrf.mxu0
  %8424 = vdwg.mxu0
  %8425 = vmatprep.subr.mxu0 0.0
  %8426 = vmatpush1.msra.mxu0 0.0
  %8427 = vmatprep.subr.mxu0 0.0
  %8428 = vmatpush1.msra.mxu0 0.0
  %8429 = vmatprep.subr.mxu0 0.0
  %8430 = vmatpush1.msra.mxu0 0.0
  %8431 = vmatprep.subr.mxu0 0.0
  %8432 = vmatpush1.msra.mxu0 0.0
  %8433 = vmatprep.subr.mxu0 0.0
  %8434 = vmatpush1.msra.mxu0 0.0
  %8435 = vmatprep.subr.mxu0 0.0
  %8436 = vmatpush1.msra.mxu0 0.0
  %8437 = vmatprep.subr.mxu0 0.0
  %8438 = vmatpush1.msra.mxu0 0.0
  %8439 = vmatprep.subr.mxu0 0.0
  %8440 = vmatpush1.msra.mxu0 0.0
  %8441 = vmatprep.subr.mxu0 0.0
  %8442 = vmatpush1.msra.mxu0 0.0
  %8443 = vmatprep.subr.mxu0 0.0
  %8444 = vmatpush1.msra.mxu0 0.0
  %8445 = vmatprep.subr.mxu0 0.0
  %8446 = vmatpush1.msra.mxu0 %v5901
  %8447 = vmatprep.subr.mxu0 0.0
  %8448 = vmatpush1.msra.mxu0 %v5900
  %8449 = vmatprep.subr.mxu0 0.0
  %8450 = vmatpush1.msra.mxu0 %v5899
  %8451 = vmatprep.subr.mxu0 0.0
  %8452 = vmatpush1.msra.mxu0 %v5898
  %8453 = vmatprep.subr.mxu0 0.0
  %8454 = vmatpush1.msra.mxu0 %v5897
  %8455 = vmatprep.subr.mxu0 0.0
  %8456 = vmatpush1.msra.mxu0 %v5896
  %8457 = vmatprep.subr.mxu0 0.0
  %8458 = vmatpush2.msra.mxu0 0.0
  %8459 = vmatprep.subr.mxu0 0.0
  %8460 = vmatpush2.msra.mxu0 0.0
  %8461 = vmatprep.subr.mxu0 0.0
  %8462 = vmatpush2.msra.mxu0 0.0
  %8463 = vmatprep.subr.mxu0 0.0
  %8464 = vmatpush2.msra.mxu0 0.0
  %8465 = vmatprep.subr.mxu0 0.0
  %8466 = vmatpush2.msra.mxu0 0.0
  %8467 = vmatprep.subr.mxu0 0.0
  %8468 = vmatpush2.msra.mxu0 0.0
  %8469 = vmatprep.subr.mxu0 0.0
  %8470 = vmatpush2.msra.mxu0 0.0
  %8471 = vmatprep.subr.mxu0 0.0
  %8472 = vmatpush2.msra.mxu0 0.0
  %8473 = vmatprep.subr.mxu0 0.0
  %8474 = vmatpush2.msra.mxu0 0.0
  %8475 = vmatprep.subr.mxu0 0.0
  %8476 = vmatpush2.msra.mxu0 0.0
  %8477 = vmatprep.subr.mxu0 0.0
  %8478 = vmatpush2.msra.mxu0 0.0
  %8479 = vmatprep.subr.mxu0 0.0
  %8480 = vmatpush2.msra.mxu0 0.0
  %8481 = vmatprep.subr.mxu0 0.0
  %8482 = vmatpush2.msra.mxu0 0.0
  %8483 = vmatprep.subr.mxu0 0.0
  %8484 = vmatpush2.msra.mxu0 0.0
  %8485 = vmatprep.subr.mxu0 0.0
  %8486 = vmatpush2.msra.mxu0 0.0
  %8487 = vmatprep.subr.mxu0 0.0
  %8488 = vmatpush2.msra.mxu0 0.0
  %8489 = vmatprep.mubr.f32.mxu0 0.0
  %8490 = vmatmul.mubr.f32.gmra.mxu0 %v8353
  %v8491 = vpop.f32.mrf.mxu0
  %v8492 = vadd.f32 %v5911, %v8491
  %v8493 = vpop.f32.mrf.mxu0
  %8494 = vdwg.mxu0
  %8495 = vmatprep.subr.mxu0 0.0
  %8496 = vmatpush1.msra.mxu0 0.0
  %8497 = vmatprep.subr.mxu0 0.0
  %8498 = vmatpush1.msra.mxu0 0.0
  %8499 = vmatprep.subr.mxu0 0.0
  %8500 = vmatpush1.msra.mxu0 0.0
  %8501 = vmatprep.subr.mxu0 0.0
  %8502 = vmatpush1.msra.mxu0 0.0
  %8503 = vmatprep.subr.mxu0 0.0
  %8504 = vmatpush1.msra.mxu0 0.0
  %8505 = vmatprep.subr.mxu0 0.0
  %8506 = vmatpush1.msra.mxu0 0.0
  %8507 = vmatprep.subr.mxu0 0.0
  %8508 = vmatpush1.msra.mxu0 0.0
  %8509 = vmatprep.subr.mxu0 0.0
  %8510 = vmatpush1.msra.mxu0 0.0
  %8511 = vmatprep.subr.mxu0 0.0
  %8512 = vmatpush1.msra.mxu0 0.0
  %8513 = vmatprep.subr.mxu0 0.0
  %8514 = vmatpush1.msra.mxu0 0.0
  %8515 = vmatprep.subr.mxu0 0.0
  %8516 = vmatpush1.msra.mxu0 %v5908
  %8517 = vmatprep.subr.mxu0 0.0
  %8518 = vmatpush1.msra.mxu0 %v5907
  %8519 = vmatprep.subr.mxu0 0.0
  %8520 = vmatpush1.msra.mxu0 %v5906
  %8521 = vmatprep.subr.mxu0 0.0
  %8522 = vmatpush1.msra.mxu0 %v5905
  %8523 = vmatprep.subr.mxu0 0.0
  %8524 = vmatpush1.msra.mxu0 %v5904
  %8525 = vmatprep.subr.mxu0 0.0
  %8526 = vmatpush1.msra.mxu0 %v5903
  %8527 = vmatprep.subr.mxu0 0.0
  %8528 = vmatpush2.msra.mxu0 0.0
  %8529 = vmatprep.subr.mxu0 0.0
  %8530 = vmatpush2.msra.mxu0 0.0
  %8531 = vmatprep.subr.mxu0 0.0
  %8532 = vmatpush2.msra.mxu0 0.0
  %8533 = vmatprep.subr.mxu0 0.0
  %8534 = vmatpush2.msra.mxu0 0.0
  %8535 = vmatprep.subr.mxu0 0.0
  %8536 = vmatpush2.msra.mxu0 0.0
  %8537 = vmatprep.subr.mxu0 0.0
  %8538 = vmatpush2.msra.mxu0 0.0
  %8539 = vmatprep.subr.mxu0 0.0
  %8540 = vmatpush2.msra.mxu0 0.0
  %8541 = vmatprep.subr.mxu0 0.0
  %8542 = vmatpush2.msra.mxu0 0.0
  %8543 = vmatprep.subr.mxu0 0.0
  %8544 = vmatpush2.msra.mxu0 0.0
  %8545 = vmatprep.subr.mxu0 0.0
  %8546 = vmatpush2.msra.mxu0 0.0
  %8547 = vmatprep.subr.mxu0 0.0
  %8548 = vmatpush2.msra.mxu0 0.0
  %8549 = vmatprep.subr.mxu0 0.0
  %8550 = vmatpush2.msra.mxu0 0.0
  %8551 = vmatprep.subr.mxu0 0.0
  %8552 = vmatpush2.msra.mxu0 0.0
  %8553 = vmatprep.subr.mxu0 0.0
  %8554 = vmatpush2.msra.mxu0 0.0
  %8555 = vmatprep.subr.mxu0 0.0
  %8556 = vmatpush2.msra.mxu0 0.0
  %8557 = vmatprep.subr.mxu0 0.0
  %8558 = vmatpush2.msra.mxu0 0.0
  %8559 = vmatprep.mubr.f32.mxu0 0.0
  %8560 = vmatmul.mubr.f32.gmra.mxu0 %v8353
  %v8561 = vpop.f32.mrf.mxu0
  %v8562 = vadd.f32 %v5913, %v8561
  %v8563 = vpop.f32.mrf.mxu0
  %8564 = vdwg.mxu0
  %v8566 = vrot.slane %v8422, 6
  %v8568 = vadd.f32 %v5706, %v8566
  %v8569 = vxor.u32 %v8568, 2147483648
  %v8570 = vmul.f32 %v8569, 1.442695
  %v8571 = vpow.pop %v8570
  %v8572 = vadd.f32 %v8571, 1.0
  %v8573 = vrcp.pop %v8572
  %v8574 = vmul.f32 1.0, %v8573
  %v8576 = vrot.slane %v8492, 6
  %v8578 = vadd.f32 %v5796, %v8576
  %v8579 = vxor.u32 %v8578, 2147483648
  %v8580 = vmul.f32 %v8579, 1.442695
  %v8581 = vpow.pop %v8580
  %v8582 = vadd.f32 %v8581, 1.0
  %v8583 = vrcp.pop %v8582
  %v8584 = vmul.f32 1.0, %v8583
  %v8586 = vrot.slane %v8562, 6
  %v8588 = vmul.f32 %v8574, %v8586
  %v8589 = vadd.f32 %v5886, %v8588
  %v8590 = vtanh.pop %v8589
  %v8591 = vsub.f32 1.0, %v8584
  %v8592 = vmul.f32 %v8591, %v8590
  %v8593 = vrot.slane %v8350, 7
  %v8595 = vmul.f32 %v8584, %v8593
  %v8596 = vadd.f32 %v8592, %v8595
  %v8598 = vrot.slane %v8596, 2
  %v8599 = vsel %vm518, %v8598, 0
  %8601 = vmatprep.subr.mxu0 0.0
  %8602 = vmatpush1.msra.mxu0 0.0
  %8603 = vmatprep.subr.mxu0 0.0
  %8604 = vmatpush1.msra.mxu0 0.0
  %8605 = vmatprep.subr.mxu0 0.0
  %8606 = vmatpush1.msra.mxu0 0.0
  %8607 = vmatprep.subr.mxu0 0.0
  %8608 = vmatpush1.msra.mxu0 0.0
  %8609 = vmatprep.subr.mxu0 0.0
  %8610 = vmatpush1.msra.mxu0 0.0
  %8611 = vmatprep.subr.mxu0 0.0
  %8612 = vmatpush1.msra.mxu0 0.0
  %8613 = vmatprep.subr.mxu0 0.0
  %8614 = vmatpush1.msra.mxu0 0.0
  %8615 = vmatprep.subr.mxu0 0.0
  %8616 = vmatpush1.msra.mxu0 0.0
  %8617 = vmatprep.subr.mxu0 0.0
  %8618 = vmatpush1.msra.mxu0 0.0
  %8619 = vmatprep.subr.mxu0 0.0
  %8620 = vmatpush1.msra.mxu0 0.0
  %8621 = vmatprep.subr.mxu0 0.0
  %8622 = vmatpush1.msra.mxu0 %v5894
  %8623 = vmatprep.subr.mxu0 0.0
  %8624 = vmatpush1.msra.mxu0 %v5893
  %8625 = vmatprep.subr.mxu0 0.0
  %8626 = vmatpush1.msra.mxu0 %v5892
  %8627 = vmatprep.subr.mxu0 0.0
  %8628 = vmatpush1.msra.mxu0 %v5891
  %8629 = vmatprep.subr.mxu0 0.0
  %8630 = vmatpush1.msra.mxu0 %v5890
  %8631 = vmatprep.subr.mxu0 0.0
  %8632 = vmatpush1.msra.mxu0 %v5889
  %8633 = vmatprep.subr.mxu0 0.0
  %8634 = vmatpush2.msra.mxu0 0.0
  %8635 = vmatprep.subr.mxu0 0.0
  %8636 = vmatpush2.msra.mxu0 0.0
  %8637 = vmatprep.subr.mxu0 0.0
  %8638 = vmatpush2.msra.mxu0 0.0
  %8639 = vmatprep.subr.mxu0 0.0
  %8640 = vmatpush2.msra.mxu0 0.0
  %8641 = vmatprep.subr.mxu0 0.0
  %8642 = vmatpush2.msra.mxu0 0.0
  %8643 = vmatprep.subr.mxu0 0.0
  %8644 = vmatpush2.msra.mxu0 0.0
  %8645 = vmatprep.subr.mxu0 0.0
  %8646 = vmatpush2.msra.mxu0 0.0
  %8647 = vmatprep.subr.mxu0 0.0
  %8648 = vmatpush2.msra.mxu0 0.0
  %8649 = vmatprep.subr.mxu0 0.0
  %8650 = vmatpush2.msra.mxu0 0.0
  %8651 = vmatprep.subr.mxu0 0.0
  %8652 = vmatpush2.msra.mxu0 0.0
  %8653 = vmatprep.subr.mxu0 0.0
  %8654 = vmatpush2.msra.mxu0 0.0
  %8655 = vmatprep.subr.mxu0 0.0
  %8656 = vmatpush2.msra.mxu0 0.0
  %8657 = vmatprep.subr.mxu0 0.0
  %8658 = vmatpush2.msra.mxu0 0.0
  %8659 = vmatprep.subr.mxu0 0.0
  %8660 = vmatpush2.msra.mxu0 0.0
  %8661 = vmatprep.subr.mxu0 0.0
  %8662 = vmatpush2.msra.mxu0 0.0
  %8663 = vmatprep.subr.mxu0 0.0
  %8664 = vmatpush2.msra.mxu0 0.0
  %8665 = vmatprep.mubr.f32.mxu0 0.0
  %8666 = vmatmul.mubr.f32.gmra.mxu0 %v8599
  %v8667 = vpop.f32.mrf.mxu0
  %v8668 = vadd.f32 %v5909, %v8667
  %v8669 = vpop.f32.mrf.mxu0
  %8670 = vdwg.mxu0
  %8671 = vmatprep.subr.mxu0 0.0
  %8672 = vmatpush1.msra.mxu0 0.0
  %8673 = vmatprep.subr.mxu0 0.0
  %8674 = vmatpush1.msra.mxu0 0.0
  %8675 = vmatprep.subr.mxu0 0.0
  %8676 = vmatpush1.msra.mxu0 0.0
  %8677 = vmatprep.subr.mxu0 0.0
  %8678 = vmatpush1.msra.mxu0 0.0
  %8679 = vmatprep.subr.mxu0 0.0
  %8680 = vmatpush1.msra.mxu0 0.0
  %8681 = vmatprep.subr.mxu0 0.0
  %8682 = vmatpush1.msra.mxu0 0.0
  %8683 = vmatprep.subr.mxu0 0.0
  %8684 = vmatpush1.msra.mxu0 0.0
  %8685 = vmatprep.subr.mxu0 0.0
  %8686 = vmatpush1.msra.mxu0 0.0
  %8687 = vmatprep.subr.mxu0 0.0
  %8688 = vmatpush1.msra.mxu0 0.0
  %8689 = vmatprep.subr.mxu0 0.0
  %8690 = vmatpush1.msra.mxu0 0.0
  %8691 = vmatprep.subr.mxu0 0.0
  %8692 = vmatpush1.msra.mxu0 %v5901
  %8693 = vmatprep.subr.mxu0 0.0
  %8694 = vmatpush1.msra.mxu0 %v5900
  %8695 = vmatprep.subr.mxu0 0.0
  %8696 = vmatpush1.msra.mxu0 %v5899
  %8697 = vmatprep.subr.mxu0 0.0
  %8698 = vmatpush1.msra.mxu0 %v5898
  %8699 = vmatprep.subr.mxu0 0.0
  %8700 = vmatpush1.msra.mxu0 %v5897
  %8701 = vmatprep.subr.mxu0 0.0
  %8702 = vmatpush1.msra.mxu0 %v5896
  %8703 = vmatprep.subr.mxu0 0.0
  %8704 = vmatpush2.msra.mxu0 0.0
  %8705 = vmatprep.subr.mxu0 0.0
  %8706 = vmatpush2.msra.mxu0 0.0
  %8707 = vmatprep.subr.mxu0 0.0
  %8708 = vmatpush2.msra.mxu0 0.0
  %8709 = vmatprep.subr.mxu0 0.0
  %8710 = vmatpush2.msra.mxu0 0.0
  %8711 = vmatprep.subr.mxu0 0.0
  %8712 = vmatpush2.msra.mxu0 0.0
  %8713 = vmatprep.subr.mxu0 0.0
  %8714 = vmatpush2.msra.mxu0 0.0
  %8715 = vmatprep.subr.mxu0 0.0
  %8716 = vmatpush2.msra.mxu0 0.0
  %8717 = vmatprep.subr.mxu0 0.0
  %8718 = vmatpush2.msra.mxu0 0.0
  %8719 = vmatprep.subr.mxu0 0.0
  %8720 = vmatpush2.msra.mxu0 0.0
  %8721 = vmatprep.subr.mxu0 0.0
  %8722 = vmatpush2.msra.mxu0 0.0
  %8723 = vmatprep.subr.mxu0 0.0
  %8724 = vmatpush2.msra.mxu0 0.0
  %8725 = vmatprep.subr.mxu0 0.0
  %8726 = vmatpush2.msra.mxu0 0.0
  %8727 = vmatprep.subr.mxu0 0.0
  %8728 = vmatpush2.msra.mxu0 0.0
  %8729 = vmatprep.subr.mxu0 0.0
  %8730 = vmatpush2.msra.mxu0 0.0
  %8731 = vmatprep.subr.mxu0 0.0
  %8732 = vmatpush2.msra.mxu0 0.0
  %8733 = vmatprep.subr.mxu0 0.0
  %8734 = vmatpush2.msra.mxu0 0.0
  %8735 = vmatprep.mubr.f32.mxu0 0.0
  %8736 = vmatmul.mubr.f32.gmra.mxu0 %v8599
  %v8737 = vpop.f32.mrf.mxu0
  %v8738 = vadd.f32 %v5911, %v8737
  %v8739 = vpop.f32.mrf.mxu0
  %8740 = vdwg.mxu0
  %8741 = vmatprep.subr.mxu0 0.0
  %8742 = vmatpush1.msra.mxu0 0.0
  %8743 = vmatprep.subr.mxu0 0.0
  %8744 = vmatpush1.msra.mxu0 0.0
  %8745 = vmatprep.subr.mxu0 0.0
  %8746 = vmatpush1.msra.mxu0 0.0
  %8747 = vmatprep.subr.mxu0 0.0
  %8748 = vmatpush1.msra.mxu0 0.0
  %8749 = vmatprep.subr.mxu0 0.0
  %8750 = vmatpush1.msra.mxu0 0.0
  %8751 = vmatprep.subr.mxu0 0.0
  %8752 = vmatpush1.msra.mxu0 0.0
  %8753 = vmatprep.subr.mxu0 0.0
  %8754 = vmatpush1.msra.mxu0 0.0
  %8755 = vmatprep.subr.mxu0 0.0
  %8756 = vmatpush1.msra.mxu0 0.0
  %8757 = vmatprep.subr.mxu0 0.0
  %8758 = vmatpush1.msra.mxu0 0.0
  %8759 = vmatprep.subr.mxu0 0.0
  %8760 = vmatpush1.msra.mxu0 0.0
  %8761 = vmatprep.subr.mxu0 0.0
  %8762 = vmatpush1.msra.mxu0 %v5908
  %8763 = vmatprep.subr.mxu0 0.0
  %8764 = vmatpush1.msra.mxu0 %v5907
  %8765 = vmatprep.subr.mxu0 0.0
  %8766 = vmatpush1.msra.mxu0 %v5906
  %8767 = vmatprep.subr.mxu0 0.0
  %8768 = vmatpush1.msra.mxu0 %v5905
  %8769 = vmatprep.subr.mxu0 0.0
  %8770 = vmatpush1.msra.mxu0 %v5904
  %8771 = vmatprep.subr.mxu0 0.0
  %8772 = vmatpush1.msra.mxu0 %v5903
  %8773 = vmatprep.subr.mxu0 0.0
  %8774 = vmatpush2.msra.mxu0 0.0
  %8775 = vmatprep.subr.mxu0 0.0
  %8776 = vmatpush2.msra.mxu0 0.0
  %8777 = vmatprep.subr.mxu0 0.0
  %8778 = vmatpush2.msra.mxu0 0.0
  %8779 = vmatprep.subr.mxu0 0.0
  %8780 = vmatpush2.msra.mxu0 0.0
  %8781 = vmatprep.subr.mxu0 0.0
  %8782 = vmatpush2.msra.mxu0 0.0
  %8783 = vmatprep.subr.mxu0 0.0
  %8784 = vmatpush2.msra.mxu0 0.0
  %8785 = vmatprep.subr.mxu0 0.0
  %8786 = vmatpush2.msra.mxu0 0.0
  %8787 = vmatprep.subr.mxu0 0.0
  %8788 = vmatpush2.msra.mxu0 0.0
  %8789 = vmatprep.subr.mxu0 0.0
  %8790 = vmatpush2.msra.mxu0 0.0
  %8791 = vmatprep.subr.mxu0 0.0
  %8792 = vmatpush2.msra.mxu0 0.0
  %8793 = vmatprep.subr.mxu0 0.0
  %8794 = vmatpush2.msra.mxu0 0.0
  %8795 = vmatprep.subr.mxu0 0.0
  %8796 = vmatpush2.msra.mxu0 0.0
  %8797 = vmatprep.subr.mxu0 0.0
  %8798 = vmatpush2.msra.mxu0 0.0
  %8799 = vmatprep.subr.mxu0 0.0
  %8800 = vmatpush2.msra.mxu0 0.0
  %8801 = vmatprep.subr.mxu0 0.0
  %8802 = vmatpush2.msra.mxu0 0.0
  %8803 = vmatprep.subr.mxu0 0.0
  %8804 = vmatpush2.msra.mxu0 0.0
  %8805 = vmatprep.mubr.f32.mxu0 0.0
  %8806 = vmatmul.mubr.f32.gmra.mxu0 %v8599
  %v8807 = vpop.f32.mrf.mxu0
  %v8808 = vadd.f32 %v5913, %v8807
  %v8809 = vpop.f32.mrf.mxu0
  %8810 = vdwg.mxu0
  %v8812 = vrot.slane %v8668, 5
  %v8814 = vadd.f32 %v5706, %v8812
  %v8815 = vxor.u32 %v8814, 2147483648
  %v8816 = vmul.f32 %v8815, 1.442695
  %v8817 = vpow.pop %v8816
  %v8818 = vadd.f32 %v8817, 1.0
  %v8819 = vrcp.pop %v8818
  %v8820 = vmul.f32 1.0, %v8819
  %v8822 = vrot.slane %v8738, 5
  %v8824 = vadd.f32 %v5796, %v8822
  %v8825 = vxor.u32 %v8824, 2147483648
  %v8826 = vmul.f32 %v8825, 1.442695
  %v8827 = vpow.pop %v8826
  %v8828 = vadd.f32 %v8827, 1.0
  %v8829 = vrcp.pop %v8828
  %v8830 = vmul.f32 1.0, %v8829
  %v8832 = vrot.slane %v8808, 5
  %v8834 = vmul.f32 %v8820, %v8832
  %v8835 = vadd.f32 %v5886, %v8834
  %v8836 = vtanh.pop %v8835
  %v8837 = vsub.f32 1.0, %v8830
  %v8838 = vmul.f32 %v8837, %v8836
  %v8839 = vrot.slane %v8596, 7
  %v8841 = vmul.f32 %v8830, %v8839
  %v8842 = vadd.f32 %v8838, %v8841
  %v8844 = vrot.slane %v8842, 3
  %v8845 = vsel %vm518, %v8844, 0
  %8847 = vmatprep.subr.mxu0 0.0
  %8848 = vmatpush1.msra.mxu0 0.0
  %8849 = vmatprep.subr.mxu0 0.0
  %8850 = vmatpush1.msra.mxu0 0.0
  %8851 = vmatprep.subr.mxu0 0.0
  %8852 = vmatpush1.msra.mxu0 0.0
  %8853 = vmatprep.subr.mxu0 0.0
  %8854 = vmatpush1.msra.mxu0 0.0
  %8855 = vmatprep.subr.mxu0 0.0
  %8856 = vmatpush1.msra.mxu0 0.0
  %8857 = vmatprep.subr.mxu0 0.0
  %8858 = vmatpush1.msra.mxu0 0.0
  %8859 = vmatprep.subr.mxu0 0.0
  %8860 = vmatpush1.msra.mxu0 0.0
  %8861 = vmatprep.subr.mxu0 0.0
  %8862 = vmatpush1.msra.mxu0 0.0
  %8863 = vmatprep.subr.mxu0 0.0
  %8864 = vmatpush1.msra.mxu0 0.0
  %8865 = vmatprep.subr.mxu0 0.0
  %8866 = vmatpush1.msra.mxu0 0.0
  %8867 = vmatprep.subr.mxu0 0.0
  %8868 = vmatpush1.msra.mxu0 %v5894
  %8869 = vmatprep.subr.mxu0 0.0
  %8870 = vmatpush1.msra.mxu0 %v5893
  %8871 = vmatprep.subr.mxu0 0.0
  %8872 = vmatpush1.msra.mxu0 %v5892
  %8873 = vmatprep.subr.mxu0 0.0
  %8874 = vmatpush1.msra.mxu0 %v5891
  %8875 = vmatprep.subr.mxu0 0.0
  %8876 = vmatpush1.msra.mxu0 %v5890
  %8877 = vmatprep.subr.mxu0 0.0
  %8878 = vmatpush1.msra.mxu0 %v5889
  %8879 = vmatprep.subr.mxu0 0.0
  %8880 = vmatpush2.msra.mxu0 0.0
  %8881 = vmatprep.subr.mxu0 0.0
  %8882 = vmatpush2.msra.mxu0 0.0
  %8883 = vmatprep.subr.mxu0 0.0
  %8884 = vmatpush2.msra.mxu0 0.0
  %8885 = vmatprep.subr.mxu0 0.0
  %8886 = vmatpush2.msra.mxu0 0.0
  %8887 = vmatprep.subr.mxu0 0.0
  %8888 = vmatpush2.msra.mxu0 0.0
  %8889 = vmatprep.subr.mxu0 0.0
  %8890 = vmatpush2.msra.mxu0 0.0
  %8891 = vmatprep.subr.mxu0 0.0
  %8892 = vmatpush2.msra.mxu0 0.0
  %8893 = vmatprep.subr.mxu0 0.0
  %8894 = vmatpush2.msra.mxu0 0.0
  %8895 = vmatprep.subr.mxu0 0.0
  %8896 = vmatpush2.msra.mxu0 0.0
  %8897 = vmatprep.subr.mxu0 0.0
  %8898 = vmatpush2.msra.mxu0 0.0
  %8899 = vmatprep.subr.mxu0 0.0
  %8900 = vmatpush2.msra.mxu0 0.0
  %8901 = vmatprep.subr.mxu0 0.0
  %8902 = vmatpush2.msra.mxu0 0.0
  %8903 = vmatprep.subr.mxu0 0.0
  %8904 = vmatpush2.msra.mxu0 0.0
  %8905 = vmatprep.subr.mxu0 0.0
  %8906 = vmatpush2.msra.mxu0 0.0
  %8907 = vmatprep.subr.mxu0 0.0
  %8908 = vmatpush2.msra.mxu0 0.0
  %8909 = vmatprep.subr.mxu0 0.0
  %8910 = vmatpush2.msra.mxu0 0.0
  %8911 = vmatprep.mubr.f32.mxu0 0.0
  %8912 = vmatmul.mubr.f32.gmra.mxu0 %v8845
  %v8913 = vpop.f32.mrf.mxu0
  %v8914 = vadd.f32 %v5909, %v8913
  %v8915 = vpop.f32.mrf.mxu0
  %8916 = vdwg.mxu0
  %8917 = vmatprep.subr.mxu0 0.0
  %8918 = vmatpush1.msra.mxu0 0.0
  %8919 = vmatprep.subr.mxu0 0.0
  %8920 = vmatpush1.msra.mxu0 0.0
  %8921 = vmatprep.subr.mxu0 0.0
  %8922 = vmatpush1.msra.mxu0 0.0
  %8923 = vmatprep.subr.mxu0 0.0
  %8924 = vmatpush1.msra.mxu0 0.0
  %8925 = vmatprep.subr.mxu0 0.0
  %8926 = vmatpush1.msra.mxu0 0.0
  %8927 = vmatprep.subr.mxu0 0.0
  %8928 = vmatpush1.msra.mxu0 0.0
  %8929 = vmatprep.subr.mxu0 0.0
  %8930 = vmatpush1.msra.mxu0 0.0
  %8931 = vmatprep.subr.mxu0 0.0
  %8932 = vmatpush1.msra.mxu0 0.0
  %8933 = vmatprep.subr.mxu0 0.0
  %8934 = vmatpush1.msra.mxu0 0.0
  %8935 = vmatprep.subr.mxu0 0.0
  %8936 = vmatpush1.msra.mxu0 0.0
  %8937 = vmatprep.subr.mxu0 0.0
  %8938 = vmatpush1.msra.mxu0 %v5901
  %8939 = vmatprep.subr.mxu0 0.0
  %8940 = vmatpush1.msra.mxu0 %v5900
  %8941 = vmatprep.subr.mxu0 0.0
  %8942 = vmatpush1.msra.mxu0 %v5899
  %8943 = vmatprep.subr.mxu0 0.0
  %8944 = vmatpush1.msra.mxu0 %v5898
  %8945 = vmatprep.subr.mxu0 0.0
  %8946 = vmatpush1.msra.mxu0 %v5897
  %8947 = vmatprep.subr.mxu0 0.0
  %8948 = vmatpush1.msra.mxu0 %v5896
  %8949 = vmatprep.subr.mxu0 0.0
  %8950 = vmatpush2.msra.mxu0 0.0
  %8951 = vmatprep.subr.mxu0 0.0
  %8952 = vmatpush2.msra.mxu0 0.0
  %8953 = vmatprep.subr.mxu0 0.0
  %8954 = vmatpush2.msra.mxu0 0.0
  %8955 = vmatprep.subr.mxu0 0.0
  %8956 = vmatpush2.msra.mxu0 0.0
  %8957 = vmatprep.subr.mxu0 0.0
  %8958 = vmatpush2.msra.mxu0 0.0
  %8959 = vmatprep.subr.mxu0 0.0
  %8960 = vmatpush2.msra.mxu0 0.0
  %8961 = vmatprep.subr.mxu0 0.0
  %8962 = vmatpush2.msra.mxu0 0.0
  %8963 = vmatprep.subr.mxu0 0.0
  %8964 = vmatpush2.msra.mxu0 0.0
  %8965 = vmatprep.subr.mxu0 0.0
  %8966 = vmatpush2.msra.mxu0 0.0
  %8967 = vmatprep.subr.mxu0 0.0
  %8968 = vmatpush2.msra.mxu0 0.0
  %8969 = vmatprep.subr.mxu0 0.0
  %8970 = vmatpush2.msra.mxu0 0.0
  %8971 = vmatprep.subr.mxu0 0.0
  %8972 = vmatpush2.msra.mxu0 0.0
  %8973 = vmatprep.subr.mxu0 0.0
  %8974 = vmatpush2.msra.mxu0 0.0
  %8975 = vmatprep.subr.mxu0 0.0
  %8976 = vmatpush2.msra.mxu0 0.0
  %8977 = vmatprep.subr.mxu0 0.0
  %8978 = vmatpush2.msra.mxu0 0.0
  %8979 = vmatprep.subr.mxu0 0.0
  %8980 = vmatpush2.msra.mxu0 0.0
  %8981 = vmatprep.mubr.f32.mxu0 0.0
  %8982 = vmatmul.mubr.f32.gmra.mxu0 %v8845
  %v8983 = vpop.f32.mrf.mxu0
  %v8984 = vadd.f32 %v5911, %v8983
  %v8985 = vpop.f32.mrf.mxu0
  %8986 = vdwg.mxu0
  %8987 = vmatprep.subr.mxu0 0.0
  %8988 = vmatpush1.msra.mxu0 0.0
  %8989 = vmatprep.subr.mxu0 0.0
  %8990 = vmatpush1.msra.mxu0 0.0
  %8991 = vmatprep.subr.mxu0 0.0
  %8992 = vmatpush1.msra.mxu0 0.0
  %8993 = vmatprep.subr.mxu0 0.0
  %8994 = vmatpush1.msra.mxu0 0.0
  %8995 = vmatprep.subr.mxu0 0.0
  %8996 = vmatpush1.msra.mxu0 0.0
  %8997 = vmatprep.subr.mxu0 0.0
  %8998 = vmatpush1.msra.mxu0 0.0
  %8999 = vmatprep.subr.mxu0 0.0
  %9000 = vmatpush1.msra.mxu0 0.0
  %9001 = vmatprep.subr.mxu0 0.0
  %9002 = vmatpush1.msra.mxu0 0.0
  %9003 = vmatprep.subr.mxu0 0.0
  %9004 = vmatpush1.msra.mxu0 0.0
  %9005 = vmatprep.subr.mxu0 0.0
  %9006 = vmatpush1.msra.mxu0 0.0
  %9007 = vmatprep.subr.mxu0 0.0
  %9008 = vmatpush1.msra.mxu0 %v5908
  %9009 = vmatprep.subr.mxu0 0.0
  %9010 = vmatpush1.msra.mxu0 %v5907
  %9011 = vmatprep.subr.mxu0 0.0
  %9012 = vmatpush1.msra.mxu0 %v5906
  %9013 = vmatprep.subr.mxu0 0.0
  %9014 = vmatpush1.msra.mxu0 %v5905
  %9015 = vmatprep.subr.mxu0 0.0
  %9016 = vmatpush1.msra.mxu0 %v5904
  %9017 = vmatprep.subr.mxu0 0.0
  %9018 = vmatpush1.msra.mxu0 %v5903
  %9019 = vmatprep.subr.mxu0 0.0
  %9020 = vmatpush2.msra.mxu0 0.0
  %9021 = vmatprep.subr.mxu0 0.0
  %9022 = vmatpush2.msra.mxu0 0.0
  %9023 = vmatprep.subr.mxu0 0.0
  %9024 = vmatpush2.msra.mxu0 0.0
  %9025 = vmatprep.subr.mxu0 0.0
  %9026 = vmatpush2.msra.mxu0 0.0
  %9027 = vmatprep.subr.mxu0 0.0
  %9028 = vmatpush2.msra.mxu0 0.0
  %9029 = vmatprep.subr.mxu0 0.0
  %9030 = vmatpush2.msra.mxu0 0.0
  %9031 = vmatprep.subr.mxu0 0.0
  %9032 = vmatpush2.msra.mxu0 0.0
  %9033 = vmatprep.subr.mxu0 0.0
  %9034 = vmatpush2.msra.mxu0 0.0
  %9035 = vmatprep.subr.mxu0 0.0
  %9036 = vmatpush2.msra.mxu0 0.0
  %9037 = vmatprep.subr.mxu0 0.0
  %9038 = vmatpush2.msra.mxu0 0.0
  %9039 = vmatprep.subr.mxu0 0.0
  %9040 = vmatpush2.msra.mxu0 0.0
  %9041 = vmatprep.subr.mxu0 0.0
  %9042 = vmatpush2.msra.mxu0 0.0
  %9043 = vmatprep.subr.mxu0 0.0
  %9044 = vmatpush2.msra.mxu0 0.0
  %9045 = vmatprep.subr.mxu0 0.0
  %9046 = vmatpush2.msra.mxu0 0.0
  %9047 = vmatprep.subr.mxu0 0.0
  %9048 = vmatpush2.msra.mxu0 0.0
  %9049 = vmatprep.subr.mxu0 0.0
  %9050 = vmatpush2.msra.mxu0 0.0
  %9051 = vmatprep.mubr.f32.mxu0 0.0
  %9052 = vmatmul.mubr.f32.gmra.mxu0 %v8845
  %v9053 = vpop.f32.mrf.mxu0
  %v9054 = vadd.f32 %v5913, %v9053
  %v9055 = vpop.f32.mrf.mxu0
  %9056 = vdwg.mxu0
  %v9058 = vrot.slane %v8914, 4
  %v9060 = vadd.f32 %v5706, %v9058
  %v9061 = vxor.u32 %v9060, 2147483648
  %v9062 = vmul.f32 %v9061, 1.442695
  %v9063 = vpow.pop %v9062
  %v9064 = vadd.f32 %v9063, 1.0
  %v9065 = vrcp.pop %v9064
  %v9066 = vmul.f32 1.0, %v9065
  %v9068 = vrot.slane %v8984, 4
  %v9070 = vadd.f32 %v5796, %v9068
  %v9071 = vxor.u32 %v9070, 2147483648
  %v9072 = vmul.f32 %v9071, 1.442695
  %v9073 = vpow.pop %v9072
  %v9074 = vadd.f32 %v9073, 1.0
  %v9075 = vrcp.pop %v9074
  %v9076 = vmul.f32 1.0, %v9075
  %v9078 = vrot.slane %v9054, 4
  %v9080 = vmul.f32 %v9066, %v9078
  %v9081 = vadd.f32 %v5886, %v9080
  %v9082 = vtanh.pop %v9081
  %v9083 = vsub.f32 1.0, %v9076
  %v9084 = vmul.f32 %v9083, %v9082
  %v9085 = vrot.slane %v8842, 7
  %v9087 = vmul.f32 %v9076, %v9085
  %v9088 = vadd.f32 %v9084, %v9087
  %v9090 = vrot.slane %v9088, 4
  %v9091 = vsel %vm518, %v9090, 0
  %9093 = vmatprep.subr.mxu0 0.0
  %9094 = vmatpush1.msra.mxu0 0.0
  %9095 = vmatprep.subr.mxu0 0.0
  %9096 = vmatpush1.msra.mxu0 0.0
  %9097 = vmatprep.subr.mxu0 0.0
  %9098 = vmatpush1.msra.mxu0 0.0
  %9099 = vmatprep.subr.mxu0 0.0
  %9100 = vmatpush1.msra.mxu0 0.0
  %9101 = vmatprep.subr.mxu0 0.0
  %9102 = vmatpush1.msra.mxu0 0.0
  %9103 = vmatprep.subr.mxu0 0.0
  %9104 = vmatpush1.msra.mxu0 0.0
  %9105 = vmatprep.subr.mxu0 0.0
  %9106 = vmatpush1.msra.mxu0 0.0
  %9107 = vmatprep.subr.mxu0 0.0
  %9108 = vmatpush1.msra.mxu0 0.0
  %9109 = vmatprep.subr.mxu0 0.0
  %9110 = vmatpush1.msra.mxu0 0.0
  %9111 = vmatprep.subr.mxu0 0.0
  %9112 = vmatpush1.msra.mxu0 0.0
  %9113 = vmatprep.subr.mxu0 0.0
  %9114 = vmatpush1.msra.mxu0 %v5894
  %9115 = vmatprep.subr.mxu0 0.0
  %9116 = vmatpush1.msra.mxu0 %v5893
  %9117 = vmatprep.subr.mxu0 0.0
  %9118 = vmatpush1.msra.mxu0 %v5892
  %9119 = vmatprep.subr.mxu0 0.0
  %9120 = vmatpush1.msra.mxu0 %v5891
  %9121 = vmatprep.subr.mxu0 0.0
  %9122 = vmatpush1.msra.mxu0 %v5890
  %9123 = vmatprep.subr.mxu0 0.0
  %9124 = vmatpush1.msra.mxu0 %v5889
  %9125 = vmatprep.subr.mxu0 0.0
  %9126 = vmatpush2.msra.mxu0 0.0
  %9127 = vmatprep.subr.mxu0 0.0
  %9128 = vmatpush2.msra.mxu0 0.0
  %9129 = vmatprep.subr.mxu0 0.0
  %9130 = vmatpush2.msra.mxu0 0.0
  %9131 = vmatprep.subr.mxu0 0.0
  %9132 = vmatpush2.msra.mxu0 0.0
  %9133 = vmatprep.subr.mxu0 0.0
  %9134 = vmatpush2.msra.mxu0 0.0
  %9135 = vmatprep.subr.mxu0 0.0
  %9136 = vmatpush2.msra.mxu0 0.0
  %9137 = vmatprep.subr.mxu0 0.0
  %9138 = vmatpush2.msra.mxu0 0.0
  %9139 = vmatprep.subr.mxu0 0.0
  %9140 = vmatpush2.msra.mxu0 0.0
  %9141 = vmatprep.subr.mxu0 0.0
  %9142 = vmatpush2.msra.mxu0 0.0
  %9143 = vmatprep.subr.mxu0 0.0
  %9144 = vmatpush2.msra.mxu0 0.0
  %9145 = vmatprep.subr.mxu0 0.0
  %9146 = vmatpush2.msra.mxu0 0.0
  %9147 = vmatprep.subr.mxu0 0.0
  %9148 = vmatpush2.msra.mxu0 0.0
  %9149 = vmatprep.subr.mxu0 0.0
  %9150 = vmatpush2.msra.mxu0 0.0
  %9151 = vmatprep.subr.mxu0 0.0
  %9152 = vmatpush2.msra.mxu0 0.0
  %9153 = vmatprep.subr.mxu0 0.0
  %9154 = vmatpush2.msra.mxu0 0.0
  %9155 = vmatprep.subr.mxu0 0.0
  %9156 = vmatpush2.msra.mxu0 0.0
  %9157 = vmatprep.mubr.f32.mxu0 0.0
  %9158 = vmatmul.mubr.f32.gmra.mxu0 %v9091
  %v9159 = vpop.f32.mrf.mxu0
  %v9160 = vadd.f32 %v5909, %v9159
  %v9161 = vpop.f32.mrf.mxu0
  %9162 = vdwg.mxu0
  %9163 = vmatprep.subr.mxu0 0.0
  %9164 = vmatpush1.msra.mxu0 0.0
  %9165 = vmatprep.subr.mxu0 0.0
  %9166 = vmatpush1.msra.mxu0 0.0
  %9167 = vmatprep.subr.mxu0 0.0
  %9168 = vmatpush1.msra.mxu0 0.0
  %9169 = vmatprep.subr.mxu0 0.0
  %9170 = vmatpush1.msra.mxu0 0.0
  %9171 = vmatprep.subr.mxu0 0.0
  %9172 = vmatpush1.msra.mxu0 0.0
  %9173 = vmatprep.subr.mxu0 0.0
  %9174 = vmatpush1.msra.mxu0 0.0
  %9175 = vmatprep.subr.mxu0 0.0
  %9176 = vmatpush1.msra.mxu0 0.0
  %9177 = vmatprep.subr.mxu0 0.0
  %9178 = vmatpush1.msra.mxu0 0.0
  %9179 = vmatprep.subr.mxu0 0.0
  %9180 = vmatpush1.msra.mxu0 0.0
  %9181 = vmatprep.subr.mxu0 0.0
  %9182 = vmatpush1.msra.mxu0 0.0
  %9183 = vmatprep.subr.mxu0 0.0
  %9184 = vmatpush1.msra.mxu0 %v5901
  %9185 = vmatprep.subr.mxu0 0.0
  %9186 = vmatpush1.msra.mxu0 %v5900
  %9187 = vmatprep.subr.mxu0 0.0
  %9188 = vmatpush1.msra.mxu0 %v5899
  %9189 = vmatprep.subr.mxu0 0.0
  %9190 = vmatpush1.msra.mxu0 %v5898
  %9191 = vmatprep.subr.mxu0 0.0
  %9192 = vmatpush1.msra.mxu0 %v5897
  %9193 = vmatprep.subr.mxu0 0.0
  %9194 = vmatpush1.msra.mxu0 %v5896
  %9195 = vmatprep.subr.mxu0 0.0
  %9196 = vmatpush2.msra.mxu0 0.0
  %9197 = vmatprep.subr.mxu0 0.0
  %9198 = vmatpush2.msra.mxu0 0.0
  %9199 = vmatprep.subr.mxu0 0.0
  %9200 = vmatpush2.msra.mxu0 0.0
  %9201 = vmatprep.subr.mxu0 0.0
  %9202 = vmatpush2.msra.mxu0 0.0
  %9203 = vmatprep.subr.mxu0 0.0
  %9204 = vmatpush2.msra.mxu0 0.0
  %9205 = vmatprep.subr.mxu0 0.0
  %9206 = vmatpush2.msra.mxu0 0.0
  %9207 = vmatprep.subr.mxu0 0.0
  %9208 = vmatpush2.msra.mxu0 0.0
  %9209 = vmatprep.subr.mxu0 0.0
  %9210 = vmatpush2.msra.mxu0 0.0
  %9211 = vmatprep.subr.mxu0 0.0
  %9212 = vmatpush2.msra.mxu0 0.0
  %9213 = vmatprep.subr.mxu0 0.0
  %9214 = vmatpush2.msra.mxu0 0.0
  %9215 = vmatprep.subr.mxu0 0.0
  %9216 = vmatpush2.msra.mxu0 0.0
  %9217 = vmatprep.subr.mxu0 0.0
  %9218 = vmatpush2.msra.mxu0 0.0
  %9219 = vmatprep.subr.mxu0 0.0
  %9220 = vmatpush2.msra.mxu0 0.0
  %9221 = vmatprep.subr.mxu0 0.0
  %9222 = vmatpush2.msra.mxu0 0.0
  %9223 = vmatprep.subr.mxu0 0.0
  %9224 = vmatpush2.msra.mxu0 0.0
  %9225 = vmatprep.subr.mxu0 0.0
  %9226 = vmatpush2.msra.mxu0 0.0
  %9227 = vmatprep.mubr.f32.mxu0 0.0
  %9228 = vmatmul.mubr.f32.gmra.mxu0 %v9091
  %v9229 = vpop.f32.mrf.mxu0
  %v9230 = vadd.f32 %v5911, %v9229
  %v9231 = vpop.f32.mrf.mxu0
  %9232 = vdwg.mxu0
  %9233 = vmatprep.subr.mxu0 0.0
  %9234 = vmatpush1.msra.mxu0 0.0
  %9235 = vmatprep.subr.mxu0 0.0
  %9236 = vmatpush1.msra.mxu0 0.0
  %9237 = vmatprep.subr.mxu0 0.0
  %9238 = vmatpush1.msra.mxu0 0.0
  %9239 = vmatprep.subr.mxu0 0.0
  %9240 = vmatpush1.msra.mxu0 0.0
  %9241 = vmatprep.subr.mxu0 0.0
  %9242 = vmatpush1.msra.mxu0 0.0
  %9243 = vmatprep.subr.mxu0 0.0
  %9244 = vmatpush1.msra.mxu0 0.0
  %9245 = vmatprep.subr.mxu0 0.0
  %9246 = vmatpush1.msra.mxu0 0.0
  %9247 = vmatprep.subr.mxu0 0.0
  %9248 = vmatpush1.msra.mxu0 0.0
  %9249 = vmatprep.subr.mxu0 0.0
  %9250 = vmatpush1.msra.mxu0 0.0
  %9251 = vmatprep.subr.mxu0 0.0
  %9252 = vmatpush1.msra.mxu0 0.0
  %9253 = vmatprep.subr.mxu0 0.0
  %9254 = vmatpush1.msra.mxu0 %v5908
  %9255 = vmatprep.subr.mxu0 0.0
  %9256 = vmatpush1.msra.mxu0 %v5907
  %9257 = vmatprep.subr.mxu0 0.0
  %9258 = vmatpush1.msra.mxu0 %v5906
  %9259 = vmatprep.subr.mxu0 0.0
  %9260 = vmatpush1.msra.mxu0 %v5905
  %9261 = vmatprep.subr.mxu0 0.0
  %9262 = vmatpush1.msra.mxu0 %v5904
  %9263 = vmatprep.subr.mxu0 0.0
  %9264 = vmatpush1.msra.mxu0 %v5903
  %9265 = vmatprep.subr.mxu0 0.0
  %9266 = vmatpush2.msra.mxu0 0.0
  %9267 = vmatprep.subr.mxu0 0.0
  %9268 = vmatpush2.msra.mxu0 0.0
  %9269 = vmatprep.subr.mxu0 0.0
  %9270 = vmatpush2.msra.mxu0 0.0
  %9271 = vmatprep.subr.mxu0 0.0
  %9272 = vmatpush2.msra.mxu0 0.0
  %9273 = vmatprep.subr.mxu0 0.0
  %9274 = vmatpush2.msra.mxu0 0.0
  %9275 = vmatprep.subr.mxu0 0.0
  %9276 = vmatpush2.msra.mxu0 0.0
  %9277 = vmatprep.subr.mxu0 0.0
  %9278 = vmatpush2.msra.mxu0 0.0
  %9279 = vmatprep.subr.mxu0 0.0
  %9280 = vmatpush2.msra.mxu0 0.0
  %9281 = vmatprep.subr.mxu0 0.0
  %9282 = vmatpush2.msra.mxu0 0.0
  %9283 = vmatprep.subr.mxu0 0.0
  %9284 = vmatpush2.msra.mxu0 0.0
  %9285 = vmatprep.subr.mxu0 0.0
  %9286 = vmatpush2.msra.mxu0 0.0
  %9287 = vmatprep.subr.mxu0 0.0
  %9288 = vmatpush2.msra.mxu0 0.0
  %9289 = vmatprep.subr.mxu0 0.0
  %9290 = vmatpush2.msra.mxu0 0.0
  %9291 = vmatprep.subr.mxu0 0.0
  %9292 = vmatpush2.msra.mxu0 0.0
  %9293 = vmatprep.subr.mxu0 0.0
  %9294 = vmatpush2.msra.mxu0 0.0
  %9295 = vmatprep.subr.mxu0 0.0
  %9296 = vmatpush2.msra.mxu0 0.0
  %9297 = vmatprep.mubr.f32.mxu0 0.0
  %9298 = vmatmul.mubr.f32.gmra.mxu0 %v9091
  %v9299 = vpop.f32.mrf.mxu0
  %v9300 = vadd.f32 %v5913, %v9299
  %v9301 = vpop.f32.mrf.mxu0
  %9302 = vdwg.mxu0
  %v9304 = vrot.slane %v9160, 3
  %v9306 = vadd.f32 %v5706, %v9304
  %v9307 = vxor.u32 %v9306, 2147483648
  %v9308 = vmul.f32 %v9307, 1.442695
  %v9309 = vpow.pop %v9308
  %v9310 = vadd.f32 %v9309, 1.0
  %v9311 = vrcp.pop %v9310
  %v9312 = vmul.f32 1.0, %v9311
  %v9314 = vrot.slane %v9230, 3
  %v9316 = vadd.f32 %v5796, %v9314
  %v9317 = vxor.u32 %v9316, 2147483648
  %v9318 = vmul.f32 %v9317, 1.442695
  %v9319 = vpow.pop %v9318
  %v9320 = vadd.f32 %v9319, 1.0
  %v9321 = vrcp.pop %v9320
  %v9322 = vmul.f32 1.0, %v9321
  %v9324 = vrot.slane %v9300, 3
  %v9326 = vmul.f32 %v9312, %v9324
  %v9327 = vadd.f32 %v5886, %v9326
  %v9328 = vtanh.pop %v9327
  %v9329 = vsub.f32 1.0, %v9322
  %v9330 = vmul.f32 %v9329, %v9328
  %v9331 = vrot.slane %v9088, 7
  %v9333 = vmul.f32 %v9322, %v9331
  %v9334 = vadd.f32 %v9330, %v9333
  %v9336 = vrot.slane %v9334, 5
  %v9337 = vsel %vm518, %v9336, 0
  %9339 = vmatprep.subr.mxu0 0.0
  %9340 = vmatpush1.msra.mxu0 0.0
  %9341 = vmatprep.subr.mxu0 0.0
  %9342 = vmatpush1.msra.mxu0 0.0
  %9343 = vmatprep.subr.mxu0 0.0
  %9344 = vmatpush1.msra.mxu0 0.0
  %9345 = vmatprep.subr.mxu0 0.0
  %9346 = vmatpush1.msra.mxu0 0.0
  %9347 = vmatprep.subr.mxu0 0.0
  %9348 = vmatpush1.msra.mxu0 0.0
  %9349 = vmatprep.subr.mxu0 0.0
  %9350 = vmatpush1.msra.mxu0 0.0
  %9351 = vmatprep.subr.mxu0 0.0
  %9352 = vmatpush1.msra.mxu0 0.0
  %9353 = vmatprep.subr.mxu0 0.0
  %9354 = vmatpush1.msra.mxu0 0.0
  %9355 = vmatprep.subr.mxu0 0.0
  %9356 = vmatpush1.msra.mxu0 0.0
  %9357 = vmatprep.subr.mxu0 0.0
  %9358 = vmatpush1.msra.mxu0 0.0
  %9359 = vmatprep.subr.mxu0 0.0
  %9360 = vmatpush1.msra.mxu0 %v5894
  %9361 = vmatprep.subr.mxu0 0.0
  %9362 = vmatpush1.msra.mxu0 %v5893
  %9363 = vmatprep.subr.mxu0 0.0
  %9364 = vmatpush1.msra.mxu0 %v5892
  %9365 = vmatprep.subr.mxu0 0.0
  %9366 = vmatpush1.msra.mxu0 %v5891
  %9367 = vmatprep.subr.mxu0 0.0
  %9368 = vmatpush1.msra.mxu0 %v5890
  %9369 = vmatprep.subr.mxu0 0.0
  %9370 = vmatpush1.msra.mxu0 %v5889
  %9371 = vmatprep.subr.mxu0 0.0
  %9372 = vmatpush2.msra.mxu0 0.0
  %9373 = vmatprep.subr.mxu0 0.0
  %9374 = vmatpush2.msra.mxu0 0.0
  %9375 = vmatprep.subr.mxu0 0.0
  %9376 = vmatpush2.msra.mxu0 0.0
  %9377 = vmatprep.subr.mxu0 0.0
  %9378 = vmatpush2.msra.mxu0 0.0
  %9379 = vmatprep.subr.mxu0 0.0
  %9380 = vmatpush2.msra.mxu0 0.0
  %9381 = vmatprep.subr.mxu0 0.0
  %9382 = vmatpush2.msra.mxu0 0.0
  %9383 = vmatprep.subr.mxu0 0.0
  %9384 = vmatpush2.msra.mxu0 0.0
  %9385 = vmatprep.subr.mxu0 0.0
  %9386 = vmatpush2.msra.mxu0 0.0
  %9387 = vmatprep.subr.mxu0 0.0
  %9388 = vmatpush2.msra.mxu0 0.0
  %9389 = vmatprep.subr.mxu0 0.0
  %9390 = vmatpush2.msra.mxu0 0.0
  %9391 = vmatprep.subr.mxu0 0.0
  %9392 = vmatpush2.msra.mxu0 0.0
  %9393 = vmatprep.subr.mxu0 0.0
  %9394 = vmatpush2.msra.mxu0 0.0
  %9395 = vmatprep.subr.mxu0 0.0
  %9396 = vmatpush2.msra.mxu0 0.0
  %9397 = vmatprep.subr.mxu0 0.0
  %9398 = vmatpush2.msra.mxu0 0.0
  %9399 = vmatprep.subr.mxu0 0.0
  %9400 = vmatpush2.msra.mxu0 0.0
  %9401 = vmatprep.subr.mxu0 0.0
  %9402 = vmatpush2.msra.mxu0 0.0
  %9403 = vmatprep.mubr.f32.mxu0 0.0
  %9404 = vmatmul.mubr.f32.gmra.mxu0 %v9337
  %v9405 = vpop.f32.mrf.mxu0
  %v9406 = vadd.f32 %v5909, %v9405
  %v9407 = vpop.f32.mrf.mxu0
  %9408 = vdwg.mxu0
  %9409 = vmatprep.subr.mxu0 0.0
  %9410 = vmatpush1.msra.mxu0 0.0
  %9411 = vmatprep.subr.mxu0 0.0
  %9412 = vmatpush1.msra.mxu0 0.0
  %9413 = vmatprep.subr.mxu0 0.0
  %9414 = vmatpush1.msra.mxu0 0.0
  %9415 = vmatprep.subr.mxu0 0.0
  %9416 = vmatpush1.msra.mxu0 0.0
  %9417 = vmatprep.subr.mxu0 0.0
  %9418 = vmatpush1.msra.mxu0 0.0
  %9419 = vmatprep.subr.mxu0 0.0
  %9420 = vmatpush1.msra.mxu0 0.0
  %9421 = vmatprep.subr.mxu0 0.0
  %9422 = vmatpush1.msra.mxu0 0.0
  %9423 = vmatprep.subr.mxu0 0.0
  %9424 = vmatpush1.msra.mxu0 0.0
  %9425 = vmatprep.subr.mxu0 0.0
  %9426 = vmatpush1.msra.mxu0 0.0
  %9427 = vmatprep.subr.mxu0 0.0
  %9428 = vmatpush1.msra.mxu0 0.0
  %9429 = vmatprep.subr.mxu0 0.0
  %9430 = vmatpush1.msra.mxu0 %v5901
  %9431 = vmatprep.subr.mxu0 0.0
  %9432 = vmatpush1.msra.mxu0 %v5900
  %9433 = vmatprep.subr.mxu0 0.0
  %9434 = vmatpush1.msra.mxu0 %v5899
  %9435 = vmatprep.subr.mxu0 0.0
  %9436 = vmatpush1.msra.mxu0 %v5898
  %9437 = vmatprep.subr.mxu0 0.0
  %9438 = vmatpush1.msra.mxu0 %v5897
  %9439 = vmatprep.subr.mxu0 0.0
  %9440 = vmatpush1.msra.mxu0 %v5896
  %9441 = vmatprep.subr.mxu0 0.0
  %9442 = vmatpush2.msra.mxu0 0.0
  %9443 = vmatprep.subr.mxu0 0.0
  %9444 = vmatpush2.msra.mxu0 0.0
  %9445 = vmatprep.subr.mxu0 0.0
  %9446 = vmatpush2.msra.mxu0 0.0
  %9447 = vmatprep.subr.mxu0 0.0
  %9448 = vmatpush2.msra.mxu0 0.0
  %9449 = vmatprep.subr.mxu0 0.0
  %9450 = vmatpush2.msra.mxu0 0.0
  %9451 = vmatprep.subr.mxu0 0.0
  %9452 = vmatpush2.msra.mxu0 0.0
  %9453 = vmatprep.subr.mxu0 0.0
  %9454 = vmatpush2.msra.mxu0 0.0
  %9455 = vmatprep.subr.mxu0 0.0
  %9456 = vmatpush2.msra.mxu0 0.0
  %9457 = vmatprep.subr.mxu0 0.0
  %9458 = vmatpush2.msra.mxu0 0.0
  %9459 = vmatprep.subr.mxu0 0.0
  %9460 = vmatpush2.msra.mxu0 0.0
  %9461 = vmatprep.subr.mxu0 0.0
  %9462 = vmatpush2.msra.mxu0 0.0
  %9463 = vmatprep.subr.mxu0 0.0
  %9464 = vmatpush2.msra.mxu0 0.0
  %9465 = vmatprep.subr.mxu0 0.0
  %9466 = vmatpush2.msra.mxu0 0.0
  %9467 = vmatprep.subr.mxu0 0.0
  %9468 = vmatpush2.msra.mxu0 0.0
  %9469 = vmatprep.subr.mxu0 0.0
  %9470 = vmatpush2.msra.mxu0 0.0
  %9471 = vmatprep.subr.mxu0 0.0
  %9472 = vmatpush2.msra.mxu0 0.0
  %9473 = vmatprep.mubr.f32.mxu0 0.0
  %9474 = vmatmul.mubr.f32.gmra.mxu0 %v9337
  %v9475 = vpop.f32.mrf.mxu0
  %v9476 = vadd.f32 %v5911, %v9475
  %v9477 = vpop.f32.mrf.mxu0
  %9478 = vdwg.mxu0
  %9479 = vmatprep.subr.mxu0 0.0
  %9480 = vmatpush1.msra.mxu0 0.0
  %9481 = vmatprep.subr.mxu0 0.0
  %9482 = vmatpush1.msra.mxu0 0.0
  %9483 = vmatprep.subr.mxu0 0.0
  %9484 = vmatpush1.msra.mxu0 0.0
  %9485 = vmatprep.subr.mxu0 0.0
  %9486 = vmatpush1.msra.mxu0 0.0
  %9487 = vmatprep.subr.mxu0 0.0
  %9488 = vmatpush1.msra.mxu0 0.0
  %9489 = vmatprep.subr.mxu0 0.0
  %9490 = vmatpush1.msra.mxu0 0.0
  %9491 = vmatprep.subr.mxu0 0.0
  %9492 = vmatpush1.msra.mxu0 0.0
  %9493 = vmatprep.subr.mxu0 0.0
  %9494 = vmatpush1.msra.mxu0 0.0
  %9495 = vmatprep.subr.mxu0 0.0
  %9496 = vmatpush1.msra.mxu0 0.0
  %9497 = vmatprep.subr.mxu0 0.0
  %9498 = vmatpush1.msra.mxu0 0.0
  %9499 = vmatprep.subr.mxu0 0.0
  %9500 = vmatpush1.msra.mxu0 %v5908
  %9501 = vmatprep.subr.mxu0 0.0
  %9502 = vmatpush1.msra.mxu0 %v5907
  %9503 = vmatprep.subr.mxu0 0.0
  %9504 = vmatpush1.msra.mxu0 %v5906
  %9505 = vmatprep.subr.mxu0 0.0
  %9506 = vmatpush1.msra.mxu0 %v5905
  %9507 = vmatprep.subr.mxu0 0.0
  %9508 = vmatpush1.msra.mxu0 %v5904
  %9509 = vmatprep.subr.mxu0 0.0
  %9510 = vmatpush1.msra.mxu0 %v5903
  %9511 = vmatprep.subr.mxu0 0.0
  %9512 = vmatpush2.msra.mxu0 0.0
  %9513 = vmatprep.subr.mxu0 0.0
  %9514 = vmatpush2.msra.mxu0 0.0
  %9515 = vmatprep.subr.mxu0 0.0
  %9516 = vmatpush2.msra.mxu0 0.0
  %9517 = vmatprep.subr.mxu0 0.0
  %9518 = vmatpush2.msra.mxu0 0.0
  %9519 = vmatprep.subr.mxu0 0.0
  %9520 = vmatpush2.msra.mxu0 0.0
  %9521 = vmatprep.subr.mxu0 0.0
  %9522 = vmatpush2.msra.mxu0 0.0
  %9523 = vmatprep.subr.mxu0 0.0
  %9524 = vmatpush2.msra.mxu0 0.0
  %9525 = vmatprep.subr.mxu0 0.0
  %9526 = vmatpush2.msra.mxu0 0.0
  %9527 = vmatprep.subr.mxu0 0.0
  %9528 = vmatpush2.msra.mxu0 0.0
  %9529 = vmatprep.subr.mxu0 0.0
  %9530 = vmatpush2.msra.mxu0 0.0
  %9531 = vmatprep.subr.mxu0 0.0
  %9532 = vmatpush2.msra.mxu0 0.0
  %9533 = vmatprep.subr.mxu0 0.0
  %9534 = vmatpush2.msra.mxu0 0.0
  %9535 = vmatprep.subr.mxu0 0.0
  %9536 = vmatpush2.msra.mxu0 0.0
  %9537 = vmatprep.subr.mxu0 0.0
  %9538 = vmatpush2.msra.mxu0 0.0
  %9539 = vmatprep.subr.mxu0 0.0
  %9540 = vmatpush2.msra.mxu0 0.0
  %9541 = vmatprep.subr.mxu0 0.0
  %9542 = vmatpush2.msra.mxu0 0.0
  %9543 = vmatprep.mubr.f32.mxu0 0.0
  %9544 = vmatmul.mubr.f32.gmra.mxu0 %v9337
  %v9545 = vpop.f32.mrf.mxu0
  %v9546 = vadd.f32 %v5913, %v9545
  %v9547 = vpop.f32.mrf.mxu0
  %9548 = vdwg.mxu0
  %v9550 = vrot.slane %v9406, 2
  %v9552 = vadd.f32 %v5706, %v9550
  %v9553 = vxor.u32 %v9552, 2147483648
  %v9554 = vmul.f32 %v9553, 1.442695
  %v9555 = vpow.pop %v9554
  %v9556 = vadd.f32 %v9555, 1.0
  %v9557 = vrcp.pop %v9556
  %v9558 = vmul.f32 1.0, %v9557
  %v9560 = vrot.slane %v9476, 2
  %v9562 = vadd.f32 %v5796, %v9560
  %v9563 = vxor.u32 %v9562, 2147483648
  %v9564 = vmul.f32 %v9563, 1.442695
  %v9565 = vpow.pop %v9564
  %v9566 = vadd.f32 %v9565, 1.0
  %v9567 = vrcp.pop %v9566
  %v9568 = vmul.f32 1.0, %v9567
  %v9570 = vrot.slane %v9546, 2
  %v9572 = vmul.f32 %v9558, %v9570
  %v9573 = vadd.f32 %v5886, %v9572
  %v9574 = vtanh.pop %v9573
  %v9575 = vsub.f32 1.0, %v9568
  %v9576 = vmul.f32 %v9575, %v9574
  %v9577 = vrot.slane %v9334, 7
  %v9579 = vmul.f32 %v9568, %v9577
  %v9580 = vadd.f32 %v9576, %v9579
  %v9582 = vrot.slane %v9580, 6
  %v9583 = vsel %vm518, %v9582, 0
  %9585 = vmatprep.subr.mxu0 0.0
  %9586 = vmatpush1.msra.mxu0 0.0
  %9587 = vmatprep.subr.mxu0 0.0
  %9588 = vmatpush1.msra.mxu0 0.0
  %9589 = vmatprep.subr.mxu0 0.0
  %9590 = vmatpush1.msra.mxu0 0.0
  %9591 = vmatprep.subr.mxu0 0.0
  %9592 = vmatpush1.msra.mxu0 0.0
  %9593 = vmatprep.subr.mxu0 0.0
  %9594 = vmatpush1.msra.mxu0 0.0
  %9595 = vmatprep.subr.mxu0 0.0
  %9596 = vmatpush1.msra.mxu0 0.0
  %9597 = vmatprep.subr.mxu0 0.0
  %9598 = vmatpush1.msra.mxu0 0.0
  %9599 = vmatprep.subr.mxu0 0.0
  %9600 = vmatpush1.msra.mxu0 0.0
  %9601 = vmatprep.subr.mxu0 0.0
  %9602 = vmatpush1.msra.mxu0 0.0
  %9603 = vmatprep.subr.mxu0 0.0
  %9604 = vmatpush1.msra.mxu0 0.0
  %9605 = vmatprep.subr.mxu0 0.0
  %9606 = vmatpush1.msra.mxu0 %v5894
  %9607 = vmatprep.subr.mxu0 0.0
  %9608 = vmatpush1.msra.mxu0 %v5893
  %9609 = vmatprep.subr.mxu0 0.0
  %9610 = vmatpush1.msra.mxu0 %v5892
  %9611 = vmatprep.subr.mxu0 0.0
  %9612 = vmatpush1.msra.mxu0 %v5891
  %9613 = vmatprep.subr.mxu0 0.0
  %9614 = vmatpush1.msra.mxu0 %v5890
  %9615 = vmatprep.subr.mxu0 0.0
  %9616 = vmatpush1.msra.mxu0 %v5889
  %9617 = vmatprep.subr.mxu0 0.0
  %9618 = vmatpush2.msra.mxu0 0.0
  %9619 = vmatprep.subr.mxu0 0.0
  %9620 = vmatpush2.msra.mxu0 0.0
  %9621 = vmatprep.subr.mxu0 0.0
  %9622 = vmatpush2.msra.mxu0 0.0
  %9623 = vmatprep.subr.mxu0 0.0
  %9624 = vmatpush2.msra.mxu0 0.0
  %9625 = vmatprep.subr.mxu0 0.0
  %9626 = vmatpush2.msra.mxu0 0.0
  %9627 = vmatprep.subr.mxu0 0.0
  %9628 = vmatpush2.msra.mxu0 0.0
  %9629 = vmatprep.subr.mxu0 0.0
  %9630 = vmatpush2.msra.mxu0 0.0
  %9631 = vmatprep.subr.mxu0 0.0
  %9632 = vmatpush2.msra.mxu0 0.0
  %9633 = vmatprep.subr.mxu0 0.0
  %9634 = vmatpush2.msra.mxu0 0.0
  %9635 = vmatprep.subr.mxu0 0.0
  %9636 = vmatpush2.msra.mxu0 0.0
  %9637 = vmatprep.subr.mxu0 0.0
  %9638 = vmatpush2.msra.mxu0 0.0
  %9639 = vmatprep.subr.mxu0 0.0
  %9640 = vmatpush2.msra.mxu0 0.0
  %9641 = vmatprep.subr.mxu0 0.0
  %9642 = vmatpush2.msra.mxu0 0.0
  %9643 = vmatprep.subr.mxu0 0.0
  %9644 = vmatpush2.msra.mxu0 0.0
  %9645 = vmatprep.subr.mxu0 0.0
  %9646 = vmatpush2.msra.mxu0 0.0
  %9647 = vmatprep.subr.mxu0 0.0
  %9648 = vmatpush2.msra.mxu0 0.0
  %9649 = vmatprep.mubr.f32.mxu0 0.0
  %9650 = vmatmul.mubr.f32.gmra.mxu0 %v9583
  %v9651 = vpop.f32.mrf.mxu0
  %v9652 = vadd.f32 %v5909, %v9651
  %v9653 = vpop.f32.mrf.mxu0
  %9654 = vdwg.mxu0
  %9655 = vmatprep.subr.mxu0 0.0
  %9656 = vmatpush1.msra.mxu0 0.0
  %9657 = vmatprep.subr.mxu0 0.0
  %9658 = vmatpush1.msra.mxu0 0.0
  %9659 = vmatprep.subr.mxu0 0.0
  %9660 = vmatpush1.msra.mxu0 0.0
  %9661 = vmatprep.subr.mxu0 0.0
  %9662 = vmatpush1.msra.mxu0 0.0
  %9663 = vmatprep.subr.mxu0 0.0
  %9664 = vmatpush1.msra.mxu0 0.0
  %9665 = vmatprep.subr.mxu0 0.0
  %9666 = vmatpush1.msra.mxu0 0.0
  %9667 = vmatprep.subr.mxu0 0.0
  %9668 = vmatpush1.msra.mxu0 0.0
  %9669 = vmatprep.subr.mxu0 0.0
  %9670 = vmatpush1.msra.mxu0 0.0
  %9671 = vmatprep.subr.mxu0 0.0
  %9672 = vmatpush1.msra.mxu0 0.0
  %9673 = vmatprep.subr.mxu0 0.0
  %9674 = vmatpush1.msra.mxu0 0.0
  %9675 = vmatprep.subr.mxu0 0.0
  %9676 = vmatpush1.msra.mxu0 %v5901
  %9677 = vmatprep.subr.mxu0 0.0
  %9678 = vmatpush1.msra.mxu0 %v5900
  %9679 = vmatprep.subr.mxu0 0.0
  %9680 = vmatpush1.msra.mxu0 %v5899
  %9681 = vmatprep.subr.mxu0 0.0
  %9682 = vmatpush1.msra.mxu0 %v5898
  %9683 = vmatprep.subr.mxu0 0.0
  %9684 = vmatpush1.msra.mxu0 %v5897
  %9685 = vmatprep.subr.mxu0 0.0
  %9686 = vmatpush1.msra.mxu0 %v5896
  %9687 = vmatprep.subr.mxu0 0.0
  %9688 = vmatpush2.msra.mxu0 0.0
  %9689 = vmatprep.subr.mxu0 0.0
  %9690 = vmatpush2.msra.mxu0 0.0
  %9691 = vmatprep.subr.mxu0 0.0
  %9692 = vmatpush2.msra.mxu0 0.0
  %9693 = vmatprep.subr.mxu0 0.0
  %9694 = vmatpush2.msra.mxu0 0.0
  %9695 = vmatprep.subr.mxu0 0.0
  %9696 = vmatpush2.msra.mxu0 0.0
  %9697 = vmatprep.subr.mxu0 0.0
  %9698 = vmatpush2.msra.mxu0 0.0
  %9699 = vmatprep.subr.mxu0 0.0
  %9700 = vmatpush2.msra.mxu0 0.0
  %9701 = vmatprep.subr.mxu0 0.0
  %9702 = vmatpush2.msra.mxu0 0.0
  %9703 = vmatprep.subr.mxu0 0.0
  %9704 = vmatpush2.msra.mxu0 0.0
  %9705 = vmatprep.subr.mxu0 0.0
  %9706 = vmatpush2.msra.mxu0 0.0
  %9707 = vmatprep.subr.mxu0 0.0
  %9708 = vmatpush2.msra.mxu0 0.0
  %9709 = vmatprep.subr.mxu0 0.0
  %9710 = vmatpush2.msra.mxu0 0.0
  %9711 = vmatprep.subr.mxu0 0.0
  %9712 = vmatpush2.msra.mxu0 0.0
  %9713 = vmatprep.subr.mxu0 0.0
  %9714 = vmatpush2.msra.mxu0 0.0
  %9715 = vmatprep.subr.mxu0 0.0
  %9716 = vmatpush2.msra.mxu0 0.0
  %9717 = vmatprep.subr.mxu0 0.0
  %9718 = vmatpush2.msra.mxu0 0.0
  %9719 = vmatprep.mubr.f32.mxu0 0.0
  %9720 = vmatmul.mubr.f32.gmra.mxu0 %v9583
  %v9721 = vpop.f32.mrf.mxu0
  %v9722 = vadd.f32 %v5911, %v9721
  %v9723 = vpop.f32.mrf.mxu0
  %9724 = vdwg.mxu0
  %9725 = vmatprep.subr.mxu0 0.0
  %9726 = vmatpush1.msra.mxu0 0.0
  %9727 = vmatprep.subr.mxu0 0.0
  %9728 = vmatpush1.msra.mxu0 0.0
  %9729 = vmatprep.subr.mxu0 0.0
  %9730 = vmatpush1.msra.mxu0 0.0
  %9731 = vmatprep.subr.mxu0 0.0
  %9732 = vmatpush1.msra.mxu0 0.0
  %9733 = vmatprep.subr.mxu0 0.0
  %9734 = vmatpush1.msra.mxu0 0.0
  %9735 = vmatprep.subr.mxu0 0.0
  %9736 = vmatpush1.msra.mxu0 0.0
  %9737 = vmatprep.subr.mxu0 0.0
  %9738 = vmatpush1.msra.mxu0 0.0
  %9739 = vmatprep.subr.mxu0 0.0
  %9740 = vmatpush1.msra.mxu0 0.0
  %9741 = vmatprep.subr.mxu0 0.0
  %9742 = vmatpush1.msra.mxu0 0.0
  %9743 = vmatprep.subr.mxu0 0.0
  %9744 = vmatpush1.msra.mxu0 0.0
  %9745 = vmatprep.subr.mxu0 0.0
  %9746 = vmatpush1.msra.mxu0 %v5908
  %9747 = vmatprep.subr.mxu0 0.0
  %9748 = vmatpush1.msra.mxu0 %v5907
  %9749 = vmatprep.subr.mxu0 0.0
  %9750 = vmatpush1.msra.mxu0 %v5906
  %9751 = vmatprep.subr.mxu0 0.0
  %9752 = vmatpush1.msra.mxu0 %v5905
  %9753 = vmatprep.subr.mxu0 0.0
  %9754 = vmatpush1.msra.mxu0 %v5904
  %9755 = vmatprep.subr.mxu0 0.0
  %9756 = vmatpush1.msra.mxu0 %v5903
  %9757 = vmatprep.subr.mxu0 0.0
  %9758 = vmatpush2.msra.mxu0 0.0
  %9759 = vmatprep.subr.mxu0 0.0
  %9760 = vmatpush2.msra.mxu0 0.0
  %9761 = vmatprep.subr.mxu0 0.0
  %9762 = vmatpush2.msra.mxu0 0.0
  %9763 = vmatprep.subr.mxu0 0.0
  %9764 = vmatpush2.msra.mxu0 0.0
  %9765 = vmatprep.subr.mxu0 0.0
  %9766 = vmatpush2.msra.mxu0 0.0
  %9767 = vmatprep.subr.mxu0 0.0
  %9768 = vmatpush2.msra.mxu0 0.0
  %9769 = vmatprep.subr.mxu0 0.0
  %9770 = vmatpush2.msra.mxu0 0.0
  %9771 = vmatprep.subr.mxu0 0.0
  %9772 = vmatpush2.msra.mxu0 0.0
  %9773 = vmatprep.subr.mxu0 0.0
  %9774 = vmatpush2.msra.mxu0 0.0
  %9775 = vmatprep.subr.mxu0 0.0
  %9776 = vmatpush2.msra.mxu0 0.0
  %9777 = vmatprep.subr.mxu0 0.0
  %9778 = vmatpush2.msra.mxu0 0.0
  %9779 = vmatprep.subr.mxu0 0.0
  %9780 = vmatpush2.msra.mxu0 0.0
  %9781 = vmatprep.subr.mxu0 0.0
  %9782 = vmatpush2.msra.mxu0 0.0
  %9783 = vmatprep.subr.mxu0 0.0
  %9784 = vmatpush2.msra.mxu0 0.0
  %9785 = vmatprep.subr.mxu0 0.0
  %9786 = vmatpush2.msra.mxu0 0.0
  %9787 = vmatprep.subr.mxu0 0.0
  %9788 = vmatpush2.msra.mxu0 0.0
  %9789 = vmatprep.mubr.f32.mxu0 0.0
  %9790 = vmatmul.mubr.f32.gmra.mxu0 %v9583
  %v9791 = vpop.f32.mrf.mxu0
  %v9792 = vadd.f32 %v5913, %v9791
  %v9793 = vpop.f32.mrf.mxu0
  %9794 = vdwg.mxu0
  %v9796 = vrot.slane %v9652, 1
  %v9798 = vadd.f32 %v5706, %v9796
  %v9799 = vxor.u32 %v9798, 2147483648
  %v9800 = vmul.f32 %v9799, 1.442695
  %v9801 = vpow.pop %v9800
  %v9802 = vadd.f32 %v9801, 1.0
  %v9803 = vrcp.pop %v9802
  %v9804 = vmul.f32 1.0, %v9803
  %v9806 = vrot.slane %v9722, 1
  %v9808 = vadd.f32 %v5796, %v9806
  %v9809 = vxor.u32 %v9808, 2147483648
  %v9810 = vmul.f32 %v9809, 1.442695
  %v9811 = vpow.pop %v9810
  %v9812 = vadd.f32 %v9811, 1.0
  %v9813 = vrcp.pop %v9812
  %v9814 = vmul.f32 1.0, %v9813
  %v9816 = vrot.slane %v9792, 1
  %v9818 = vmul.f32 %v9804, %v9816
  %v9819 = vadd.f32 %v5886, %v9818
  %v9820 = vtanh.pop %v9819
  %v9821 = vsub.f32 1.0, %v9814
  %v9822 = vmul.f32 %v9821, %v9820
  %v9823 = vrot.slane %v9580, 7
  %v9825 = vmul.f32 %v9814, %v9823
  %v9826 = vadd.f32 %v9822, %v9825
  %9827 = vst.msk [vmem:[%s69 - $0x7] sm:$0x80] %vm4782, %v9826
  %v9828 = vsel %vm4784, %v6148, %v6393
  %v9829 = vsel %vm4786, %v9828, %v6639
  %v9830 = vsel %vm4788, %v9829, %v6885
  %v9831 = vsel %vm4790, %v9830, %v7131
  %v9832 = vsel %vm4792, %v9831, %v7377
  %v9833 = vsel %vm4794, %v9832, %v7623
  %v9834 = vsel %vm4796, %v9833, %v7869
  %v9835 = vsel %vm4784, %v8105, %v8350
  %v9836 = vsel %vm4786, %v9835, %v8596
  %v9837 = vsel %vm4788, %v9836, %v8842
  %v9838 = vsel %vm4790, %v9837, %v9088
  %v9839 = vsel %vm4792, %v9838, %v9334
  %v9840 = vsel %vm4794, %v9839, %v9580
  %v9841 = vsel %vm4796, %v9840, %v9826
  %v9842 = vld [vmem:[%s55] sm:$0xff]
  %v9843 = vld [vmem:[%s55 + $0x8] sm:$0xff]
  %v9844 = vld [vmem:[%s55 + $0x10] sm:$0xff]
  %v9845 = vld [vmem:[%s55 + $0x18] sm:$0xff]
  %v9846 = vld [vmem:[%s55 + $0x20] sm:$0xff]
  %v9847 = vld [vmem:[%s55 + $0x28] sm:$0xff]
  %v9848 = vld [vmem:[%s57] sm:$0x1]
  %v9850 = vlaneseq
  %v9851 = vshrl.u32 %v9850, 7
  %v9852 = vsub.s32 0, %v9851
  %v9853 = vrot.slane %v9848, %v9852
  %v9856 = vsel %vm518, %v9834, 0
  %v9859 = vsel %vm518, %v9841, 0
  %9861 = vmatprep.subr.mxu0 0.0
  %9862 = vmatpush1.msra.mxu0 0.0
  %9863 = vmatprep.subr.mxu0 0.0
  %9864 = vmatpush1.msra.mxu0 0.0
  %9865 = vmatprep.subr.mxu0 0.0
  %9866 = vmatpush1.msra.mxu0 0.0
  %9867 = vmatprep.subr.mxu0 0.0
  %9868 = vmatpush1.msra.mxu0 0.0
  %9869 = vmatprep.subr.mxu0 0.0
  %9870 = vmatpush1.msra.mxu0 0.0
  %9871 = vmatprep.subr.mxu0 0.0
  %9872 = vmatpush1.msra.mxu0 0.0
  %9873 = vmatprep.subr.mxu0 0.0
  %9874 = vmatpush1.msra.mxu0 0.0
  %9875 = vmatprep.subr.mxu0 0.0
  %9876 = vmatpush1.msra.mxu0 0.0
  %9877 = vmatprep.subr.mxu0 0.0
  %9878 = vmatpush1.msra.mxu0 0.0
  %9879 = vmatprep.subr.mxu0 0.0
  %9880 = vmatpush1.msra.mxu0 0.0
  %9881 = vmatprep.subr.mxu0 0.0
  %9882 = vmatpush1.msra.mxu0 %v9847
  %9883 = vmatprep.subr.mxu0 0.0
  %9884 = vmatpush1.msra.mxu0 %v9846
  %9885 = vmatprep.subr.mxu0 0.0
  %9886 = vmatpush1.msra.mxu0 %v9845
  %9887 = vmatprep.subr.mxu0 0.0
  %9888 = vmatpush1.msra.mxu0 %v9844
  %9889 = vmatprep.subr.mxu0 0.0
  %9890 = vmatpush1.msra.mxu0 %v9843
  %9891 = vmatprep.subr.mxu0 0.0
  %9892 = vmatpush1.msra.mxu0 %v9842
  %9893 = vmatprep.subr.mxu0 0.0
  %9894 = vmatpush2.msra.mxu0 0.0
  %9895 = vmatprep.subr.mxu0 0.0
  %9896 = vmatpush2.msra.mxu0 0.0
  %9897 = vmatprep.subr.mxu0 0.0
  %9898 = vmatpush2.msra.mxu0 0.0
  %9899 = vmatprep.subr.mxu0 0.0
  %9900 = vmatpush2.msra.mxu0 0.0
  %9901 = vmatprep.subr.mxu0 0.0
  %9902 = vmatpush2.msra.mxu0 0.0
  %9903 = vmatprep.subr.mxu0 0.0
  %9904 = vmatpush2.msra.mxu0 0.0
  %9905 = vmatprep.subr.mxu0 0.0
  %9906 = vmatpush2.msra.mxu0 0.0
  %9907 = vmatprep.subr.mxu0 0.0
  %9908 = vmatpush2.msra.mxu0 0.0
  %9909 = vmatprep.subr.mxu0 0.0
  %9910 = vmatpush2.msra.mxu0 0.0
  %9911 = vmatprep.subr.mxu0 0.0
  %9912 = vmatpush2.msra.mxu0 0.0
  %9913 = vmatprep.subr.mxu0 0.0
  %9914 = vmatpush2.msra.mxu0 0.0
  %9915 = vmatprep.subr.mxu0 0.0
  %9916 = vmatpush2.msra.mxu0 0.0
  %9917 = vmatprep.subr.mxu0 0.0
  %9918 = vmatpush2.msra.mxu0 0.0
  %9919 = vmatprep.subr.mxu0 0.0
  %9920 = vmatpush2.msra.mxu0 0.0
  %9921 = vmatprep.subr.mxu0 0.0
  %9922 = vmatpush2.msra.mxu0 0.0
  %9923 = vmatprep.subr.mxu0 0.0
  %9924 = vmatpush2.msra.mxu0 0.0
  %9925 = vmatprep.mubr.f32.mxu0 0.0
  %9926 = vmatmul.mubr.f32.gmra.mxu0 %v9856
  %v9927 = vpop.f32.mrf.mxu0
  %v9928 = vadd.f32 %v9853, %v9927
  %v9929 = vpop.f32.mrf.mxu0
  %9930 = vmatprep.mubr.f32.mxu0 0.0
  %9931 = vmatmul.mubr.f32.gmra.mxu0 %v9859
  %v9932 = vpop.f32.mrf.mxu0
  %v9933 = vadd.f32 %v9853, %v9932
  %v9934 = vpop.f32.mrf.mxu0
  %9935 = vdwg.mxu0
  %v9936 = vmul.f32 %v9834, %v9928
  %v9937 = vmul.f32 %v9841, %v9933
  %v9938 = vld [vmem:[%s59] sm:$0xff]
  %v9939 = vld [vmem:[%s59 + $0x8] sm:$0xff]
  %v9940 = vld [vmem:[%s59 + $0x10] sm:$0xff]
  %v9941 = vld [vmem:[%s59 + $0x18] sm:$0xff]
  %v9942 = vld [vmem:[%s59 + $0x20] sm:$0xff]
  %v9943 = vld [vmem:[%s59 + $0x28] sm:$0xff]
  %v9945 = vsel %vm518, %v9936, 0
  %v9948 = vsel %vm518, %v9937, 0
  %9950 = vmatprep.subr.mxu0 0.0
  %9951 = vmatpush1.msra.mxu0 0.0
  %9952 = vmatprep.subr.mxu0 0.0
  %9953 = vmatpush1.msra.mxu0 0.0
  %9954 = vmatprep.subr.mxu0 0.0
  %9955 = vmatpush1.msra.mxu0 0.0
  %9956 = vmatprep.subr.mxu0 0.0
  %9957 = vmatpush1.msra.mxu0 0.0
  %9958 = vmatprep.subr.mxu0 0.0
  %9959 = vmatpush1.msra.mxu0 0.0
  %9960 = vmatprep.subr.mxu0 0.0
  %9961 = vmatpush1.msra.mxu0 0.0
  %9962 = vmatprep.subr.mxu0 0.0
  %9963 = vmatpush1.msra.mxu0 0.0
  %9964 = vmatprep.subr.mxu0 0.0
  %9965 = vmatpush1.msra.mxu0 0.0
  %9966 = vmatprep.subr.mxu0 0.0
  %9967 = vmatpush1.msra.mxu0 0.0
  %9968 = vmatprep.subr.mxu0 0.0
  %9969 = vmatpush1.msra.mxu0 0.0
  %9970 = vmatprep.subr.mxu0 0.0
  %9971 = vmatpush1.msra.mxu0 %v9943
  %9972 = vmatprep.subr.mxu0 0.0
  %9973 = vmatpush1.msra.mxu0 %v9942
  %9974 = vmatprep.subr.mxu0 0.0
  %9975 = vmatpush1.msra.mxu0 %v9941
  %9976 = vmatprep.subr.mxu0 0.0
  %9977 = vmatpush1.msra.mxu0 %v9940
  %9978 = vmatprep.subr.mxu0 0.0
  %9979 = vmatpush1.msra.mxu0 %v9939
  %9980 = vmatprep.subr.mxu0 0.0
  %9981 = vmatpush1.msra.mxu0 %v9938
  %9982 = vmatprep.subr.mxu0 0.0
  %9983 = vmatpush2.msra.mxu0 0.0
  %9984 = vmatprep.subr.mxu0 0.0
  %9985 = vmatpush2.msra.mxu0 0.0
  %9986 = vmatprep.subr.mxu0 0.0
  %9987 = vmatpush2.msra.mxu0 0.0
  %9988 = vmatprep.subr.mxu0 0.0
  %9989 = vmatpush2.msra.mxu0 0.0
  %9990 = vmatprep.subr.mxu0 0.0
  %9991 = vmatpush2.msra.mxu0 0.0
  %9992 = vmatprep.subr.mxu0 0.0
  %9993 = vmatpush2.msra.mxu0 0.0
  %9994 = vmatprep.subr.mxu0 0.0
  %9995 = vmatpush2.msra.mxu0 0.0
  %9996 = vmatprep.subr.mxu0 0.0
  %9997 = vmatpush2.msra.mxu0 0.0
  %9998 = vmatprep.subr.mxu0 0.0
  %9999 = vmatpush2.msra.mxu0 0.0
  %10000 = vmatprep.subr.mxu0 0.0
  %10001 = vmatpush2.msra.mxu0 0.0
  %10002 = vmatprep.subr.mxu0 0.0
  %10003 = vmatpush2.msra.mxu0 0.0
  %10004 = vmatprep.subr.mxu0 0.0
  %10005 = vmatpush2.msra.mxu0 0.0
  %10006 = vmatprep.subr.mxu0 0.0
  %10007 = vmatpush2.msra.mxu0 0.0
  %10008 = vmatprep.subr.mxu0 0.0
  %10009 = vmatpush2.msra.mxu0 0.0
  %10010 = vmatprep.subr.mxu0 0.0
  %10011 = vmatpush2.msra.mxu0 0.0
  %10012 = vmatprep.subr.mxu0 0.0
  %10013 = vmatpush2.msra.mxu0 0.0
  %10014 = vmatprep.mubr.f32.mxu0 0.0
  %10015 = vmatmul.mubr.f32.gmra.mxu0 %v9945
  %v10016 = vpop.f32.mrf.mxu0
  %v10017 = vadd.f32 0.0, %v10016
  %v10018 = vpop.f32.mrf.mxu0
  %10019 = vmatprep.mubr.f32.mxu0 0.0
  %10020 = vmatmul.mubr.f32.gmra.mxu0 %v9948
  %v10021 = vpop.f32.mrf.mxu0
  %v10022 = vadd.f32 0.0, %v10021
  %v10023 = vpop.f32.mrf.mxu0
  %10024 = vdwg.mxu0
  %v10025 = vtanh.pop %v10017
  %v10026 = vtanh.pop %v10022
  %v10027 = vsel %vm4990, %v10025, -inf
  %10028 = vmax.xlane.f32.xlu0 %v10027
  %v10029 = vpop.xlane.xlu0 %10028
  %v10030 = vsel %vm4990, %v10026, -inf
  %10031 = vmax.xlane.f32.xlu0 %v10030
  %v10032 = vpop.xlane.xlu0 %10031
  %v10033 = vsub.f32 %v10025, %v10029
  %v10034 = vsub.f32 %v10026, %v10032
  %v10035 = vmul.f32 %v10033, 1.442695
  %v10036 = vpow.pop %v10035
  %v10037 = vmul.f32 %v10034, 1.442695
  %v10038 = vpow.pop %v10037
  %v10039 = vsel %vm4990, %v10036, 0.0
  %10040 = vadd.xlane.f32.xlu0 %v10039
  %v10041 = vpop.xlane.xlu0 %10040
  %v10042 = vsel %vm4990, %v10038, 0.0
  %10043 = vadd.xlane.f32.xlu0 %v10042
  %v10044 = vpop.xlane.xlu0 %10043
  %v10045 = vrcp.pop %v10041
  %v10046 = vrcp.pop %v10044
  %v10047 = vmul.f32 %v10036, %v10045
  %v10048 = vmul.f32 %v10038, %v10046
  %v10049 = vld [vmem:[%s61] sm:$0x7]
  %v10051 = vsel %vm4990, %v10047, 0
  %v10054 = vsel %vm4990, %v10048, 0
  %v10057 = vsel %vm4788, %v10049, 0
  %10059 = vmatprep.subr.mxu0 0.0
  %10060 = vmatpush1.msra.mxu0 0.0
  %10061 = vmatprep.subr.mxu0 0.0
  %10062 = vmatpush1.msra.mxu0 0.0
  %10063 = vmatprep.subr.mxu0 0.0
  %10064 = vmatpush1.msra.mxu0 0.0
  %10065 = vmatprep.subr.mxu0 0.0
  %10066 = vmatpush1.msra.mxu0 0.0
  %10067 = vmatprep.subr.mxu0 0.0
  %10068 = vmatpush1.msra.mxu0 0.0
  %10069 = vmatprep.subr.mxu0 0.0
  %10070 = vmatpush1.msra.mxu0 0.0
  %10071 = vmatprep.subr.mxu0 0.0
  %10072 = vmatpush1.msra.mxu0 0.0
  %10073 = vmatprep.subr.mxu0 0.0
  %10074 = vmatpush1.msra.mxu0 0.0
  %10075 = vmatprep.subr.mxu0 0.0
  %10076 = vmatpush1.msra.mxu0 0.0
  %10077 = vmatprep.subr.mxu0 0.0
  %10078 = vmatpush1.msra.mxu0 0.0
  %10079 = vmatprep.subr.mxu0 0.0
  %10080 = vmatpush1.msra.mxu0 0.0
  %10081 = vmatprep.subr.mxu0 0.0
  %10082 = vmatpush1.msra.mxu0 0.0
  %10083 = vmatprep.subr.mxu0 0.0
  %10084 = vmatpush1.msra.mxu0 0.0
  %10085 = vmatprep.subr.mxu0 0.0
  %10086 = vmatpush1.msra.mxu0 0.0
  %10087 = vmatprep.subr.mxu0 0.0
  %10088 = vmatpush1.msra.mxu0 0.0
  %10089 = vmatprep.subr.mxu0 0.0
  %10090 = vmatpush1.msra.mxu0 %v10057
  %10091 = vmatprep.subr.mxu0 0.0
  %10092 = vmatpush2.msra.mxu0 0.0
  %10093 = vmatprep.subr.mxu0 0.0
  %10094 = vmatpush2.msra.mxu0 0.0
  %10095 = vmatprep.subr.mxu0 0.0
  %10096 = vmatpush2.msra.mxu0 0.0
  %10097 = vmatprep.subr.mxu0 0.0
  %10098 = vmatpush2.msra.mxu0 0.0
  %10099 = vmatprep.subr.mxu0 0.0
  %10100 = vmatpush2.msra.mxu0 0.0
  %10101 = vmatprep.subr.mxu0 0.0
  %10102 = vmatpush2.msra.mxu0 0.0
  %10103 = vmatprep.subr.mxu0 0.0
  %10104 = vmatpush2.msra.mxu0 0.0
  %10105 = vmatprep.subr.mxu0 0.0
  %10106 = vmatpush2.msra.mxu0 0.0
  %10107 = vmatprep.subr.mxu0 0.0
  %10108 = vmatpush2.msra.mxu0 0.0
  %10109 = vmatprep.subr.mxu0 0.0
  %10110 = vmatpush2.msra.mxu0 0.0
  %10111 = vmatprep.subr.mxu0 0.0
  %10112 = vmatpush2.msra.mxu0 0.0
  %10113 = vmatprep.subr.mxu0 0.0
  %10114 = vmatpush2.msra.mxu0 0.0
  %10115 = vmatprep.subr.mxu0 0.0
  %10116 = vmatpush2.msra.mxu0 0.0
  %10117 = vmatprep.subr.mxu0 0.0
  %10118 = vmatpush2.msra.mxu0 0.0
  %10119 = vmatprep.subr.mxu0 0.0
  %10120 = vmatpush2.msra.mxu0 0.0
  %10121 = vmatprep.subr.mxu0 0.0
  %10122 = vmatpush2.msra.mxu0 0.0
  %10123 = vmatprep.mubr.f32.mxu0 0.0
  %10124 = vmatmul.mubr.f32.gmra.mxu0 %v10051
  %v10125 = vpop.f32.mrf.mxu0
  %v10126 = vadd.f32 0.0, %v10125
  %v10127 = vpop.f32.mrf.mxu0
  %10128 = vmatprep.mubr.f32.mxu0 0.0
  %10129 = vmatmul.mubr.f32.gmra.mxu0 %v10054
  %v10130 = vpop.f32.mrf.mxu0
  %v10131 = vadd.f32 0.0, %v10130
  %v10132 = vpop.f32.mrf.mxu0
  %10133 = vdwg.mxu0
  %v10134 = vmul.f32 %v10126, %v9834
  %v10135 = vmul.f32 %v10131, %v9841
  %v10136 = vld [vmem:[%s63] sm:$0xff]
  %v10137 = vld [vmem:[%s63 + $0x8] sm:$0xff]
  %v10138 = vld [vmem:[%s63 + $0x10] sm:$0xff]
  %v10139 = vld [vmem:[%s63 + $0x18] sm:$0xff]
  %v10140 = vld [vmem:[%s63 + $0x20] sm:$0xff]
  %v10141 = vld [vmem:[%s63 + $0x28] sm:$0xff]
  %v10143 = vsel %vm518, %v10134, 0
  %v10146 = vsel %vm518, %v10135, 0
  %10148 = vmatprep.subr.mxu0 0.0
  %10149 = vmatpush1.msra.mxu0 0.0
  %10150 = vmatprep.subr.mxu0 0.0
  %10151 = vmatpush1.msra.mxu0 0.0
  %10152 = vmatprep.subr.mxu0 0.0
  %10153 = vmatpush1.msra.mxu0 0.0
  %10154 = vmatprep.subr.mxu0 0.0
  %10155 = vmatpush1.msra.mxu0 0.0
  %10156 = vmatprep.subr.mxu0 0.0
  %10157 = vmatpush1.msra.mxu0 0.0
  %10158 = vmatprep.subr.mxu0 0.0
  %10159 = vmatpush1.msra.mxu0 0.0
  %10160 = vmatprep.subr.mxu0 0.0
  %10161 = vmatpush1.msra.mxu0 0.0
  %10162 = vmatprep.subr.mxu0 0.0
  %10163 = vmatpush1.msra.mxu0 0.0
  %10164 = vmatprep.subr.mxu0 0.0
  %10165 = vmatpush1.msra.mxu0 0.0
  %10166 = vmatprep.subr.mxu0 0.0
  %10167 = vmatpush1.msra.mxu0 0.0
  %10168 = vmatprep.subr.mxu0 0.0
  %10169 = vmatpush1.msra.mxu0 %v10141
  %10170 = vmatprep.subr.mxu0 0.0
  %10171 = vmatpush1.msra.mxu0 %v10140
  %10172 = vmatprep.subr.mxu0 0.0
  %10173 = vmatpush1.msra.mxu0 %v10139
  %10174 = vmatprep.subr.mxu0 0.0
  %10175 = vmatpush1.msra.mxu0 %v10138
  %10176 = vmatprep.subr.mxu0 0.0
  %10177 = vmatpush1.msra.mxu0 %v10137
  %10178 = vmatprep.subr.mxu0 0.0
  %10179 = vmatpush1.msra.mxu0 %v10136
  %10180 = vmatprep.subr.mxu0 0.0
  %10181 = vmatpush2.msra.mxu0 0.0
  %10182 = vmatprep.subr.mxu0 0.0
  %10183 = vmatpush2.msra.mxu0 0.0
  %10184 = vmatprep.subr.mxu0 0.0
  %10185 = vmatpush2.msra.mxu0 0.0
  %10186 = vmatprep.subr.mxu0 0.0
  %10187 = vmatpush2.msra.mxu0 0.0
  %10188 = vmatprep.subr.mxu0 0.0
  %10189 = vmatpush2.msra.mxu0 0.0
  %10190 = vmatprep.subr.mxu0 0.0
  %10191 = vmatpush2.msra.mxu0 0.0
  %10192 = vmatprep.subr.mxu0 0.0
  %10193 = vmatpush2.msra.mxu0 0.0
  %10194 = vmatprep.subr.mxu0 0.0
  %10195 = vmatpush2.msra.mxu0 0.0
  %10196 = vmatprep.subr.mxu0 0.0
  %10197 = vmatpush2.msra.mxu0 0.0
  %10198 = vmatprep.subr.mxu0 0.0
  %10199 = vmatpush2.msra.mxu0 0.0
  %10200 = vmatprep.subr.mxu0 0.0
  %10201 = vmatpush2.msra.mxu0 0.0
  %10202 = vmatprep.subr.mxu0 0.0
  %10203 = vmatpush2.msra.mxu0 0.0
  %10204 = vmatprep.subr.mxu0 0.0
  %10205 = vmatpush2.msra.mxu0 0.0
  %10206 = vmatprep.subr.mxu0 0.0
  %10207 = vmatpush2.msra.mxu0 0.0
  %10208 = vmatprep.subr.mxu0 0.0
  %10209 = vmatpush2.msra.mxu0 0.0
  %10210 = vmatprep.subr.mxu0 0.0
  %10211 = vmatpush2.msra.mxu0 0.0
  %10212 = vmatprep.mubr.f32.mxu0 0.0
  %10213 = vmatmul.mubr.f32.gmra.mxu0 %v10143
  %v10214 = vpop.f32.mrf.mxu0
  %v10215 = vadd.f32 0.0, %v10214
  %v10216 = vpop.f32.mrf.mxu0
  %10217 = vmatprep.mubr.f32.mxu0 0.0
  %10218 = vmatmul.mubr.f32.gmra.mxu0 %v10146
  %v10219 = vpop.f32.mrf.mxu0
  %v10220 = vadd.f32 0.0, %v10219
  %v10221 = vpop.f32.mrf.mxu0
  %10222 = vdwg.mxu0
  %v10223 = vadd.f32 %v9834, %v10215
  %v10224 = vadd.f32 %v9841, %v10220
  %v10225 = vxor.u32 %v10223, 2147483648
  %v10226 = vxor.u32 %v10224, 2147483648
  %v10227 = vmul.f32 %v10225, 1.442695
  %v10228 = vpow.pop %v10227
  %v10229 = vmul.f32 %v10226, 1.442695
  %v10230 = vpow.pop %v10229
  %v10231 = vadd.f32 %v10228, 1.0
  %v10232 = vadd.f32 %v10230, 1.0
  %v10233 = vrcp.pop %v10231
  %v10234 = vmul.f32 1.0, %v10233
  %v10235 = vrcp.pop %v10232
  %v10236 = vmul.f32 1.0, %v10235
  %10237 = vst.msk [vmem:[%s65] sm:$0xff] %vm518, %v10234
  %10238 = vst.msk [vmem:[%s65 + $0x8] sm:$0xff] %vm518, %v10236
  // Predicated region
  $region130: #{anomuly_forward.1} parent=0 // pred_check
    _
  $region131: #{anomuly_forward.1} parent=0 // pred_check_branch
    %10240 = sbr.rel (0) target = $region133
  $region132: #{anomuly_forward.1} parent=0 // pred_region
    _
  $region133: #{anomuly_forward.1} parent=0 // pred_fallthru
    _
  // Predicated region
  $region134: #{anomuly_forward.1} parent=0 // pred_check
    _
  $region135: #{anomuly_forward.1} parent=0 // pred_check_branch
    %10242 = sbr.rel (0) target = $region137
  $region136: #{anomuly_forward.1} parent=0 // pred_region
    _
  $region137: #{anomuly_forward.1} parent=0 // pred_fallthru
    _
  // Predicated region
  $region138: #{anomuly_forward.1} parent=0 // pred_check
    _
  $region139: #{anomuly_forward.1} parent=0 // pred_check_branch
    %10244 = sbr.rel (0) target = $region141
  $region140: #{anomuly_forward.1} parent=0 // pred_region
    _
  $region141: #{anomuly_forward.1} parent=0 // pred_fallthru
    _
  // Predicated region
  $region142: #{anomuly_forward.1} parent=0 // pred_check
    _
  $region143: #{anomuly_forward.1} parent=0 // pred_check_branch
    %10246 = sbr.rel (0) target = $region145
  $region144: #{anomuly_forward.1} parent=0 // pred_region
    _
  $region145: #{anomuly_forward.1} parent=0 // pred_fallthru
    _
  // Predicated region
  $region146: #{anomuly_forward.1} parent=0 // pred_check
    _
  $region147: #{anomuly_forward.1} parent=0 // pred_check_branch
    %10248 = sbr.rel (0) target = $region149
  $region148: #{anomuly_forward.1} parent=0 // pred_region
    _
  $region149: #{anomuly_forward.1} parent=0 // pred_fallthru
    _
  // Predicated region
  $region150: #{anomuly_forward.1} parent=0 // pred_check
    _
  $region151: #{anomuly_forward.1} parent=0 // pred_check_branch
    %10250 = sbr.rel (0) target = $region153
  $region152: #{anomuly_forward.1} parent=0 // pred_region
    _
  $region153: #{anomuly_forward.1} parent=0 // pred_fallthru
    _

</llo_original>
